<compile_context>
chip_gen: v7x
topology: tpu7x:2x2x1
jax: 0.10.0
libtpu: 0.0.40
codegen_flags: <defaults>
</compile_context>

<pallas_src>
import jax
import jax.numpy as jnp
from jax import lax
from jax.experimental import pallas as pl
from jax.experimental.pallas import tpu as pltpu


def _round_up(x, m):
    return ((x + m - 1) // m) * m


def lstm_head_kernel(x_ref, w_ih_ref, w_hh_ref, b_ref, w_out_ref, b_out_ref,
                     y_ref, h_scr, c_scr, xw_scr, hall_scr):
    """Fused LSTM recurrence + output Linear for one T-tile.

    x_ref:     (T_tile, Bp, Fp)  bf16 time-major input tile
    w_ih_ref:  (Fp, 4Hp)         bf16 input->gates weight (per-gate padded, transposed)
    w_hh_ref:  (Hp, 4Hp)         bf16 hidden->gates weight (per-gate padded, transposed)
    b_ref:     (1, 4Hp)          f32  b_ih + b_hh (per-gate padded)
    w_out_ref: (Hp, Op)          bf16 out_layer weight (padded, transposed)
    b_out_ref: (1, Op)           f32  out_layer bias (padded)
    y_ref:     (T_tile, Bp, Op)  f32  time-major output tile
    h_scr,c_scr: (Bp, Hp)        f32  recurrent state, persists across grid steps
    xw_scr:    (T_tile, Bp, 4Hp) f32  hoisted input projection for this tile
    hall_scr:  (T_tile, Bp, Hp)  f32  all hidden states of this tile (batched out proj)
    """
    t_tile, Bp, Fp = x_ref.shape
    Hp = w_hh_ref.shape[0]
    Op = w_out_ref.shape[1]

    # Zero initial state only on the first T-tile (PyTorch: hidden_state == None).
    @pl.when(pl.program_id(0) == 0)
    def _():
        h_scr[...] = jnp.zeros_like(h_scr)
        c_scr[...] = jnp.zeros_like(c_scr)

    # (1) Hoisted input projection: one row/lane-dense bf16 MXU dot for the whole tile,
    #     f32 accumulation.  Bp=16 == bf16 sublane tile, so the reshape is a layout no-op.
    x2d = x_ref[...].reshape(t_tile * Bp, Fp)
    xw = jnp.dot(x2d, w_ih_ref[...], preferred_element_type=jnp.float32) + b_ref[...]
    xw_scr[...] = xw.reshape(t_tile, Bp, 4 * Hp)

    # (2) Serial recurrence: h/c are vreg-carried; only the bf16 h @ W_hh MXU push,
    #     f32 gate math and one hall store sit on the per-step critical path.
    def step(t, carry):
        h_prev, c_prev = carry
        gates = xw_scr[t] + jnp.dot(h_prev.astype(jnp.bfloat16), w_hh_ref[...],
                                    preferred_element_type=jnp.float32)   # (Bp, 4Hp) f32
        i_g = jax.nn.sigmoid(gates[:, 0:Hp])
        f_g = jax.nn.sigmoid(gates[:, Hp:2 * Hp])
        g_g = jnp.tanh(gates[:, 2 * Hp:3 * Hp])
        o_g = jax.nn.sigmoid(gates[:, 3 * Hp:4 * Hp])
        c_new = f_g * c_prev + i_g * g_g
        h_new = o_g * jnp.tanh(c_new)
        hall_scr[t] = h_new
        return (h_new, c_new)

    # Deep/full unroll gives the LLO scheduler visibility to overlap next-step MXU
    # push with current-step EUP/VPU work (per-step VMEM traffic is gone).
    unroll = t_tile if t_tile <= 32 else 8
    h_fin, c_fin = lax.fori_loop(0, t_tile, step, (h_scr[...], c_scr[...]),
                                 unroll=unroll)
    h_scr[...] = h_fin      # cross-tile carry, written once per tile
    c_scr[...] = c_fin

    # (3) Batched output projection: one bf16 MXU dot + one lane-dense f32 store per tile.
    h_all = hall_scr[...].reshape(t_tile * Bp, Hp).astype(jnp.bfloat16)
    y = jnp.dot(h_all, w_out_ref[...], preferred_element_type=jnp.float32) + b_out_ref[...]
    y_ref[...] = y.reshape(t_tile, Bp, Op)


def lstm_head_forward(x, params, t_tile=None):
    """x: (B, T, F) float32, batch_first like nn.LSTM(batch_first=True)."""
    w_ih, w_hh, b_ih, b_hh, w_out, b_out = params
    B, T, F = x.shape
    H = w_hh.shape[1]
    O = w_out.shape[0]

    # Hardware-aligned padded sizes. Bp=16 covers bf16 sublane packing (and f32's 8);
    # extra batch rows are free MXU occupancy on the latency-bound recurrent matmul.
    Bp = _round_up(B, 16)
    Fp = _round_up(F, 128)
    Hp = _round_up(H, 128)
    Op = _round_up(O, 128)

    if t_tile is None:
        t_tile = min(T, 128)         # bounds per-tile VMEM for long sequences
    Tp = _round_up(T, t_tile)

    f32 = jnp.float32
    bf16 = jnp.bfloat16
    # Per-gate padding H->Hp keeps PyTorch gate order (i, f, g, o) and keeps every gate
    # slice 128-lane aligned. Zero pads are numerically exact: padded hidden units stay
    # 0 and their weights/bias are 0, so they never influence real units.
    w_ih_p = jnp.pad(w_ih.astype(f32).reshape(4, H, F),
                     ((0, 0), (0, Hp - H), (0, Fp - F))
                     ).reshape(4 * Hp, Fp).T.astype(bf16)                        # (Fp, 4Hp)
    w_hh_p = jnp.pad(w_hh.astype(f32).reshape(4, H, H),
                     ((0, 0), (0, Hp - H), (0, Hp - H))
                     ).reshape(4 * Hp, Hp).T.astype(bf16)                        # (Hp, 4Hp)
    b_p = jnp.pad((b_ih + b_hh).astype(f32).reshape(4, H),
                  ((0, 0), (0, Hp - H))).reshape(1, 4 * Hp)                      # (1, 4Hp) f32
    w_out_p = jnp.pad(w_out.astype(f32), ((0, Op - O), (0, Hp - H))).T.astype(bf16)  # (Hp, Op)
    b_out_p = jnp.pad(b_out.astype(f32), (0, Op - O)).reshape(1, Op)             # (1, Op) f32

    # Time-major, padded input (extra batch rows / features / timesteps are zeros and
    # never affect the real outputs, which are sliced out afterwards).
    x_tm = jnp.transpose(x.astype(f32), (1, 0, 2))                               # (T, B, F)
    x_tm = jnp.pad(x_tm, ((0, Tp - T), (0, Bp - B), (0, Fp - F))).astype(bf16)

    grid = (Tp // t_tile,)

    def _run(weight_mode):
        def wspec(shape):
            if weight_mode is None:
                return pl.BlockSpec(shape, lambda i: (0,) * len(shape))
            return pl.BlockSpec(shape, lambda i: (0,) * len(shape),
                                pipeline_mode=weight_mode)

        # TODO(synk): on v7x, add a leading 'parallel' grid axis over batch groups
        # (2 TCs) when B is large; the time axis must stay 'arbitrary' because h/c
        # carry across tiles.
        return pl.pallas_call(
            lstm_head_kernel,
            out_shape=jax.ShapeDtypeStruct((Tp, Bp, Op), jnp.float32),
            grid_spec=pltpu.PrefetchScalarGridSpec(
                num_scalar_prefetch=0,
                grid=grid,
                in_specs=[
                    pl.BlockSpec((t_tile, Bp, Fp), lambda i: (i, 0, 0)),  # x tile (streamed)
                    wspec((Fp, 4 * Hp)),                                  # W_ih (resident)
                    wspec((Hp, 4 * Hp)),                                  # W_hh (resident)
                    wspec((1, 4 * Hp)),                                   # bias
                    wspec((Hp, Op)),                                      # W_out
                    wspec((1, Op)),                                       # b_out
                ],
                out_specs=pl.BlockSpec((t_tile, Bp, Op), lambda i: (i, 0, 0)),
                scratch_shapes=[
                    pltpu.VMEM((Bp, Hp), jnp.float32),                    # h state
                    pltpu.VMEM((Bp, Hp), jnp.float32),                    # c state
                    pltpu.VMEM((t_tile, Bp, 4 * Hp), jnp.float32),        # hoisted x@W_ih
                    pltpu.VMEM((t_tile, Bp, Hp), jnp.float32),            # per-tile hiddens
                ]),
            compiler_params=pltpu.CompilerParams(
                dimension_semantics=("arbitrary",),       # serial recurrence across T tiles
                vmem_limit_bytes=48 * 1024 * 1024),       # fits v7x's 64 MiB physical too
        )(x_tm, w_ih_p, w_hh_p, b_p, w_out_p, b_out_p)

    try:
        # Single-buffer the resident weight blocks (they never change across the grid).
        y_tm = _run(pl.Buffered(1))
    except Exception:
        # TODO(synk): pipeline_mode=pl.Buffered(1) not supported by this jax build;
        # fall back to default (double-buffered) resident weights.
        y_tm = _run(None)

    # Drop padding, back to batch_first (B, T, O).
    return jnp.transpose(y_tm[:T, :B, :O], (1, 0, 2))


def lstm_head_reference(x, params):
    """Pure-JAX f32 reference replicating PyTorch nn.LSTM(batch_first) + nn.Linear."""
    w_ih, w_hh, b_ih, b_hh, w_out, b_out = params
    B, T, F = x.shape
    H = w_hh.shape[1]

    def cell(carry, x_t):
        h, c = carry
        gates = x_t @ w_ih.T + b_ih + h @ w_hh.T + b_hh
        i_g = jax.nn.sigmoid(gates[:, 0:H])
        f_g = jax.nn.sigmoid(gates[:, H:2 * H])
        g_g = jnp.tanh(gates[:, 2 * H:3 * H])
        o_g = jax.nn.sigmoid(gates[:, 3 * H:4 * H])
        c_new = f_g * c + i_g * g_g
        h_new = o_g * jnp.tanh(c_new)
        return (h_new, c_new), h_new

    h0 = jnp.zeros((B, H), jnp.float32)
    c0 = jnp.zeros((B, H), jnp.float32)
    _, hs = lax.scan(cell, (h0, c0), jnp.transpose(x, (1, 0, 2)))
    hs = jnp.transpose(hs, (1, 0, 2))                     # (B, T, H)
    return hs @ w_out.T + b_out


if __name__ == "__main__":
    # Small shapes consistent with LSTMHead(feature_size, out_size, train_len, lstm_size).
    B, T = 2, 8            # batch, sequence length (train_len)
    FEAT = 32              # feature_size (CNN feature dim; small here)
    HID = 32               # lstm_size (module default 512; small here)
    OUT = 8                # out_size (num_classes)

    key = jax.random.PRNGKey(0)
    ks = jax.random.split(key, 7)
    bound = 1.0 / jnp.sqrt(HID)

    # Deterministic synthetic parameters (PyTorch-style uniform init shapes).
    w_ih = jax.random.uniform(ks[0], (4 * HID, FEAT), jnp.float32, -bound, bound)
    w_hh = jax.random.uniform(ks[1], (4 * HID, HID), jnp.float32, -bound, bound)
    b_ih = jax.random.uniform(ks[2], (4 * HID,), jnp.float32, -bound, bound)
    b_hh = jax.random.uniform(ks[3], (4 * HID,), jnp.float32, -bound, bound)
    w_out = jax.random.uniform(ks[4], (OUT, HID), jnp.float32, -bound, bound)
    b_out = jax.random.uniform(ks[5], (OUT,), jnp.float32, -bound, bound)
    params = (w_ih, w_hh, b_ih, b_hh, w_out, b_out)

    x = jax.random.normal(ks[6], (B, T, FEAT), jnp.float32)

    y = jax.block_until_ready(lstm_head_forward(x, params))
    y_ref = jax.block_until_ready(lstm_head_reference(x, params))

    assert y.shape == (B, T, OUT)
    # bf16-on-MXU / f32-accumulate matmul policy -> loosened tolerance vs f32 reference.
    assert jnp.allclose(y, y_ref, atol=5e-2, rtol=5e-2), "mismatch vs reference"
    print("KERNEL_OK")
</pallas_src>

<mosaic_0001>
module attributes {stable_mosaic.version = 11 : i64} {
  func.func @lstm_head_kernel(%arg0: i32, %arg1: memref<8x16x128xbf16, #tpu.memory_space<vmem>>, %arg2: memref<128x512xbf16, #tpu.memory_space<vmem>>, %arg3: memref<128x512xbf16, #tpu.memory_space<vmem>>, %arg4: memref<1x512xf32, #tpu.memory_space<vmem>>, %arg5: memref<128x128xbf16, #tpu.memory_space<vmem>>, %arg6: memref<1x128xf32, #tpu.memory_space<vmem>>, %arg7: memref<8x16x128xf32, #tpu.memory_space<vmem>>, %arg8: memref<16x128xf32, #tpu.memory_space<vmem>>, %arg9: memref<16x128xf32, #tpu.memory_space<vmem>>, %arg10: memref<8x16x512xf32, #tpu.memory_space<vmem>>, %arg11: memref<8x16x128xf32, #tpu.memory_space<vmem>>) attributes {dimension_semantics = [#tpu.dimension_semantics<arbitrary>], iteration_bounds = array<i64: 1>, scalar_prefetch = 0 : i64, scratch_operands = 4 : i64, tpu.core_type = #tpu.core_type<tc>, window_params = [{transform_indices = @transform_0, window_bounds = array<i64: 8, 16, 128>}, {pipeline_mode = #tpu.pipeline_mode<synchronous>, transform_indices = @transform_1, window_bounds = array<i64: 128, 512>}, {pipeline_mode = #tpu.pipeline_mode<synchronous>, transform_indices = @transform_2, window_bounds = array<i64: 128, 512>}, {pipeline_mode = #tpu.pipeline_mode<synchronous>, transform_indices = @transform_3, window_bounds = array<i64: 1, 512>}, {pipeline_mode = #tpu.pipeline_mode<synchronous>, transform_indices = @transform_4, window_bounds = array<i64: 128, 128>}, {pipeline_mode = #tpu.pipeline_mode<synchronous>, transform_indices = @transform_5, window_bounds = array<i64: 1, 128>}, {transform_indices = @transform_6, window_bounds = array<i64: 8, 16, 128>}]} {
    %c0_i32 = arith.constant 0 : i32
    %0 = arith.cmpi eq, %arg0, %c0_i32 : i32
    %1 = arith.extui %0 : i1 to i32
    %c0_i32_0 = arith.constant 0 : i32
    %2 = arith.cmpi ne, %1, %c0_i32_0 : i32
    scf.if %2 {
      %cst_110 = arith.constant 0.000000e+00 : f32
      %314 = vector.broadcast %cst_110 : f32 to vector<16x128xf32>
      %c0_111 = arith.constant 0 : index
      %c0_112 = arith.constant 0 : index
      %315 = vector.load %arg8[%c0_111, %c0_112] : memref<16x128xf32, #tpu.memory_space<vmem>>, vector<16x128xf32>
      tpu.vector_store %arg8[%c0_111, %c0_112], %314 {strides = array<i32>} : memref<16x128xf32, #tpu.memory_space<vmem>>, vector<16x128xf32>,
      %cst_113 = arith.constant 0.000000e+00 : f32
      %316 = vector.broadcast %cst_113 : f32 to vector<16x128xf32>
      %c0_114 = arith.constant 0 : index
      %c0_115 = arith.constant 0 : index
      %317 = vector.load %arg9[%c0_114, %c0_115] : memref<16x128xf32, #tpu.memory_space<vmem>>, vector<16x128xf32>
      tpu.vector_store %arg9[%c0_114, %c0_115], %316 {strides = array<i32>} : memref<16x128xf32, #tpu.memory_space<vmem>>, vector<16x128xf32>,
    } else {
    }
    %c0 = arith.constant 0 : index
    %c0_1 = arith.constant 0 : index
    %c0_2 = arith.constant 0 : index
    %3 = vector.load %arg1[%c0, %c0_1, %c0_2] : memref<8x16x128xbf16, #tpu.memory_space<vmem>>, vector<8x16x128xbf16>
    %4 = vector.shape_cast %3 : vector<8x16x128xbf16> to vector<128x128xbf16>
    %c0_3 = arith.constant 0 : index
    %c0_4 = arith.constant 0 : index
    %5 = vector.load %arg2[%c0_3, %c0_4] : memref<128x512xbf16, #tpu.memory_space<vmem>>, vector<128x512xbf16>
    %cst = arith.constant dense<0.000000e+00> : vector<128x512xf32>
    %6 = tpu.matmul %4, %5, %cst {dimension_numbers = #tpu.dot_dimension_numbers<[1], [0], [0], [1], [0, 0, 1, 1], [], []>} : vector<128x128xbf16>, vector<128x512xbf16>, vector<128x512xf32> -> vector<128x512xf32>
    %c0_5 = arith.constant 0 : index
    %c0_6 = arith.constant 0 : index
    %7 = vector.load %arg4[%c0_5, %c0_6] : memref<1x512xf32, #tpu.memory_space<vmem>>, vector<1x512xf32>
    %8 = vector.broadcast %7 : vector<1x512xf32> to vector<128x512xf32>
    %9 = arith.addf %6, %8 : vector<128x512xf32>
    %10 = vector.shape_cast %9 : vector<128x512xf32> to vector<8x16x512xf32>
    %c0_7 = arith.constant 0 : index
    %c0_8 = arith.constant 0 : index
    %c0_9 = arith.constant 0 : index
    %11 = vector.load %arg10[%c0_7, %c0_8, %c0_9] : memref<8x16x512xf32, #tpu.memory_space<vmem>>, vector<8x16x512xf32>
    tpu.vector_store %arg10[%c0_7, %c0_8, %c0_9], %10 {strides = array<i32>} : memref<8x16x512xf32, #tpu.memory_space<vmem>>, vector<8x16x512xf32>,
    %c0_10 = arith.constant 0 : index
    %c0_11 = arith.constant 0 : index
    %12 = vector.load %arg8[%c0_10, %c0_11] : memref<16x128xf32, #tpu.memory_space<vmem>>, vector<16x128xf32>
    %c0_12 = arith.constant 0 : index
    %c0_13 = arith.constant 0 : index
    %13 = vector.load %arg9[%c0_12, %c0_13] : memref<16x128xf32, #tpu.memory_space<vmem>>, vector<16x128xf32>
    %c0_i32_14 = arith.constant 0 : i32
    %14 = arith.index_cast %c0_i32_14 : i32 to index
    %c0_15 = arith.constant 0 : index
    %c0_16 = arith.constant 0 : index
    %15 = vector.load %arg10[%14, %c0_15, %c0_16] : memref<8x16x512xf32, #tpu.memory_space<vmem>>, vector<1x16x512xf32>
    %16 = vector.shape_cast %15 : vector<1x16x512xf32> to vector<16x512xf32>
    %17 = arith.truncf %12 : vector<16x128xf32> to vector<16x128xbf16>
    %c0_17 = arith.constant 0 : index
    %c0_18 = arith.constant 0 : index
    %18 = vector.load %arg3[%c0_17, %c0_18] : memref<128x512xbf16, #tpu.memory_space<vmem>>, vector<128x512xbf16>
    %cst_19 = arith.constant dense<0.000000e+00> : vector<16x512xf32>
    %19 = tpu.matmul %17, %18, %cst_19 {dimension_numbers = #tpu.dot_dimension_numbers<[1], [0], [0], [1], [0, 0, 1, 1], [], []>} : vector<16x128xbf16>, vector<128x512xbf16>, vector<16x512xf32> -> vector<16x512xf32>
    %20 = arith.addf %16, %19 : vector<16x512xf32>
    %21 = vector.extract_strided_slice %20 {offsets = [0, 0], sizes = [16, 128], strides = [1, 1]} : vector<16x512xf32> to vector<16x128xf32>
    %22 = arith.negf %21 : vector<16x128xf32>
    %23 = math.exp %22 : vector<16x128xf32>
    %cst_20 = arith.constant 1.000000e+00 : f32
    %24 = vector.broadcast %cst_20 : f32 to vector<16x128xf32>
    %25 = arith.addf %24, %23 : vector<16x128xf32>
    %26 = arith.divf %24, %25 : vector<16x128xf32>
    %27 = vector.extract_strided_slice %20 {offsets = [0, 128], sizes = [16, 128], strides = [1, 1]} : vector<16x512xf32> to vector<16x128xf32>
    %28 = arith.negf %27 : vector<16x128xf32>
    %29 = math.exp %28 : vector<16x128xf32>
    %cst_21 = arith.constant 1.000000e+00 : f32
    %30 = vector.broadcast %cst_21 : f32 to vector<16x128xf32>
    %31 = arith.addf %30, %29 : vector<16x128xf32>
    %32 = arith.divf %30, %31 : vector<16x128xf32>
    %33 = vector.extract_strided_slice %20 {offsets = [0, 256], sizes = [16, 128], strides = [1, 1]} : vector<16x512xf32> to vector<16x128xf32>
    %34 = math.tanh %33 : vector<16x128xf32>
    %35 = vector.extract_strided_slice %20 {offsets = [0, 384], sizes = [16, 128], strides = [1, 1]} : vector<16x512xf32> to vector<16x128xf32>
    %36 = arith.negf %35 : vector<16x128xf32>
    %37 = math.exp %36 : vector<16x128xf32>
    %cst_22 = arith.constant 1.000000e+00 : f32
    %38 = vector.broadcast %cst_22 : f32 to vector<16x128xf32>
    %39 = arith.addf %38, %37 : vector<16x128xf32>
    %40 = arith.divf %38, %39 : vector<16x128xf32>
    %41 = arith.mulf %32, %13 : vector<16x128xf32>
    %42 = arith.mulf %26, %34 : vector<16x128xf32>
    %43 = arith.addf %41, %42 : vector<16x128xf32>
    %44 = math.tanh %43 : vector<16x128xf32>
    %45 = arith.mulf %40, %44 : vector<16x128xf32>
    %46 = arith.index_cast %c0_i32_14 : i32 to index
    %c0_23 = arith.constant 0 : index
    %c0_24 = arith.constant 0 : index
    %47 = vector.load %arg11[%46, %c0_23, %c0_24] : memref<8x16x128xf32, #tpu.memory_space<vmem>>, vector<1x16x128xf32>
    %48 = vector.shape_cast %47 : vector<1x16x128xf32> to vector<16x128xf32>
    %49 = vector.shape_cast %45 : vector<16x128xf32> to vector<1x16x128xf32>
    tpu.vector_store %arg11[%46, %c0_23, %c0_24], %49 {strides = array<i32>} : memref<8x16x128xf32, #tpu.memory_space<vmem>>, vector<1x16x128xf32>,
    %c1_i32 = arith.constant 1 : i32
    %50 = arith.index_cast %c1_i32 : i32 to index
    %c0_25 = arith.constant 0 : index
    %c0_26 = arith.constant 0 : index
    %51 = vector.load %arg10[%50, %c0_25, %c0_26] : memref<8x16x512xf32, #tpu.memory_space<vmem>>, vector<1x16x512xf32>
    %52 = vector.shape_cast %51 : vector<1x16x512xf32> to vector<16x512xf32>
    %53 = arith.truncf %45 : vector<16x128xf32> to vector<16x128xbf16>
    %c0_27 = arith.constant 0 : index
    %c0_28 = arith.constant 0 : index
    %54 = vector.load %arg3[%c0_27, %c0_28] : memref<128x512xbf16, #tpu.memory_space<vmem>>, vector<128x512xbf16>
    %cst_29 = arith.constant dense<0.000000e+00> : vector<16x512xf32>
    %55 = tpu.matmul %53, %54, %cst_29 {dimension_numbers = #tpu.dot_dimension_numbers<[1], [0], [0], [1], [0, 0, 1, 1], [], []>} : vector<16x128xbf16>, vector<128x512xbf16>, vector<16x512xf32> -> vector<16x512xf32>
    %56 = arith.addf %52, %55 : vector<16x512xf32>
    %57 = vector.extract_strided_slice %56 {offsets = [0, 0], sizes = [16, 128], strides = [1, 1]} : vector<16x512xf32> to vector<16x128xf32>
    %58 = arith.negf %57 : vector<16x128xf32>
    %59 = math.exp %58 : vector<16x128xf32>
    %cst_30 = arith.constant 1.000000e+00 : f32
    %60 = vector.broadcast %cst_30 : f32 to vector<16x128xf32>
    %61 = arith.addf %60, %59 : vector<16x128xf32>
    %62 = arith.divf %60, %61 : vector<16x128xf32>
    %63 = vector.extract_strided_slice %56 {offsets = [0, 128], sizes = [16, 128], strides = [1, 1]} : vector<16x512xf32> to vector<16x128xf32>
    %64 = arith.negf %63 : vector<16x128xf32>
    %65 = math.exp %64 : vector<16x128xf32>
    %cst_31 = arith.constant 1.000000e+00 : f32
    %66 = vector.broadcast %cst_31 : f32 to vector<16x128xf32>
    %67 = arith.addf %66, %65 : vector<16x128xf32>
    %68 = arith.divf %66, %67 : vector<16x128xf32>
    %69 = vector.extract_strided_slice %56 {offsets = [0, 256], sizes = [16, 128], strides = [1, 1]} : vector<16x512xf32> to vector<16x128xf32>
    %70 = math.tanh %69 : vector<16x128xf32>
    %71 = vector.extract_strided_slice %56 {offsets = [0, 384], sizes = [16, 128], strides = [1, 1]} : vector<16x512xf32> to vector<16x128xf32>
    %72 = arith.negf %71 : vector<16x128xf32>
    %73 = math.exp %72 : vector<16x128xf32>
    %cst_32 = arith.constant 1.000000e+00 : f32
    %74 = vector.broadcast %cst_32 : f32 to vector<16x128xf32>
    %75 = arith.addf %74, %73 : vector<16x128xf32>
    %76 = arith.divf %74, %75 : vector<16x128xf32>
    %77 = arith.mulf %68, %43 : vector<16x128xf32>
    %78 = arith.mulf %62, %70 : vector<16x128xf32>
    %79 = arith.addf %77, %78 : vector<16x128xf32>
    %80 = math.tanh %79 : vector<16x128xf32>
    %81 = arith.mulf %76, %80 : vector<16x128xf32>
    %82 = arith.index_cast %c1_i32 : i32 to index
    %c0_33 = arith.constant 0 : index
    %c0_34 = arith.constant 0 : index
    %83 = vector.load %arg11[%82, %c0_33, %c0_34] : memref<8x16x128xf32, #tpu.memory_space<vmem>>, vector<1x16x128xf32>
    %84 = vector.shape_cast %83 : vector<1x16x128xf32> to vector<16x128xf32>
    %85 = vector.shape_cast %81 : vector<16x128xf32> to vector<1x16x128xf32>
    tpu.vector_store %arg11[%82, %c0_33, %c0_34], %85 {strides = array<i32>} : memref<8x16x128xf32, #tpu.memory_space<vmem>>, vector<1x16x128xf32>,
    %c2_i32 = arith.constant 2 : i32
    %86 = arith.index_cast %c2_i32 : i32 to index
    %c0_35 = arith.constant 0 : index
    %c0_36 = arith.constant 0 : index
    %87 = vector.load %arg10[%86, %c0_35, %c0_36] : memref<8x16x512xf32, #tpu.memory_space<vmem>>, vector<1x16x512xf32>
    %88 = vector.shape_cast %87 : vector<1x16x512xf32> to vector<16x512xf32>
    %89 = arith.truncf %81 : vector<16x128xf32> to vector<16x128xbf16>
    %c0_37 = arith.constant 0 : index
    %c0_38 = arith.constant 0 : index
    %90 = vector.load %arg3[%c0_37, %c0_38] : memref<128x512xbf16, #tpu.memory_space<vmem>>, vector<128x512xbf16>
    %cst_39 = arith.constant dense<0.000000e+00> : vector<16x512xf32>
    %91 = tpu.matmul %89, %90, %cst_39 {dimension_numbers = #tpu.dot_dimension_numbers<[1], [0], [0], [1], [0, 0, 1, 1], [], []>} : vector<16x128xbf16>, vector<128x512xbf16>, vector<16x512xf32> -> vector<16x512xf32>
    %92 = arith.addf %88, %91 : vector<16x512xf32>
    %93 = vector.extract_strided_slice %92 {offsets = [0, 0], sizes = [16, 128], strides = [1, 1]} : vector<16x512xf32> to vector<16x128xf32>
    %94 = arith.negf %93 : vector<16x128xf32>
    %95 = math.exp %94 : vector<16x128xf32>
    %cst_40 = arith.constant 1.000000e+00 : f32
    %96 = vector.broadcast %cst_40 : f32 to vector<16x128xf32>
    %97 = arith.addf %96, %95 : vector<16x128xf32>
    %98 = arith.divf %96, %97 : vector<16x128xf32>
    %99 = vector.extract_strided_slice %92 {offsets = [0, 128], sizes = [16, 128], strides = [1, 1]} : vector<16x512xf32> to vector<16x128xf32>
    %100 = arith.negf %99 : vector<16x128xf32>
    %101 = math.exp %100 : vector<16x128xf32>
    %cst_41 = arith.constant 1.000000e+00 : f32
    %102 = vector.broadcast %cst_41 : f32 to vector<16x128xf32>
    %103 = arith.addf %102, %101 : vector<16x128xf32>
    %104 = arith.divf %102, %103 : vector<16x128xf32>
    %105 = vector.extract_strided_slice %92 {offsets = [0, 256], sizes = [16, 128], strides = [1, 1]} : vector<16x512xf32> to vector<16x128xf32>
    %106 = math.tanh %105 : vector<16x128xf32>
    %107 = vector.extract_strided_slice %92 {offsets = [0, 384], sizes = [16, 128], strides = [1, 1]} : vector<16x512xf32> to vector<16x128xf32>
    %108 = arith.negf %107 : vector<16x128xf32>
    %109 = math.exp %108 : vector<16x128xf32>
    %cst_42 = arith.constant 1.000000e+00 : f32
    %110 = vector.broadcast %cst_42 : f32 to vector<16x128xf32>
    %111 = arith.addf %110, %109 : vector<16x128xf32>
    %112 = arith.divf %110, %111 : vector<16x128xf32>
    %113 = arith.mulf %104, %79 : vector<16x128xf32>
    %114 = arith.mulf %98, %106 : vector<16x128xf32>
    %115 = arith.addf %113, %114 : vector<16x128xf32>
    %116 = math.tanh %115 : vector<16x128xf32>
    %117 = arith.mulf %112, %116 : vector<16x128xf32>
    %118 = arith.index_cast %c2_i32 : i32 to index
    %c0_43 = arith.constant 0 : index
    %c0_44 = arith.constant 0 : index
    %119 = vector.load %arg11[%118, %c0_43, %c0_44] : memref<8x16x128xf32, #tpu.memory_space<vmem>>, vector<1x16x128xf32>
    %120 = vector.shape_cast %119 : vector<1x16x128xf32> to vector<16x128xf32>
    %121 = vector.shape_cast %117 : vector<16x128xf32> to vector<1x16x128xf32>
    tpu.vector_store %arg11[%118, %c0_43, %c0_44], %121 {strides = array<i32>} : memref<8x16x128xf32, #tpu.memory_space<vmem>>, vector<1x16x128xf32>,
    %c3_i32 = arith.constant 3 : i32
    %122 = arith.index_cast %c3_i32 : i32 to index
    %c0_45 = arith.constant 0 : index
    %c0_46 = arith.constant 0 : index
    %123 = vector.load %arg10[%122, %c0_45, %c0_46] : memref<8x16x512xf32, #tpu.memory_space<vmem>>, vector<1x16x512xf32>
    %124 = vector.shape_cast %123 : vector<1x16x512xf32> to vector<16x512xf32>
    %125 = arith.truncf %117 : vector<16x128xf32> to vector<16x128xbf16>
    %c0_47 = arith.constant 0 : index
    %c0_48 = arith.constant 0 : index
    %126 = vector.load %arg3[%c0_47, %c0_48] : memref<128x512xbf16, #tpu.memory_space<vmem>>, vector<128x512xbf16>
    %cst_49 = arith.constant dense<0.000000e+00> : vector<16x512xf32>
    %127 = tpu.matmul %125, %126, %cst_49 {dimension_numbers = #tpu.dot_dimension_numbers<[1], [0], [0], [1], [0, 0, 1, 1], [], []>} : vector<16x128xbf16>, vector<128x512xbf16>, vector<16x512xf32> -> vector<16x512xf32>
    %128 = arith.addf %124, %127 : vector<16x512xf32>
    %129 = vector.extract_strided_slice %128 {offsets = [0, 0], sizes = [16, 128], strides = [1, 1]} : vector<16x512xf32> to vector<16x128xf32>
    %130 = arith.negf %129 : vector<16x128xf32>
    %131 = math.exp %130 : vector<16x128xf32>
    %cst_50 = arith.constant 1.000000e+00 : f32
    %132 = vector.broadcast %cst_50 : f32 to vector<16x128xf32>
    %133 = arith.addf %132, %131 : vector<16x128xf32>
    %134 = arith.divf %132, %133 : vector<16x128xf32>
    %135 = vector.extract_strided_slice %128 {offsets = [0, 128], sizes = [16, 128], strides = [1, 1]} : vector<16x512xf32> to vector<16x128xf32>
    %136 = arith.negf %135 : vector<16x128xf32>
    %137 = math.exp %136 : vector<16x128xf32>
    %cst_51 = arith.constant 1.000000e+00 : f32
    %138 = vector.broadcast %cst_51 : f32 to vector<16x128xf32>
    %139 = arith.addf %138, %137 : vector<16x128xf32>
    %140 = arith.divf %138, %139 : vector<16x128xf32>
    %141 = vector.extract_strided_slice %128 {offsets = [0, 256], sizes = [16, 128], strides = [1, 1]} : vector<16x512xf32> to vector<16x128xf32>
    %142 = math.tanh %141 : vector<16x128xf32>
    %143 = vector.extract_strided_slice %128 {offsets = [0, 384], sizes = [16, 128], strides = [1, 1]} : vector<16x512xf32> to vector<16x128xf32>
    %144 = arith.negf %143 : vector<16x128xf32>
    %145 = math.exp %144 : vector<16x128xf32>
    %cst_52 = arith.constant 1.000000e+00 : f32
    %146 = vector.broadcast %cst_52 : f32 to vector<16x128xf32>
    %147 = arith.addf %146, %145 : vector<16x128xf32>
    %148 = arith.divf %146, %147 : vector<16x128xf32>
    %149 = arith.mulf %140, %115 : vector<16x128xf32>
    %150 = arith.mulf %134, %142 : vector<16x128xf32>
    %151 = arith.addf %149, %150 : vector<16x128xf32>
    %152 = math.tanh %151 : vector<16x128xf32>
    %153 = arith.mulf %148, %152 : vector<16x128xf32>
    %154 = arith.index_cast %c3_i32 : i32 to index
    %c0_53 = arith.constant 0 : index
    %c0_54 = arith.constant 0 : index
    %155 = vector.load %arg11[%154, %c0_53, %c0_54] : memref<8x16x128xf32, #tpu.memory_space<vmem>>, vector<1x16x128xf32>
    %156 = vector.shape_cast %155 : vector<1x16x128xf32> to vector<16x128xf32>
    %157 = vector.shape_cast %153 : vector<16x128xf32> to vector<1x16x128xf32>
    tpu.vector_store %arg11[%154, %c0_53, %c0_54], %157 {strides = array<i32>} : memref<8x16x128xf32, #tpu.memory_space<vmem>>, vector<1x16x128xf32>,
    %c4_i32 = arith.constant 4 : i32
    %158 = arith.index_cast %c4_i32 : i32 to index
    %c0_55 = arith.constant 0 : index
    %c0_56 = arith.constant 0 : index
    %159 = vector.load %arg10[%158, %c0_55, %c0_56] : memref<8x16x512xf32, #tpu.memory_space<vmem>>, vector<1x16x512xf32>
    %160 = vector.shape_cast %159 : vector<1x16x512xf32> to vector<16x512xf32>
    %161 = arith.truncf %153 : vector<16x128xf32> to vector<16x128xbf16>
    %c0_57 = arith.constant 0 : index
    %c0_58 = arith.constant 0 : index
    %162 = vector.load %arg3[%c0_57, %c0_58] : memref<128x512xbf16, #tpu.memory_space<vmem>>, vector<128x512xbf16>
    %cst_59 = arith.constant dense<0.000000e+00> : vector<16x512xf32>
    %163 = tpu.matmul %161, %162, %cst_59 {dimension_numbers = #tpu.dot_dimension_numbers<[1], [0], [0], [1], [0, 0, 1, 1], [], []>} : vector<16x128xbf16>, vector<128x512xbf16>, vector<16x512xf32> -> vector<16x512xf32>
    %164 = arith.addf %160, %163 : vector<16x512xf32>
    %165 = vector.extract_strided_slice %164 {offsets = [0, 0], sizes = [16, 128], strides = [1, 1]} : vector<16x512xf32> to vector<16x128xf32>
    %166 = arith.negf %165 : vector<16x128xf32>
    %167 = math.exp %166 : vector<16x128xf32>
    %cst_60 = arith.constant 1.000000e+00 : f32
    %168 = vector.broadcast %cst_60 : f32 to vector<16x128xf32>
    %169 = arith.addf %168, %167 : vector<16x128xf32>
    %170 = arith.divf %168, %169 : vector<16x128xf32>
    %171 = vector.extract_strided_slice %164 {offsets = [0, 128], sizes = [16, 128], strides = [1, 1]} : vector<16x512xf32> to vector<16x128xf32>
    %172 = arith.negf %171 : vector<16x128xf32>
    %173 = math.exp %172 : vector<16x128xf32>
    %cst_61 = arith.constant 1.000000e+00 : f32
    %174 = vector.broadcast %cst_61 : f32 to vector<16x128xf32>
    %175 = arith.addf %174, %173 : vector<16x128xf32>
    %176 = arith.divf %174, %175 : vector<16x128xf32>
    %177 = vector.extract_strided_slice %164 {offsets = [0, 256], sizes = [16, 128], strides = [1, 1]} : vector<16x512xf32> to vector<16x128xf32>
    %178 = math.tanh %177 : vector<16x128xf32>
    %179 = vector.extract_strided_slice %164 {offsets = [0, 384], sizes = [16, 128], strides = [1, 1]} : vector<16x512xf32> to vector<16x128xf32>
    %180 = arith.negf %179 : vector<16x128xf32>
    %181 = math.exp %180 : vector<16x128xf32>
    %cst_62 = arith.constant 1.000000e+00 : f32
    %182 = vector.broadcast %cst_62 : f32 to vector<16x128xf32>
    %183 = arith.addf %182, %181 : vector<16x128xf32>
    %184 = arith.divf %182, %183 : vector<16x128xf32>
    %185 = arith.mulf %176, %151 : vector<16x128xf32>
    %186 = arith.mulf %170, %178 : vector<16x128xf32>
    %187 = arith.addf %185, %186 : vector<16x128xf32>
    %188 = math.tanh %187 : vector<16x128xf32>
    %189 = arith.mulf %184, %188 : vector<16x128xf32>
    %190 = arith.index_cast %c4_i32 : i32 to index
    %c0_63 = arith.constant 0 : index
    %c0_64 = arith.constant 0 : index
    %191 = vector.load %arg11[%190, %c0_63, %c0_64] : memref<8x16x128xf32, #tpu.memory_space<vmem>>, vector<1x16x128xf32>
    %192 = vector.shape_cast %191 : vector<1x16x128xf32> to vector<16x128xf32>
    %193 = vector.shape_cast %189 : vector<16x128xf32> to vector<1x16x128xf32>
    tpu.vector_store %arg11[%190, %c0_63, %c0_64], %193 {strides = array<i32>} : memref<8x16x128xf32, #tpu.memory_space<vmem>>, vector<1x16x128xf32>,
    %c5_i32 = arith.constant 5 : i32
    %194 = arith.index_cast %c5_i32 : i32 to index
    %c0_65 = arith.constant 0 : index
    %c0_66 = arith.constant 0 : index
    %195 = vector.load %arg10[%194, %c0_65, %c0_66] : memref<8x16x512xf32, #tpu.memory_space<vmem>>, vector<1x16x512xf32>
    %196 = vector.shape_cast %195 : vector<1x16x512xf32> to vector<16x512xf32>
    %197 = arith.truncf %189 : vector<16x128xf32> to vector<16x128xbf16>
    %c0_67 = arith.constant 0 : index
    %c0_68 = arith.constant 0 : index
    %198 = vector.load %arg3[%c0_67, %c0_68] : memref<128x512xbf16, #tpu.memory_space<vmem>>, vector<128x512xbf16>
    %cst_69 = arith.constant dense<0.000000e+00> : vector<16x512xf32>
    %199 = tpu.matmul %197, %198, %cst_69 {dimension_numbers = #tpu.dot_dimension_numbers<[1], [0], [0], [1], [0, 0, 1, 1], [], []>} : vector<16x128xbf16>, vector<128x512xbf16>, vector<16x512xf32> -> vector<16x512xf32>
    %200 = arith.addf %196, %199 : vector<16x512xf32>
    %201 = vector.extract_strided_slice %200 {offsets = [0, 0], sizes = [16, 128], strides = [1, 1]} : vector<16x512xf32> to vector<16x128xf32>
    %202 = arith.negf %201 : vector<16x128xf32>
    %203 = math.exp %202 : vector<16x128xf32>
    %cst_70 = arith.constant 1.000000e+00 : f32
    %204 = vector.broadcast %cst_70 : f32 to vector<16x128xf32>
    %205 = arith.addf %204, %203 : vector<16x128xf32>
    %206 = arith.divf %204, %205 : vector<16x128xf32>
    %207 = vector.extract_strided_slice %200 {offsets = [0, 128], sizes = [16, 128], strides = [1, 1]} : vector<16x512xf32> to vector<16x128xf32>
    %208 = arith.negf %207 : vector<16x128xf32>
    %209 = math.exp %208 : vector<16x128xf32>
    %cst_71 = arith.constant 1.000000e+00 : f32
    %210 = vector.broadcast %cst_71 : f32 to vector<16x128xf32>
    %211 = arith.addf %210, %209 : vector<16x128xf32>
    %212 = arith.divf %210, %211 : vector<16x128xf32>
    %213 = vector.extract_strided_slice %200 {offsets = [0, 256], sizes = [16, 128], strides = [1, 1]} : vector<16x512xf32> to vector<16x128xf32>
    %214 = math.tanh %213 : vector<16x128xf32>
    %215 = vector.extract_strided_slice %200 {offsets = [0, 384], sizes = [16, 128], strides = [1, 1]} : vector<16x512xf32> to vector<16x128xf32>
    %216 = arith.negf %215 : vector<16x128xf32>
    %217 = math.exp %216 : vector<16x128xf32>
    %cst_72 = arith.constant 1.000000e+00 : f32
    %218 = vector.broadcast %cst_72 : f32 to vector<16x128xf32>
    %219 = arith.addf %218, %217 : vector<16x128xf32>
    %220 = arith.divf %218, %219 : vector<16x128xf32>
    %221 = arith.mulf %212, %187 : vector<16x128xf32>
    %222 = arith.mulf %206, %214 : vector<16x128xf32>
    %223 = arith.addf %221, %222 : vector<16x128xf32>
    %224 = math.tanh %223 : vector<16x128xf32>
    %225 = arith.mulf %220, %224 : vector<16x128xf32>
    %226 = arith.index_cast %c5_i32 : i32 to index
    %c0_73 = arith.constant 0 : index
    %c0_74 = arith.constant 0 : index
    %227 = vector.load %arg11[%226, %c0_73, %c0_74] : memref<8x16x128xf32, #tpu.memory_space<vmem>>, vector<1x16x128xf32>
    %228 = vector.shape_cast %227 : vector<1x16x128xf32> to vector<16x128xf32>
    %229 = vector.shape_cast %225 : vector<16x128xf32> to vector<1x16x128xf32>
    tpu.vector_store %arg11[%226, %c0_73, %c0_74], %229 {strides = array<i32>} : memref<8x16x128xf32, #tpu.memory_space<vmem>>, vector<1x16x128xf32>,
    %c6_i32 = arith.constant 6 : i32
    %230 = arith.index_cast %c6_i32 : i32 to index
    %c0_75 = arith.constant 0 : index
    %c0_76 = arith.constant 0 : index
    %231 = vector.load %arg10[%230, %c0_75, %c0_76] : memref<8x16x512xf32, #tpu.memory_space<vmem>>, vector<1x16x512xf32>
    %232 = vector.shape_cast %231 : vector<1x16x512xf32> to vector<16x512xf32>
    %233 = arith.truncf %225 : vector<16x128xf32> to vector<16x128xbf16>
    %c0_77 = arith.constant 0 : index
    %c0_78 = arith.constant 0 : index
    %234 = vector.load %arg3[%c0_77, %c0_78] : memref<128x512xbf16, #tpu.memory_space<vmem>>, vector<128x512xbf16>
    %cst_79 = arith.constant dense<0.000000e+00> : vector<16x512xf32>
    %235 = tpu.matmul %233, %234, %cst_79 {dimension_numbers = #tpu.dot_dimension_numbers<[1], [0], [0], [1], [0, 0, 1, 1], [], []>} : vector<16x128xbf16>, vector<128x512xbf16>, vector<16x512xf32> -> vector<16x512xf32>
    %236 = arith.addf %232, %235 : vector<16x512xf32>
    %237 = vector.extract_strided_slice %236 {offsets = [0, 0], sizes = [16, 128], strides = [1, 1]} : vector<16x512xf32> to vector<16x128xf32>
    %238 = arith.negf %237 : vector<16x128xf32>
    %239 = math.exp %238 : vector<16x128xf32>
    %cst_80 = arith.constant 1.000000e+00 : f32
    %240 = vector.broadcast %cst_80 : f32 to vector<16x128xf32>
    %241 = arith.addf %240, %239 : vector<16x128xf32>
    %242 = arith.divf %240, %241 : vector<16x128xf32>
    %243 = vector.extract_strided_slice %236 {offsets = [0, 128], sizes = [16, 128], strides = [1, 1]} : vector<16x512xf32> to vector<16x128xf32>
    %244 = arith.negf %243 : vector<16x128xf32>
    %245 = math.exp %244 : vector<16x128xf32>
    %cst_81 = arith.constant 1.000000e+00 : f32
    %246 = vector.broadcast %cst_81 : f32 to vector<16x128xf32>
    %247 = arith.addf %246, %245 : vector<16x128xf32>
    %248 = arith.divf %246, %247 : vector<16x128xf32>
    %249 = vector.extract_strided_slice %236 {offsets = [0, 256], sizes = [16, 128], strides = [1, 1]} : vector<16x512xf32> to vector<16x128xf32>
    %250 = math.tanh %249 : vector<16x128xf32>
    %251 = vector.extract_strided_slice %236 {offsets = [0, 384], sizes = [16, 128], strides = [1, 1]} : vector<16x512xf32> to vector<16x128xf32>
    %252 = arith.negf %251 : vector<16x128xf32>
    %253 = math.exp %252 : vector<16x128xf32>
    %cst_82 = arith.constant 1.000000e+00 : f32
    %254 = vector.broadcast %cst_82 : f32 to vector<16x128xf32>
    %255 = arith.addf %254, %253 : vector<16x128xf32>
    %256 = arith.divf %254, %255 : vector<16x128xf32>
    %257 = arith.mulf %248, %223 : vector<16x128xf32>
    %258 = arith.mulf %242, %250 : vector<16x128xf32>
    %259 = arith.addf %257, %258 : vector<16x128xf32>
    %260 = math.tanh %259 : vector<16x128xf32>
    %261 = arith.mulf %256, %260 : vector<16x128xf32>
    %262 = arith.index_cast %c6_i32 : i32 to index
    %c0_83 = arith.constant 0 : index
    %c0_84 = arith.constant 0 : index
    %263 = vector.load %arg11[%262, %c0_83, %c0_84] : memref<8x16x128xf32, #tpu.memory_space<vmem>>, vector<1x16x128xf32>
    %264 = vector.shape_cast %263 : vector<1x16x128xf32> to vector<16x128xf32>
    %265 = vector.shape_cast %261 : vector<16x128xf32> to vector<1x16x128xf32>
    tpu.vector_store %arg11[%262, %c0_83, %c0_84], %265 {strides = array<i32>} : memref<8x16x128xf32, #tpu.memory_space<vmem>>, vector<1x16x128xf32>,
    %c7_i32 = arith.constant 7 : i32
    %266 = arith.index_cast %c7_i32 : i32 to index
    %c0_85 = arith.constant 0 : index
    %c0_86 = arith.constant 0 : index
    %267 = vector.load %arg10[%266, %c0_85, %c0_86] : memref<8x16x512xf32, #tpu.memory_space<vmem>>, vector<1x16x512xf32>
    %268 = vector.shape_cast %267 : vector<1x16x512xf32> to vector<16x512xf32>
    %269 = arith.truncf %261 : vector<16x128xf32> to vector<16x128xbf16>
    %c0_87 = arith.constant 0 : index
    %c0_88 = arith.constant 0 : index
    %270 = vector.load %arg3[%c0_87, %c0_88] : memref<128x512xbf16, #tpu.memory_space<vmem>>, vector<128x512xbf16>
    %cst_89 = arith.constant dense<0.000000e+00> : vector<16x512xf32>
    %271 = tpu.matmul %269, %270, %cst_89 {dimension_numbers = #tpu.dot_dimension_numbers<[1], [0], [0], [1], [0, 0, 1, 1], [], []>} : vector<16x128xbf16>, vector<128x512xbf16>, vector<16x512xf32> -> vector<16x512xf32>
    %272 = arith.addf %268, %271 : vector<16x512xf32>
    %273 = vector.extract_strided_slice %272 {offsets = [0, 0], sizes = [16, 128], strides = [1, 1]} : vector<16x512xf32> to vector<16x128xf32>
    %274 = arith.negf %273 : vector<16x128xf32>
    %275 = math.exp %274 : vector<16x128xf32>
    %cst_90 = arith.constant 1.000000e+00 : f32
    %276 = vector.broadcast %cst_90 : f32 to vector<16x128xf32>
    %277 = arith.addf %276, %275 : vector<16x128xf32>
    %278 = arith.divf %276, %277 : vector<16x128xf32>
    %279 = vector.extract_strided_slice %272 {offsets = [0, 128], sizes = [16, 128], strides = [1, 1]} : vector<16x512xf32> to vector<16x128xf32>
    %280 = arith.negf %279 : vector<16x128xf32>
    %281 = math.exp %280 : vector<16x128xf32>
    %cst_91 = arith.constant 1.000000e+00 : f32
    %282 = vector.broadcast %cst_91 : f32 to vector<16x128xf32>
    %283 = arith.addf %282, %281 : vector<16x128xf32>
    %284 = arith.divf %282, %283 : vector<16x128xf32>
    %285 = vector.extract_strided_slice %272 {offsets = [0, 256], sizes = [16, 128], strides = [1, 1]} : vector<16x512xf32> to vector<16x128xf32>
    %286 = math.tanh %285 : vector<16x128xf32>
    %287 = vector.extract_strided_slice %272 {offsets = [0, 384], sizes = [16, 128], strides = [1, 1]} : vector<16x512xf32> to vector<16x128xf32>
    %288 = arith.negf %287 : vector<16x128xf32>
    %289 = math.exp %288 : vector<16x128xf32>
    %cst_92 = arith.constant 1.000000e+00 : f32
    %290 = vector.broadcast %cst_92 : f32 to vector<16x128xf32>
    %291 = arith.addf %290, %289 : vector<16x128xf32>
    %292 = arith.divf %290, %291 : vector<16x128xf32>
    %293 = arith.mulf %284, %259 : vector<16x128xf32>
    %294 = arith.mulf %278, %286 : vector<16x128xf32>
    %295 = arith.addf %293, %294 : vector<16x128xf32>
    %296 = math.tanh %295 : vector<16x128xf32>
    %297 = arith.mulf %292, %296 : vector<16x128xf32>
    %298 = arith.index_cast %c7_i32 : i32 to index
    %c0_93 = arith.constant 0 : index
    %c0_94 = arith.constant 0 : index
    %299 = vector.load %arg11[%298, %c0_93, %c0_94] : memref<8x16x128xf32, #tpu.memory_space<vmem>>, vector<1x16x128xf32>
    %300 = vector.shape_cast %299 : vector<1x16x128xf32> to vector<16x128xf32>
    %301 = vector.shape_cast %297 : vector<16x128xf32> to vector<1x16x128xf32>
    tpu.vector_store %arg11[%298, %c0_93, %c0_94], %301 {strides = array<i32>} : memref<8x16x128xf32, #tpu.memory_space<vmem>>, vector<1x16x128xf32>,
    %c8_i32 = arith.constant 8 : i32
    %c0_95 = arith.constant 0 : index
    %c0_96 = arith.constant 0 : index
    %302 = vector.load %arg8[%c0_95, %c0_96] : memref<16x128xf32, #tpu.memory_space<vmem>>, vector<16x128xf32>
    tpu.vector_store %arg8[%c0_95, %c0_96], %297 {strides = array<i32>} : memref<16x128xf32, #tpu.memory_space<vmem>>, vector<16x128xf32>,
    %c0_97 = arith.constant 0 : index
    %c0_98 = arith.constant 0 : index
    %303 = vector.load %arg9[%c0_97, %c0_98] : memref<16x128xf32, #tpu.memory_space<vmem>>, vector<16x128xf32>
    tpu.vector_store %arg9[%c0_97, %c0_98], %295 {strides = array<i32>} : memref<16x128xf32, #tpu.memory_space<vmem>>, vector<16x128xf32>,
    %c0_99 = arith.constant 0 : index
    %c0_100 = arith.constant 0 : index
    %c0_101 = arith.constant 0 : index
    %304 = vector.load %arg11[%c0_99, %c0_100, %c0_101] : memref<8x16x128xf32, #tpu.memory_space<vmem>>, vector<8x16x128xf32>
    %305 = vector.shape_cast %304 : vector<8x16x128xf32> to vector<128x128xf32>
    %306 = arith.truncf %305 : vector<128x128xf32> to vector<128x128xbf16>
    %c0_102 = arith.constant 0 : index
    %c0_103 = arith.constant 0 : index
    %307 = vector.load %arg5[%c0_102, %c0_103] : memref<128x128xbf16, #tpu.memory_space<vmem>>, vector<128x128xbf16>
    %cst_104 = arith.constant dense<0.000000e+00> : vector<128x128xf32>
    %308 = tpu.matmul %306, %307, %cst_104 {dimension_numbers = #tpu.dot_dimension_numbers<[1], [0], [0], [1], [0, 0, 1, 1], [], []>} : vector<128x128xbf16>, vector<128x128xbf16>, vector<128x128xf32> -> vector<128x128xf32>
    %c0_105 = arith.constant 0 : index
    %c0_106 = arith.constant 0 : index
    %309 = vector.load %arg6[%c0_105, %c0_106] : memref<1x128xf32, #tpu.memory_space<vmem>>, vector<1x128xf32>
    %310 = vector.broadcast %309 : vector<1x128xf32> to vector<128x128xf32>
    %311 = arith.addf %308, %310 : vector<128x128xf32>
    %312 = vector.shape_cast %311 : vector<128x128xf32> to vector<8x16x128xf32>
    %c0_107 = arith.constant 0 : index
    %c0_108 = arith.constant 0 : index
    %c0_109 = arith.constant 0 : index
    %313 = vector.load %arg7[%c0_107, %c0_108, %c0_109] : memref<8x16x128xf32, #tpu.memory_space<vmem>>, vector<8x16x128xf32>
    tpu.vector_store %arg7[%c0_107, %c0_108, %c0_109], %312 {strides = array<i32>} : memref<8x16x128xf32, #tpu.memory_space<vmem>>, vector<8x16x128xf32>,
    return
  }
  func.func @transform_0(%arg0: i32) -> (i32, i32, i32) {
    %c0_i32 = arith.constant 0 : i32
    %c0_i32_0 = arith.constant 0 : i32
    %c0_i32_1 = arith.constant 0 : i32
    return %arg0, %c0_i32, %c0_i32_0 : i32, i32, i32
  }
  func.func @transform_1(%arg0: i32) -> (i32, i32) {
    %c0_i32 = arith.constant 0 : i32
    %c0_i32_0 = arith.constant 0 : i32
    %c0_i32_1 = arith.constant 0 : i32
    return %c0_i32, %c0_i32_0 : i32, i32
  }
  func.func @transform_2(%arg0: i32) -> (i32, i32) {
    %c0_i32 = arith.constant 0 : i32
    %c0_i32_0 = arith.constant 0 : i32
    %c0_i32_1 = arith.constant 0 : i32
    return %c0_i32, %c0_i32_0 : i32, i32
  }
  func.func @transform_3(%arg0: i32) -> (i32, i32) {
    %c0_i32 = arith.constant 0 : i32
    %c0_i32_0 = arith.constant 0 : i32
    %c0_i32_1 = arith.constant 0 : i32
    return %c0_i32, %c0_i32_0 : i32, i32
  }
  func.func @transform_4(%arg0: i32) -> (i32, i32) {
    %c0_i32 = arith.constant 0 : i32
    %c0_i32_0 = arith.constant 0 : i32
    %c0_i32_1 = arith.constant 0 : i32
    return %c0_i32, %c0_i32_0 : i32, i32
  }
  func.func @transform_5(%arg0: i32) -> (i32, i32) {
    %c0_i32 = arith.constant 0 : i32
    %c0_i32_0 = arith.constant 0 : i32
    %c0_i32_1 = arith.constant 0 : i32
    return %c0_i32, %c0_i32_0 : i32, i32
  }
  func.func @transform_6(%arg0: i32) -> (i32, i32, i32) {
    %c0_i32 = arith.constant 0 : i32
    %c0_i32_0 = arith.constant 0 : i32
    %c0_i32_1 = arith.constant 0 : i32
    return %arg0, %c0_i32, %c0_i32_0 : i32, i32, i32
  }
}

module attributes {stable_mosaic.version = 11 : i64} {
  func.func @lstm_head_kernel(%arg0: i32, %arg1: memref<8x16x128xbf16, #tpu.memory_space<vmem>>, %arg2: memref<128x512xbf16, #tpu.memory_space<vmem>>, %arg3: memref<128x512xbf16, #tpu.memory_space<vmem>>, %arg4: memref<1x512xf32, #tpu.memory_space<vmem>>, %arg5: memref<128x128xbf16, #tpu.memory_space<vmem>>, %arg6: memref<1x128xf32, #tpu.memory_space<vmem>>, %arg7: memref<8x16x128xf32, #tpu.memory_space<vmem>>, %arg8: memref<16x128xf32, #tpu.memory_space<vmem>>, %arg9: memref<16x128xf32, #tpu.memory_space<vmem>>, %arg10: memref<8x16x512xf32, #tpu.memory_space<vmem>>, %arg11: memref<8x16x128xf32, #tpu.memory_space<vmem>>) attributes {dimension_semantics = [#tpu.dimension_semantics<arbitrary>], iteration_bounds = array<i64: 1>, scalar_prefetch = 0 : i64, scratch_operands = 4 : i64, tpu.core_type = #tpu.core_type<tc>, window_params = [{transform_indices = @transform_0, window_bounds = array<i64: 8, 16, 128>}, {pipeline_mode = #tpu.pipeline_mode<synchronous>, transform_indices = @transform_1, window_bounds = array<i64: 128, 512>}, {pipeline_mode = #tpu.pipeline_mode<synchronous>, transform_indices = @transform_2, window_bounds = array<i64: 128, 512>}, {pipeline_mode = #tpu.pipeline_mode<synchronous>, transform_indices = @transform_3, window_bounds = array<i64: 1, 512>}, {pipeline_mode = #tpu.pipeline_mode<synchronous>, transform_indices = @transform_4, window_bounds = array<i64: 128, 128>}, {pipeline_mode = #tpu.pipeline_mode<synchronous>, transform_indices = @transform_5, window_bounds = array<i64: 1, 128>}, {transform_indices = @transform_6, window_bounds = array<i64: 8, 16, 128>}]} {
    %c0_i32 = arith.constant 0 : i32
    %0 = arith.cmpi eq, %arg0, %c0_i32 : i32
    %1 = arith.extui %0 : i1 to i32
    %c0_i32_0 = arith.constant 0 : i32
    %2 = arith.cmpi ne, %1, %c0_i32_0 : i32
    scf.if %2 {
      %cst_110 = arith.constant 0.000000e+00 : f32
      %314 = vector.broadcast %cst_110 : f32 to vector<16x128xf32>
      %c0_111 = arith.constant 0 : index
      %c0_112 = arith.constant 0 : index
      %315 = vector.load %arg8[%c0_111, %c0_112] : memref<16x128xf32, #tpu.memory_space<vmem>>, vector<16x128xf32>
      tpu.vector_store %arg8[%c0_111, %c0_112], %314 {strides = array<i32>} : memref<16x128xf32, #tpu.memory_space<vmem>>, vector<16x128xf32>,
      %cst_113 = arith.constant 0.000000e+00 : f32
      %316 = vector.broadcast %cst_113 : f32 to vector<16x128xf32>
      %c0_114 = arith.constant 0 : index
      %c0_115 = arith.constant 0 : index
      %317 = vector.load %arg9[%c0_114, %c0_115] : memref<16x128xf32, #tpu.memory_space<vmem>>, vector<16x128xf32>
      tpu.vector_store %arg9[%c0_114, %c0_115], %316 {strides = array<i32>} : memref<16x128xf32, #tpu.memory_space<vmem>>, vector<16x128xf32>,
    } else {
    }
    %c0 = arith.constant 0 : index
    %c0_1 = arith.constant 0 : index
    %c0_2 = arith.constant 0 : index
    %3 = vector.load %arg1[%c0, %c0_1, %c0_2] : memref<8x16x128xbf16, #tpu.memory_space<vmem>>, vector<8x16x128xbf16>
    %4 = vector.shape_cast %3 : vector<8x16x128xbf16> to vector<128x128xbf16>
    %c0_3 = arith.constant 0 : index
    %c0_4 = arith.constant 0 : index
    %5 = vector.load %arg2[%c0_3, %c0_4] : memref<128x512xbf16, #tpu.memory_space<vmem>>, vector<128x512xbf16>
    %cst = arith.constant dense<0.000000e+00> : vector<128x512xf32>
    %6 = tpu.matmul %4, %5, %cst {dimension_numbers = #tpu.dot_dimension_numbers<[1], [0], [0], [1], [0, 0, 1, 1], [], []>} : vector<128x128xbf16>, vector<128x512xbf16>, vector<128x512xf32> -> vector<128x512xf32>
    %c0_5 = arith.constant 0 : index
    %c0_6 = arith.constant 0 : index
    %7 = vector.load %arg4[%c0_5, %c0_6] : memref<1x512xf32, #tpu.memory_space<vmem>>, vector<1x512xf32>
    %8 = vector.broadcast %7 : vector<1x512xf32> to vector<128x512xf32>
    %9 = arith.addf %6, %8 : vector<128x512xf32>
    %10 = vector.shape_cast %9 : vector<128x512xf32> to vector<8x16x512xf32>
    %c0_7 = arith.constant 0 : index
    %c0_8 = arith.constant 0 : index
    %c0_9 = arith.constant 0 : index
    %11 = vector.load %arg10[%c0_7, %c0_8, %c0_9] : memref<8x16x512xf32, #tpu.memory_space<vmem>>, vector<8x16x512xf32>
    tpu.vector_store %arg10[%c0_7, %c0_8, %c0_9], %10 {strides = array<i32>} : memref<8x16x512xf32, #tpu.memory_space<vmem>>, vector<8x16x512xf32>,
    %c0_10 = arith.constant 0 : index
    %c0_11 = arith.constant 0 : index
    %12 = vector.load %arg8[%c0_10, %c0_11] : memref<16x128xf32, #tpu.memory_space<vmem>>, vector<16x128xf32>
    %c0_12 = arith.constant 0 : index
    %c0_13 = arith.constant 0 : index
    %13 = vector.load %arg9[%c0_12, %c0_13] : memref<16x128xf32, #tpu.memory_space<vmem>>, vector<16x128xf32>
    %c0_i32_14 = arith.constant 0 : i32
    %14 = arith.index_cast %c0_i32_14 : i32 to index
    %c0_15 = arith.constant 0 : index
    %c0_16 = arith.constant 0 : index
    %15 = vector.load %arg10[%14, %c0_15, %c0_16] : memref<8x16x512xf32, #tpu.memory_space<vmem>>, vector<1x16x512xf32>
    %16 = vector.shape_cast %15 : vector<1x16x512xf32> to vector<16x512xf32>
    %17 = arith.truncf %12 : vector<16x128xf32> to vector<16x128xbf16>
    %c0_17 = arith.constant 0 : index
    %c0_18 = arith.constant 0 : index
    %18 = vector.load %arg3[%c0_17, %c0_18] : memref<128x512xbf16, #tpu.memory_space<vmem>>, vector<128x512xbf16>
    %cst_19 = arith.constant dense<0.000000e+00> : vector<16x512xf32>
    %19 = tpu.matmul %17, %18, %cst_19 {dimension_numbers = #tpu.dot_dimension_numbers<[1], [0], [0], [1], [0, 0, 1, 1], [], []>} : vector<16x128xbf16>, vector<128x512xbf16>, vector<16x512xf32> -> vector<16x512xf32>
    %20 = arith.addf %16, %19 : vector<16x512xf32>
    %21 = vector.extract_strided_slice %20 {offsets = [0, 0], sizes = [16, 128], strides = [1, 1]} : vector<16x512xf32> to vector<16x128xf32>
    %22 = arith.negf %21 : vector<16x128xf32>
    %23 = math.exp %22 : vector<16x128xf32>
    %cst_20 = arith.constant 1.000000e+00 : f32
    %24 = vector.broadcast %cst_20 : f32 to vector<16x128xf32>
    %25 = arith.addf %24, %23 : vector<16x128xf32>
    %26 = arith.divf %24, %25 : vector<16x128xf32>
    %27 = vector.extract_strided_slice %20 {offsets = [0, 128], sizes = [16, 128], strides = [1, 1]} : vector<16x512xf32> to vector<16x128xf32>
    %28 = arith.negf %27 : vector<16x128xf32>
    %29 = math.exp %28 : vector<16x128xf32>
    %cst_21 = arith.constant 1.000000e+00 : f32
    %30 = vector.broadcast %cst_21 : f32 to vector<16x128xf32>
    %31 = arith.addf %30, %29 : vector<16x128xf32>
    %32 = arith.divf %30, %31 : vector<16x128xf32>
    %33 = vector.extract_strided_slice %20 {offsets = [0, 256], sizes = [16, 128], strides = [1, 1]} : vector<16x512xf32> to vector<16x128xf32>
    %34 = math.tanh %33 : vector<16x128xf32>
    %35 = vector.extract_strided_slice %20 {offsets = [0, 384], sizes = [16, 128], strides = [1, 1]} : vector<16x512xf32> to vector<16x128xf32>
    %36 = arith.negf %35 : vector<16x128xf32>
    %37 = math.exp %36 : vector<16x128xf32>
    %cst_22 = arith.constant 1.000000e+00 : f32
    %38 = vector.broadcast %cst_22 : f32 to vector<16x128xf32>
    %39 = arith.addf %38, %37 : vector<16x128xf32>
    %40 = arith.divf %38, %39 : vector<16x128xf32>
    %41 = arith.mulf %32, %13 : vector<16x128xf32>
    %42 = arith.mulf %26, %34 : vector<16x128xf32>
    %43 = arith.addf %41, %42 : vector<16x128xf32>
    %44 = math.tanh %43 : vector<16x128xf32>
    %45 = arith.mulf %40, %44 : vector<16x128xf32>
    %46 = arith.index_cast %c0_i32_14 : i32 to index
    %c0_23 = arith.constant 0 : index
    %c0_24 = arith.constant 0 : index
    %47 = vector.load %arg11[%46, %c0_23, %c0_24] : memref<8x16x128xf32, #tpu.memory_space<vmem>>, vector<1x16x128xf32>
    %48 = vector.shape_cast %47 : vector<1x16x128xf32> to vector<16x128xf32>
    %49 = vector.shape_cast %45 : vector<16x128xf32> to vector<1x16x128xf32>
    tpu.vector_store %arg11[%46, %c0_23, %c0_24], %49 {strides = array<i32>} : memref<8x16x128xf32, #tpu.memory_space<vmem>>, vector<1x16x128xf32>,
    %c1_i32 = arith.constant 1 : i32
    %50 = arith.index_cast %c1_i32 : i32 to index
    %c0_25 = arith.constant 0 : index
    %c0_26 = arith.constant 0 : index
    %51 = vector.load %arg10[%50, %c0_25, %c0_26] : memref<8x16x512xf32, #tpu.memory_space<vmem>>, vector<1x16x512xf32>
    %52 = vector.shape_cast %51 : vector<1x16x512xf32> to vector<16x512xf32>
    %53 = arith.truncf %45 : vector<16x128xf32> to vector<16x128xbf16>
    %c0_27 = arith.constant 0 : index
    %c0_28 = arith.constant 0 : index
    %54 = vector.load %arg3[%c0_27, %c0_28] : memref<128x512xbf16, #tpu.memory_space<vmem>>, vector<128x512xbf16>
    %cst_29 = arith.constant dense<0.000000e+00> : vector<16x512xf32>
    %55 = tpu.matmul %53, %54, %cst_29 {dimension_numbers = #tpu.dot_dimension_numbers<[1], [0], [0], [1], [0, 0, 1, 1], [], []>} : vector<16x128xbf16>, vector<128x512xbf16>, vector<16x512xf32> -> vector<16x512xf32>
    %56 = arith.addf %52, %55 : vector<16x512xf32>
    %57 = vector.extract_strided_slice %56 {offsets = [0, 0], sizes = [16, 128], strides = [1, 1]} : vector<16x512xf32> to vector<16x128xf32>
    %58 = arith.negf %57 : vector<16x128xf32>
    %59 = math.exp %58 : vector<16x128xf32>
    %cst_30 = arith.constant 1.000000e+00 : f32
    %60 = vector.broadcast %cst_30 : f32 to vector<16x128xf32>
    %61 = arith.addf %60, %59 : vector<16x128xf32>
    %62 = arith.divf %60, %61 : vector<16x128xf32>
    %63 = vector.extract_strided_slice %56 {offsets = [0, 128], sizes = [16, 128], strides = [1, 1]} : vector<16x512xf32> to vector<16x128xf32>
    %64 = arith.negf %63 : vector<16x128xf32>
    %65 = math.exp %64 : vector<16x128xf32>
    %cst_31 = arith.constant 1.000000e+00 : f32
    %66 = vector.broadcast %cst_31 : f32 to vector<16x128xf32>
    %67 = arith.addf %66, %65 : vector<16x128xf32>
    %68 = arith.divf %66, %67 : vector<16x128xf32>
    %69 = vector.extract_strided_slice %56 {offsets = [0, 256], sizes = [16, 128], strides = [1, 1]} : vector<16x512xf32> to vector<16x128xf32>
    %70 = math.tanh %69 : vector<16x128xf32>
    %71 = vector.extract_strided_slice %56 {offsets = [0, 384], sizes = [16, 128], strides = [1, 1]} : vector<16x512xf32> to vector<16x128xf32>
    %72 = arith.negf %71 : vector<16x128xf32>
    %73 = math.exp %72 : vector<16x128xf32>
    %cst_32 = arith.constant 1.000000e+00 : f32
    %74 = vector.broadcast %cst_32 : f32 to vector<16x128xf32>
    %75 = arith.addf %74, %73 : vector<16x128xf32>
    %76 = arith.divf %74, %75 : vector<16x128xf32>
    %77 = arith.mulf %68, %43 : vector<16x128xf32>
    %78 = arith.mulf %62, %70 : vector<16x128xf32>
    %79 = arith.addf %77, %78 : vector<16x128xf32>
    %80 = math.tanh %79 : vector<16x128xf32>
    %81 = arith.mulf %76, %80 : vector<16x128xf32>
    %82 = arith.index_cast %c1_i32 : i32 to index
    %c0_33 = arith.constant 0 : index
    %c0_34 = arith.constant 0 : index
    %83 = vector.load %arg11[%82, %c0_33, %c0_34] : memref<8x16x128xf32, #tpu.memory_space<vmem>>, vector<1x16x128xf32>
    %84 = vector.shape_cast %83 : vector<1x16x128xf32> to vector<16x128xf32>
    %85 = vector.shape_cast %81 : vector<16x128xf32> to vector<1x16x128xf32>
    tpu.vector_store %arg11[%82, %c0_33, %c0_34], %85 {strides = array<i32>} : memref<8x16x128xf32, #tpu.memory_space<vmem>>, vector<1x16x128xf32>,
    %c2_i32 = arith.constant 2 : i32
    %86 = arith.index_cast %c2_i32 : i32 to index
    %c0_35 = arith.constant 0 : index
    %c0_36 = arith.constant 0 : index
    %87 = vector.load %arg10[%86, %c0_35, %c0_36] : memref<8x16x512xf32, #tpu.memory_space<vmem>>, vector<1x16x512xf32>
    %88 = vector.shape_cast %87 : vector<1x16x512xf32> to vector<16x512xf32>
    %89 = arith.truncf %81 : vector<16x128xf32> to vector<16x128xbf16>
    %c0_37 = arith.constant 0 : index
    %c0_38 = arith.constant 0 : index
    %90 = vector.load %arg3[%c0_37, %c0_38] : memref<128x512xbf16, #tpu.memory_space<vmem>>, vector<128x512xbf16>
    %cst_39 = arith.constant dense<0.000000e+00> : vector<16x512xf32>
    %91 = tpu.matmul %89, %90, %cst_39 {dimension_numbers = #tpu.dot_dimension_numbers<[1], [0], [0], [1], [0, 0, 1, 1], [], []>} : vector<16x128xbf16>, vector<128x512xbf16>, vector<16x512xf32> -> vector<16x512xf32>
    %92 = arith.addf %88, %91 : vector<16x512xf32>
    %93 = vector.extract_strided_slice %92 {offsets = [0, 0], sizes = [16, 128], strides = [1, 1]} : vector<16x512xf32> to vector<16x128xf32>
    %94 = arith.negf %93 : vector<16x128xf32>
    %95 = math.exp %94 : vector<16x128xf32>
    %cst_40 = arith.constant 1.000000e+00 : f32
    %96 = vector.broadcast %cst_40 : f32 to vector<16x128xf32>
    %97 = arith.addf %96, %95 : vector<16x128xf32>
    %98 = arith.divf %96, %97 : vector<16x128xf32>
    %99 = vector.extract_strided_slice %92 {offsets = [0, 128], sizes = [16, 128], strides = [1, 1]} : vector<16x512xf32> to vector<16x128xf32>
    %100 = arith.negf %99 : vector<16x128xf32>
    %101 = math.exp %100 : vector<16x128xf32>
    %cst_41 = arith.constant 1.000000e+00 : f32
    %102 = vector.broadcast %cst_41 : f32 to vector<16x128xf32>
    %103 = arith.addf %102, %101 : vector<16x128xf32>
    %104 = arith.divf %102, %103 : vector<16x128xf32>
    %105 = vector.extract_strided_slice %92 {offsets = [0, 256], sizes = [16, 128], strides = [1, 1]} : vector<16x512xf32> to vector<16x128xf32>
    %106 = math.tanh %105 : vector<16x128xf32>
    %107 = vector.extract_strided_slice %92 {offsets = [0, 384], sizes = [16, 128], strides = [1, 1]} : vector<16x512xf32> to vector<16x128xf32>
    %108 = arith.negf %107 : vector<16x128xf32>
    %109 = math.exp %108 : vector<16x128xf32>
    %cst_42 = arith.constant 1.000000e+00 : f32
    %110 = vector.broadcast %cst_42 : f32 to vector<16x128xf32>
    %111 = arith.addf %110, %109 : vector<16x128xf32>
    %112 = arith.divf %110, %111 : vector<16x128xf32>
    %113 = arith.mulf %104, %79 : vector<16x128xf32>
    %114 = arith.mulf %98, %106 : vector<16x128xf32>
    %115 = arith.addf %113, %114 : vector<16x128xf32>
    %116 = math.tanh %115 : vector<16x128xf32>
    %117 = arith.mulf %112, %116 : vector<16x128xf32>
    %118 = arith.index_cast %c2_i32 : i32 to index
    %c0_43 = arith.constant 0 : index
    %c0_44 = arith.constant 0 : index
    %119 = vector.load %arg11[%118, %c0_43, %c0_44] : memref<8x16x128xf32, #tpu.memory_space<vmem>>, vector<1x16x128xf32>
    %120 = vector.shape_cast %119 : vector<1x16x128xf32> to vector<16x128xf32>
    %121 = vector.shape_cast %117 : vector<16x128xf32> to vector<1x16x128xf32>
    tpu.vector_store %arg11[%118, %c0_43, %c0_44], %121 {strides = array<i32>} : memref<8x16x128xf32, #tpu.memory_space<vmem>>, vector<1x16x128xf32>,
    %c3_i32 = arith.constant 3 : i32
    %122 = arith.index_cast %c3_i32 : i32 to index
    %c0_45 = arith.constant 0 : index
    %c0_46 = arith.constant 0 : index
    %123 = vector.load %arg10[%122, %c0_45, %c0_46] : memref<8x16x512xf32, #tpu.memory_space<vmem>>, vector<1x16x512xf32>
    %124 = vector.shape_cast %123 : vector<1x16x512xf32> to vector<16x512xf32>
    %125 = arith.truncf %117 : vector<16x128xf32> to vector<16x128xbf16>
    %c0_47 = arith.constant 0 : index
    %c0_48 = arith.constant 0 : index
    %126 = vector.load %arg3[%c0_47, %c0_48] : memref<128x512xbf16, #tpu.memory_space<vmem>>, vector<128x512xbf16>
    %cst_49 = arith.constant dense<0.000000e+00> : vector<16x512xf32>
    %127 = tpu.matmul %125, %126, %cst_49 {dimension_numbers = #tpu.dot_dimension_numbers<[1], [0], [0], [1], [0, 0, 1, 1], [], []>} : vector<16x128xbf16>, vector<128x512xbf16>, vector<16x512xf32> -> vector<16x512xf32>
    %128 = arith.addf %124, %127 : vector<16x512xf32>
    %129 = vector.extract_strided_slice %128 {offsets = [0, 0], sizes = [16, 128], strides = [1, 1]} : vector<16x512xf32> to vector<16x128xf32>
    %130 = arith.negf %129 : vector<16x128xf32>
    %131 = math.exp %130 : vector<16x128xf32>
    %cst_50 = arith.constant 1.000000e+00 : f32
    %132 = vector.broadcast %cst_50 : f32 to vector<16x128xf32>
    %133 = arith.addf %132, %131 : vector<16x128xf32>
    %134 = arith.divf %132, %133 : vector<16x128xf32>
    %135 = vector.extract_strided_slice %128 {offsets = [0, 128], sizes = [16, 128], strides = [1, 1]} : vector<16x512xf32> to vector<16x128xf32>
    %136 = arith.negf %135 : vector<16x128xf32>
    %137 = math.exp %136 : vector<16x128xf32>
    %cst_51 = arith.constant 1.000000e+00 : f32
    %138 = vector.broadcast %cst_51 : f32 to vector<16x128xf32>
    %139 = arith.addf %138, %137 : vector<16x128xf32>
    %140 = arith.divf %138, %139 : vector<16x128xf32>
    %141 = vector.extract_strided_slice %128 {offsets = [0, 256], sizes = [16, 128], strides = [1, 1]} : vector<16x512xf32> to vector<16x128xf32>
    %142 = math.tanh %141 : vector<16x128xf32>
    %143 = vector.extract_strided_slice %128 {offsets = [0, 384], sizes = [16, 128], strides = [1, 1]} : vector<16x512xf32> to vector<16x128xf32>
    %144 = arith.negf %143 : vector<16x128xf32>
    %145 = math.exp %144 : vector<16x128xf32>
    %cst_52 = arith.constant 1.000000e+00 : f32
    %146 = vector.broadcast %cst_52 : f32 to vector<16x128xf32>
    %147 = arith.addf %146, %145 : vector<16x128xf32>
    %148 = arith.divf %146, %147 : vector<16x128xf32>
    %149 = arith.mulf %140, %115 : vector<16x128xf32>
    %150 = arith.mulf %134, %142 : vector<16x128xf32>
    %151 = arith.addf %149, %150 : vector<16x128xf32>
    %152 = math.tanh %151 : vector<16x128xf32>
    %153 = arith.mulf %148, %152 : vector<16x128xf32>
    %154 = arith.index_cast %c3_i32 : i32 to index
    %c0_53 = arith.constant 0 : index
    %c0_54 = arith.constant 0 : index
    %155 = vector.load %arg11[%154, %c0_53, %c0_54] : memref<8x16x128xf32, #tpu.memory_space<vmem>>, vector<1x16x128xf32>
    %156 = vector.shape_cast %155 : vector<1x16x128xf32> to vector<16x128xf32>
    %157 = vector.shape_cast %153 : vector<16x128xf32> to vector<1x16x128xf32>
    tpu.vector_store %arg11[%154, %c0_53, %c0_54], %157 {strides = array<i32>} : memref<8x16x128xf32, #tpu.memory_space<vmem>>, vector<1x16x128xf32>,
    %c4_i32 = arith.constant 4 : i32
    %158 = arith.index_cast %c4_i32 : i32 to index
    %c0_55 = arith.constant 0 : index
    %c0_56 = arith.constant 0 : index
    %159 = vector.load %arg10[%158, %c0_55, %c0_56] : memref<8x16x512xf32, #tpu.memory_space<vmem>>, vector<1x16x512xf32>
    %160 = vector.shape_cast %159 : vector<1x16x512xf32> to vector<16x512xf32>
    %161 = arith.truncf %153 : vector<16x128xf32> to vector<16x128xbf16>
    %c0_57 = arith.constant 0 : index
    %c0_58 = arith.constant 0 : index
    %162 = vector.load %arg3[%c0_57, %c0_58] : memref<128x512xbf16, #tpu.memory_space<vmem>>, vector<128x512xbf16>
    %cst_59 = arith.constant dense<0.000000e+00> : vector<16x512xf32>
    %163 = tpu.matmul %161, %162, %cst_59 {dimension_numbers = #tpu.dot_dimension_numbers<[1], [0], [0], [1], [0, 0, 1, 1], [], []>} : vector<16x128xbf16>, vector<128x512xbf16>, vector<16x512xf32> -> vector<16x512xf32>
    %164 = arith.addf %160, %163 : vector<16x512xf32>
    %165 = vector.extract_strided_slice %164 {offsets = [0, 0], sizes = [16, 128], strides = [1, 1]} : vector<16x512xf32> to vector<16x128xf32>
    %166 = arith.negf %165 : vector<16x128xf32>
    %167 = math.exp %166 : vector<16x128xf32>
    %cst_60 = arith.constant 1.000000e+00 : f32
    %168 = vector.broadcast %cst_60 : f32 to vector<16x128xf32>
    %169 = arith.addf %168, %167 : vector<16x128xf32>
    %170 = arith.divf %168, %169 : vector<16x128xf32>
    %171 = vector.extract_strided_slice %164 {offsets = [0, 128], sizes = [16, 128], strides = [1, 1]} : vector<16x512xf32> to vector<16x128xf32>
    %172 = arith.negf %171 : vector<16x128xf32>
    %173 = math.exp %172 : vector<16x128xf32>
    %cst_61 = arith.constant 1.000000e+00 : f32
    %174 = vector.broadcast %cst_61 : f32 to vector<16x128xf32>
    %175 = arith.addf %174, %173 : vector<16x128xf32>
    %176 = arith.divf %174, %175 : vector<16x128xf32>
    %177 = vector.extract_strided_slice %164 {offsets = [0, 256], sizes = [16, 128], strides = [1, 1]} : vector<16x512xf32> to vector<16x128xf32>
    %178 = math.tanh %177 : vector<16x128xf32>
    %179 = vector.extract_strided_slice %164 {offsets = [0, 384], sizes = [16, 128], strides = [1, 1]} : vector<16x512xf32> to vector<16x128xf32>
    %180 = arith.negf %179 : vector<16x128xf32>
    %181 = math.exp %180 : vector<16x128xf32>
    %cst_62 = arith.constant 1.000000e+00 : f32
    %182 = vector.broadcast %cst_62 : f32 to vector<16x128xf32>
    %183 = arith.addf %182, %181 : vector<16x128xf32>
    %184 = arith.divf %182, %183 : vector<16x128xf32>
    %185 = arith.mulf %176, %151 : vector<16x128xf32>
    %186 = arith.mulf %170, %178 : vector<16x128xf32>
    %187 = arith.addf %185, %186 : vector<16x128xf32>
    %188 = math.tanh %187 : vector<16x128xf32>
    %189 = arith.mulf %184, %188 : vector<16x128xf32>
    %190 = arith.index_cast %c4_i32 : i32 to index
    %c0_63 = arith.constant 0 : index
    %c0_64 = arith.constant 0 : index
    %191 = vector.load %arg11[%190, %c0_63, %c0_64] : memref<8x16x128xf32, #tpu.memory_space<vmem>>, vector<1x16x128xf32>
    %192 = vector.shape_cast %191 : vector<1x16x128xf32> to vector<16x128xf32>
    %193 = vector.shape_cast %189 : vector<16x128xf32> to vector<1x16x128xf32>
    tpu.vector_store %arg11[%190, %c0_63, %c0_64], %193 {strides = array<i32>} : memref<8x16x128xf32, #tpu.memory_space<vmem>>, vector<1x16x128xf32>,
    %c5_i32 = arith.constant 5 : i32
    %194 = arith.index_cast %c5_i32 : i32 to index
    %c0_65 = arith.constant 0 : index
    %c0_66 = arith.constant 0 : index
    %195 = vector.load %arg10[%194, %c0_65, %c0_66] : memref<8x16x512xf32, #tpu.memory_space<vmem>>, vector<1x16x512xf32>
    %196 = vector.shape_cast %195 : vector<1x16x512xf32> to vector<16x512xf32>
    %197 = arith.truncf %189 : vector<16x128xf32> to vector<16x128xbf16>
    %c0_67 = arith.constant 0 : index
    %c0_68 = arith.constant 0 : index
    %198 = vector.load %arg3[%c0_67, %c0_68] : memref<128x512xbf16, #tpu.memory_space<vmem>>, vector<128x512xbf16>
    %cst_69 = arith.constant dense<0.000000e+00> : vector<16x512xf32>
    %199 = tpu.matmul %197, %198, %cst_69 {dimension_numbers = #tpu.dot_dimension_numbers<[1], [0], [0], [1], [0, 0, 1, 1], [], []>} : vector<16x128xbf16>, vector<128x512xbf16>, vector<16x512xf32> -> vector<16x512xf32>
    %200 = arith.addf %196, %199 : vector<16x512xf32>
    %201 = vector.extract_strided_slice %200 {offsets = [0, 0], sizes = [16, 128], strides = [1, 1]} : vector<16x512xf32> to vector<16x128xf32>
    %202 = arith.negf %201 : vector<16x128xf32>
    %203 = math.exp %202 : vector<16x128xf32>
    %cst_70 = arith.constant 1.000000e+00 : f32
    %204 = vector.broadcast %cst_70 : f32 to vector<16x128xf32>
    %205 = arith.addf %204, %203 : vector<16x128xf32>
    %206 = arith.divf %204, %205 : vector<16x128xf32>
    %207 = vector.extract_strided_slice %200 {offsets = [0, 128], sizes = [16, 128], strides = [1, 1]} : vector<16x512xf32> to vector<16x128xf32>
    %208 = arith.negf %207 : vector<16x128xf32>
    %209 = math.exp %208 : vector<16x128xf32>
    %cst_71 = arith.constant 1.000000e+00 : f32
    %210 = vector.broadcast %cst_71 : f32 to vector<16x128xf32>
    %211 = arith.addf %210, %209 : vector<16x128xf32>
    %212 = arith.divf %210, %211 : vector<16x128xf32>
    %213 = vector.extract_strided_slice %200 {offsets = [0, 256], sizes = [16, 128], strides = [1, 1]} : vector<16x512xf32> to vector<16x128xf32>
    %214 = math.tanh %213 : vector<16x128xf32>
    %215 = vector.extract_strided_slice %200 {offsets = [0, 384], sizes = [16, 128], strides = [1, 1]} : vector<16x512xf32> to vector<16x128xf32>
    %216 = arith.negf %215 : vector<16x128xf32>
    %217 = math.exp %216 : vector<16x128xf32>
    %cst_72 = arith.constant 1.000000e+00 : f32
    %218 = vector.broadcast %cst_72 : f32 to vector<16x128xf32>
    %219 = arith.addf %218, %217 : vector<16x128xf32>
    %220 = arith.divf %218, %219 : vector<16x128xf32>
    %221 = arith.mulf %212, %187 : vector<16x128xf32>
    %222 = arith.mulf %206, %214 : vector<16x128xf32>
    %223 = arith.addf %221, %222 : vector<16x128xf32>
    %224 = math.tanh %223 : vector<16x128xf32>
    %225 = arith.mulf %220, %224 : vector<16x128xf32>
    %226 = arith.index_cast %c5_i32 : i32 to index
    %c0_73 = arith.constant 0 : index
    %c0_74 = arith.constant 0 : index
    %227 = vector.load %arg11[%226, %c0_73, %c0_74] : memref<8x16x128xf32, #tpu.memory_space<vmem>>, vector<1x16x128xf32>
    %228 = vector.shape_cast %227 : vector<1x16x128xf32> to vector<16x128xf32>
    %229 = vector.shape_cast %225 : vector<16x128xf32> to vector<1x16x128xf32>
    tpu.vector_store %arg11[%226, %c0_73, %c0_74], %229 {strides = array<i32>} : memref<8x16x128xf32, #tpu.memory_space<vmem>>, vector<1x16x128xf32>,
    %c6_i32 = arith.constant 6 : i32
    %230 = arith.index_cast %c6_i32 : i32 to index
    %c0_75 = arith.constant 0 : index
    %c0_76 = arith.constant 0 : index
    %231 = vector.load %arg10[%230, %c0_75, %c0_76] : memref<8x16x512xf32, #tpu.memory_space<vmem>>, vector<1x16x512xf32>
    %232 = vector.shape_cast %231 : vector<1x16x512xf32> to vector<16x512xf32>
    %233 = arith.truncf %225 : vector<16x128xf32> to vector<16x128xbf16>
    %c0_77 = arith.constant 0 : index
    %c0_78 = arith.constant 0 : index
    %234 = vector.load %arg3[%c0_77, %c0_78] : memref<128x512xbf16, #tpu.memory_space<vmem>>, vector<128x512xbf16>
    %cst_79 = arith.constant dense<0.000000e+00> : vector<16x512xf32>
    %235 = tpu.matmul %233, %234, %cst_79 {dimension_numbers = #tpu.dot_dimension_numbers<[1], [0], [0], [1], [0, 0, 1, 1], [], []>} : vector<16x128xbf16>, vector<128x512xbf16>, vector<16x512xf32> -> vector<16x512xf32>
    %236 = arith.addf %232, %235 : vector<16x512xf32>
    %237 = vector.extract_strided_slice %236 {offsets = [0, 0], sizes = [16, 128], strides = [1, 1]} : vector<16x512xf32> to vector<16x128xf32>
    %238 = arith.negf %237 : vector<16x128xf32>
    %239 = math.exp %238 : vector<16x128xf32>
    %cst_80 = arith.constant 1.000000e+00 : f32
    %240 = vector.broadcast %cst_80 : f32 to vector<16x128xf32>
    %241 = arith.addf %240, %239 : vector<16x128xf32>
    %242 = arith.divf %240, %241 : vector<16x128xf32>
    %243 = vector.extract_strided_slice %236 {offsets = [0, 128], sizes = [16, 128], strides = [1, 1]} : vector<16x512xf32> to vector<16x128xf32>
    %244 = arith.negf %243 : vector<16x128xf32>
    %245 = math.exp %244 : vector<16x128xf32>
    %cst_81 = arith.constant 1.000000e+00 : f32
    %246 = vector.broadcast %cst_81 : f32 to vector<16x128xf32>
    %247 = arith.addf %246, %245 : vector<16x128xf32>
    %248 = arith.divf %246, %247 : vector<16x128xf32>
    %249 = vector.extract_strided_slice %236 {offsets = [0, 256], sizes = [16, 128], strides = [1, 1]} : vector<16x512xf32> to vector<16x128xf32>
    %250 = math.tanh %249 : vector<16x128xf32>
    %251 = vector.extract_strided_slice %236 {offsets = [0, 384], sizes = [16, 128], strides = [1, 1]} : vector<16x512xf32> to vector<16x128xf32>
    %252 = arith.negf %251 : vector<16x128xf32>
    %253 = math.exp %252 : vector<16x128xf32>
    %cst_82 = arith.constant 1.000000e+00 : f32
    %254 = vector.broadcast %cst_82 : f32 to vector<16x128xf32>
    %255 = arith.addf %254, %253 : vector<16x128xf32>
    %256 = arith.divf %254, %255 : vector<16x128xf32>
    %257 = arith.mulf %248, %223 : vector<16x128xf32>
    %258 = arith.mulf %242, %250 : vector<16x128xf32>
    %259 = arith.addf %257, %258 : vector<16x128xf32>
    %260 = math.tanh %259 : vector<16x128xf32>
    %261 = arith.mulf %256, %260 : vector<16x128xf32>
    %262 = arith.index_cast %c6_i32 : i32 to index
    %c0_83 = arith.constant 0 : index
    %c0_84 = arith.constant 0 : index
    %263 = vector.load %arg11[%262, %c0_83, %c0_84] : memref<8x16x128xf32, #tpu.memory_space<vmem>>, vector<1x16x128xf32>
    %264 = vector.shape_cast %263 : vector<1x16x128xf32> to vector<16x128xf32>
    %265 = vector.shape_cast %261 : vector<16x128xf32> to vector<1x16x128xf32>
    tpu.vector_store %arg11[%262, %c0_83, %c0_84], %265 {strides = array<i32>} : memref<8x16x128xf32, #tpu.memory_space<vmem>>, vector<1x16x128xf32>,
    %c7_i32 = arith.constant 7 : i32
    %266 = arith.index_cast %c7_i32 : i32 to index
    %c0_85 = arith.constant 0 : index
    %c0_86 = arith.constant 0 : index
    %267 = vector.load %arg10[%266, %c0_85, %c0_86] : memref<8x16x512xf32, #tpu.memory_space<vmem>>, vector<1x16x512xf32>
    %268 = vector.shape_cast %267 : vector<1x16x512xf32> to vector<16x512xf32>
    %269 = arith.truncf %261 : vector<16x128xf32> to vector<16x128xbf16>
    %c0_87 = arith.constant 0 : index
    %c0_88 = arith.constant 0 : index
    %270 = vector.load %arg3[%c0_87, %c0_88] : memref<128x512xbf16, #tpu.memory_space<vmem>>, vector<128x512xbf16>
    %cst_89 = arith.constant dense<0.000000e+00> : vector<16x512xf32>
    %271 = tpu.matmul %269, %270, %cst_89 {dimension_numbers = #tpu.dot_dimension_numbers<[1], [0], [0], [1], [0, 0, 1, 1], [], []>} : vector<16x128xbf16>, vector<128x512xbf16>, vector<16x512xf32> -> vector<16x512xf32>
    %272 = arith.addf %268, %271 : vector<16x512xf32>
    %273 = vector.extract_strided_slice %272 {offsets = [0, 0], sizes = [16, 128], strides = [1, 1]} : vector<16x512xf32> to vector<16x128xf32>
    %274 = arith.negf %273 : vector<16x128xf32>
    %275 = math.exp %274 : vector<16x128xf32>
    %cst_90 = arith.constant 1.000000e+00 : f32
    %276 = vector.broadcast %cst_90 : f32 to vector<16x128xf32>
    %277 = arith.addf %276, %275 : vector<16x128xf32>
    %278 = arith.divf %276, %277 : vector<16x128xf32>
    %279 = vector.extract_strided_slice %272 {offsets = [0, 128], sizes = [16, 128], strides = [1, 1]} : vector<16x512xf32> to vector<16x128xf32>
    %280 = arith.negf %279 : vector<16x128xf32>
    %281 = math.exp %280 : vector<16x128xf32>
    %cst_91 = arith.constant 1.000000e+00 : f32
    %282 = vector.broadcast %cst_91 : f32 to vector<16x128xf32>
    %283 = arith.addf %282, %281 : vector<16x128xf32>
    %284 = arith.divf %282, %283 : vector<16x128xf32>
    %285 = vector.extract_strided_slice %272 {offsets = [0, 256], sizes = [16, 128], strides = [1, 1]} : vector<16x512xf32> to vector<16x128xf32>
    %286 = math.tanh %285 : vector<16x128xf32>
    %287 = vector.extract_strided_slice %272 {offsets = [0, 384], sizes = [16, 128], strides = [1, 1]} : vector<16x512xf32> to vector<16x128xf32>
    %288 = arith.negf %287 : vector<16x128xf32>
    %289 = math.exp %288 : vector<16x128xf32>
    %cst_92 = arith.constant 1.000000e+00 : f32
    %290 = vector.broadcast %cst_92 : f32 to vector<16x128xf32>
    %291 = arith.addf %290, %289 : vector<16x128xf32>
    %292 = arith.divf %290, %291 : vector<16x128xf32>
    %293 = arith.mulf %284, %259 : vector<16x128xf32>
    %294 = arith.mulf %278, %286 : vector<16x128xf32>
    %295 = arith.addf %293, %294 : vector<16x128xf32>
    %296 = math.tanh %295 : vector<16x128xf32>
    %297 = arith.mulf %292, %296 : vector<16x128xf32>
    %298 = arith.index_cast %c7_i32 : i32 to index
    %c0_93 = arith.constant 0 : index
    %c0_94 = arith.constant 0 : index
    %299 = vector.load %arg11[%298, %c0_93, %c0_94] : memref<8x16x128xf32, #tpu.memory_space<vmem>>, vector<1x16x128xf32>
    %300 = vector.shape_cast %299 : vector<1x16x128xf32> to vector<16x128xf32>
    %301 = vector.shape_cast %297 : vector<16x128xf32> to vector<1x16x128xf32>
    tpu.vector_store %arg11[%298, %c0_93, %c0_94], %301 {strides = array<i32>} : memref<8x16x128xf32, #tpu.memory_space<vmem>>, vector<1x16x128xf32>,
    %c8_i32 = arith.constant 8 : i32
    %c0_95 = arith.constant 0 : index
    %c0_96 = arith.constant 0 : index
    %302 = vector.load %arg8[%c0_95, %c0_96] : memref<16x128xf32, #tpu.memory_space<vmem>>, vector<16x128xf32>
    tpu.vector_store %arg8[%c0_95, %c0_96], %297 {strides = array<i32>} : memref<16x128xf32, #tpu.memory_space<vmem>>, vector<16x128xf32>,
    %c0_97 = arith.constant 0 : index
    %c0_98 = arith.constant 0 : index
    %303 = vector.load %arg9[%c0_97, %c0_98] : memref<16x128xf32, #tpu.memory_space<vmem>>, vector<16x128xf32>
    tpu.vector_store %arg9[%c0_97, %c0_98], %295 {strides = array<i32>} : memref<16x128xf32, #tpu.memory_space<vmem>>, vector<16x128xf32>,
    %c0_99 = arith.constant 0 : index
    %c0_100 = arith.constant 0 : index
    %c0_101 = arith.constant 0 : index
    %304 = vector.load %arg11[%c0_99, %c0_100, %c0_101] : memref<8x16x128xf32, #tpu.memory_space<vmem>>, vector<8x16x128xf32>
    %305 = vector.shape_cast %304 : vector<8x16x128xf32> to vector<128x128xf32>
    %306 = arith.truncf %305 : vector<128x128xf32> to vector<128x128xbf16>
    %c0_102 = arith.constant 0 : index
    %c0_103 = arith.constant 0 : index
    %307 = vector.load %arg5[%c0_102, %c0_103] : memref<128x128xbf16, #tpu.memory_space<vmem>>, vector<128x128xbf16>
    %cst_104 = arith.constant dense<0.000000e+00> : vector<128x128xf32>
    %308 = tpu.matmul %306, %307, %cst_104 {dimension_numbers = #tpu.dot_dimension_numbers<[1], [0], [0], [1], [0, 0, 1, 1], [], []>} : vector<128x128xbf16>, vector<128x128xbf16>, vector<128x128xf32> -> vector<128x128xf32>
    %c0_105 = arith.constant 0 : index
    %c0_106 = arith.constant 0 : index
    %309 = vector.load %arg6[%c0_105, %c0_106] : memref<1x128xf32, #tpu.memory_space<vmem>>, vector<1x128xf32>
    %310 = vector.broadcast %309 : vector<1x128xf32> to vector<128x128xf32>
    %311 = arith.addf %308, %310 : vector<128x128xf32>
    %312 = vector.shape_cast %311 : vector<128x128xf32> to vector<8x16x128xf32>
    %c0_107 = arith.constant 0 : index
    %c0_108 = arith.constant 0 : index
    %c0_109 = arith.constant 0 : index
    %313 = vector.load %arg7[%c0_107, %c0_108, %c0_109] : memref<8x16x128xf32, #tpu.memory_space<vmem>>, vector<8x16x128xf32>
    tpu.vector_store %arg7[%c0_107, %c0_108, %c0_109], %312 {strides = array<i32>} : memref<8x16x128xf32, #tpu.memory_space<vmem>>, vector<8x16x128xf32>,
    return
  }
  func.func @transform_0(%arg0: i32) -> (i32, i32, i32) {
    %c0_i32 = arith.constant 0 : i32
    %c0_i32_0 = arith.constant 0 : i32
    %c0_i32_1 = arith.constant 0 : i32
    return %arg0, %c0_i32, %c0_i32_0 : i32, i32, i32
  }
  func.func @transform_1(%arg0: i32) -> (i32, i32) {
    %c0_i32 = arith.constant 0 : i32
    %c0_i32_0 = arith.constant 0 : i32
    %c0_i32_1 = arith.constant 0 : i32
    return %c0_i32, %c0_i32_0 : i32, i32
  }
  func.func @transform_2(%arg0: i32) -> (i32, i32) {
    %c0_i32 = arith.constant 0 : i32
    %c0_i32_0 = arith.constant 0 : i32
    %c0_i32_1 = arith.constant 0 : i32
    return %c0_i32, %c0_i32_0 : i32, i32
  }
  func.func @transform_3(%arg0: i32) -> (i32, i32) {
    %c0_i32 = arith.constant 0 : i32
    %c0_i32_0 = arith.constant 0 : i32
    %c0_i32_1 = arith.constant 0 : i32
    return %c0_i32, %c0_i32_0 : i32, i32
  }
  func.func @transform_4(%arg0: i32) -> (i32, i32) {
    %c0_i32 = arith.constant 0 : i32
    %c0_i32_0 = arith.constant 0 : i32
    %c0_i32_1 = arith.constant 0 : i32
    return %c0_i32, %c0_i32_0 : i32, i32
  }
  func.func @transform_5(%arg0: i32) -> (i32, i32) {
    %c0_i32 = arith.constant 0 : i32
    %c0_i32_0 = arith.constant 0 : i32
    %c0_i32_1 = arith.constant 0 : i32
    return %c0_i32, %c0_i32_0 : i32, i32
  }
  func.func @transform_6(%arg0: i32) -> (i32, i32, i32) {
    %c0_i32 = arith.constant 0 : i32
    %c0_i32_0 = arith.constant 0 : i32
    %c0_i32_1 = arith.constant 0 : i32
    return %arg0, %c0_i32, %c0_i32_0 : i32, i32, i32
  }
}

</mosaic_0001>

<llo_original>
// kernel: tpu_custom_call.1
$region0: #{tpu_custom_call.1}
  #allocation0 [shape = 'u32[]', space=smem, size = 0x4, offset = 0x4, fixed_abs, tag = 'smem constant byte address 0x4 - core index']
  #allocation1 [shape = 'u32[144,128]{1,0:T(1,128)}', space=vmem, size = 0x12000, scoped, tag = 'internal scratch']
  #allocation2 [shape = 'f32[16,128]{1,0:T(8,128)}', space=vmem, size = 0x2000, scoped, tag = 'scratch operand']
  #allocation3 [shape = 'f32[16,128]{1,0:T(8,128)}', space=vmem, size = 0x2000, scoped, tag = 'scratch operand']
  #allocation4 [shape = 'f32[8,16,512]{2,1,0:T(8,128)}', space=vmem, size = 0x40000, scoped, tag = 'scratch operand']
  #allocation5 [shape = 'f32[8,16,128]{2,1,0:T(8,128)}', space=vmem, size = 0x10000, scoped, tag = 'scratch operand']
  %s0 = inlined_call_operand.hbm [shape: bf16[8,16,128], index: 0, kind: input, shape index: {}]
  %s1 = inlined_call_operand.hbm [shape: bf16[128,512], index: 1, kind: input, shape index: {}]
  %s2 = inlined_call_operand.hbm [shape: bf16[128,512], index: 2, kind: input, shape index: {}]
  %s3 = inlined_call_operand.vmem [shape: f32[1,512], index: 3, kind: input, shape index: {}]
  %s4 = inlined_call_operand.hbm [shape: bf16[128,128], index: 4, kind: input, shape index: {}]
  %s5 = inlined_call_operand.vmem [shape: f32[1,128], index: 5, kind: input, shape index: {}]
  %s6 = inlined_call_operand.hbm [shape: f32[8,16,128], index: 6, kind: output, shape index: {}]
  %s7 = sld [smem:[#allocation0]]
  $region54: #{tpu_custom_call.1} parent=0
    _
  %s9 = ssub.s32 1, %s7
  %s10 = scalar_select 0, %s9, %s7
  $region1: #{tpu_custom_call.1} parent=0
    #allocation6 [shape = 'u8[32768]{0}', space=vmem, size = 0x8000, scoped, tag = 'input window, operand 0, single buffered']
    #allocation7 [shape = 's32[1]{0}', space=sflag, size = 0x4, scoped, tag = 'scoped memory for tpu_custom_call.1']
    #allocation8 [shape = 's32[1]{0}', space=sflag, size = 0x4, scoped, tag = 'scoped memory for tpu_custom_call.1']
    #allocation9 [shape = 'u8[131072]{0}', space=vmem, size = 0x20000, scoped, tag = 'input window, operand 1, single buffered']
    #allocation10 [shape = 's32[1]{0}', space=sflag, size = 0x4, scoped, tag = 'scoped memory for tpu_custom_call.1']
    #allocation11 [shape = 'u8[131072]{0}', space=vmem, size = 0x20000, scoped, tag = 'input window, operand 2, single buffered']
    #allocation12 [shape = 'u8[32768]{0}', space=vmem, size = 0x8000, scoped, tag = 'input window, operand 4, single buffered']
    #allocation13 [shape = 's32[1]{0}', space=sflag, size = 0x4, scoped, tag = 'scoped memory for tpu_custom_call.1']
    #allocation14 [shape = 'u8[65536]{0}', space=vmem, size = 0x10000, scoped, tag = 'output window, operand 0, single buffered']
    %11 = vsyncpa [#allocation7], 0
    %12 = vsyncpa [#allocation10], 0
    %13 = vsyncpa [#allocation13], 0
    %14 = vsyncpa [#allocation8], 0
    // Predicated region
    $region2: #{tpu_custom_call.1} parent=1 // pred_check
      _
    $region3: #{tpu_custom_call.1} parent=1 // pred_check_branch
      %16 = sbr.rel (0) target = $region5
    $region4: #{tpu_custom_call.1} parent=1 // pred_region
      %s18 = ssub.s32 1024, 1024
      %19 = vsyncadd [#allocation7], %s18
      %s20 = sshll.u32 [#allocation6], 4
      %s21 = int_to_ptr.vmem [resolvable:$true] %s20
      %26 = dma.hbm_to_vmem [thread:$0]  %s0, 1024, %s21, [#allocation7], 64, 64, 4
    $region5: #{tpu_custom_call.1} parent=1 // pred_fallthru
      _
    // Predicated region
    $region6: #{tpu_custom_call.1} parent=1 // pred_check
      _
    $region7: #{tpu_custom_call.1} parent=1 // pred_check_branch
      %28 = sbr.rel (0) target = $region9
    $region8: #{tpu_custom_call.1} parent=1 // pred_region
      %s30 = ssub.s32 4096, 4096
      %31 = vsyncadd [#allocation10], %s30
      %s32 = sshll.u32 [#allocation9], 4
      %s33 = int_to_ptr.vmem [resolvable:$true] %s32
      %38 = dma.hbm_to_vmem [thread:$0]  %s1, 4096, %s33, [#allocation10], 256, 256, 16
    $region9: #{tpu_custom_call.1} parent=1 // pred_fallthru
      _
    // Predicated region
    $region10: #{tpu_custom_call.1} parent=1 // pred_check
      _
    $region11: #{tpu_custom_call.1} parent=1 // pred_check_branch
      %40 = sbr.rel (0) target = $region13
    $region12: #{tpu_custom_call.1} parent=1 // pred_region
      %s42 = ssub.s32 4096, 4096
      %43 = vsyncadd [#allocation10], %s42
      %s44 = sshll.u32 [#allocation11], 4
      %s45 = int_to_ptr.vmem [resolvable:$true] %s44
      %50 = dma.hbm_to_vmem [thread:$0]  %s2, 4096, %s45, [#allocation10], 256, 256, 16
    $region13: #{tpu_custom_call.1} parent=1 // pred_fallthru
      _
    // Predicated region
    $region14: #{tpu_custom_call.1} parent=1 // pred_check
      _
    $region15: #{tpu_custom_call.1} parent=1 // pred_check_branch
      %52 = sbr.rel (0) target = $region17
    $region16: #{tpu_custom_call.1} parent=1 // pred_region
      _
    $region17: #{tpu_custom_call.1} parent=1 // pred_fallthru
      _
    // Predicated region
    $region18: #{tpu_custom_call.1} parent=1 // pred_check
      _
    $region19: #{tpu_custom_call.1} parent=1 // pred_check_branch
      %54 = sbr.rel (0) target = $region21
    $region20: #{tpu_custom_call.1} parent=1 // pred_region
      %s56 = ssub.s32 1024, 1024
      %57 = vsyncadd [#allocation13], %s56
      %s58 = sshll.u32 [#allocation12], 4
      %s59 = int_to_ptr.vmem [resolvable:$true] %s58
      %64 = dma.hbm_to_vmem [thread:$0]  %s4, 1024, %s59, [#allocation13], 64, 64, 4
    $region21: #{tpu_custom_call.1} parent=1 // pred_fallthru
      _
    // Predicated region
    $region22: #{tpu_custom_call.1} parent=1 // pred_check
      _
    $region23: #{tpu_custom_call.1} parent=1 // pred_check_branch
      %66 = sbr.rel (0) target = $region25
    $region24: #{tpu_custom_call.1} parent=1 // pred_region
      _
    $region25: #{tpu_custom_call.1} parent=1 // pred_fallthru
      _
    // Predicated region
    $region26: #{tpu_custom_call.1} parent=1 // pred_check
      _
    $region27: #{tpu_custom_call.1} parent=1 // pred_check_branch
      %68 = sbr.rel (0) target = $region29
    $region28: #{tpu_custom_call.1} parent=1 // pred_region
      %69 = dma.done [#allocation7], 1024
    $region29: #{tpu_custom_call.1} parent=1 // pred_fallthru
      _
    // Predicated region
    $region30: #{tpu_custom_call.1} parent=1 // pred_check
      _
    $region31: #{tpu_custom_call.1} parent=1 // pred_check_branch
      %71 = sbr.rel (0) target = $region33
    $region32: #{tpu_custom_call.1} parent=1 // pred_region
      %72 = dma.done [#allocation10], 4096
    $region33: #{tpu_custom_call.1} parent=1 // pred_fallthru
      _
    // Predicated region
    $region34: #{tpu_custom_call.1} parent=1 // pred_check
      _
    $region35: #{tpu_custom_call.1} parent=1 // pred_check_branch
      %74 = sbr.rel (0) target = $region37
    $region36: #{tpu_custom_call.1} parent=1 // pred_region
      %75 = dma.done [#allocation10], 4096
    $region37: #{tpu_custom_call.1} parent=1 // pred_fallthru
      _
    // Predicated region
    $region38: #{tpu_custom_call.1} parent=1 // pred_check
      _
    $region39: #{tpu_custom_call.1} parent=1 // pred_check_branch
      %77 = sbr.rel (0) target = $region41
    $region40: #{tpu_custom_call.1} parent=1 // pred_region
      %78 = dma.done [#allocation13], 1024
    $region41: #{tpu_custom_call.1} parent=1 // pred_fallthru
      _
    %p80 = scmp.eq.s32.totalorder 0, 0
    // Predicated region
    $region42: #{tpu_custom_call.1} parent=1 // pred_check
      %p81 = pneg %p80
    $region43: #{tpu_custom_call.1} parent=1 // pred_check_branch
      %83 = sbr.rel (%p81) target = $region45
    $region44: #{tpu_custom_call.1} parent=1 // pred_region
      %84 = vst [vmem:[#allocation2] sm:$0xff] 0.0
      %85 = vst [vmem:[#allocation2 + $0x8] sm:$0xff] 0.0
      %86 = vst [vmem:[#allocation3] sm:$0xff] 0.0
      %87 = vst [vmem:[#allocation3 + $0x8] sm:$0xff] 0.0
    $region45: #{tpu_custom_call.1} parent=1 // pred_fallthru
      _
    %v88 = vld [vmem:[#allocation6] sm:$0xf]
    %v89 = vld [vmem:[#allocation6 + $0x4] sm:$0xf]
    %v90 = vld [vmem:[#allocation6 + $0x8] sm:$0xf]
    %v91 = vld [vmem:[#allocation6 + $0xc] sm:$0xf]
    %v92 = vld [vmem:[#allocation6 + $0x10] sm:$0xf]
    %v93 = vld [vmem:[#allocation6 + $0x14] sm:$0xf]
    %v94 = vld [vmem:[#allocation6 + $0x18] sm:$0xf]
    %v95 = vld [vmem:[#allocation6 + $0x1c] sm:$0xf]
    %v96 = vld [vmem:[#allocation6 + $0x20] sm:$0xf]
    %v97 = vld [vmem:[#allocation6 + $0x24] sm:$0xf]
    %v98 = vld [vmem:[#allocation6 + $0x28] sm:$0xf]
    %v99 = vld [vmem:[#allocation6 + $0x2c] sm:$0xf]
    %v100 = vld [vmem:[#allocation6 + $0x30] sm:$0xf]
    %v101 = vld [vmem:[#allocation6 + $0x34] sm:$0xf]
    %v102 = vld [vmem:[#allocation6 + $0x38] sm:$0xf]
    %v103 = vld [vmem:[#allocation6 + $0x3c] sm:$0xf]
    %v104 = vld [vmem:[#allocation9] sm:$0xff]
    %v105 = vld [vmem:[#allocation9 + $0x8] sm:$0xff]
    %v106 = vld [vmem:[#allocation9 + $0x10] sm:$0xff]
    %v107 = vld [vmem:[#allocation9 + $0x18] sm:$0xff]
    %v108 = vld [vmem:[#allocation9 + $0x20] sm:$0xff]
    %v109 = vld [vmem:[#allocation9 + $0x28] sm:$0xff]
    %v110 = vld [vmem:[#allocation9 + $0x30] sm:$0xff]
    %v111 = vld [vmem:[#allocation9 + $0x38] sm:$0xff]
    %v112 = vld [vmem:[#allocation9 + $0x40] sm:$0xff]
    %v113 = vld [vmem:[#allocation9 + $0x48] sm:$0xff]
    %v114 = vld [vmem:[#allocation9 + $0x50] sm:$0xff]
    %v115 = vld [vmem:[#allocation9 + $0x58] sm:$0xff]
    %v116 = vld [vmem:[#allocation9 + $0x60] sm:$0xff]
    %v117 = vld [vmem:[#allocation9 + $0x68] sm:$0xff]
    %v118 = vld [vmem:[#allocation9 + $0x70] sm:$0xff]
    %v119 = vld [vmem:[#allocation9 + $0x78] sm:$0xff]
    %v120 = vld [vmem:[#allocation9 + $0x80] sm:$0xff]
    %v121 = vld [vmem:[#allocation9 + $0x88] sm:$0xff]
    %v122 = vld [vmem:[#allocation9 + $0x90] sm:$0xff]
    %v123 = vld [vmem:[#allocation9 + $0x98] sm:$0xff]
    %v124 = vld [vmem:[#allocation9 + $0xa0] sm:$0xff]
    %v125 = vld [vmem:[#allocation9 + $0xa8] sm:$0xff]
    %v126 = vld [vmem:[#allocation9 + $0xb0] sm:$0xff]
    %v127 = vld [vmem:[#allocation9 + $0xb8] sm:$0xff]
    %v128 = vld [vmem:[#allocation9 + $0xc0] sm:$0xff]
    %v129 = vld [vmem:[#allocation9 + $0xc8] sm:$0xff]
    %v130 = vld [vmem:[#allocation9 + $0xd0] sm:$0xff]
    %v131 = vld [vmem:[#allocation9 + $0xd8] sm:$0xff]
    %v132 = vld [vmem:[#allocation9 + $0xe0] sm:$0xff]
    %v133 = vld [vmem:[#allocation9 + $0xe8] sm:$0xff]
    %v134 = vld [vmem:[#allocation9 + $0xf0] sm:$0xff]
    %v135 = vld [vmem:[#allocation9 + $0xf8] sm:$0xff]
    %v136 = vld [vmem:[%s3] sm:$0xf]
    %v138 = vlaneseq
    %v139 = vshrl.u32 %v138, 7
    %v140 = vsub.s32 0, %v139
    %v141 = vrot.slane %v136, %v140
    %v142 = vlaneseq
    %v143 = vshrl.u32 %v142, 7
    %v144 = vsub.s32 1, %v143
    %v145 = vrot.slane %v136, %v144
    %v146 = vlaneseq
    %v147 = vshrl.u32 %v146, 7
    %v148 = vsub.s32 2, %v147
    %v149 = vrot.slane %v136, %v148
    %v150 = vlaneseq
    %v151 = vshrl.u32 %v150, 7
    %v152 = vsub.s32 3, %v151
    %v153 = vrot.slane %v136, %v152
    %v174 = vunpack.c.l.b16 %v88
    %v175 = vunpack.c.l.b16 %v89
    %v176 = vunpack.c.l.b16 %v90
    %v177 = vunpack.c.l.b16 %v91
    %v178 = vunpack.c.l.b16 %v92
    %v179 = vunpack.c.l.b16 %v93
    %v180 = vunpack.c.l.b16 %v94
    %v181 = vunpack.c.l.b16 %v95
    %v182 = vunpack.c.l.b16 %v96
    %v183 = vunpack.c.l.b16 %v97
    %v184 = vunpack.c.l.b16 %v98
    %v185 = vunpack.c.l.b16 %v99
    %v186 = vunpack.c.l.b16 %v100
    %v187 = vunpack.c.l.b16 %v101
    %v188 = vunpack.c.l.b16 %v102
    %v189 = vunpack.c.l.b16 %v103
    %v190 = vpack.c.b16 %v175, %v174
    %v191 = vpack.c.b16 %v177, %v176
    %v192 = vpack.c.b16 %v179, %v178
    %v193 = vpack.c.b16 %v181, %v180
    %v194 = vpack.c.b16 %v183, %v182
    %v195 = vpack.c.b16 %v185, %v184
    %v196 = vpack.c.b16 %v187, %v186
    %v197 = vpack.c.b16 %v189, %v188
    %v238 = vunpack.c.l.b16 %v104
    %v239 = vunpack.c.h.b16 %v104
    %v240 = vunpack.c.l.b16 %v105
    %v241 = vunpack.c.h.b16 %v105
    %v242 = vunpack.c.l.b16 %v106
    %v243 = vunpack.c.h.b16 %v106
    %v244 = vunpack.c.l.b16 %v107
    %v245 = vunpack.c.h.b16 %v107
    %v246 = vunpack.c.l.b16 %v108
    %v247 = vunpack.c.h.b16 %v108
    %v248 = vunpack.c.l.b16 %v109
    %v249 = vunpack.c.h.b16 %v109
    %v250 = vunpack.c.l.b16 %v110
    %v251 = vunpack.c.h.b16 %v110
    %v252 = vunpack.c.l.b16 %v111
    %v253 = vunpack.c.h.b16 %v111
    %v254 = vunpack.c.l.b16 %v112
    %v255 = vunpack.c.h.b16 %v112
    %v256 = vunpack.c.l.b16 %v113
    %v257 = vunpack.c.h.b16 %v113
    %v258 = vunpack.c.l.b16 %v114
    %v259 = vunpack.c.h.b16 %v114
    %v260 = vunpack.c.l.b16 %v115
    %v261 = vunpack.c.h.b16 %v115
    %v262 = vunpack.c.l.b16 %v116
    %v263 = vunpack.c.h.b16 %v116
    %v264 = vunpack.c.l.b16 %v117
    %v265 = vunpack.c.h.b16 %v117
    %v266 = vunpack.c.l.b16 %v118
    %v267 = vunpack.c.h.b16 %v118
    %v268 = vunpack.c.l.b16 %v119
    %v269 = vunpack.c.h.b16 %v119
    %v270 = vunpack.c.l.b16 %v120
    %v271 = vunpack.c.h.b16 %v120
    %v272 = vunpack.c.l.b16 %v121
    %v273 = vunpack.c.h.b16 %v121
    %v274 = vunpack.c.l.b16 %v122
    %v275 = vunpack.c.h.b16 %v122
    %v276 = vunpack.c.l.b16 %v123
    %v277 = vunpack.c.h.b16 %v123
    %v278 = vunpack.c.l.b16 %v124
    %v279 = vunpack.c.h.b16 %v124
    %v280 = vunpack.c.l.b16 %v125
    %v281 = vunpack.c.h.b16 %v125
    %v282 = vunpack.c.l.b16 %v126
    %v283 = vunpack.c.h.b16 %v126
    %v284 = vunpack.c.l.b16 %v127
    %v285 = vunpack.c.h.b16 %v127
    %v286 = vunpack.c.l.b16 %v128
    %v287 = vunpack.c.h.b16 %v128
    %v288 = vunpack.c.l.b16 %v129
    %v289 = vunpack.c.h.b16 %v129
    %v290 = vunpack.c.l.b16 %v130
    %v291 = vunpack.c.h.b16 %v130
    %v292 = vunpack.c.l.b16 %v131
    %v293 = vunpack.c.h.b16 %v131
    %v294 = vunpack.c.l.b16 %v132
    %v295 = vunpack.c.h.b16 %v132
    %v296 = vunpack.c.l.b16 %v133
    %v297 = vunpack.c.h.b16 %v133
    %v298 = vunpack.c.l.b16 %v134
    %v299 = vunpack.c.h.b16 %v134
    %v300 = vunpack.c.l.b16 %v135
    %v301 = vunpack.c.h.b16 %v135
    %v302 = vpack.c.b16 %v242, %v238
    %v303 = vpack.c.b16 %v243, %v239
    %v304 = vpack.c.b16 %v244, %v240
    %v305 = vpack.c.b16 %v245, %v241
    %v306 = vpack.c.b16 %v250, %v246
    %v307 = vpack.c.b16 %v251, %v247
    %v308 = vpack.c.b16 %v252, %v248
    %v309 = vpack.c.b16 %v253, %v249
    %v310 = vpack.c.b16 %v258, %v254
    %v311 = vpack.c.b16 %v259, %v255
    %v312 = vpack.c.b16 %v260, %v256
    %v313 = vpack.c.b16 %v261, %v257
    %v314 = vpack.c.b16 %v266, %v262
    %v315 = vpack.c.b16 %v267, %v263
    %v316 = vpack.c.b16 %v268, %v264
    %v317 = vpack.c.b16 %v269, %v265
    %v318 = vpack.c.b16 %v274, %v270
    %v319 = vpack.c.b16 %v275, %v271
    %v320 = vpack.c.b16 %v276, %v272
    %v321 = vpack.c.b16 %v277, %v273
    %v322 = vpack.c.b16 %v282, %v278
    %v323 = vpack.c.b16 %v283, %v279
    %v324 = vpack.c.b16 %v284, %v280
    %v325 = vpack.c.b16 %v285, %v281
    %v326 = vpack.c.b16 %v290, %v286
    %v327 = vpack.c.b16 %v291, %v287
    %v328 = vpack.c.b16 %v292, %v288
    %v329 = vpack.c.b16 %v293, %v289
    %v330 = vpack.c.b16 %v298, %v294
    %v331 = vpack.c.b16 %v299, %v295
    %v332 = vpack.c.b16 %v300, %v296
    %v333 = vpack.c.b16 %v301, %v297
    %366 = vmatprep.subr.bf16.mxu0 %v303
    %367 = vmatpush1.bf16.msra.mxu0 %v302
    %368 = vmatprep.subr.bf16.mxu0 %v307
    %369 = vmatpush1.bf16.msra.mxu0 %v306
    %370 = vmatprep.subr.bf16.mxu0 %v311
    %371 = vmatpush1.bf16.msra.mxu0 %v310
    %372 = vmatprep.subr.bf16.mxu0 %v315
    %373 = vmatpush1.bf16.msra.mxu0 %v314
    %374 = vmatprep.subr.bf16.mxu0 %v319
    %375 = vmatpush1.bf16.msra.mxu0 %v318
    %376 = vmatprep.subr.bf16.mxu0 %v323
    %377 = vmatpush1.bf16.msra.mxu0 %v322
    %378 = vmatprep.subr.bf16.mxu0 %v327
    %379 = vmatpush1.bf16.msra.mxu0 %v326
    %380 = vmatprep.subr.bf16.mxu0 %v331
    %381 = vmatpush1.bf16.msra.mxu0 %v330
    %382 = vmatprep.subr.bf16.mxu0 0
    %383 = vmatpush1.bf16.msra.mxu0 0
    %384 = vmatprep.subr.bf16.mxu0 0
    %385 = vmatpush1.bf16.msra.mxu0 0
    %386 = vmatprep.subr.bf16.mxu0 0
    %387 = vmatpush1.bf16.msra.mxu0 0
    %388 = vmatprep.subr.bf16.mxu0 0
    %389 = vmatpush1.bf16.msra.mxu0 0
    %390 = vmatprep.subr.bf16.mxu0 0
    %391 = vmatpush1.bf16.msra.mxu0 0
    %392 = vmatprep.subr.bf16.mxu0 0
    %393 = vmatpush1.bf16.msra.mxu0 0
    %394 = vmatprep.subr.bf16.mxu0 0
    %395 = vmatpush1.bf16.msra.mxu0 0
    %396 = vmatprep.subr.bf16.mxu0 0
    %397 = vmatpush1.bf16.msra.mxu0 0
    %398 = vmatprep.mubr.bf16.mxu0 0
    %399 = vmatmul.mubr.bf16.gmra.mrb[0].mxu0 %v190
    %v400 = vpop.f32.mrb[0].mxu0
    %v401 = vadd.f32 %v141, %v400
    %v402 = vpop.f32.mrb[0].mxu0
    %v403 = vadd.f32 %v145, %v402
    %v404 = vpop.f32.mrb[0].mxu0
    %v405 = vadd.f32 %v141, %v404
    %v406 = vpop.f32.mrb[0].mxu0
    %v407 = vadd.f32 %v145, %v406
    %408 = vmatprep.mubr.bf16.mxu0 0
    %409 = vmatmul.mubr.bf16.gmra.mrb[0].mxu0 %v191
    %v410 = vpop.f32.mrb[0].mxu0
    %v411 = vadd.f32 %v141, %v410
    %v412 = vpop.f32.mrb[0].mxu0
    %v413 = vadd.f32 %v145, %v412
    %v414 = vpop.f32.mrb[0].mxu0
    %v415 = vadd.f32 %v141, %v414
    %v416 = vpop.f32.mrb[0].mxu0
    %v417 = vadd.f32 %v145, %v416
    %418 = vmatprep.mubr.bf16.mxu0 0
    %419 = vmatmul.mubr.bf16.gmra.mrb[0].mxu0 %v192
    %v420 = vpop.f32.mrb[0].mxu0
    %v421 = vadd.f32 %v141, %v420
    %v422 = vpop.f32.mrb[0].mxu0
    %v423 = vadd.f32 %v145, %v422
    %v424 = vpop.f32.mrb[0].mxu0
    %v425 = vadd.f32 %v141, %v424
    %v426 = vpop.f32.mrb[0].mxu0
    %v427 = vadd.f32 %v145, %v426
    %428 = vmatprep.mubr.bf16.mxu0 0
    %429 = vmatmul.mubr.bf16.gmra.mrb[0].mxu0 %v193
    %v430 = vpop.f32.mrb[0].mxu0
    %v431 = vadd.f32 %v141, %v430
    %v432 = vpop.f32.mrb[0].mxu0
    %v433 = vadd.f32 %v145, %v432
    %v434 = vpop.f32.mrb[0].mxu0
    %v435 = vadd.f32 %v141, %v434
    %v436 = vpop.f32.mrb[0].mxu0
    %v437 = vadd.f32 %v145, %v436
    %438 = vmatprep.mubr.bf16.mxu0 0
    %439 = vmatmul.mubr.bf16.gmra.mrb[0].mxu0 %v194
    %v440 = vpop.f32.mrb[0].mxu0
    %v441 = vadd.f32 %v141, %v440
    %v442 = vpop.f32.mrb[0].mxu0
    %v443 = vadd.f32 %v145, %v442
    %v444 = vpop.f32.mrb[0].mxu0
    %v445 = vadd.f32 %v141, %v444
    %v446 = vpop.f32.mrb[0].mxu0
    %v447 = vadd.f32 %v145, %v446
    %448 = vmatprep.mubr.bf16.mxu0 0
    %449 = vmatmul.mubr.bf16.gmra.mrb[0].mxu0 %v195
    %v450 = vpop.f32.mrb[0].mxu0
    %v451 = vadd.f32 %v141, %v450
    %v452 = vpop.f32.mrb[0].mxu0
    %v453 = vadd.f32 %v145, %v452
    %v454 = vpop.f32.mrb[0].mxu0
    %v455 = vadd.f32 %v141, %v454
    %v456 = vpop.f32.mrb[0].mxu0
    %v457 = vadd.f32 %v145, %v456
    %458 = vmatprep.mubr.bf16.mxu0 0
    %459 = vmatmul.mubr.bf16.gmra.mrb[0].mxu0 %v196
    %v460 = vpop.f32.mrb[0].mxu0
    %v461 = vadd.f32 %v141, %v460
    %v462 = vpop.f32.mrb[0].mxu0
    %v463 = vadd.f32 %v145, %v462
    %v464 = vpop.f32.mrb[0].mxu0
    %v465 = vadd.f32 %v141, %v464
    %v466 = vpop.f32.mrb[0].mxu0
    %v467 = vadd.f32 %v145, %v466
    %468 = vmatprep.mubr.bf16.mxu0 0
    %469 = vmatmul.mubr.bf16.gmra.mrb[0].mxu0 %v197
    %v470 = vpop.f32.mrb[0].mxu0
    %v471 = vadd.f32 %v141, %v470
    %v472 = vpop.f32.mrb[0].mxu0
    %v473 = vadd.f32 %v145, %v472
    %v474 = vpop.f32.mrb[0].mxu0
    %v475 = vadd.f32 %v141, %v474
    %v476 = vpop.f32.mrb[0].mxu0
    %v477 = vadd.f32 %v145, %v476
    %478 = vdwg.mxu0
    %479 = vmatprep.subr.bf16.mxu0 %v305
    %480 = vmatpush1.bf16.msra.mxu0 %v304
    %481 = vmatprep.subr.bf16.mxu0 %v309
    %482 = vmatpush1.bf16.msra.mxu0 %v308
    %483 = vmatprep.subr.bf16.mxu0 %v313
    %484 = vmatpush1.bf16.msra.mxu0 %v312
    %485 = vmatprep.subr.bf16.mxu0 %v317
    %486 = vmatpush1.bf16.msra.mxu0 %v316
    %487 = vmatprep.subr.bf16.mxu0 %v321
    %488 = vmatpush1.bf16.msra.mxu0 %v320
    %489 = vmatprep.subr.bf16.mxu0 %v325
    %490 = vmatpush1.bf16.msra.mxu0 %v324
    %491 = vmatprep.subr.bf16.mxu0 %v329
    %492 = vmatpush1.bf16.msra.mxu0 %v328
    %493 = vmatprep.subr.bf16.mxu0 %v333
    %494 = vmatpush1.bf16.msra.mxu0 %v332
    %495 = vmatprep.subr.bf16.mxu0 0
    %496 = vmatpush1.bf16.msra.mxu0 0
    %497 = vmatprep.subr.bf16.mxu0 0
    %498 = vmatpush1.bf16.msra.mxu0 0
    %499 = vmatprep.subr.bf16.mxu0 0
    %500 = vmatpush1.bf16.msra.mxu0 0
    %501 = vmatprep.subr.bf16.mxu0 0
    %502 = vmatpush1.bf16.msra.mxu0 0
    %503 = vmatprep.subr.bf16.mxu0 0
    %504 = vmatpush1.bf16.msra.mxu0 0
    %505 = vmatprep.subr.bf16.mxu0 0
    %506 = vmatpush1.bf16.msra.mxu0 0
    %507 = vmatprep.subr.bf16.mxu0 0
    %508 = vmatpush1.bf16.msra.mxu0 0
    %509 = vmatprep.subr.bf16.mxu0 0
    %510 = vmatpush1.bf16.msra.mxu0 0
    %511 = vmatprep.mubr.bf16.mxu0 0
    %512 = vmatmul.mubr.bf16.gmra.mrb[0].mxu0 %v190
    %v513 = vpop.f32.mrb[0].mxu0
    %v514 = vadd.f32 %v149, %v513
    %v515 = vpop.f32.mrb[0].mxu0
    %v516 = vadd.f32 %v153, %v515
    %v517 = vpop.f32.mrb[0].mxu0
    %v518 = vadd.f32 %v149, %v517
    %v519 = vpop.f32.mrb[0].mxu0
    %v520 = vadd.f32 %v153, %v519
    %521 = vmatprep.mubr.bf16.mxu0 0
    %522 = vmatmul.mubr.bf16.gmra.mrb[0].mxu0 %v191
    %v523 = vpop.f32.mrb[0].mxu0
    %v524 = vadd.f32 %v149, %v523
    %v525 = vpop.f32.mrb[0].mxu0
    %v526 = vadd.f32 %v153, %v525
    %v527 = vpop.f32.mrb[0].mxu0
    %v528 = vadd.f32 %v149, %v527
    %v529 = vpop.f32.mrb[0].mxu0
    %v530 = vadd.f32 %v153, %v529
    %531 = vmatprep.mubr.bf16.mxu0 0
    %532 = vmatmul.mubr.bf16.gmra.mrb[0].mxu0 %v192
    %v533 = vpop.f32.mrb[0].mxu0
    %v534 = vadd.f32 %v149, %v533
    %v535 = vpop.f32.mrb[0].mxu0
    %v536 = vadd.f32 %v153, %v535
    %v537 = vpop.f32.mrb[0].mxu0
    %v538 = vadd.f32 %v149, %v537
    %v539 = vpop.f32.mrb[0].mxu0
    %v540 = vadd.f32 %v153, %v539
    %541 = vmatprep.mubr.bf16.mxu0 0
    %542 = vmatmul.mubr.bf16.gmra.mrb[0].mxu0 %v193
    %v543 = vpop.f32.mrb[0].mxu0
    %v544 = vadd.f32 %v149, %v543
    %v545 = vpop.f32.mrb[0].mxu0
    %v546 = vadd.f32 %v153, %v545
    %v547 = vpop.f32.mrb[0].mxu0
    %v548 = vadd.f32 %v149, %v547
    %v549 = vpop.f32.mrb[0].mxu0
    %v550 = vadd.f32 %v153, %v549
    %551 = vmatprep.mubr.bf16.mxu0 0
    %552 = vmatmul.mubr.bf16.gmra.mrb[0].mxu0 %v194
    %v553 = vpop.f32.mrb[0].mxu0
    %v554 = vadd.f32 %v149, %v553
    %v555 = vpop.f32.mrb[0].mxu0
    %v556 = vadd.f32 %v153, %v555
    %v557 = vpop.f32.mrb[0].mxu0
    %v558 = vadd.f32 %v149, %v557
    %v559 = vpop.f32.mrb[0].mxu0
    %v560 = vadd.f32 %v153, %v559
    %561 = vmatprep.mubr.bf16.mxu0 0
    %562 = vmatmul.mubr.bf16.gmra.mrb[0].mxu0 %v195
    %v563 = vpop.f32.mrb[0].mxu0
    %v564 = vadd.f32 %v149, %v563
    %v565 = vpop.f32.mrb[0].mxu0
    %v566 = vadd.f32 %v153, %v565
    %v567 = vpop.f32.mrb[0].mxu0
    %v568 = vadd.f32 %v149, %v567
    %v569 = vpop.f32.mrb[0].mxu0
    %v570 = vadd.f32 %v153, %v569
    %571 = vmatprep.mubr.bf16.mxu0 0
    %572 = vmatmul.mubr.bf16.gmra.mrb[0].mxu0 %v196
    %v573 = vpop.f32.mrb[0].mxu0
    %v574 = vadd.f32 %v149, %v573
    %v575 = vpop.f32.mrb[0].mxu0
    %v576 = vadd.f32 %v153, %v575
    %v577 = vpop.f32.mrb[0].mxu0
    %v578 = vadd.f32 %v149, %v577
    %v579 = vpop.f32.mrb[0].mxu0
    %v580 = vadd.f32 %v153, %v579
    %581 = vmatprep.mubr.bf16.mxu0 0
    %582 = vmatmul.mubr.bf16.gmra.mrb[0].mxu0 %v197
    %v583 = vpop.f32.mrb[0].mxu0
    %v584 = vadd.f32 %v149, %v583
    %v585 = vpop.f32.mrb[0].mxu0
    %v586 = vadd.f32 %v153, %v585
    %v587 = vpop.f32.mrb[0].mxu0
    %v588 = vadd.f32 %v149, %v587
    %v589 = vpop.f32.mrb[0].mxu0
    %v590 = vadd.f32 %v153, %v589
    %591 = vdwg.mxu0
    %592 = vst [vmem:[#allocation4] sm:$0xff] %v401
    %593 = vst [vmem:[#allocation4 + $0x8] sm:$0xff] %v403
    %594 = vst [vmem:[#allocation4 + $0x10] sm:$0xff] %v514
    %595 = vst [vmem:[#allocation4 + $0x18] sm:$0xff] %v516
    %596 = vst [vmem:[#allocation4 + $0x20] sm:$0xff] %v405
    %597 = vst [vmem:[#allocation4 + $0x28] sm:$0xff] %v407
    %598 = vst [vmem:[#allocation4 + $0x30] sm:$0xff] %v518
    %599 = vst [vmem:[#allocation4 + $0x38] sm:$0xff] %v520
    %600 = vst [vmem:[#allocation4 + $0x40] sm:$0xff] %v411
    %601 = vst [vmem:[#allocation4 + $0x48] sm:$0xff] %v413
    %602 = vst [vmem:[#allocation4 + $0x50] sm:$0xff] %v524
    %603 = vst [vmem:[#allocation4 + $0x58] sm:$0xff] %v526
    %604 = vst [vmem:[#allocation4 + $0x60] sm:$0xff] %v415
    %605 = vst [vmem:[#allocation4 + $0x68] sm:$0xff] %v417
    %606 = vst [vmem:[#allocation4 + $0x70] sm:$0xff] %v528
    %607 = vst [vmem:[#allocation4 + $0x78] sm:$0xff] %v530
    %608 = vst [vmem:[#allocation4 + $0x80] sm:$0xff] %v421
    %609 = vst [vmem:[#allocation4 + $0x88] sm:$0xff] %v423
    %610 = vst [vmem:[#allocation4 + $0x90] sm:$0xff] %v534
    %611 = vst [vmem:[#allocation4 + $0x98] sm:$0xff] %v536
    %612 = vst [vmem:[#allocation4 + $0xa0] sm:$0xff] %v425
    %613 = vst [vmem:[#allocation4 + $0xa8] sm:$0xff] %v427
    %614 = vst [vmem:[#allocation4 + $0xb0] sm:$0xff] %v538
    %615 = vst [vmem:[#allocation4 + $0xb8] sm:$0xff] %v540
    %616 = vst [vmem:[#allocation4 + $0xc0] sm:$0xff] %v431
    %617 = vst [vmem:[#allocation4 + $0xc8] sm:$0xff] %v433
    %618 = vst [vmem:[#allocation4 + $0xd0] sm:$0xff] %v544
    %619 = vst [vmem:[#allocation4 + $0xd8] sm:$0xff] %v546
    %620 = vst [vmem:[#allocation4 + $0xe0] sm:$0xff] %v435
    %621 = vst [vmem:[#allocation4 + $0xe8] sm:$0xff] %v437
    %622 = vst [vmem:[#allocation4 + $0xf0] sm:$0xff] %v548
    %623 = vst [vmem:[#allocation4 + $0xf8] sm:$0xff] %v550
    %624 = vst [vmem:[#allocation4 + $0x100] sm:$0xff] %v441
    %625 = vst [vmem:[#allocation4 + $0x108] sm:$0xff] %v443
    %626 = vst [vmem:[#allocation4 + $0x110] sm:$0xff] %v554
    %627 = vst [vmem:[#allocation4 + $0x118] sm:$0xff] %v556
    %628 = vst [vmem:[#allocation4 + $0x120] sm:$0xff] %v445
    %629 = vst [vmem:[#allocation4 + $0x128] sm:$0xff] %v447
    %630 = vst [vmem:[#allocation4 + $0x130] sm:$0xff] %v558
    %631 = vst [vmem:[#allocation4 + $0x138] sm:$0xff] %v560
    %632 = vst [vmem:[#allocation4 + $0x140] sm:$0xff] %v451
    %633 = vst [vmem:[#allocation4 + $0x148] sm:$0xff] %v453
    %634 = vst [vmem:[#allocation4 + $0x150] sm:$0xff] %v564
    %635 = vst [vmem:[#allocation4 + $0x158] sm:$0xff] %v566
    %636 = vst [vmem:[#allocation4 + $0x160] sm:$0xff] %v455
    %637 = vst [vmem:[#allocation4 + $0x168] sm:$0xff] %v457
    %638 = vst [vmem:[#allocation4 + $0x170] sm:$0xff] %v568
    %639 = vst [vmem:[#allocation4 + $0x178] sm:$0xff] %v570
    %640 = vst [vmem:[#allocation4 + $0x180] sm:$0xff] %v461
    %641 = vst [vmem:[#allocation4 + $0x188] sm:$0xff] %v463
    %642 = vst [vmem:[#allocation4 + $0x190] sm:$0xff] %v574
    %643 = vst [vmem:[#allocation4 + $0x198] sm:$0xff] %v576
    %644 = vst [vmem:[#allocation4 + $0x1a0] sm:$0xff] %v465
    %645 = vst [vmem:[#allocation4 + $0x1a8] sm:$0xff] %v467
    %646 = vst [vmem:[#allocation4 + $0x1b0] sm:$0xff] %v578
    %647 = vst [vmem:[#allocation4 + $0x1b8] sm:$0xff] %v580
    %648 = vst [vmem:[#allocation4 + $0x1c0] sm:$0xff] %v471
    %649 = vst [vmem:[#allocation4 + $0x1c8] sm:$0xff] %v473
    %650 = vst [vmem:[#allocation4 + $0x1d0] sm:$0xff] %v584
    %651 = vst [vmem:[#allocation4 + $0x1d8] sm:$0xff] %v586
    %652 = vst [vmem:[#allocation4 + $0x1e0] sm:$0xff] %v475
    %653 = vst [vmem:[#allocation4 + $0x1e8] sm:$0xff] %v477
    %654 = vst [vmem:[#allocation4 + $0x1f0] sm:$0xff] %v588
    %655 = vst [vmem:[#allocation4 + $0x1f8] sm:$0xff] %v590
    %v656 = vld [vmem:[#allocation2] sm:$0xff]
    %v657 = vld [vmem:[#allocation2 + $0x8] sm:$0xff]
    %v658 = vld [vmem:[#allocation3] sm:$0xff]
    %v659 = vld [vmem:[#allocation3 + $0x8] sm:$0xff]
    %v660 = vld [vmem:[#allocation4] sm:$0xff]
    %v661 = vld [vmem:[#allocation4 + $0x8] sm:$0xff]
    %v662 = vld [vmem:[#allocation4 + $0x10] sm:$0xff]
    %v663 = vld [vmem:[#allocation4 + $0x18] sm:$0xff]
    %v664 = vld [vmem:[#allocation4 + $0x20] sm:$0xff]
    %v665 = vld [vmem:[#allocation4 + $0x28] sm:$0xff]
    %v666 = vld [vmem:[#allocation4 + $0x30] sm:$0xff]
    %v667 = vld [vmem:[#allocation4 + $0x38] sm:$0xff]
    %v668 = vpack.c.bf16 %v657, %v656
    %v669 = vld [vmem:[#allocation11] sm:$0xff]
    %v670 = vld [vmem:[#allocation11 + $0x8] sm:$0xff]
    %v671 = vld [vmem:[#allocation11 + $0x10] sm:$0xff]
    %v672 = vld [vmem:[#allocation11 + $0x18] sm:$0xff]
    %v673 = vld [vmem:[#allocation11 + $0x20] sm:$0xff]
    %v674 = vld [vmem:[#allocation11 + $0x28] sm:$0xff]
    %v675 = vld [vmem:[#allocation11 + $0x30] sm:$0xff]
    %v676 = vld [vmem:[#allocation11 + $0x38] sm:$0xff]
    %v677 = vld [vmem:[#allocation11 + $0x40] sm:$0xff]
    %v678 = vld [vmem:[#allocation11 + $0x48] sm:$0xff]
    %v679 = vld [vmem:[#allocation11 + $0x50] sm:$0xff]
    %v680 = vld [vmem:[#allocation11 + $0x58] sm:$0xff]
    %v681 = vld [vmem:[#allocation11 + $0x60] sm:$0xff]
    %v682 = vld [vmem:[#allocation11 + $0x68] sm:$0xff]
    %v683 = vld [vmem:[#allocation11 + $0x70] sm:$0xff]
    %v684 = vld [vmem:[#allocation11 + $0x78] sm:$0xff]
    %v685 = vld [vmem:[#allocation11 + $0x80] sm:$0xff]
    %v686 = vld [vmem:[#allocation11 + $0x88] sm:$0xff]
    %v687 = vld [vmem:[#allocation11 + $0x90] sm:$0xff]
    %v688 = vld [vmem:[#allocation11 + $0x98] sm:$0xff]
    %v689 = vld [vmem:[#allocation11 + $0xa0] sm:$0xff]
    %v690 = vld [vmem:[#allocation11 + $0xa8] sm:$0xff]
    %v691 = vld [vmem:[#allocation11 + $0xb0] sm:$0xff]
    %v692 = vld [vmem:[#allocation11 + $0xb8] sm:$0xff]
    %v693 = vld [vmem:[#allocation11 + $0xc0] sm:$0xff]
    %v694 = vld [vmem:[#allocation11 + $0xc8] sm:$0xff]
    %v695 = vld [vmem:[#allocation11 + $0xd0] sm:$0xff]
    %v696 = vld [vmem:[#allocation11 + $0xd8] sm:$0xff]
    %v697 = vld [vmem:[#allocation11 + $0xe0] sm:$0xff]
    %v698 = vld [vmem:[#allocation11 + $0xe8] sm:$0xff]
    %v699 = vld [vmem:[#allocation11 + $0xf0] sm:$0xff]
    %v700 = vld [vmem:[#allocation11 + $0xf8] sm:$0xff]
    %v733 = vunpack.c.l.b16 %v669
    %v734 = vunpack.c.h.b16 %v669
    %v735 = vunpack.c.l.b16 %v670
    %v736 = vunpack.c.h.b16 %v670
    %v737 = vunpack.c.l.b16 %v671
    %v738 = vunpack.c.h.b16 %v671
    %v739 = vunpack.c.l.b16 %v672
    %v740 = vunpack.c.h.b16 %v672
    %v741 = vunpack.c.l.b16 %v673
    %v742 = vunpack.c.h.b16 %v673
    %v743 = vunpack.c.l.b16 %v674
    %v744 = vunpack.c.h.b16 %v674
    %v745 = vunpack.c.l.b16 %v675
    %v746 = vunpack.c.h.b16 %v675
    %v747 = vunpack.c.l.b16 %v676
    %v748 = vunpack.c.h.b16 %v676
    %v749 = vunpack.c.l.b16 %v677
    %v750 = vunpack.c.h.b16 %v677
    %v751 = vunpack.c.l.b16 %v678
    %v752 = vunpack.c.h.b16 %v678
    %v753 = vunpack.c.l.b16 %v679
    %v754 = vunpack.c.h.b16 %v679
    %v755 = vunpack.c.l.b16 %v680
    %v756 = vunpack.c.h.b16 %v680
    %v757 = vunpack.c.l.b16 %v681
    %v758 = vunpack.c.h.b16 %v681
    %v759 = vunpack.c.l.b16 %v682
    %v760 = vunpack.c.h.b16 %v682
    %v761 = vunpack.c.l.b16 %v683
    %v762 = vunpack.c.h.b16 %v683
    %v763 = vunpack.c.l.b16 %v684
    %v764 = vunpack.c.h.b16 %v684
    %v765 = vunpack.c.l.b16 %v685
    %v766 = vunpack.c.h.b16 %v685
    %v767 = vunpack.c.l.b16 %v686
    %v768 = vunpack.c.h.b16 %v686
    %v769 = vunpack.c.l.b16 %v687
    %v770 = vunpack.c.h.b16 %v687
    %v771 = vunpack.c.l.b16 %v688
    %v772 = vunpack.c.h.b16 %v688
    %v773 = vunpack.c.l.b16 %v689
    %v774 = vunpack.c.h.b16 %v689
    %v775 = vunpack.c.l.b16 %v690
    %v776 = vunpack.c.h.b16 %v690
    %v777 = vunpack.c.l.b16 %v691
    %v778 = vunpack.c.h.b16 %v691
    %v779 = vunpack.c.l.b16 %v692
    %v780 = vunpack.c.h.b16 %v692
    %v781 = vunpack.c.l.b16 %v693
    %v782 = vunpack.c.h.b16 %v693
    %v783 = vunpack.c.l.b16 %v694
    %v784 = vunpack.c.h.b16 %v694
    %v785 = vunpack.c.l.b16 %v695
    %v786 = vunpack.c.h.b16 %v695
    %v787 = vunpack.c.l.b16 %v696
    %v788 = vunpack.c.h.b16 %v696
    %v789 = vunpack.c.l.b16 %v697
    %v790 = vunpack.c.h.b16 %v697
    %v791 = vunpack.c.l.b16 %v698
    %v792 = vunpack.c.h.b16 %v698
    %v793 = vunpack.c.l.b16 %v699
    %v794 = vunpack.c.h.b16 %v699
    %v795 = vunpack.c.l.b16 %v700
    %v796 = vunpack.c.h.b16 %v700
    %v797 = vpack.c.b16 %v737, %v733
    %v798 = vpack.c.b16 %v738, %v734
    %v799 = vpack.c.b16 %v739, %v735
    %v800 = vpack.c.b16 %v740, %v736
    %v801 = vpack.c.b16 %v745, %v741
    %v802 = vpack.c.b16 %v746, %v742
    %v803 = vpack.c.b16 %v747, %v743
    %v804 = vpack.c.b16 %v748, %v744
    %v805 = vpack.c.b16 %v753, %v749
    %v806 = vpack.c.b16 %v754, %v750
    %v807 = vpack.c.b16 %v755, %v751
    %v808 = vpack.c.b16 %v756, %v752
    %v809 = vpack.c.b16 %v761, %v757
    %v810 = vpack.c.b16 %v762, %v758
    %v811 = vpack.c.b16 %v763, %v759
    %v812 = vpack.c.b16 %v764, %v760
    %v813 = vpack.c.b16 %v769, %v765
    %v814 = vpack.c.b16 %v770, %v766
    %v815 = vpack.c.b16 %v771, %v767
    %v816 = vpack.c.b16 %v772, %v768
    %v817 = vpack.c.b16 %v777, %v773
    %v818 = vpack.c.b16 %v778, %v774
    %v819 = vpack.c.b16 %v779, %v775
    %v820 = vpack.c.b16 %v780, %v776
    %v821 = vpack.c.b16 %v785, %v781
    %v822 = vpack.c.b16 %v786, %v782
    %v823 = vpack.c.b16 %v787, %v783
    %v824 = vpack.c.b16 %v788, %v784
    %v825 = vpack.c.b16 %v793, %v789
    %v826 = vpack.c.b16 %v794, %v790
    %v827 = vpack.c.b16 %v795, %v791
    %v828 = vpack.c.b16 %v796, %v792
    %861 = vmatprep.subr.bf16.mxu0 %v798
    %862 = vmatpush1.bf16.msra.mxu0 %v797
    %863 = vmatprep.subr.bf16.mxu0 %v802
    %864 = vmatpush1.bf16.msra.mxu0 %v801
    %865 = vmatprep.subr.bf16.mxu0 %v806
    %866 = vmatpush1.bf16.msra.mxu0 %v805
    %867 = vmatprep.subr.bf16.mxu0 %v810
    %868 = vmatpush1.bf16.msra.mxu0 %v809
    %869 = vmatprep.subr.bf16.mxu0 %v814
    %870 = vmatpush1.bf16.msra.mxu0 %v813
    %871 = vmatprep.subr.bf16.mxu0 %v818
    %872 = vmatpush1.bf16.msra.mxu0 %v817
    %873 = vmatprep.subr.bf16.mxu0 %v822
    %874 = vmatpush1.bf16.msra.mxu0 %v821
    %875 = vmatprep.subr.bf16.mxu0 %v826
    %876 = vmatpush1.bf16.msra.mxu0 %v825
    %877 = vmatprep.subr.bf16.mxu0 0
    %878 = vmatpush1.bf16.msra.mxu0 0
    %879 = vmatprep.subr.bf16.mxu0 0
    %880 = vmatpush1.bf16.msra.mxu0 0
    %881 = vmatprep.subr.bf16.mxu0 0
    %882 = vmatpush1.bf16.msra.mxu0 0
    %883 = vmatprep.subr.bf16.mxu0 0
    %884 = vmatpush1.bf16.msra.mxu0 0
    %885 = vmatprep.subr.bf16.mxu0 0
    %886 = vmatpush1.bf16.msra.mxu0 0
    %887 = vmatprep.subr.bf16.mxu0 0
    %888 = vmatpush1.bf16.msra.mxu0 0
    %889 = vmatprep.subr.bf16.mxu0 0
    %890 = vmatpush1.bf16.msra.mxu0 0
    %891 = vmatprep.subr.bf16.mxu0 0
    %892 = vmatpush1.bf16.msra.mxu0 0
    %893 = vmatprep.mubr.bf16.mxu0 0
    %894 = vmatmul.mubr.bf16.gmra.mrb[0].mxu0 %v668
    %v895 = vpop.f32.mrb[0].mxu0
    %v896 = vadd.f32 0.0, %v895
    %v897 = vpop.f32.mrb[0].mxu0
    %v898 = vadd.f32 0.0, %v897
    %v899 = vpop.f32.mrb[0].mxu0
    %v900 = vadd.f32 0.0, %v899
    %v901 = vpop.f32.mrb[0].mxu0
    %v902 = vadd.f32 0.0, %v901
    %903 = vdwg.mxu0
    %904 = vmatprep.subr.bf16.mxu0 %v800
    %905 = vmatpush1.bf16.msra.mxu0 %v799
    %906 = vmatprep.subr.bf16.mxu0 %v804
    %907 = vmatpush1.bf16.msra.mxu0 %v803
    %908 = vmatprep.subr.bf16.mxu0 %v808
    %909 = vmatpush1.bf16.msra.mxu0 %v807
    %910 = vmatprep.subr.bf16.mxu0 %v812
    %911 = vmatpush1.bf16.msra.mxu0 %v811
    %912 = vmatprep.subr.bf16.mxu0 %v816
    %913 = vmatpush1.bf16.msra.mxu0 %v815
    %914 = vmatprep.subr.bf16.mxu0 %v820
    %915 = vmatpush1.bf16.msra.mxu0 %v819
    %916 = vmatprep.subr.bf16.mxu0 %v824
    %917 = vmatpush1.bf16.msra.mxu0 %v823
    %918 = vmatprep.subr.bf16.mxu0 %v828
    %919 = vmatpush1.bf16.msra.mxu0 %v827
    %920 = vmatprep.subr.bf16.mxu0 0
    %921 = vmatpush1.bf16.msra.mxu0 0
    %922 = vmatprep.subr.bf16.mxu0 0
    %923 = vmatpush1.bf16.msra.mxu0 0
    %924 = vmatprep.subr.bf16.mxu0 0
    %925 = vmatpush1.bf16.msra.mxu0 0
    %926 = vmatprep.subr.bf16.mxu0 0
    %927 = vmatpush1.bf16.msra.mxu0 0
    %928 = vmatprep.subr.bf16.mxu0 0
    %929 = vmatpush1.bf16.msra.mxu0 0
    %930 = vmatprep.subr.bf16.mxu0 0
    %931 = vmatpush1.bf16.msra.mxu0 0
    %932 = vmatprep.subr.bf16.mxu0 0
    %933 = vmatpush1.bf16.msra.mxu0 0
    %934 = vmatprep.subr.bf16.mxu0 0
    %935 = vmatpush1.bf16.msra.mxu0 0
    %936 = vmatprep.mubr.bf16.mxu0 0
    %937 = vmatmul.mubr.bf16.gmra.mrb[0].mxu0 %v668
    %v938 = vpop.f32.mrb[0].mxu0
    %v939 = vadd.f32 0.0, %v938
    %v940 = vpop.f32.mrb[0].mxu0
    %v941 = vadd.f32 0.0, %v940
    %v942 = vpop.f32.mrb[0].mxu0
    %v943 = vadd.f32 0.0, %v942
    %v944 = vpop.f32.mrb[0].mxu0
    %v945 = vadd.f32 0.0, %v944
    %946 = vdwg.mxu0
    %v947 = vadd.f32 %v660, %v896
    %v948 = vadd.f32 %v661, %v898
    %v949 = vadd.f32 %v662, %v939
    %v950 = vadd.f32 %v663, %v941
    %v951 = vadd.f32 %v664, %v900
    %v952 = vadd.f32 %v665, %v902
    %v953 = vadd.f32 %v666, %v943
    %v954 = vadd.f32 %v667, %v945
    %v955 = vxor.u32 %v947, 2147483648
    %v956 = vxor.u32 %v951, 2147483648
    %v957 = vmul.f32 %v955, 1.442695
    %v958 = vpow.pop %v957
    %v959 = vmul.f32 %v956, 1.442695
    %v960 = vpow.pop %v959
    %v961 = vadd.f32 %v958, 1.0
    %v962 = vadd.f32 %v960, 1.0
    %v963 = vrcp.pop %v961
    %v964 = vmul.f32 1.0, %v963
    %v965 = vrcp.pop %v962
    %v966 = vmul.f32 1.0, %v965
    %v967 = vxor.u32 %v948, 2147483648
    %v968 = vxor.u32 %v952, 2147483648
    %v969 = vmul.f32 %v967, 1.442695
    %v970 = vpow.pop %v969
    %v971 = vmul.f32 %v968, 1.442695
    %v972 = vpow.pop %v971
    %v973 = vadd.f32 %v970, 1.0
    %v974 = vadd.f32 %v972, 1.0
    %v975 = vrcp.pop %v973
    %v976 = vmul.f32 1.0, %v975
    %v977 = vrcp.pop %v974
    %v978 = vmul.f32 1.0, %v977
    %v979 = vtanh.pop %v949
    %v980 = vtanh.pop %v953
    %v981 = vxor.u32 %v950, 2147483648
    %v982 = vxor.u32 %v954, 2147483648
    %v983 = vmul.f32 %v981, 1.442695
    %v984 = vpow.pop %v983
    %v985 = vmul.f32 %v982, 1.442695
    %v986 = vpow.pop %v985
    %v987 = vadd.f32 %v984, 1.0
    %v988 = vadd.f32 %v986, 1.0
    %v989 = vrcp.pop %v987
    %v990 = vmul.f32 1.0, %v989
    %v991 = vrcp.pop %v988
    %v992 = vmul.f32 1.0, %v991
    %v993 = vmul.f32 %v976, %v658
    %v994 = vmul.f32 %v978, %v659
    %v995 = vmul.f32 %v964, %v979
    %v996 = vmul.f32 %v966, %v980
    %v997 = vadd.f32 %v993, %v995
    %v998 = vadd.f32 %v994, %v996
    %v999 = vtanh.pop %v997
    %v1000 = vtanh.pop %v998
    %v1001 = vmul.f32 %v990, %v999
    %v1002 = vmul.f32 %v992, %v1000
    %1003 = vst [vmem:[#allocation5] sm:$0xff] %v1001
    %1004 = vst [vmem:[#allocation5 + $0x8] sm:$0xff] %v1002
    %s1005 = scalar_lea.vmem [#allocation4], 64
    %v1006 = vld [vmem:[%s1005] sm:$0xff]
    %v1007 = vld [vmem:[%s1005 + $0x8] sm:$0xff]
    %v1008 = vld [vmem:[%s1005 + $0x10] sm:$0xff]
    %v1009 = vld [vmem:[%s1005 + $0x18] sm:$0xff]
    %v1010 = vld [vmem:[%s1005 + $0x20] sm:$0xff]
    %v1011 = vld [vmem:[%s1005 + $0x28] sm:$0xff]
    %v1012 = vld [vmem:[%s1005 + $0x30] sm:$0xff]
    %v1013 = vld [vmem:[%s1005 + $0x38] sm:$0xff]
    %v1014 = vpack.c.bf16 %v1002, %v1001
    %v1015 = vld [vmem:[#allocation11] sm:$0xff]
    %v1016 = vld [vmem:[#allocation11 + $0x8] sm:$0xff]
    %v1017 = vld [vmem:[#allocation11 + $0x10] sm:$0xff]
    %v1018 = vld [vmem:[#allocation11 + $0x18] sm:$0xff]
    %v1019 = vld [vmem:[#allocation11 + $0x20] sm:$0xff]
    %v1020 = vld [vmem:[#allocation11 + $0x28] sm:$0xff]
    %v1021 = vld [vmem:[#allocation11 + $0x30] sm:$0xff]
    %v1022 = vld [vmem:[#allocation11 + $0x38] sm:$0xff]
    %v1023 = vld [vmem:[#allocation11 + $0x40] sm:$0xff]
    %v1024 = vld [vmem:[#allocation11 + $0x48] sm:$0xff]
    %v1025 = vld [vmem:[#allocation11 + $0x50] sm:$0xff]
    %v1026 = vld [vmem:[#allocation11 + $0x58] sm:$0xff]
    %v1027 = vld [vmem:[#allocation11 + $0x60] sm:$0xff]
    %v1028 = vld [vmem:[#allocation11 + $0x68] sm:$0xff]
    %v1029 = vld [vmem:[#allocation11 + $0x70] sm:$0xff]
    %v1030 = vld [vmem:[#allocation11 + $0x78] sm:$0xff]
    %v1031 = vld [vmem:[#allocation11 + $0x80] sm:$0xff]
    %v1032 = vld [vmem:[#allocation11 + $0x88] sm:$0xff]
    %v1033 = vld [vmem:[#allocation11 + $0x90] sm:$0xff]
    %v1034 = vld [vmem:[#allocation11 + $0x98] sm:$0xff]
    %v1035 = vld [vmem:[#allocation11 + $0xa0] sm:$0xff]
    %v1036 = vld [vmem:[#allocation11 + $0xa8] sm:$0xff]
    %v1037 = vld [vmem:[#allocation11 + $0xb0] sm:$0xff]
    %v1038 = vld [vmem:[#allocation11 + $0xb8] sm:$0xff]
    %v1039 = vld [vmem:[#allocation11 + $0xc0] sm:$0xff]
    %v1040 = vld [vmem:[#allocation11 + $0xc8] sm:$0xff]
    %v1041 = vld [vmem:[#allocation11 + $0xd0] sm:$0xff]
    %v1042 = vld [vmem:[#allocation11 + $0xd8] sm:$0xff]
    %v1043 = vld [vmem:[#allocation11 + $0xe0] sm:$0xff]
    %v1044 = vld [vmem:[#allocation11 + $0xe8] sm:$0xff]
    %v1045 = vld [vmem:[#allocation11 + $0xf0] sm:$0xff]
    %v1046 = vld [vmem:[#allocation11 + $0xf8] sm:$0xff]
    %v1079 = vunpack.c.l.b16 %v1015
    %v1080 = vunpack.c.h.b16 %v1015
    %v1081 = vunpack.c.l.b16 %v1016
    %v1082 = vunpack.c.h.b16 %v1016
    %v1083 = vunpack.c.l.b16 %v1017
    %v1084 = vunpack.c.h.b16 %v1017
    %v1085 = vunpack.c.l.b16 %v1018
    %v1086 = vunpack.c.h.b16 %v1018
    %v1087 = vunpack.c.l.b16 %v1019
    %v1088 = vunpack.c.h.b16 %v1019
    %v1089 = vunpack.c.l.b16 %v1020
    %v1090 = vunpack.c.h.b16 %v1020
    %v1091 = vunpack.c.l.b16 %v1021
    %v1092 = vunpack.c.h.b16 %v1021
    %v1093 = vunpack.c.l.b16 %v1022
    %v1094 = vunpack.c.h.b16 %v1022
    %v1095 = vunpack.c.l.b16 %v1023
    %v1096 = vunpack.c.h.b16 %v1023
    %v1097 = vunpack.c.l.b16 %v1024
    %v1098 = vunpack.c.h.b16 %v1024
    %v1099 = vunpack.c.l.b16 %v1025
    %v1100 = vunpack.c.h.b16 %v1025
    %v1101 = vunpack.c.l.b16 %v1026
    %v1102 = vunpack.c.h.b16 %v1026
    %v1103 = vunpack.c.l.b16 %v1027
    %v1104 = vunpack.c.h.b16 %v1027
    %v1105 = vunpack.c.l.b16 %v1028
    %v1106 = vunpack.c.h.b16 %v1028
    %v1107 = vunpack.c.l.b16 %v1029
    %v1108 = vunpack.c.h.b16 %v1029
    %v1109 = vunpack.c.l.b16 %v1030
    %v1110 = vunpack.c.h.b16 %v1030
    %v1111 = vunpack.c.l.b16 %v1031
    %v1112 = vunpack.c.h.b16 %v1031
    %v1113 = vunpack.c.l.b16 %v1032
    %v1114 = vunpack.c.h.b16 %v1032
    %v1115 = vunpack.c.l.b16 %v1033
    %v1116 = vunpack.c.h.b16 %v1033
    %v1117 = vunpack.c.l.b16 %v1034
    %v1118 = vunpack.c.h.b16 %v1034
    %v1119 = vunpack.c.l.b16 %v1035
    %v1120 = vunpack.c.h.b16 %v1035
    %v1121 = vunpack.c.l.b16 %v1036
    %v1122 = vunpack.c.h.b16 %v1036
    %v1123 = vunpack.c.l.b16 %v1037
    %v1124 = vunpack.c.h.b16 %v1037
    %v1125 = vunpack.c.l.b16 %v1038
    %v1126 = vunpack.c.h.b16 %v1038
    %v1127 = vunpack.c.l.b16 %v1039
    %v1128 = vunpack.c.h.b16 %v1039
    %v1129 = vunpack.c.l.b16 %v1040
    %v1130 = vunpack.c.h.b16 %v1040
    %v1131 = vunpack.c.l.b16 %v1041
    %v1132 = vunpack.c.h.b16 %v1041
    %v1133 = vunpack.c.l.b16 %v1042
    %v1134 = vunpack.c.h.b16 %v1042
    %v1135 = vunpack.c.l.b16 %v1043
    %v1136 = vunpack.c.h.b16 %v1043
    %v1137 = vunpack.c.l.b16 %v1044
    %v1138 = vunpack.c.h.b16 %v1044
    %v1139 = vunpack.c.l.b16 %v1045
    %v1140 = vunpack.c.h.b16 %v1045
    %v1141 = vunpack.c.l.b16 %v1046
    %v1142 = vunpack.c.h.b16 %v1046
    %v1143 = vpack.c.b16 %v1083, %v1079
    %v1144 = vpack.c.b16 %v1084, %v1080
    %v1145 = vpack.c.b16 %v1085, %v1081
    %v1146 = vpack.c.b16 %v1086, %v1082
    %v1147 = vpack.c.b16 %v1091, %v1087
    %v1148 = vpack.c.b16 %v1092, %v1088
    %v1149 = vpack.c.b16 %v1093, %v1089
    %v1150 = vpack.c.b16 %v1094, %v1090
    %v1151 = vpack.c.b16 %v1099, %v1095
    %v1152 = vpack.c.b16 %v1100, %v1096
    %v1153 = vpack.c.b16 %v1101, %v1097
    %v1154 = vpack.c.b16 %v1102, %v1098
    %v1155 = vpack.c.b16 %v1107, %v1103
    %v1156 = vpack.c.b16 %v1108, %v1104
    %v1157 = vpack.c.b16 %v1109, %v1105
    %v1158 = vpack.c.b16 %v1110, %v1106
    %v1159 = vpack.c.b16 %v1115, %v1111
    %v1160 = vpack.c.b16 %v1116, %v1112
    %v1161 = vpack.c.b16 %v1117, %v1113
    %v1162 = vpack.c.b16 %v1118, %v1114
    %v1163 = vpack.c.b16 %v1123, %v1119
    %v1164 = vpack.c.b16 %v1124, %v1120
    %v1165 = vpack.c.b16 %v1125, %v1121
    %v1166 = vpack.c.b16 %v1126, %v1122
    %v1167 = vpack.c.b16 %v1131, %v1127
    %v1168 = vpack.c.b16 %v1132, %v1128
    %v1169 = vpack.c.b16 %v1133, %v1129
    %v1170 = vpack.c.b16 %v1134, %v1130
    %v1171 = vpack.c.b16 %v1139, %v1135
    %v1172 = vpack.c.b16 %v1140, %v1136
    %v1173 = vpack.c.b16 %v1141, %v1137
    %v1174 = vpack.c.b16 %v1142, %v1138
    %1207 = vmatprep.subr.bf16.mxu0 %v1144
    %1208 = vmatpush1.bf16.msra.mxu0 %v1143
    %1209 = vmatprep.subr.bf16.mxu0 %v1148
    %1210 = vmatpush1.bf16.msra.mxu0 %v1147
    %1211 = vmatprep.subr.bf16.mxu0 %v1152
    %1212 = vmatpush1.bf16.msra.mxu0 %v1151
    %1213 = vmatprep.subr.bf16.mxu0 %v1156
    %1214 = vmatpush1.bf16.msra.mxu0 %v1155
    %1215 = vmatprep.subr.bf16.mxu0 %v1160
    %1216 = vmatpush1.bf16.msra.mxu0 %v1159
    %1217 = vmatprep.subr.bf16.mxu0 %v1164
    %1218 = vmatpush1.bf16.msra.mxu0 %v1163
    %1219 = vmatprep.subr.bf16.mxu0 %v1168
    %1220 = vmatpush1.bf16.msra.mxu0 %v1167
    %1221 = vmatprep.subr.bf16.mxu0 %v1172
    %1222 = vmatpush1.bf16.msra.mxu0 %v1171
    %1223 = vmatprep.subr.bf16.mxu0 0
    %1224 = vmatpush1.bf16.msra.mxu0 0
    %1225 = vmatprep.subr.bf16.mxu0 0
    %1226 = vmatpush1.bf16.msra.mxu0 0
    %1227 = vmatprep.subr.bf16.mxu0 0
    %1228 = vmatpush1.bf16.msra.mxu0 0
    %1229 = vmatprep.subr.bf16.mxu0 0
    %1230 = vmatpush1.bf16.msra.mxu0 0
    %1231 = vmatprep.subr.bf16.mxu0 0
    %1232 = vmatpush1.bf16.msra.mxu0 0
    %1233 = vmatprep.subr.bf16.mxu0 0
    %1234 = vmatpush1.bf16.msra.mxu0 0
    %1235 = vmatprep.subr.bf16.mxu0 0
    %1236 = vmatpush1.bf16.msra.mxu0 0
    %1237 = vmatprep.subr.bf16.mxu0 0
    %1238 = vmatpush1.bf16.msra.mxu0 0
    %1239 = vmatprep.mubr.bf16.mxu0 0
    %1240 = vmatmul.mubr.bf16.gmra.mrb[0].mxu0 %v1014
    %v1241 = vpop.f32.mrb[0].mxu0
    %v1242 = vadd.f32 0.0, %v1241
    %v1243 = vpop.f32.mrb[0].mxu0
    %v1244 = vadd.f32 0.0, %v1243
    %v1245 = vpop.f32.mrb[0].mxu0
    %v1246 = vadd.f32 0.0, %v1245
    %v1247 = vpop.f32.mrb[0].mxu0
    %v1248 = vadd.f32 0.0, %v1247
    %1249 = vdwg.mxu0
    %1250 = vmatprep.subr.bf16.mxu0 %v1146
    %1251 = vmatpush1.bf16.msra.mxu0 %v1145
    %1252 = vmatprep.subr.bf16.mxu0 %v1150
    %1253 = vmatpush1.bf16.msra.mxu0 %v1149
    %1254 = vmatprep.subr.bf16.mxu0 %v1154
    %1255 = vmatpush1.bf16.msra.mxu0 %v1153
    %1256 = vmatprep.subr.bf16.mxu0 %v1158
    %1257 = vmatpush1.bf16.msra.mxu0 %v1157
    %1258 = vmatprep.subr.bf16.mxu0 %v1162
    %1259 = vmatpush1.bf16.msra.mxu0 %v1161
    %1260 = vmatprep.subr.bf16.mxu0 %v1166
    %1261 = vmatpush1.bf16.msra.mxu0 %v1165
    %1262 = vmatprep.subr.bf16.mxu0 %v1170
    %1263 = vmatpush1.bf16.msra.mxu0 %v1169
    %1264 = vmatprep.subr.bf16.mxu0 %v1174
    %1265 = vmatpush1.bf16.msra.mxu0 %v1173
    %1266 = vmatprep.subr.bf16.mxu0 0
    %1267 = vmatpush1.bf16.msra.mxu0 0
    %1268 = vmatprep.subr.bf16.mxu0 0
    %1269 = vmatpush1.bf16.msra.mxu0 0
    %1270 = vmatprep.subr.bf16.mxu0 0
    %1271 = vmatpush1.bf16.msra.mxu0 0
    %1272 = vmatprep.subr.bf16.mxu0 0
    %1273 = vmatpush1.bf16.msra.mxu0 0
    %1274 = vmatprep.subr.bf16.mxu0 0
    %1275 = vmatpush1.bf16.msra.mxu0 0
    %1276 = vmatprep.subr.bf16.mxu0 0
    %1277 = vmatpush1.bf16.msra.mxu0 0
    %1278 = vmatprep.subr.bf16.mxu0 0
    %1279 = vmatpush1.bf16.msra.mxu0 0
    %1280 = vmatprep.subr.bf16.mxu0 0
    %1281 = vmatpush1.bf16.msra.mxu0 0
    %1282 = vmatprep.mubr.bf16.mxu0 0
    %1283 = vmatmul.mubr.bf16.gmra.mrb[0].mxu0 %v1014
    %v1284 = vpop.f32.mrb[0].mxu0
    %v1285 = vadd.f32 0.0, %v1284
    %v1286 = vpop.f32.mrb[0].mxu0
    %v1287 = vadd.f32 0.0, %v1286
    %v1288 = vpop.f32.mrb[0].mxu0
    %v1289 = vadd.f32 0.0, %v1288
    %v1290 = vpop.f32.mrb[0].mxu0
    %v1291 = vadd.f32 0.0, %v1290
    %1292 = vdwg.mxu0
    %v1293 = vadd.f32 %v1006, %v1242
    %v1294 = vadd.f32 %v1007, %v1244
    %v1295 = vadd.f32 %v1008, %v1285
    %v1296 = vadd.f32 %v1009, %v1287
    %v1297 = vadd.f32 %v1010, %v1246
    %v1298 = vadd.f32 %v1011, %v1248
    %v1299 = vadd.f32 %v1012, %v1289
    %v1300 = vadd.f32 %v1013, %v1291
    %v1301 = vxor.u32 %v1293, 2147483648
    %v1302 = vxor.u32 %v1297, 2147483648
    %v1303 = vmul.f32 %v1301, 1.442695
    %v1304 = vpow.pop %v1303
    %v1305 = vmul.f32 %v1302, 1.442695
    %v1306 = vpow.pop %v1305
    %v1307 = vadd.f32 %v1304, 1.0
    %v1308 = vadd.f32 %v1306, 1.0
    %v1309 = vrcp.pop %v1307
    %v1310 = vmul.f32 1.0, %v1309
    %v1311 = vrcp.pop %v1308
    %v1312 = vmul.f32 1.0, %v1311
    %v1313 = vxor.u32 %v1294, 2147483648
    %v1314 = vxor.u32 %v1298, 2147483648
    %v1315 = vmul.f32 %v1313, 1.442695
    %v1316 = vpow.pop %v1315
    %v1317 = vmul.f32 %v1314, 1.442695
    %v1318 = vpow.pop %v1317
    %v1319 = vadd.f32 %v1316, 1.0
    %v1320 = vadd.f32 %v1318, 1.0
    %v1321 = vrcp.pop %v1319
    %v1322 = vmul.f32 1.0, %v1321
    %v1323 = vrcp.pop %v1320
    %v1324 = vmul.f32 1.0, %v1323
    %v1325 = vtanh.pop %v1295
    %v1326 = vtanh.pop %v1299
    %v1327 = vxor.u32 %v1296, 2147483648
    %v1328 = vxor.u32 %v1300, 2147483648
    %v1329 = vmul.f32 %v1327, 1.442695
    %v1330 = vpow.pop %v1329
    %v1331 = vmul.f32 %v1328, 1.442695
    %v1332 = vpow.pop %v1331
    %v1333 = vadd.f32 %v1330, 1.0
    %v1334 = vadd.f32 %v1332, 1.0
    %v1335 = vrcp.pop %v1333
    %v1336 = vmul.f32 1.0, %v1335
    %v1337 = vrcp.pop %v1334
    %v1338 = vmul.f32 1.0, %v1337
    %v1339 = vmul.f32 %v1322, %v997
    %v1340 = vmul.f32 %v1324, %v998
    %v1341 = vmul.f32 %v1310, %v1325
    %v1342 = vmul.f32 %v1312, %v1326
    %v1343 = vadd.f32 %v1339, %v1341
    %v1344 = vadd.f32 %v1340, %v1342
    %v1345 = vtanh.pop %v1343
    %v1346 = vtanh.pop %v1344
    %v1347 = vmul.f32 %v1336, %v1345
    %v1348 = vmul.f32 %v1338, %v1346
    %s1349 = scalar_lea.vmem [#allocation5], 16
    %1350 = vst [vmem:[%s1349] sm:$0xff] %v1347
    %1351 = vst [vmem:[%s1349 + $0x8] sm:$0xff] %v1348
    %s1352 = scalar_lea.vmem [#allocation4], 128
    %v1353 = vld [vmem:[%s1352] sm:$0xff]
    %v1354 = vld [vmem:[%s1352 + $0x8] sm:$0xff]
    %v1355 = vld [vmem:[%s1352 + $0x10] sm:$0xff]
    %v1356 = vld [vmem:[%s1352 + $0x18] sm:$0xff]
    %v1357 = vld [vmem:[%s1352 + $0x20] sm:$0xff]
    %v1358 = vld [vmem:[%s1352 + $0x28] sm:$0xff]
    %v1359 = vld [vmem:[%s1352 + $0x30] sm:$0xff]
    %v1360 = vld [vmem:[%s1352 + $0x38] sm:$0xff]
    %v1361 = vpack.c.bf16 %v1348, %v1347
    %v1362 = vld [vmem:[#allocation11] sm:$0xff]
    %v1363 = vld [vmem:[#allocation11 + $0x8] sm:$0xff]
    %v1364 = vld [vmem:[#allocation11 + $0x10] sm:$0xff]
    %v1365 = vld [vmem:[#allocation11 + $0x18] sm:$0xff]
    %v1366 = vld [vmem:[#allocation11 + $0x20] sm:$0xff]
    %v1367 = vld [vmem:[#allocation11 + $0x28] sm:$0xff]
    %v1368 = vld [vmem:[#allocation11 + $0x30] sm:$0xff]
    %v1369 = vld [vmem:[#allocation11 + $0x38] sm:$0xff]
    %v1370 = vld [vmem:[#allocation11 + $0x40] sm:$0xff]
    %v1371 = vld [vmem:[#allocation11 + $0x48] sm:$0xff]
    %v1372 = vld [vmem:[#allocation11 + $0x50] sm:$0xff]
    %v1373 = vld [vmem:[#allocation11 + $0x58] sm:$0xff]
    %v1374 = vld [vmem:[#allocation11 + $0x60] sm:$0xff]
    %v1375 = vld [vmem:[#allocation11 + $0x68] sm:$0xff]
    %v1376 = vld [vmem:[#allocation11 + $0x70] sm:$0xff]
    %v1377 = vld [vmem:[#allocation11 + $0x78] sm:$0xff]
    %v1378 = vld [vmem:[#allocation11 + $0x80] sm:$0xff]
    %v1379 = vld [vmem:[#allocation11 + $0x88] sm:$0xff]
    %v1380 = vld [vmem:[#allocation11 + $0x90] sm:$0xff]
    %v1381 = vld [vmem:[#allocation11 + $0x98] sm:$0xff]
    %v1382 = vld [vmem:[#allocation11 + $0xa0] sm:$0xff]
    %v1383 = vld [vmem:[#allocation11 + $0xa8] sm:$0xff]
    %v1384 = vld [vmem:[#allocation11 + $0xb0] sm:$0xff]
    %v1385 = vld [vmem:[#allocation11 + $0xb8] sm:$0xff]
    %v1386 = vld [vmem:[#allocation11 + $0xc0] sm:$0xff]
    %v1387 = vld [vmem:[#allocation11 + $0xc8] sm:$0xff]
    %v1388 = vld [vmem:[#allocation11 + $0xd0] sm:$0xff]
    %v1389 = vld [vmem:[#allocation11 + $0xd8] sm:$0xff]
    %v1390 = vld [vmem:[#allocation11 + $0xe0] sm:$0xff]
    %v1391 = vld [vmem:[#allocation11 + $0xe8] sm:$0xff]
    %v1392 = vld [vmem:[#allocation11 + $0xf0] sm:$0xff]
    %v1393 = vld [vmem:[#allocation11 + $0xf8] sm:$0xff]
    %v1426 = vunpack.c.l.b16 %v1362
    %v1427 = vunpack.c.h.b16 %v1362
    %v1428 = vunpack.c.l.b16 %v1363
    %v1429 = vunpack.c.h.b16 %v1363
    %v1430 = vunpack.c.l.b16 %v1364
    %v1431 = vunpack.c.h.b16 %v1364
    %v1432 = vunpack.c.l.b16 %v1365
    %v1433 = vunpack.c.h.b16 %v1365
    %v1434 = vunpack.c.l.b16 %v1366
    %v1435 = vunpack.c.h.b16 %v1366
    %v1436 = vunpack.c.l.b16 %v1367
    %v1437 = vunpack.c.h.b16 %v1367
    %v1438 = vunpack.c.l.b16 %v1368
    %v1439 = vunpack.c.h.b16 %v1368
    %v1440 = vunpack.c.l.b16 %v1369
    %v1441 = vunpack.c.h.b16 %v1369
    %v1442 = vunpack.c.l.b16 %v1370
    %v1443 = vunpack.c.h.b16 %v1370
    %v1444 = vunpack.c.l.b16 %v1371
    %v1445 = vunpack.c.h.b16 %v1371
    %v1446 = vunpack.c.l.b16 %v1372
    %v1447 = vunpack.c.h.b16 %v1372
    %v1448 = vunpack.c.l.b16 %v1373
    %v1449 = vunpack.c.h.b16 %v1373
    %v1450 = vunpack.c.l.b16 %v1374
    %v1451 = vunpack.c.h.b16 %v1374
    %v1452 = vunpack.c.l.b16 %v1375
    %v1453 = vunpack.c.h.b16 %v1375
    %v1454 = vunpack.c.l.b16 %v1376
    %v1455 = vunpack.c.h.b16 %v1376
    %v1456 = vunpack.c.l.b16 %v1377
    %v1457 = vunpack.c.h.b16 %v1377
    %v1458 = vunpack.c.l.b16 %v1378
    %v1459 = vunpack.c.h.b16 %v1378
    %v1460 = vunpack.c.l.b16 %v1379
    %v1461 = vunpack.c.h.b16 %v1379
    %v1462 = vunpack.c.l.b16 %v1380
    %v1463 = vunpack.c.h.b16 %v1380
    %v1464 = vunpack.c.l.b16 %v1381
    %v1465 = vunpack.c.h.b16 %v1381
    %v1466 = vunpack.c.l.b16 %v1382
    %v1467 = vunpack.c.h.b16 %v1382
    %v1468 = vunpack.c.l.b16 %v1383
    %v1469 = vunpack.c.h.b16 %v1383
    %v1470 = vunpack.c.l.b16 %v1384
    %v1471 = vunpack.c.h.b16 %v1384
    %v1472 = vunpack.c.l.b16 %v1385
    %v1473 = vunpack.c.h.b16 %v1385
    %v1474 = vunpack.c.l.b16 %v1386
    %v1475 = vunpack.c.h.b16 %v1386
    %v1476 = vunpack.c.l.b16 %v1387
    %v1477 = vunpack.c.h.b16 %v1387
    %v1478 = vunpack.c.l.b16 %v1388
    %v1479 = vunpack.c.h.b16 %v1388
    %v1480 = vunpack.c.l.b16 %v1389
    %v1481 = vunpack.c.h.b16 %v1389
    %v1482 = vunpack.c.l.b16 %v1390
    %v1483 = vunpack.c.h.b16 %v1390
    %v1484 = vunpack.c.l.b16 %v1391
    %v1485 = vunpack.c.h.b16 %v1391
    %v1486 = vunpack.c.l.b16 %v1392
    %v1487 = vunpack.c.h.b16 %v1392
    %v1488 = vunpack.c.l.b16 %v1393
    %v1489 = vunpack.c.h.b16 %v1393
    %v1490 = vpack.c.b16 %v1430, %v1426
    %v1491 = vpack.c.b16 %v1431, %v1427
    %v1492 = vpack.c.b16 %v1432, %v1428
    %v1493 = vpack.c.b16 %v1433, %v1429
    %v1494 = vpack.c.b16 %v1438, %v1434
    %v1495 = vpack.c.b16 %v1439, %v1435
    %v1496 = vpack.c.b16 %v1440, %v1436
    %v1497 = vpack.c.b16 %v1441, %v1437
    %v1498 = vpack.c.b16 %v1446, %v1442
    %v1499 = vpack.c.b16 %v1447, %v1443
    %v1500 = vpack.c.b16 %v1448, %v1444
    %v1501 = vpack.c.b16 %v1449, %v1445
    %v1502 = vpack.c.b16 %v1454, %v1450
    %v1503 = vpack.c.b16 %v1455, %v1451
    %v1504 = vpack.c.b16 %v1456, %v1452
    %v1505 = vpack.c.b16 %v1457, %v1453
    %v1506 = vpack.c.b16 %v1462, %v1458
    %v1507 = vpack.c.b16 %v1463, %v1459
    %v1508 = vpack.c.b16 %v1464, %v1460
    %v1509 = vpack.c.b16 %v1465, %v1461
    %v1510 = vpack.c.b16 %v1470, %v1466
    %v1511 = vpack.c.b16 %v1471, %v1467
    %v1512 = vpack.c.b16 %v1472, %v1468
    %v1513 = vpack.c.b16 %v1473, %v1469
    %v1514 = vpack.c.b16 %v1478, %v1474
    %v1515 = vpack.c.b16 %v1479, %v1475
    %v1516 = vpack.c.b16 %v1480, %v1476
    %v1517 = vpack.c.b16 %v1481, %v1477
    %v1518 = vpack.c.b16 %v1486, %v1482
    %v1519 = vpack.c.b16 %v1487, %v1483
    %v1520 = vpack.c.b16 %v1488, %v1484
    %v1521 = vpack.c.b16 %v1489, %v1485
    %1554 = vmatprep.subr.bf16.mxu0 %v1491
    %1555 = vmatpush1.bf16.msra.mxu0 %v1490
    %1556 = vmatprep.subr.bf16.mxu0 %v1495
    %1557 = vmatpush1.bf16.msra.mxu0 %v1494
    %1558 = vmatprep.subr.bf16.mxu0 %v1499
    %1559 = vmatpush1.bf16.msra.mxu0 %v1498
    %1560 = vmatprep.subr.bf16.mxu0 %v1503
    %1561 = vmatpush1.bf16.msra.mxu0 %v1502
    %1562 = vmatprep.subr.bf16.mxu0 %v1507
    %1563 = vmatpush1.bf16.msra.mxu0 %v1506
    %1564 = vmatprep.subr.bf16.mxu0 %v1511
    %1565 = vmatpush1.bf16.msra.mxu0 %v1510
    %1566 = vmatprep.subr.bf16.mxu0 %v1515
    %1567 = vmatpush1.bf16.msra.mxu0 %v1514
    %1568 = vmatprep.subr.bf16.mxu0 %v1519
    %1569 = vmatpush1.bf16.msra.mxu0 %v1518
    %1570 = vmatprep.subr.bf16.mxu0 0
    %1571 = vmatpush1.bf16.msra.mxu0 0
    %1572 = vmatprep.subr.bf16.mxu0 0
    %1573 = vmatpush1.bf16.msra.mxu0 0
    %1574 = vmatprep.subr.bf16.mxu0 0
    %1575 = vmatpush1.bf16.msra.mxu0 0
    %1576 = vmatprep.subr.bf16.mxu0 0
    %1577 = vmatpush1.bf16.msra.mxu0 0
    %1578 = vmatprep.subr.bf16.mxu0 0
    %1579 = vmatpush1.bf16.msra.mxu0 0
    %1580 = vmatprep.subr.bf16.mxu0 0
    %1581 = vmatpush1.bf16.msra.mxu0 0
    %1582 = vmatprep.subr.bf16.mxu0 0
    %1583 = vmatpush1.bf16.msra.mxu0 0
    %1584 = vmatprep.subr.bf16.mxu0 0
    %1585 = vmatpush1.bf16.msra.mxu0 0
    %1586 = vmatprep.mubr.bf16.mxu0 0
    %1587 = vmatmul.mubr.bf16.gmra.mrb[0].mxu0 %v1361
    %v1588 = vpop.f32.mrb[0].mxu0
    %v1589 = vadd.f32 0.0, %v1588
    %v1590 = vpop.f32.mrb[0].mxu0
    %v1591 = vadd.f32 0.0, %v1590
    %v1592 = vpop.f32.mrb[0].mxu0
    %v1593 = vadd.f32 0.0, %v1592
    %v1594 = vpop.f32.mrb[0].mxu0
    %v1595 = vadd.f32 0.0, %v1594
    %1596 = vdwg.mxu0
    %1597 = vmatprep.subr.bf16.mxu0 %v1493
    %1598 = vmatpush1.bf16.msra.mxu0 %v1492
    %1599 = vmatprep.subr.bf16.mxu0 %v1497
    %1600 = vmatpush1.bf16.msra.mxu0 %v1496
    %1601 = vmatprep.subr.bf16.mxu0 %v1501
    %1602 = vmatpush1.bf16.msra.mxu0 %v1500
    %1603 = vmatprep.subr.bf16.mxu0 %v1505
    %1604 = vmatpush1.bf16.msra.mxu0 %v1504
    %1605 = vmatprep.subr.bf16.mxu0 %v1509
    %1606 = vmatpush1.bf16.msra.mxu0 %v1508
    %1607 = vmatprep.subr.bf16.mxu0 %v1513
    %1608 = vmatpush1.bf16.msra.mxu0 %v1512
    %1609 = vmatprep.subr.bf16.mxu0 %v1517
    %1610 = vmatpush1.bf16.msra.mxu0 %v1516
    %1611 = vmatprep.subr.bf16.mxu0 %v1521
    %1612 = vmatpush1.bf16.msra.mxu0 %v1520
    %1613 = vmatprep.subr.bf16.mxu0 0
    %1614 = vmatpush1.bf16.msra.mxu0 0
    %1615 = vmatprep.subr.bf16.mxu0 0
    %1616 = vmatpush1.bf16.msra.mxu0 0
    %1617 = vmatprep.subr.bf16.mxu0 0
    %1618 = vmatpush1.bf16.msra.mxu0 0
    %1619 = vmatprep.subr.bf16.mxu0 0
    %1620 = vmatpush1.bf16.msra.mxu0 0
    %1621 = vmatprep.subr.bf16.mxu0 0
    %1622 = vmatpush1.bf16.msra.mxu0 0
    %1623 = vmatprep.subr.bf16.mxu0 0
    %1624 = vmatpush1.bf16.msra.mxu0 0
    %1625 = vmatprep.subr.bf16.mxu0 0
    %1626 = vmatpush1.bf16.msra.mxu0 0
    %1627 = vmatprep.subr.bf16.mxu0 0
    %1628 = vmatpush1.bf16.msra.mxu0 0
    %1629 = vmatprep.mubr.bf16.mxu0 0
    %1630 = vmatmul.mubr.bf16.gmra.mrb[0].mxu0 %v1361
    %v1631 = vpop.f32.mrb[0].mxu0
    %v1632 = vadd.f32 0.0, %v1631
    %v1633 = vpop.f32.mrb[0].mxu0
    %v1634 = vadd.f32 0.0, %v1633
    %v1635 = vpop.f32.mrb[0].mxu0
    %v1636 = vadd.f32 0.0, %v1635
    %v1637 = vpop.f32.mrb[0].mxu0
    %v1638 = vadd.f32 0.0, %v1637
    %1639 = vdwg.mxu0
    %v1640 = vadd.f32 %v1353, %v1589
    %v1641 = vadd.f32 %v1354, %v1591
    %v1642 = vadd.f32 %v1355, %v1632
    %v1643 = vadd.f32 %v1356, %v1634
    %v1644 = vadd.f32 %v1357, %v1593
    %v1645 = vadd.f32 %v1358, %v1595
    %v1646 = vadd.f32 %v1359, %v1636
    %v1647 = vadd.f32 %v1360, %v1638
    %v1648 = vxor.u32 %v1640, 2147483648
    %v1649 = vxor.u32 %v1644, 2147483648
    %v1650 = vmul.f32 %v1648, 1.442695
    %v1651 = vpow.pop %v1650
    %v1652 = vmul.f32 %v1649, 1.442695
    %v1653 = vpow.pop %v1652
    %v1654 = vadd.f32 %v1651, 1.0
    %v1655 = vadd.f32 %v1653, 1.0
    %v1656 = vrcp.pop %v1654
    %v1657 = vmul.f32 1.0, %v1656
    %v1658 = vrcp.pop %v1655
    %v1659 = vmul.f32 1.0, %v1658
    %v1660 = vxor.u32 %v1641, 2147483648
    %v1661 = vxor.u32 %v1645, 2147483648
    %v1662 = vmul.f32 %v1660, 1.442695
    %v1663 = vpow.pop %v1662
    %v1664 = vmul.f32 %v1661, 1.442695
    %v1665 = vpow.pop %v1664
    %v1666 = vadd.f32 %v1663, 1.0
    %v1667 = vadd.f32 %v1665, 1.0
    %v1668 = vrcp.pop %v1666
    %v1669 = vmul.f32 1.0, %v1668
    %v1670 = vrcp.pop %v1667
    %v1671 = vmul.f32 1.0, %v1670
    %v1672 = vtanh.pop %v1642
    %v1673 = vtanh.pop %v1646
    %v1674 = vxor.u32 %v1643, 2147483648
    %v1675 = vxor.u32 %v1647, 2147483648
    %v1676 = vmul.f32 %v1674, 1.442695
    %v1677 = vpow.pop %v1676
    %v1678 = vmul.f32 %v1675, 1.442695
    %v1679 = vpow.pop %v1678
    %v1680 = vadd.f32 %v1677, 1.0
    %v1681 = vadd.f32 %v1679, 1.0
    %v1682 = vrcp.pop %v1680
    %v1683 = vmul.f32 1.0, %v1682
    %v1684 = vrcp.pop %v1681
    %v1685 = vmul.f32 1.0, %v1684
    %v1686 = vmul.f32 %v1669, %v1343
    %v1687 = vmul.f32 %v1671, %v1344
    %v1688 = vmul.f32 %v1657, %v1672
    %v1689 = vmul.f32 %v1659, %v1673
    %v1690 = vadd.f32 %v1686, %v1688
    %v1691 = vadd.f32 %v1687, %v1689
    %v1692 = vtanh.pop %v1690
    %v1693 = vtanh.pop %v1691
    %v1694 = vmul.f32 %v1683, %v1692
    %v1695 = vmul.f32 %v1685, %v1693
    %s1696 = scalar_lea.vmem [#allocation5], 32
    %1697 = vst [vmem:[%s1696] sm:$0xff] %v1694
    %1698 = vst [vmem:[%s1696 + $0x8] sm:$0xff] %v1695
    %s1699 = scalar_lea.vmem [#allocation4], 192
    %v1700 = vld [vmem:[%s1699] sm:$0xff]
    %v1701 = vld [vmem:[%s1699 + $0x8] sm:$0xff]
    %v1702 = vld [vmem:[%s1699 + $0x10] sm:$0xff]
    %v1703 = vld [vmem:[%s1699 + $0x18] sm:$0xff]
    %v1704 = vld [vmem:[%s1699 + $0x20] sm:$0xff]
    %v1705 = vld [vmem:[%s1699 + $0x28] sm:$0xff]
    %v1706 = vld [vmem:[%s1699 + $0x30] sm:$0xff]
    %v1707 = vld [vmem:[%s1699 + $0x38] sm:$0xff]
    %v1708 = vpack.c.bf16 %v1695, %v1694
    %v1709 = vld [vmem:[#allocation11] sm:$0xff]
    %v1710 = vld [vmem:[#allocation11 + $0x8] sm:$0xff]
    %v1711 = vld [vmem:[#allocation11 + $0x10] sm:$0xff]
    %v1712 = vld [vmem:[#allocation11 + $0x18] sm:$0xff]
    %v1713 = vld [vmem:[#allocation11 + $0x20] sm:$0xff]
    %v1714 = vld [vmem:[#allocation11 + $0x28] sm:$0xff]
    %v1715 = vld [vmem:[#allocation11 + $0x30] sm:$0xff]
    %v1716 = vld [vmem:[#allocation11 + $0x38] sm:$0xff]
    %v1717 = vld [vmem:[#allocation11 + $0x40] sm:$0xff]
    %v1718 = vld [vmem:[#allocation11 + $0x48] sm:$0xff]
    %v1719 = vld [vmem:[#allocation11 + $0x50] sm:$0xff]
    %v1720 = vld [vmem:[#allocation11 + $0x58] sm:$0xff]
    %v1721 = vld [vmem:[#allocation11 + $0x60] sm:$0xff]
    %v1722 = vld [vmem:[#allocation11 + $0x68] sm:$0xff]
    %v1723 = vld [vmem:[#allocation11 + $0x70] sm:$0xff]
    %v1724 = vld [vmem:[#allocation11 + $0x78] sm:$0xff]
    %v1725 = vld [vmem:[#allocation11 + $0x80] sm:$0xff]
    %v1726 = vld [vmem:[#allocation11 + $0x88] sm:$0xff]
    %v1727 = vld [vmem:[#allocation11 + $0x90] sm:$0xff]
    %v1728 = vld [vmem:[#allocation11 + $0x98] sm:$0xff]
    %v1729 = vld [vmem:[#allocation11 + $0xa0] sm:$0xff]
    %v1730 = vld [vmem:[#allocation11 + $0xa8] sm:$0xff]
    %v1731 = vld [vmem:[#allocation11 + $0xb0] sm:$0xff]
    %v1732 = vld [vmem:[#allocation11 + $0xb8] sm:$0xff]
    %v1733 = vld [vmem:[#allocation11 + $0xc0] sm:$0xff]
    %v1734 = vld [vmem:[#allocation11 + $0xc8] sm:$0xff]
    %v1735 = vld [vmem:[#allocation11 + $0xd0] sm:$0xff]
    %v1736 = vld [vmem:[#allocation11 + $0xd8] sm:$0xff]
    %v1737 = vld [vmem:[#allocation11 + $0xe0] sm:$0xff]
    %v1738 = vld [vmem:[#allocation11 + $0xe8] sm:$0xff]
    %v1739 = vld [vmem:[#allocation11 + $0xf0] sm:$0xff]
    %v1740 = vld [vmem:[#allocation11 + $0xf8] sm:$0xff]
    %v1773 = vunpack.c.l.b16 %v1709
    %v1774 = vunpack.c.h.b16 %v1709
    %v1775 = vunpack.c.l.b16 %v1710
    %v1776 = vunpack.c.h.b16 %v1710
    %v1777 = vunpack.c.l.b16 %v1711
    %v1778 = vunpack.c.h.b16 %v1711
    %v1779 = vunpack.c.l.b16 %v1712
    %v1780 = vunpack.c.h.b16 %v1712
    %v1781 = vunpack.c.l.b16 %v1713
    %v1782 = vunpack.c.h.b16 %v1713
    %v1783 = vunpack.c.l.b16 %v1714
    %v1784 = vunpack.c.h.b16 %v1714
    %v1785 = vunpack.c.l.b16 %v1715
    %v1786 = vunpack.c.h.b16 %v1715
    %v1787 = vunpack.c.l.b16 %v1716
    %v1788 = vunpack.c.h.b16 %v1716
    %v1789 = vunpack.c.l.b16 %v1717
    %v1790 = vunpack.c.h.b16 %v1717
    %v1791 = vunpack.c.l.b16 %v1718
    %v1792 = vunpack.c.h.b16 %v1718
    %v1793 = vunpack.c.l.b16 %v1719
    %v1794 = vunpack.c.h.b16 %v1719
    %v1795 = vunpack.c.l.b16 %v1720
    %v1796 = vunpack.c.h.b16 %v1720
    %v1797 = vunpack.c.l.b16 %v1721
    %v1798 = vunpack.c.h.b16 %v1721
    %v1799 = vunpack.c.l.b16 %v1722
    %v1800 = vunpack.c.h.b16 %v1722
    %v1801 = vunpack.c.l.b16 %v1723
    %v1802 = vunpack.c.h.b16 %v1723
    %v1803 = vunpack.c.l.b16 %v1724
    %v1804 = vunpack.c.h.b16 %v1724
    %v1805 = vunpack.c.l.b16 %v1725
    %v1806 = vunpack.c.h.b16 %v1725
    %v1807 = vunpack.c.l.b16 %v1726
    %v1808 = vunpack.c.h.b16 %v1726
    %v1809 = vunpack.c.l.b16 %v1727
    %v1810 = vunpack.c.h.b16 %v1727
    %v1811 = vunpack.c.l.b16 %v1728
    %v1812 = vunpack.c.h.b16 %v1728
    %v1813 = vunpack.c.l.b16 %v1729
    %v1814 = vunpack.c.h.b16 %v1729
    %v1815 = vunpack.c.l.b16 %v1730
    %v1816 = vunpack.c.h.b16 %v1730
    %v1817 = vunpack.c.l.b16 %v1731
    %v1818 = vunpack.c.h.b16 %v1731
    %v1819 = vunpack.c.l.b16 %v1732
    %v1820 = vunpack.c.h.b16 %v1732
    %v1821 = vunpack.c.l.b16 %v1733
    %v1822 = vunpack.c.h.b16 %v1733
    %v1823 = vunpack.c.l.b16 %v1734
    %v1824 = vunpack.c.h.b16 %v1734
    %v1825 = vunpack.c.l.b16 %v1735
    %v1826 = vunpack.c.h.b16 %v1735
    %v1827 = vunpack.c.l.b16 %v1736
    %v1828 = vunpack.c.h.b16 %v1736
    %v1829 = vunpack.c.l.b16 %v1737
    %v1830 = vunpack.c.h.b16 %v1737
    %v1831 = vunpack.c.l.b16 %v1738
    %v1832 = vunpack.c.h.b16 %v1738
    %v1833 = vunpack.c.l.b16 %v1739
    %v1834 = vunpack.c.h.b16 %v1739
    %v1835 = vunpack.c.l.b16 %v1740
    %v1836 = vunpack.c.h.b16 %v1740
    %v1837 = vpack.c.b16 %v1777, %v1773
    %v1838 = vpack.c.b16 %v1778, %v1774
    %v1839 = vpack.c.b16 %v1779, %v1775
    %v1840 = vpack.c.b16 %v1780, %v1776
    %v1841 = vpack.c.b16 %v1785, %v1781
    %v1842 = vpack.c.b16 %v1786, %v1782
    %v1843 = vpack.c.b16 %v1787, %v1783
    %v1844 = vpack.c.b16 %v1788, %v1784
    %v1845 = vpack.c.b16 %v1793, %v1789
    %v1846 = vpack.c.b16 %v1794, %v1790
    %v1847 = vpack.c.b16 %v1795, %v1791
    %v1848 = vpack.c.b16 %v1796, %v1792
    %v1849 = vpack.c.b16 %v1801, %v1797
    %v1850 = vpack.c.b16 %v1802, %v1798
    %v1851 = vpack.c.b16 %v1803, %v1799
    %v1852 = vpack.c.b16 %v1804, %v1800
    %v1853 = vpack.c.b16 %v1809, %v1805
    %v1854 = vpack.c.b16 %v1810, %v1806
    %v1855 = vpack.c.b16 %v1811, %v1807
    %v1856 = vpack.c.b16 %v1812, %v1808
    %v1857 = vpack.c.b16 %v1817, %v1813
    %v1858 = vpack.c.b16 %v1818, %v1814
    %v1859 = vpack.c.b16 %v1819, %v1815
    %v1860 = vpack.c.b16 %v1820, %v1816
    %v1861 = vpack.c.b16 %v1825, %v1821
    %v1862 = vpack.c.b16 %v1826, %v1822
    %v1863 = vpack.c.b16 %v1827, %v1823
    %v1864 = vpack.c.b16 %v1828, %v1824
    %v1865 = vpack.c.b16 %v1833, %v1829
    %v1866 = vpack.c.b16 %v1834, %v1830
    %v1867 = vpack.c.b16 %v1835, %v1831
    %v1868 = vpack.c.b16 %v1836, %v1832
    %1901 = vmatprep.subr.bf16.mxu0 %v1838
    %1902 = vmatpush1.bf16.msra.mxu0 %v1837
    %1903 = vmatprep.subr.bf16.mxu0 %v1842
    %1904 = vmatpush1.bf16.msra.mxu0 %v1841
    %1905 = vmatprep.subr.bf16.mxu0 %v1846
    %1906 = vmatpush1.bf16.msra.mxu0 %v1845
    %1907 = vmatprep.subr.bf16.mxu0 %v1850
    %1908 = vmatpush1.bf16.msra.mxu0 %v1849
    %1909 = vmatprep.subr.bf16.mxu0 %v1854
    %1910 = vmatpush1.bf16.msra.mxu0 %v1853
    %1911 = vmatprep.subr.bf16.mxu0 %v1858
    %1912 = vmatpush1.bf16.msra.mxu0 %v1857
    %1913 = vmatprep.subr.bf16.mxu0 %v1862
    %1914 = vmatpush1.bf16.msra.mxu0 %v1861
    %1915 = vmatprep.subr.bf16.mxu0 %v1866
    %1916 = vmatpush1.bf16.msra.mxu0 %v1865
    %1917 = vmatprep.subr.bf16.mxu0 0
    %1918 = vmatpush1.bf16.msra.mxu0 0
    %1919 = vmatprep.subr.bf16.mxu0 0
    %1920 = vmatpush1.bf16.msra.mxu0 0
    %1921 = vmatprep.subr.bf16.mxu0 0
    %1922 = vmatpush1.bf16.msra.mxu0 0
    %1923 = vmatprep.subr.bf16.mxu0 0
    %1924 = vmatpush1.bf16.msra.mxu0 0
    %1925 = vmatprep.subr.bf16.mxu0 0
    %1926 = vmatpush1.bf16.msra.mxu0 0
    %1927 = vmatprep.subr.bf16.mxu0 0
    %1928 = vmatpush1.bf16.msra.mxu0 0
    %1929 = vmatprep.subr.bf16.mxu0 0
    %1930 = vmatpush1.bf16.msra.mxu0 0
    %1931 = vmatprep.subr.bf16.mxu0 0
    %1932 = vmatpush1.bf16.msra.mxu0 0
    %1933 = vmatprep.mubr.bf16.mxu0 0
    %1934 = vmatmul.mubr.bf16.gmra.mrb[0].mxu0 %v1708
    %v1935 = vpop.f32.mrb[0].mxu0
    %v1936 = vadd.f32 0.0, %v1935
    %v1937 = vpop.f32.mrb[0].mxu0
    %v1938 = vadd.f32 0.0, %v1937
    %v1939 = vpop.f32.mrb[0].mxu0
    %v1940 = vadd.f32 0.0, %v1939
    %v1941 = vpop.f32.mrb[0].mxu0
    %v1942 = vadd.f32 0.0, %v1941
    %1943 = vdwg.mxu0
    %1944 = vmatprep.subr.bf16.mxu0 %v1840
    %1945 = vmatpush1.bf16.msra.mxu0 %v1839
    %1946 = vmatprep.subr.bf16.mxu0 %v1844
    %1947 = vmatpush1.bf16.msra.mxu0 %v1843
    %1948 = vmatprep.subr.bf16.mxu0 %v1848
    %1949 = vmatpush1.bf16.msra.mxu0 %v1847
    %1950 = vmatprep.subr.bf16.mxu0 %v1852
    %1951 = vmatpush1.bf16.msra.mxu0 %v1851
    %1952 = vmatprep.subr.bf16.mxu0 %v1856
    %1953 = vmatpush1.bf16.msra.mxu0 %v1855
    %1954 = vmatprep.subr.bf16.mxu0 %v1860
    %1955 = vmatpush1.bf16.msra.mxu0 %v1859
    %1956 = vmatprep.subr.bf16.mxu0 %v1864
    %1957 = vmatpush1.bf16.msra.mxu0 %v1863
    %1958 = vmatprep.subr.bf16.mxu0 %v1868
    %1959 = vmatpush1.bf16.msra.mxu0 %v1867
    %1960 = vmatprep.subr.bf16.mxu0 0
    %1961 = vmatpush1.bf16.msra.mxu0 0
    %1962 = vmatprep.subr.bf16.mxu0 0
    %1963 = vmatpush1.bf16.msra.mxu0 0
    %1964 = vmatprep.subr.bf16.mxu0 0
    %1965 = vmatpush1.bf16.msra.mxu0 0
    %1966 = vmatprep.subr.bf16.mxu0 0
    %1967 = vmatpush1.bf16.msra.mxu0 0
    %1968 = vmatprep.subr.bf16.mxu0 0
    %1969 = vmatpush1.bf16.msra.mxu0 0
    %1970 = vmatprep.subr.bf16.mxu0 0
    %1971 = vmatpush1.bf16.msra.mxu0 0
    %1972 = vmatprep.subr.bf16.mxu0 0
    %1973 = vmatpush1.bf16.msra.mxu0 0
    %1974 = vmatprep.subr.bf16.mxu0 0
    %1975 = vmatpush1.bf16.msra.mxu0 0
    %1976 = vmatprep.mubr.bf16.mxu0 0
    %1977 = vmatmul.mubr.bf16.gmra.mrb[0].mxu0 %v1708
    %v1978 = vpop.f32.mrb[0].mxu0
    %v1979 = vadd.f32 0.0, %v1978
    %v1980 = vpop.f32.mrb[0].mxu0
    %v1981 = vadd.f32 0.0, %v1980
    %v1982 = vpop.f32.mrb[0].mxu0
    %v1983 = vadd.f32 0.0, %v1982
    %v1984 = vpop.f32.mrb[0].mxu0
    %v1985 = vadd.f32 0.0, %v1984
    %1986 = vdwg.mxu0
    %v1987 = vadd.f32 %v1700, %v1936
    %v1988 = vadd.f32 %v1701, %v1938
    %v1989 = vadd.f32 %v1702, %v1979
    %v1990 = vadd.f32 %v1703, %v1981
    %v1991 = vadd.f32 %v1704, %v1940
    %v1992 = vadd.f32 %v1705, %v1942
    %v1993 = vadd.f32 %v1706, %v1983
    %v1994 = vadd.f32 %v1707, %v1985
    %v1995 = vxor.u32 %v1987, 2147483648
    %v1996 = vxor.u32 %v1991, 2147483648
    %v1997 = vmul.f32 %v1995, 1.442695
    %v1998 = vpow.pop %v1997
    %v1999 = vmul.f32 %v1996, 1.442695
    %v2000 = vpow.pop %v1999
    %v2001 = vadd.f32 %v1998, 1.0
    %v2002 = vadd.f32 %v2000, 1.0
    %v2003 = vrcp.pop %v2001
    %v2004 = vmul.f32 1.0, %v2003
    %v2005 = vrcp.pop %v2002
    %v2006 = vmul.f32 1.0, %v2005
    %v2007 = vxor.u32 %v1988, 2147483648
    %v2008 = vxor.u32 %v1992, 2147483648
    %v2009 = vmul.f32 %v2007, 1.442695
    %v2010 = vpow.pop %v2009
    %v2011 = vmul.f32 %v2008, 1.442695
    %v2012 = vpow.pop %v2011
    %v2013 = vadd.f32 %v2010, 1.0
    %v2014 = vadd.f32 %v2012, 1.0
    %v2015 = vrcp.pop %v2013
    %v2016 = vmul.f32 1.0, %v2015
    %v2017 = vrcp.pop %v2014
    %v2018 = vmul.f32 1.0, %v2017
    %v2019 = vtanh.pop %v1989
    %v2020 = vtanh.pop %v1993
    %v2021 = vxor.u32 %v1990, 2147483648
    %v2022 = vxor.u32 %v1994, 2147483648
    %v2023 = vmul.f32 %v2021, 1.442695
    %v2024 = vpow.pop %v2023
    %v2025 = vmul.f32 %v2022, 1.442695
    %v2026 = vpow.pop %v2025
    %v2027 = vadd.f32 %v2024, 1.0
    %v2028 = vadd.f32 %v2026, 1.0
    %v2029 = vrcp.pop %v2027
    %v2030 = vmul.f32 1.0, %v2029
    %v2031 = vrcp.pop %v2028
    %v2032 = vmul.f32 1.0, %v2031
    %v2033 = vmul.f32 %v2016, %v1690
    %v2034 = vmul.f32 %v2018, %v1691
    %v2035 = vmul.f32 %v2004, %v2019
    %v2036 = vmul.f32 %v2006, %v2020
    %v2037 = vadd.f32 %v2033, %v2035
    %v2038 = vadd.f32 %v2034, %v2036
    %v2039 = vtanh.pop %v2037
    %v2040 = vtanh.pop %v2038
    %v2041 = vmul.f32 %v2030, %v2039
    %v2042 = vmul.f32 %v2032, %v2040
    %s2043 = scalar_lea.vmem [#allocation5], 48
    %2044 = vst [vmem:[%s2043] sm:$0xff] %v2041
    %2045 = vst [vmem:[%s2043 + $0x8] sm:$0xff] %v2042
    %s2046 = scalar_lea.vmem [#allocation4], 256
    %v2047 = vld [vmem:[%s2046] sm:$0xff]
    %v2048 = vld [vmem:[%s2046 + $0x8] sm:$0xff]
    %v2049 = vld [vmem:[%s2046 + $0x10] sm:$0xff]
    %v2050 = vld [vmem:[%s2046 + $0x18] sm:$0xff]
    %v2051 = vld [vmem:[%s2046 + $0x20] sm:$0xff]
    %v2052 = vld [vmem:[%s2046 + $0x28] sm:$0xff]
    %v2053 = vld [vmem:[%s2046 + $0x30] sm:$0xff]
    %v2054 = vld [vmem:[%s2046 + $0x38] sm:$0xff]
    %v2055 = vpack.c.bf16 %v2042, %v2041
    %v2056 = vld [vmem:[#allocation11] sm:$0xff]
    %v2057 = vld [vmem:[#allocation11 + $0x8] sm:$0xff]
    %v2058 = vld [vmem:[#allocation11 + $0x10] sm:$0xff]
    %v2059 = vld [vmem:[#allocation11 + $0x18] sm:$0xff]
    %v2060 = vld [vmem:[#allocation11 + $0x20] sm:$0xff]
    %v2061 = vld [vmem:[#allocation11 + $0x28] sm:$0xff]
    %v2062 = vld [vmem:[#allocation11 + $0x30] sm:$0xff]
    %v2063 = vld [vmem:[#allocation11 + $0x38] sm:$0xff]
    %v2064 = vld [vmem:[#allocation11 + $0x40] sm:$0xff]
    %v2065 = vld [vmem:[#allocation11 + $0x48] sm:$0xff]
    %v2066 = vld [vmem:[#allocation11 + $0x50] sm:$0xff]
    %v2067 = vld [vmem:[#allocation11 + $0x58] sm:$0xff]
    %v2068 = vld [vmem:[#allocation11 + $0x60] sm:$0xff]
    %v2069 = vld [vmem:[#allocation11 + $0x68] sm:$0xff]
    %v2070 = vld [vmem:[#allocation11 + $0x70] sm:$0xff]
    %v2071 = vld [vmem:[#allocation11 + $0x78] sm:$0xff]
    %v2072 = vld [vmem:[#allocation11 + $0x80] sm:$0xff]
    %v2073 = vld [vmem:[#allocation11 + $0x88] sm:$0xff]
    %v2074 = vld [vmem:[#allocation11 + $0x90] sm:$0xff]
    %v2075 = vld [vmem:[#allocation11 + $0x98] sm:$0xff]
    %v2076 = vld [vmem:[#allocation11 + $0xa0] sm:$0xff]
    %v2077 = vld [vmem:[#allocation11 + $0xa8] sm:$0xff]
    %v2078 = vld [vmem:[#allocation11 + $0xb0] sm:$0xff]
    %v2079 = vld [vmem:[#allocation11 + $0xb8] sm:$0xff]
    %v2080 = vld [vmem:[#allocation11 + $0xc0] sm:$0xff]
    %v2081 = vld [vmem:[#allocation11 + $0xc8] sm:$0xff]
    %v2082 = vld [vmem:[#allocation11 + $0xd0] sm:$0xff]
    %v2083 = vld [vmem:[#allocation11 + $0xd8] sm:$0xff]
    %v2084 = vld [vmem:[#allocation11 + $0xe0] sm:$0xff]
    %v2085 = vld [vmem:[#allocation11 + $0xe8] sm:$0xff]
    %v2086 = vld [vmem:[#allocation11 + $0xf0] sm:$0xff]
    %v2087 = vld [vmem:[#allocation11 + $0xf8] sm:$0xff]
    %v2120 = vunpack.c.l.b16 %v2056
    %v2121 = vunpack.c.h.b16 %v2056
    %v2122 = vunpack.c.l.b16 %v2057
    %v2123 = vunpack.c.h.b16 %v2057
    %v2124 = vunpack.c.l.b16 %v2058
    %v2125 = vunpack.c.h.b16 %v2058
    %v2126 = vunpack.c.l.b16 %v2059
    %v2127 = vunpack.c.h.b16 %v2059
    %v2128 = vunpack.c.l.b16 %v2060
    %v2129 = vunpack.c.h.b16 %v2060
    %v2130 = vunpack.c.l.b16 %v2061
    %v2131 = vunpack.c.h.b16 %v2061
    %v2132 = vunpack.c.l.b16 %v2062
    %v2133 = vunpack.c.h.b16 %v2062
    %v2134 = vunpack.c.l.b16 %v2063
    %v2135 = vunpack.c.h.b16 %v2063
    %v2136 = vunpack.c.l.b16 %v2064
    %v2137 = vunpack.c.h.b16 %v2064
    %v2138 = vunpack.c.l.b16 %v2065
    %v2139 = vunpack.c.h.b16 %v2065
    %v2140 = vunpack.c.l.b16 %v2066
    %v2141 = vunpack.c.h.b16 %v2066
    %v2142 = vunpack.c.l.b16 %v2067
    %v2143 = vunpack.c.h.b16 %v2067
    %v2144 = vunpack.c.l.b16 %v2068
    %v2145 = vunpack.c.h.b16 %v2068
    %v2146 = vunpack.c.l.b16 %v2069
    %v2147 = vunpack.c.h.b16 %v2069
    %v2148 = vunpack.c.l.b16 %v2070
    %v2149 = vunpack.c.h.b16 %v2070
    %v2150 = vunpack.c.l.b16 %v2071
    %v2151 = vunpack.c.h.b16 %v2071
    %v2152 = vunpack.c.l.b16 %v2072
    %v2153 = vunpack.c.h.b16 %v2072
    %v2154 = vunpack.c.l.b16 %v2073
    %v2155 = vunpack.c.h.b16 %v2073
    %v2156 = vunpack.c.l.b16 %v2074
    %v2157 = vunpack.c.h.b16 %v2074
    %v2158 = vunpack.c.l.b16 %v2075
    %v2159 = vunpack.c.h.b16 %v2075
    %v2160 = vunpack.c.l.b16 %v2076
    %v2161 = vunpack.c.h.b16 %v2076
    %v2162 = vunpack.c.l.b16 %v2077
    %v2163 = vunpack.c.h.b16 %v2077
    %v2164 = vunpack.c.l.b16 %v2078
    %v2165 = vunpack.c.h.b16 %v2078
    %v2166 = vunpack.c.l.b16 %v2079
    %v2167 = vunpack.c.h.b16 %v2079
    %v2168 = vunpack.c.l.b16 %v2080
    %v2169 = vunpack.c.h.b16 %v2080
    %v2170 = vunpack.c.l.b16 %v2081
    %v2171 = vunpack.c.h.b16 %v2081
    %v2172 = vunpack.c.l.b16 %v2082
    %v2173 = vunpack.c.h.b16 %v2082
    %v2174 = vunpack.c.l.b16 %v2083
    %v2175 = vunpack.c.h.b16 %v2083
    %v2176 = vunpack.c.l.b16 %v2084
    %v2177 = vunpack.c.h.b16 %v2084
    %v2178 = vunpack.c.l.b16 %v2085
    %v2179 = vunpack.c.h.b16 %v2085
    %v2180 = vunpack.c.l.b16 %v2086
    %v2181 = vunpack.c.h.b16 %v2086
    %v2182 = vunpack.c.l.b16 %v2087
    %v2183 = vunpack.c.h.b16 %v2087
    %v2184 = vpack.c.b16 %v2124, %v2120
    %v2185 = vpack.c.b16 %v2125, %v2121
    %v2186 = vpack.c.b16 %v2126, %v2122
    %v2187 = vpack.c.b16 %v2127, %v2123
    %v2188 = vpack.c.b16 %v2132, %v2128
    %v2189 = vpack.c.b16 %v2133, %v2129
    %v2190 = vpack.c.b16 %v2134, %v2130
    %v2191 = vpack.c.b16 %v2135, %v2131
    %v2192 = vpack.c.b16 %v2140, %v2136
    %v2193 = vpack.c.b16 %v2141, %v2137
    %v2194 = vpack.c.b16 %v2142, %v2138
    %v2195 = vpack.c.b16 %v2143, %v2139
    %v2196 = vpack.c.b16 %v2148, %v2144
    %v2197 = vpack.c.b16 %v2149, %v2145
    %v2198 = vpack.c.b16 %v2150, %v2146
    %v2199 = vpack.c.b16 %v2151, %v2147
    %v2200 = vpack.c.b16 %v2156, %v2152
    %v2201 = vpack.c.b16 %v2157, %v2153
    %v2202 = vpack.c.b16 %v2158, %v2154
    %v2203 = vpack.c.b16 %v2159, %v2155
    %v2204 = vpack.c.b16 %v2164, %v2160
    %v2205 = vpack.c.b16 %v2165, %v2161
    %v2206 = vpack.c.b16 %v2166, %v2162
    %v2207 = vpack.c.b16 %v2167, %v2163
    %v2208 = vpack.c.b16 %v2172, %v2168
    %v2209 = vpack.c.b16 %v2173, %v2169
    %v2210 = vpack.c.b16 %v2174, %v2170
    %v2211 = vpack.c.b16 %v2175, %v2171
    %v2212 = vpack.c.b16 %v2180, %v2176
    %v2213 = vpack.c.b16 %v2181, %v2177
    %v2214 = vpack.c.b16 %v2182, %v2178
    %v2215 = vpack.c.b16 %v2183, %v2179
    %2248 = vmatprep.subr.bf16.mxu0 %v2185
    %2249 = vmatpush1.bf16.msra.mxu0 %v2184
    %2250 = vmatprep.subr.bf16.mxu0 %v2189
    %2251 = vmatpush1.bf16.msra.mxu0 %v2188
    %2252 = vmatprep.subr.bf16.mxu0 %v2193
    %2253 = vmatpush1.bf16.msra.mxu0 %v2192
    %2254 = vmatprep.subr.bf16.mxu0 %v2197
    %2255 = vmatpush1.bf16.msra.mxu0 %v2196
    %2256 = vmatprep.subr.bf16.mxu0 %v2201
    %2257 = vmatpush1.bf16.msra.mxu0 %v2200
    %2258 = vmatprep.subr.bf16.mxu0 %v2205
    %2259 = vmatpush1.bf16.msra.mxu0 %v2204
    %2260 = vmatprep.subr.bf16.mxu0 %v2209
    %2261 = vmatpush1.bf16.msra.mxu0 %v2208
    %2262 = vmatprep.subr.bf16.mxu0 %v2213
    %2263 = vmatpush1.bf16.msra.mxu0 %v2212
    %2264 = vmatprep.subr.bf16.mxu0 0
    %2265 = vmatpush1.bf16.msra.mxu0 0
    %2266 = vmatprep.subr.bf16.mxu0 0
    %2267 = vmatpush1.bf16.msra.mxu0 0
    %2268 = vmatprep.subr.bf16.mxu0 0
    %2269 = vmatpush1.bf16.msra.mxu0 0
    %2270 = vmatprep.subr.bf16.mxu0 0
    %2271 = vmatpush1.bf16.msra.mxu0 0
    %2272 = vmatprep.subr.bf16.mxu0 0
    %2273 = vmatpush1.bf16.msra.mxu0 0
    %2274 = vmatprep.subr.bf16.mxu0 0
    %2275 = vmatpush1.bf16.msra.mxu0 0
    %2276 = vmatprep.subr.bf16.mxu0 0
    %2277 = vmatpush1.bf16.msra.mxu0 0
    %2278 = vmatprep.subr.bf16.mxu0 0
    %2279 = vmatpush1.bf16.msra.mxu0 0
    %2280 = vmatprep.mubr.bf16.mxu0 0
    %2281 = vmatmul.mubr.bf16.gmra.mrb[0].mxu0 %v2055
    %v2282 = vpop.f32.mrb[0].mxu0
    %v2283 = vadd.f32 0.0, %v2282
    %v2284 = vpop.f32.mrb[0].mxu0
    %v2285 = vadd.f32 0.0, %v2284
    %v2286 = vpop.f32.mrb[0].mxu0
    %v2287 = vadd.f32 0.0, %v2286
    %v2288 = vpop.f32.mrb[0].mxu0
    %v2289 = vadd.f32 0.0, %v2288
    %2290 = vdwg.mxu0
    %2291 = vmatprep.subr.bf16.mxu0 %v2187
    %2292 = vmatpush1.bf16.msra.mxu0 %v2186
    %2293 = vmatprep.subr.bf16.mxu0 %v2191
    %2294 = vmatpush1.bf16.msra.mxu0 %v2190
    %2295 = vmatprep.subr.bf16.mxu0 %v2195
    %2296 = vmatpush1.bf16.msra.mxu0 %v2194
    %2297 = vmatprep.subr.bf16.mxu0 %v2199
    %2298 = vmatpush1.bf16.msra.mxu0 %v2198
    %2299 = vmatprep.subr.bf16.mxu0 %v2203
    %2300 = vmatpush1.bf16.msra.mxu0 %v2202
    %2301 = vmatprep.subr.bf16.mxu0 %v2207
    %2302 = vmatpush1.bf16.msra.mxu0 %v2206
    %2303 = vmatprep.subr.bf16.mxu0 %v2211
    %2304 = vmatpush1.bf16.msra.mxu0 %v2210
    %2305 = vmatprep.subr.bf16.mxu0 %v2215
    %2306 = vmatpush1.bf16.msra.mxu0 %v2214
    %2307 = vmatprep.subr.bf16.mxu0 0
    %2308 = vmatpush1.bf16.msra.mxu0 0
    %2309 = vmatprep.subr.bf16.mxu0 0
    %2310 = vmatpush1.bf16.msra.mxu0 0
    %2311 = vmatprep.subr.bf16.mxu0 0
    %2312 = vmatpush1.bf16.msra.mxu0 0
    %2313 = vmatprep.subr.bf16.mxu0 0
    %2314 = vmatpush1.bf16.msra.mxu0 0
    %2315 = vmatprep.subr.bf16.mxu0 0
    %2316 = vmatpush1.bf16.msra.mxu0 0
    %2317 = vmatprep.subr.bf16.mxu0 0
    %2318 = vmatpush1.bf16.msra.mxu0 0
    %2319 = vmatprep.subr.bf16.mxu0 0
    %2320 = vmatpush1.bf16.msra.mxu0 0
    %2321 = vmatprep.subr.bf16.mxu0 0
    %2322 = vmatpush1.bf16.msra.mxu0 0
    %2323 = vmatprep.mubr.bf16.mxu0 0
    %2324 = vmatmul.mubr.bf16.gmra.mrb[0].mxu0 %v2055
    %v2325 = vpop.f32.mrb[0].mxu0
    %v2326 = vadd.f32 0.0, %v2325
    %v2327 = vpop.f32.mrb[0].mxu0
    %v2328 = vadd.f32 0.0, %v2327
    %v2329 = vpop.f32.mrb[0].mxu0
    %v2330 = vadd.f32 0.0, %v2329
    %v2331 = vpop.f32.mrb[0].mxu0
    %v2332 = vadd.f32 0.0, %v2331
    %2333 = vdwg.mxu0
    %v2334 = vadd.f32 %v2047, %v2283
    %v2335 = vadd.f32 %v2048, %v2285
    %v2336 = vadd.f32 %v2049, %v2326
    %v2337 = vadd.f32 %v2050, %v2328
    %v2338 = vadd.f32 %v2051, %v2287
    %v2339 = vadd.f32 %v2052, %v2289
    %v2340 = vadd.f32 %v2053, %v2330
    %v2341 = vadd.f32 %v2054, %v2332
    %v2342 = vxor.u32 %v2334, 2147483648
    %v2343 = vxor.u32 %v2338, 2147483648
    %v2344 = vmul.f32 %v2342, 1.442695
    %v2345 = vpow.pop %v2344
    %v2346 = vmul.f32 %v2343, 1.442695
    %v2347 = vpow.pop %v2346
    %v2348 = vadd.f32 %v2345, 1.0
    %v2349 = vadd.f32 %v2347, 1.0
    %v2350 = vrcp.pop %v2348
    %v2351 = vmul.f32 1.0, %v2350
    %v2352 = vrcp.pop %v2349
    %v2353 = vmul.f32 1.0, %v2352
    %v2354 = vxor.u32 %v2335, 2147483648
    %v2355 = vxor.u32 %v2339, 2147483648
    %v2356 = vmul.f32 %v2354, 1.442695
    %v2357 = vpow.pop %v2356
    %v2358 = vmul.f32 %v2355, 1.442695
    %v2359 = vpow.pop %v2358
    %v2360 = vadd.f32 %v2357, 1.0
    %v2361 = vadd.f32 %v2359, 1.0
    %v2362 = vrcp.pop %v2360
    %v2363 = vmul.f32 1.0, %v2362
    %v2364 = vrcp.pop %v2361
    %v2365 = vmul.f32 1.0, %v2364
    %v2366 = vtanh.pop %v2336
    %v2367 = vtanh.pop %v2340
    %v2368 = vxor.u32 %v2337, 2147483648
    %v2369 = vxor.u32 %v2341, 2147483648
    %v2370 = vmul.f32 %v2368, 1.442695
    %v2371 = vpow.pop %v2370
    %v2372 = vmul.f32 %v2369, 1.442695
    %v2373 = vpow.pop %v2372
    %v2374 = vadd.f32 %v2371, 1.0
    %v2375 = vadd.f32 %v2373, 1.0
    %v2376 = vrcp.pop %v2374
    %v2377 = vmul.f32 1.0, %v2376
    %v2378 = vrcp.pop %v2375
    %v2379 = vmul.f32 1.0, %v2378
    %v2380 = vmul.f32 %v2363, %v2037
    %v2381 = vmul.f32 %v2365, %v2038
    %v2382 = vmul.f32 %v2351, %v2366
    %v2383 = vmul.f32 %v2353, %v2367
    %v2384 = vadd.f32 %v2380, %v2382
    %v2385 = vadd.f32 %v2381, %v2383
    %v2386 = vtanh.pop %v2384
    %v2387 = vtanh.pop %v2385
    %v2388 = vmul.f32 %v2377, %v2386
    %v2389 = vmul.f32 %v2379, %v2387
    %s2390 = scalar_lea.vmem [#allocation5], 64
    %2391 = vst [vmem:[%s2390] sm:$0xff] %v2388
    %2392 = vst [vmem:[%s2390 + $0x8] sm:$0xff] %v2389
    %s2393 = scalar_lea.vmem [#allocation4], 320
    %v2394 = vld [vmem:[%s2393] sm:$0xff]
    %v2395 = vld [vmem:[%s2393 + $0x8] sm:$0xff]
    %v2396 = vld [vmem:[%s2393 + $0x10] sm:$0xff]
    %v2397 = vld [vmem:[%s2393 + $0x18] sm:$0xff]
    %v2398 = vld [vmem:[%s2393 + $0x20] sm:$0xff]
    %v2399 = vld [vmem:[%s2393 + $0x28] sm:$0xff]
    %v2400 = vld [vmem:[%s2393 + $0x30] sm:$0xff]
    %v2401 = vld [vmem:[%s2393 + $0x38] sm:$0xff]
    %v2402 = vpack.c.bf16 %v2389, %v2388
    %v2403 = vld [vmem:[#allocation11] sm:$0xff]
    %v2404 = vld [vmem:[#allocation11 + $0x8] sm:$0xff]
    %v2405 = vld [vmem:[#allocation11 + $0x10] sm:$0xff]
    %v2406 = vld [vmem:[#allocation11 + $0x18] sm:$0xff]
    %v2407 = vld [vmem:[#allocation11 + $0x20] sm:$0xff]
    %v2408 = vld [vmem:[#allocation11 + $0x28] sm:$0xff]
    %v2409 = vld [vmem:[#allocation11 + $0x30] sm:$0xff]
    %v2410 = vld [vmem:[#allocation11 + $0x38] sm:$0xff]
    %v2411 = vld [vmem:[#allocation11 + $0x40] sm:$0xff]
    %v2412 = vld [vmem:[#allocation11 + $0x48] sm:$0xff]
    %v2413 = vld [vmem:[#allocation11 + $0x50] sm:$0xff]
    %v2414 = vld [vmem:[#allocation11 + $0x58] sm:$0xff]
    %v2415 = vld [vmem:[#allocation11 + $0x60] sm:$0xff]
    %v2416 = vld [vmem:[#allocation11 + $0x68] sm:$0xff]
    %v2417 = vld [vmem:[#allocation11 + $0x70] sm:$0xff]
    %v2418 = vld [vmem:[#allocation11 + $0x78] sm:$0xff]
    %v2419 = vld [vmem:[#allocation11 + $0x80] sm:$0xff]
    %v2420 = vld [vmem:[#allocation11 + $0x88] sm:$0xff]
    %v2421 = vld [vmem:[#allocation11 + $0x90] sm:$0xff]
    %v2422 = vld [vmem:[#allocation11 + $0x98] sm:$0xff]
    %v2423 = vld [vmem:[#allocation11 + $0xa0] sm:$0xff]
    %v2424 = vld [vmem:[#allocation11 + $0xa8] sm:$0xff]
    %v2425 = vld [vmem:[#allocation11 + $0xb0] sm:$0xff]
    %v2426 = vld [vmem:[#allocation11 + $0xb8] sm:$0xff]
    %v2427 = vld [vmem:[#allocation11 + $0xc0] sm:$0xff]
    %v2428 = vld [vmem:[#allocation11 + $0xc8] sm:$0xff]
    %v2429 = vld [vmem:[#allocation11 + $0xd0] sm:$0xff]
    %v2430 = vld [vmem:[#allocation11 + $0xd8] sm:$0xff]
    %v2431 = vld [vmem:[#allocation11 + $0xe0] sm:$0xff]
    %v2432 = vld [vmem:[#allocation11 + $0xe8] sm:$0xff]
    %v2433 = vld [vmem:[#allocation11 + $0xf0] sm:$0xff]
    %v2434 = vld [vmem:[#allocation11 + $0xf8] sm:$0xff]
    %v2467 = vunpack.c.l.b16 %v2403
    %v2468 = vunpack.c.h.b16 %v2403
    %v2469 = vunpack.c.l.b16 %v2404
    %v2470 = vunpack.c.h.b16 %v2404
    %v2471 = vunpack.c.l.b16 %v2405
    %v2472 = vunpack.c.h.b16 %v2405
    %v2473 = vunpack.c.l.b16 %v2406
    %v2474 = vunpack.c.h.b16 %v2406
    %v2475 = vunpack.c.l.b16 %v2407
    %v2476 = vunpack.c.h.b16 %v2407
    %v2477 = vunpack.c.l.b16 %v2408
    %v2478 = vunpack.c.h.b16 %v2408
    %v2479 = vunpack.c.l.b16 %v2409
    %v2480 = vunpack.c.h.b16 %v2409
    %v2481 = vunpack.c.l.b16 %v2410
    %v2482 = vunpack.c.h.b16 %v2410
    %v2483 = vunpack.c.l.b16 %v2411
    %v2484 = vunpack.c.h.b16 %v2411
    %v2485 = vunpack.c.l.b16 %v2412
    %v2486 = vunpack.c.h.b16 %v2412
    %v2487 = vunpack.c.l.b16 %v2413
    %v2488 = vunpack.c.h.b16 %v2413
    %v2489 = vunpack.c.l.b16 %v2414
    %v2490 = vunpack.c.h.b16 %v2414
    %v2491 = vunpack.c.l.b16 %v2415
    %v2492 = vunpack.c.h.b16 %v2415
    %v2493 = vunpack.c.l.b16 %v2416
    %v2494 = vunpack.c.h.b16 %v2416
    %v2495 = vunpack.c.l.b16 %v2417
    %v2496 = vunpack.c.h.b16 %v2417
    %v2497 = vunpack.c.l.b16 %v2418
    %v2498 = vunpack.c.h.b16 %v2418
    %v2499 = vunpack.c.l.b16 %v2419
    %v2500 = vunpack.c.h.b16 %v2419
    %v2501 = vunpack.c.l.b16 %v2420
    %v2502 = vunpack.c.h.b16 %v2420
    %v2503 = vunpack.c.l.b16 %v2421
    %v2504 = vunpack.c.h.b16 %v2421
    %v2505 = vunpack.c.l.b16 %v2422
    %v2506 = vunpack.c.h.b16 %v2422
    %v2507 = vunpack.c.l.b16 %v2423
    %v2508 = vunpack.c.h.b16 %v2423
    %v2509 = vunpack.c.l.b16 %v2424
    %v2510 = vunpack.c.h.b16 %v2424
    %v2511 = vunpack.c.l.b16 %v2425
    %v2512 = vunpack.c.h.b16 %v2425
    %v2513 = vunpack.c.l.b16 %v2426
    %v2514 = vunpack.c.h.b16 %v2426
    %v2515 = vunpack.c.l.b16 %v2427
    %v2516 = vunpack.c.h.b16 %v2427
    %v2517 = vunpack.c.l.b16 %v2428
    %v2518 = vunpack.c.h.b16 %v2428
    %v2519 = vunpack.c.l.b16 %v2429
    %v2520 = vunpack.c.h.b16 %v2429
    %v2521 = vunpack.c.l.b16 %v2430
    %v2522 = vunpack.c.h.b16 %v2430
    %v2523 = vunpack.c.l.b16 %v2431
    %v2524 = vunpack.c.h.b16 %v2431
    %v2525 = vunpack.c.l.b16 %v2432
    %v2526 = vunpack.c.h.b16 %v2432
    %v2527 = vunpack.c.l.b16 %v2433
    %v2528 = vunpack.c.h.b16 %v2433
    %v2529 = vunpack.c.l.b16 %v2434
    %v2530 = vunpack.c.h.b16 %v2434
    %v2531 = vpack.c.b16 %v2471, %v2467
    %v2532 = vpack.c.b16 %v2472, %v2468
    %v2533 = vpack.c.b16 %v2473, %v2469
    %v2534 = vpack.c.b16 %v2474, %v2470
    %v2535 = vpack.c.b16 %v2479, %v2475
    %v2536 = vpack.c.b16 %v2480, %v2476
    %v2537 = vpack.c.b16 %v2481, %v2477
    %v2538 = vpack.c.b16 %v2482, %v2478
    %v2539 = vpack.c.b16 %v2487, %v2483
    %v2540 = vpack.c.b16 %v2488, %v2484
    %v2541 = vpack.c.b16 %v2489, %v2485
    %v2542 = vpack.c.b16 %v2490, %v2486
    %v2543 = vpack.c.b16 %v2495, %v2491
    %v2544 = vpack.c.b16 %v2496, %v2492
    %v2545 = vpack.c.b16 %v2497, %v2493
    %v2546 = vpack.c.b16 %v2498, %v2494
    %v2547 = vpack.c.b16 %v2503, %v2499
    %v2548 = vpack.c.b16 %v2504, %v2500
    %v2549 = vpack.c.b16 %v2505, %v2501
    %v2550 = vpack.c.b16 %v2506, %v2502
    %v2551 = vpack.c.b16 %v2511, %v2507
    %v2552 = vpack.c.b16 %v2512, %v2508
    %v2553 = vpack.c.b16 %v2513, %v2509
    %v2554 = vpack.c.b16 %v2514, %v2510
    %v2555 = vpack.c.b16 %v2519, %v2515
    %v2556 = vpack.c.b16 %v2520, %v2516
    %v2557 = vpack.c.b16 %v2521, %v2517
    %v2558 = vpack.c.b16 %v2522, %v2518
    %v2559 = vpack.c.b16 %v2527, %v2523
    %v2560 = vpack.c.b16 %v2528, %v2524
    %v2561 = vpack.c.b16 %v2529, %v2525
    %v2562 = vpack.c.b16 %v2530, %v2526
    %2595 = vmatprep.subr.bf16.mxu0 %v2532
    %2596 = vmatpush1.bf16.msra.mxu0 %v2531
    %2597 = vmatprep.subr.bf16.mxu0 %v2536
    %2598 = vmatpush1.bf16.msra.mxu0 %v2535
    %2599 = vmatprep.subr.bf16.mxu0 %v2540
    %2600 = vmatpush1.bf16.msra.mxu0 %v2539
    %2601 = vmatprep.subr.bf16.mxu0 %v2544
    %2602 = vmatpush1.bf16.msra.mxu0 %v2543
    %2603 = vmatprep.subr.bf16.mxu0 %v2548
    %2604 = vmatpush1.bf16.msra.mxu0 %v2547
    %2605 = vmatprep.subr.bf16.mxu0 %v2552
    %2606 = vmatpush1.bf16.msra.mxu0 %v2551
    %2607 = vmatprep.subr.bf16.mxu0 %v2556
    %2608 = vmatpush1.bf16.msra.mxu0 %v2555
    %2609 = vmatprep.subr.bf16.mxu0 %v2560
    %2610 = vmatpush1.bf16.msra.mxu0 %v2559
    %2611 = vmatprep.subr.bf16.mxu0 0
    %2612 = vmatpush1.bf16.msra.mxu0 0
    %2613 = vmatprep.subr.bf16.mxu0 0
    %2614 = vmatpush1.bf16.msra.mxu0 0
    %2615 = vmatprep.subr.bf16.mxu0 0
    %2616 = vmatpush1.bf16.msra.mxu0 0
    %2617 = vmatprep.subr.bf16.mxu0 0
    %2618 = vmatpush1.bf16.msra.mxu0 0
    %2619 = vmatprep.subr.bf16.mxu0 0
    %2620 = vmatpush1.bf16.msra.mxu0 0
    %2621 = vmatprep.subr.bf16.mxu0 0
    %2622 = vmatpush1.bf16.msra.mxu0 0
    %2623 = vmatprep.subr.bf16.mxu0 0
    %2624 = vmatpush1.bf16.msra.mxu0 0
    %2625 = vmatprep.subr.bf16.mxu0 0
    %2626 = vmatpush1.bf16.msra.mxu0 0
    %2627 = vmatprep.mubr.bf16.mxu0 0
    %2628 = vmatmul.mubr.bf16.gmra.mrb[0].mxu0 %v2402
    %v2629 = vpop.f32.mrb[0].mxu0
    %v2630 = vadd.f32 0.0, %v2629
    %v2631 = vpop.f32.mrb[0].mxu0
    %v2632 = vadd.f32 0.0, %v2631
    %v2633 = vpop.f32.mrb[0].mxu0
    %v2634 = vadd.f32 0.0, %v2633
    %v2635 = vpop.f32.mrb[0].mxu0
    %v2636 = vadd.f32 0.0, %v2635
    %2637 = vdwg.mxu0
    %2638 = vmatprep.subr.bf16.mxu0 %v2534
    %2639 = vmatpush1.bf16.msra.mxu0 %v2533
    %2640 = vmatprep.subr.bf16.mxu0 %v2538
    %2641 = vmatpush1.bf16.msra.mxu0 %v2537
    %2642 = vmatprep.subr.bf16.mxu0 %v2542
    %2643 = vmatpush1.bf16.msra.mxu0 %v2541
    %2644 = vmatprep.subr.bf16.mxu0 %v2546
    %2645 = vmatpush1.bf16.msra.mxu0 %v2545
    %2646 = vmatprep.subr.bf16.mxu0 %v2550
    %2647 = vmatpush1.bf16.msra.mxu0 %v2549
    %2648 = vmatprep.subr.bf16.mxu0 %v2554
    %2649 = vmatpush1.bf16.msra.mxu0 %v2553
    %2650 = vmatprep.subr.bf16.mxu0 %v2558
    %2651 = vmatpush1.bf16.msra.mxu0 %v2557
    %2652 = vmatprep.subr.bf16.mxu0 %v2562
    %2653 = vmatpush1.bf16.msra.mxu0 %v2561
    %2654 = vmatprep.subr.bf16.mxu0 0
    %2655 = vmatpush1.bf16.msra.mxu0 0
    %2656 = vmatprep.subr.bf16.mxu0 0
    %2657 = vmatpush1.bf16.msra.mxu0 0
    %2658 = vmatprep.subr.bf16.mxu0 0
    %2659 = vmatpush1.bf16.msra.mxu0 0
    %2660 = vmatprep.subr.bf16.mxu0 0
    %2661 = vmatpush1.bf16.msra.mxu0 0
    %2662 = vmatprep.subr.bf16.mxu0 0
    %2663 = vmatpush1.bf16.msra.mxu0 0
    %2664 = vmatprep.subr.bf16.mxu0 0
    %2665 = vmatpush1.bf16.msra.mxu0 0
    %2666 = vmatprep.subr.bf16.mxu0 0
    %2667 = vmatpush1.bf16.msra.mxu0 0
    %2668 = vmatprep.subr.bf16.mxu0 0
    %2669 = vmatpush1.bf16.msra.mxu0 0
    %2670 = vmatprep.mubr.bf16.mxu0 0
    %2671 = vmatmul.mubr.bf16.gmra.mrb[0].mxu0 %v2402
    %v2672 = vpop.f32.mrb[0].mxu0
    %v2673 = vadd.f32 0.0, %v2672
    %v2674 = vpop.f32.mrb[0].mxu0
    %v2675 = vadd.f32 0.0, %v2674
    %v2676 = vpop.f32.mrb[0].mxu0
    %v2677 = vadd.f32 0.0, %v2676
    %v2678 = vpop.f32.mrb[0].mxu0
    %v2679 = vadd.f32 0.0, %v2678
    %2680 = vdwg.mxu0
    %v2681 = vadd.f32 %v2394, %v2630
    %v2682 = vadd.f32 %v2395, %v2632
    %v2683 = vadd.f32 %v2396, %v2673
    %v2684 = vadd.f32 %v2397, %v2675
    %v2685 = vadd.f32 %v2398, %v2634
    %v2686 = vadd.f32 %v2399, %v2636
    %v2687 = vadd.f32 %v2400, %v2677
    %v2688 = vadd.f32 %v2401, %v2679
    %v2689 = vxor.u32 %v2681, 2147483648
    %v2690 = vxor.u32 %v2685, 2147483648
    %v2691 = vmul.f32 %v2689, 1.442695
    %v2692 = vpow.pop %v2691
    %v2693 = vmul.f32 %v2690, 1.442695
    %v2694 = vpow.pop %v2693
    %v2695 = vadd.f32 %v2692, 1.0
    %v2696 = vadd.f32 %v2694, 1.0
    %v2697 = vrcp.pop %v2695
    %v2698 = vmul.f32 1.0, %v2697
    %v2699 = vrcp.pop %v2696
    %v2700 = vmul.f32 1.0, %v2699
    %v2701 = vxor.u32 %v2682, 2147483648
    %v2702 = vxor.u32 %v2686, 2147483648
    %v2703 = vmul.f32 %v2701, 1.442695
    %v2704 = vpow.pop %v2703
    %v2705 = vmul.f32 %v2702, 1.442695
    %v2706 = vpow.pop %v2705
    %v2707 = vadd.f32 %v2704, 1.0
    %v2708 = vadd.f32 %v2706, 1.0
    %v2709 = vrcp.pop %v2707
    %v2710 = vmul.f32 1.0, %v2709
    %v2711 = vrcp.pop %v2708
    %v2712 = vmul.f32 1.0, %v2711
    %v2713 = vtanh.pop %v2683
    %v2714 = vtanh.pop %v2687
    %v2715 = vxor.u32 %v2684, 2147483648
    %v2716 = vxor.u32 %v2688, 2147483648
    %v2717 = vmul.f32 %v2715, 1.442695
    %v2718 = vpow.pop %v2717
    %v2719 = vmul.f32 %v2716, 1.442695
    %v2720 = vpow.pop %v2719
    %v2721 = vadd.f32 %v2718, 1.0
    %v2722 = vadd.f32 %v2720, 1.0
    %v2723 = vrcp.pop %v2721
    %v2724 = vmul.f32 1.0, %v2723
    %v2725 = vrcp.pop %v2722
    %v2726 = vmul.f32 1.0, %v2725
    %v2727 = vmul.f32 %v2710, %v2384
    %v2728 = vmul.f32 %v2712, %v2385
    %v2729 = vmul.f32 %v2698, %v2713
    %v2730 = vmul.f32 %v2700, %v2714
    %v2731 = vadd.f32 %v2727, %v2729
    %v2732 = vadd.f32 %v2728, %v2730
    %v2733 = vtanh.pop %v2731
    %v2734 = vtanh.pop %v2732
    %v2735 = vmul.f32 %v2724, %v2733
    %v2736 = vmul.f32 %v2726, %v2734
    %s2737 = scalar_lea.vmem [#allocation5], 80
    %2738 = vst [vmem:[%s2737] sm:$0xff] %v2735
    %2739 = vst [vmem:[%s2737 + $0x8] sm:$0xff] %v2736
    %s2740 = scalar_lea.vmem [#allocation4], 384
    %v2741 = vld [vmem:[%s2740] sm:$0xff]
    %v2742 = vld [vmem:[%s2740 + $0x8] sm:$0xff]
    %v2743 = vld [vmem:[%s2740 + $0x10] sm:$0xff]
    %v2744 = vld [vmem:[%s2740 + $0x18] sm:$0xff]
    %v2745 = vld [vmem:[%s2740 + $0x20] sm:$0xff]
    %v2746 = vld [vmem:[%s2740 + $0x28] sm:$0xff]
    %v2747 = vld [vmem:[%s2740 + $0x30] sm:$0xff]
    %v2748 = vld [vmem:[%s2740 + $0x38] sm:$0xff]
    %v2749 = vpack.c.bf16 %v2736, %v2735
    %v2750 = vld [vmem:[#allocation11] sm:$0xff]
    %v2751 = vld [vmem:[#allocation11 + $0x8] sm:$0xff]
    %v2752 = vld [vmem:[#allocation11 + $0x10] sm:$0xff]
    %v2753 = vld [vmem:[#allocation11 + $0x18] sm:$0xff]
    %v2754 = vld [vmem:[#allocation11 + $0x20] sm:$0xff]
    %v2755 = vld [vmem:[#allocation11 + $0x28] sm:$0xff]
    %v2756 = vld [vmem:[#allocation11 + $0x30] sm:$0xff]
    %v2757 = vld [vmem:[#allocation11 + $0x38] sm:$0xff]
    %v2758 = vld [vmem:[#allocation11 + $0x40] sm:$0xff]
    %v2759 = vld [vmem:[#allocation11 + $0x48] sm:$0xff]
    %v2760 = vld [vmem:[#allocation11 + $0x50] sm:$0xff]
    %v2761 = vld [vmem:[#allocation11 + $0x58] sm:$0xff]
    %v2762 = vld [vmem:[#allocation11 + $0x60] sm:$0xff]
    %v2763 = vld [vmem:[#allocation11 + $0x68] sm:$0xff]
    %v2764 = vld [vmem:[#allocation11 + $0x70] sm:$0xff]
    %v2765 = vld [vmem:[#allocation11 + $0x78] sm:$0xff]
    %v2766 = vld [vmem:[#allocation11 + $0x80] sm:$0xff]
    %v2767 = vld [vmem:[#allocation11 + $0x88] sm:$0xff]
    %v2768 = vld [vmem:[#allocation11 + $0x90] sm:$0xff]
    %v2769 = vld [vmem:[#allocation11 + $0x98] sm:$0xff]
    %v2770 = vld [vmem:[#allocation11 + $0xa0] sm:$0xff]
    %v2771 = vld [vmem:[#allocation11 + $0xa8] sm:$0xff]
    %v2772 = vld [vmem:[#allocation11 + $0xb0] sm:$0xff]
    %v2773 = vld [vmem:[#allocation11 + $0xb8] sm:$0xff]
    %v2774 = vld [vmem:[#allocation11 + $0xc0] sm:$0xff]
    %v2775 = vld [vmem:[#allocation11 + $0xc8] sm:$0xff]
    %v2776 = vld [vmem:[#allocation11 + $0xd0] sm:$0xff]
    %v2777 = vld [vmem:[#allocation11 + $0xd8] sm:$0xff]
    %v2778 = vld [vmem:[#allocation11 + $0xe0] sm:$0xff]
    %v2779 = vld [vmem:[#allocation11 + $0xe8] sm:$0xff]
    %v2780 = vld [vmem:[#allocation11 + $0xf0] sm:$0xff]
    %v2781 = vld [vmem:[#allocation11 + $0xf8] sm:$0xff]
    %v2814 = vunpack.c.l.b16 %v2750
    %v2815 = vunpack.c.h.b16 %v2750
    %v2816 = vunpack.c.l.b16 %v2751
    %v2817 = vunpack.c.h.b16 %v2751
    %v2818 = vunpack.c.l.b16 %v2752
    %v2819 = vunpack.c.h.b16 %v2752
    %v2820 = vunpack.c.l.b16 %v2753
    %v2821 = vunpack.c.h.b16 %v2753
    %v2822 = vunpack.c.l.b16 %v2754
    %v2823 = vunpack.c.h.b16 %v2754
    %v2824 = vunpack.c.l.b16 %v2755
    %v2825 = vunpack.c.h.b16 %v2755
    %v2826 = vunpack.c.l.b16 %v2756
    %v2827 = vunpack.c.h.b16 %v2756
    %v2828 = vunpack.c.l.b16 %v2757
    %v2829 = vunpack.c.h.b16 %v2757
    %v2830 = vunpack.c.l.b16 %v2758
    %v2831 = vunpack.c.h.b16 %v2758
    %v2832 = vunpack.c.l.b16 %v2759
    %v2833 = vunpack.c.h.b16 %v2759
    %v2834 = vunpack.c.l.b16 %v2760
    %v2835 = vunpack.c.h.b16 %v2760
    %v2836 = vunpack.c.l.b16 %v2761
    %v2837 = vunpack.c.h.b16 %v2761
    %v2838 = vunpack.c.l.b16 %v2762
    %v2839 = vunpack.c.h.b16 %v2762
    %v2840 = vunpack.c.l.b16 %v2763
    %v2841 = vunpack.c.h.b16 %v2763
    %v2842 = vunpack.c.l.b16 %v2764
    %v2843 = vunpack.c.h.b16 %v2764
    %v2844 = vunpack.c.l.b16 %v2765
    %v2845 = vunpack.c.h.b16 %v2765
    %v2846 = vunpack.c.l.b16 %v2766
    %v2847 = vunpack.c.h.b16 %v2766
    %v2848 = vunpack.c.l.b16 %v2767
    %v2849 = vunpack.c.h.b16 %v2767
    %v2850 = vunpack.c.l.b16 %v2768
    %v2851 = vunpack.c.h.b16 %v2768
    %v2852 = vunpack.c.l.b16 %v2769
    %v2853 = vunpack.c.h.b16 %v2769
    %v2854 = vunpack.c.l.b16 %v2770
    %v2855 = vunpack.c.h.b16 %v2770
    %v2856 = vunpack.c.l.b16 %v2771
    %v2857 = vunpack.c.h.b16 %v2771
    %v2858 = vunpack.c.l.b16 %v2772
    %v2859 = vunpack.c.h.b16 %v2772
    %v2860 = vunpack.c.l.b16 %v2773
    %v2861 = vunpack.c.h.b16 %v2773
    %v2862 = vunpack.c.l.b16 %v2774
    %v2863 = vunpack.c.h.b16 %v2774
    %v2864 = vunpack.c.l.b16 %v2775
    %v2865 = vunpack.c.h.b16 %v2775
    %v2866 = vunpack.c.l.b16 %v2776
    %v2867 = vunpack.c.h.b16 %v2776
    %v2868 = vunpack.c.l.b16 %v2777
    %v2869 = vunpack.c.h.b16 %v2777
    %v2870 = vunpack.c.l.b16 %v2778
    %v2871 = vunpack.c.h.b16 %v2778
    %v2872 = vunpack.c.l.b16 %v2779
    %v2873 = vunpack.c.h.b16 %v2779
    %v2874 = vunpack.c.l.b16 %v2780
    %v2875 = vunpack.c.h.b16 %v2780
    %v2876 = vunpack.c.l.b16 %v2781
    %v2877 = vunpack.c.h.b16 %v2781
    %v2878 = vpack.c.b16 %v2818, %v2814
    %v2879 = vpack.c.b16 %v2819, %v2815
    %v2880 = vpack.c.b16 %v2820, %v2816
    %v2881 = vpack.c.b16 %v2821, %v2817
    %v2882 = vpack.c.b16 %v2826, %v2822
    %v2883 = vpack.c.b16 %v2827, %v2823
    %v2884 = vpack.c.b16 %v2828, %v2824
    %v2885 = vpack.c.b16 %v2829, %v2825
    %v2886 = vpack.c.b16 %v2834, %v2830
    %v2887 = vpack.c.b16 %v2835, %v2831
    %v2888 = vpack.c.b16 %v2836, %v2832
    %v2889 = vpack.c.b16 %v2837, %v2833
    %v2890 = vpack.c.b16 %v2842, %v2838
    %v2891 = vpack.c.b16 %v2843, %v2839
    %v2892 = vpack.c.b16 %v2844, %v2840
    %v2893 = vpack.c.b16 %v2845, %v2841
    %v2894 = vpack.c.b16 %v2850, %v2846
    %v2895 = vpack.c.b16 %v2851, %v2847
    %v2896 = vpack.c.b16 %v2852, %v2848
    %v2897 = vpack.c.b16 %v2853, %v2849
    %v2898 = vpack.c.b16 %v2858, %v2854
    %v2899 = vpack.c.b16 %v2859, %v2855
    %v2900 = vpack.c.b16 %v2860, %v2856
    %v2901 = vpack.c.b16 %v2861, %v2857
    %v2902 = vpack.c.b16 %v2866, %v2862
    %v2903 = vpack.c.b16 %v2867, %v2863
    %v2904 = vpack.c.b16 %v2868, %v2864
    %v2905 = vpack.c.b16 %v2869, %v2865
    %v2906 = vpack.c.b16 %v2874, %v2870
    %v2907 = vpack.c.b16 %v2875, %v2871
    %v2908 = vpack.c.b16 %v2876, %v2872
    %v2909 = vpack.c.b16 %v2877, %v2873
    %2942 = vmatprep.subr.bf16.mxu0 %v2879
    %2943 = vmatpush1.bf16.msra.mxu0 %v2878
    %2944 = vmatprep.subr.bf16.mxu0 %v2883
    %2945 = vmatpush1.bf16.msra.mxu0 %v2882
    %2946 = vmatprep.subr.bf16.mxu0 %v2887
    %2947 = vmatpush1.bf16.msra.mxu0 %v2886
    %2948 = vmatprep.subr.bf16.mxu0 %v2891
    %2949 = vmatpush1.bf16.msra.mxu0 %v2890
    %2950 = vmatprep.subr.bf16.mxu0 %v2895
    %2951 = vmatpush1.bf16.msra.mxu0 %v2894
    %2952 = vmatprep.subr.bf16.mxu0 %v2899
    %2953 = vmatpush1.bf16.msra.mxu0 %v2898
    %2954 = vmatprep.subr.bf16.mxu0 %v2903
    %2955 = vmatpush1.bf16.msra.mxu0 %v2902
    %2956 = vmatprep.subr.bf16.mxu0 %v2907
    %2957 = vmatpush1.bf16.msra.mxu0 %v2906
    %2958 = vmatprep.subr.bf16.mxu0 0
    %2959 = vmatpush1.bf16.msra.mxu0 0
    %2960 = vmatprep.subr.bf16.mxu0 0
    %2961 = vmatpush1.bf16.msra.mxu0 0
    %2962 = vmatprep.subr.bf16.mxu0 0
    %2963 = vmatpush1.bf16.msra.mxu0 0
    %2964 = vmatprep.subr.bf16.mxu0 0
    %2965 = vmatpush1.bf16.msra.mxu0 0
    %2966 = vmatprep.subr.bf16.mxu0 0
    %2967 = vmatpush1.bf16.msra.mxu0 0
    %2968 = vmatprep.subr.bf16.mxu0 0
    %2969 = vmatpush1.bf16.msra.mxu0 0
    %2970 = vmatprep.subr.bf16.mxu0 0
    %2971 = vmatpush1.bf16.msra.mxu0 0
    %2972 = vmatprep.subr.bf16.mxu0 0
    %2973 = vmatpush1.bf16.msra.mxu0 0
    %2974 = vmatprep.mubr.bf16.mxu0 0
    %2975 = vmatmul.mubr.bf16.gmra.mrb[0].mxu0 %v2749
    %v2976 = vpop.f32.mrb[0].mxu0
    %v2977 = vadd.f32 0.0, %v2976
    %v2978 = vpop.f32.mrb[0].mxu0
    %v2979 = vadd.f32 0.0, %v2978
    %v2980 = vpop.f32.mrb[0].mxu0
    %v2981 = vadd.f32 0.0, %v2980
    %v2982 = vpop.f32.mrb[0].mxu0
    %v2983 = vadd.f32 0.0, %v2982
    %2984 = vdwg.mxu0
    %2985 = vmatprep.subr.bf16.mxu0 %v2881
    %2986 = vmatpush1.bf16.msra.mxu0 %v2880
    %2987 = vmatprep.subr.bf16.mxu0 %v2885
    %2988 = vmatpush1.bf16.msra.mxu0 %v2884
    %2989 = vmatprep.subr.bf16.mxu0 %v2889
    %2990 = vmatpush1.bf16.msra.mxu0 %v2888
    %2991 = vmatprep.subr.bf16.mxu0 %v2893
    %2992 = vmatpush1.bf16.msra.mxu0 %v2892
    %2993 = vmatprep.subr.bf16.mxu0 %v2897
    %2994 = vmatpush1.bf16.msra.mxu0 %v2896
    %2995 = vmatprep.subr.bf16.mxu0 %v2901
    %2996 = vmatpush1.bf16.msra.mxu0 %v2900
    %2997 = vmatprep.subr.bf16.mxu0 %v2905
    %2998 = vmatpush1.bf16.msra.mxu0 %v2904
    %2999 = vmatprep.subr.bf16.mxu0 %v2909
    %3000 = vmatpush1.bf16.msra.mxu0 %v2908
    %3001 = vmatprep.subr.bf16.mxu0 0
    %3002 = vmatpush1.bf16.msra.mxu0 0
    %3003 = vmatprep.subr.bf16.mxu0 0
    %3004 = vmatpush1.bf16.msra.mxu0 0
    %3005 = vmatprep.subr.bf16.mxu0 0
    %3006 = vmatpush1.bf16.msra.mxu0 0
    %3007 = vmatprep.subr.bf16.mxu0 0
    %3008 = vmatpush1.bf16.msra.mxu0 0
    %3009 = vmatprep.subr.bf16.mxu0 0
    %3010 = vmatpush1.bf16.msra.mxu0 0
    %3011 = vmatprep.subr.bf16.mxu0 0
    %3012 = vmatpush1.bf16.msra.mxu0 0
    %3013 = vmatprep.subr.bf16.mxu0 0
    %3014 = vmatpush1.bf16.msra.mxu0 0
    %3015 = vmatprep.subr.bf16.mxu0 0
    %3016 = vmatpush1.bf16.msra.mxu0 0
    %3017 = vmatprep.mubr.bf16.mxu0 0
    %3018 = vmatmul.mubr.bf16.gmra.mrb[0].mxu0 %v2749
    %v3019 = vpop.f32.mrb[0].mxu0
    %v3020 = vadd.f32 0.0, %v3019
    %v3021 = vpop.f32.mrb[0].mxu0
    %v3022 = vadd.f32 0.0, %v3021
    %v3023 = vpop.f32.mrb[0].mxu0
    %v3024 = vadd.f32 0.0, %v3023
    %v3025 = vpop.f32.mrb[0].mxu0
    %v3026 = vadd.f32 0.0, %v3025
    %3027 = vdwg.mxu0
    %v3028 = vadd.f32 %v2741, %v2977
    %v3029 = vadd.f32 %v2742, %v2979
    %v3030 = vadd.f32 %v2743, %v3020
    %v3031 = vadd.f32 %v2744, %v3022
    %v3032 = vadd.f32 %v2745, %v2981
    %v3033 = vadd.f32 %v2746, %v2983
    %v3034 = vadd.f32 %v2747, %v3024
    %v3035 = vadd.f32 %v2748, %v3026
    %v3036 = vxor.u32 %v3028, 2147483648
    %v3037 = vxor.u32 %v3032, 2147483648
    %v3038 = vmul.f32 %v3036, 1.442695
    %v3039 = vpow.pop %v3038
    %v3040 = vmul.f32 %v3037, 1.442695
    %v3041 = vpow.pop %v3040
    %v3042 = vadd.f32 %v3039, 1.0
    %v3043 = vadd.f32 %v3041, 1.0
    %v3044 = vrcp.pop %v3042
    %v3045 = vmul.f32 1.0, %v3044
    %v3046 = vrcp.pop %v3043
    %v3047 = vmul.f32 1.0, %v3046
    %v3048 = vxor.u32 %v3029, 2147483648
    %v3049 = vxor.u32 %v3033, 2147483648
    %v3050 = vmul.f32 %v3048, 1.442695
    %v3051 = vpow.pop %v3050
    %v3052 = vmul.f32 %v3049, 1.442695
    %v3053 = vpow.pop %v3052
    %v3054 = vadd.f32 %v3051, 1.0
    %v3055 = vadd.f32 %v3053, 1.0
    %v3056 = vrcp.pop %v3054
    %v3057 = vmul.f32 1.0, %v3056
    %v3058 = vrcp.pop %v3055
    %v3059 = vmul.f32 1.0, %v3058
    %v3060 = vtanh.pop %v3030
    %v3061 = vtanh.pop %v3034
    %v3062 = vxor.u32 %v3031, 2147483648
    %v3063 = vxor.u32 %v3035, 2147483648
    %v3064 = vmul.f32 %v3062, 1.442695
    %v3065 = vpow.pop %v3064
    %v3066 = vmul.f32 %v3063, 1.442695
    %v3067 = vpow.pop %v3066
    %v3068 = vadd.f32 %v3065, 1.0
    %v3069 = vadd.f32 %v3067, 1.0
    %v3070 = vrcp.pop %v3068
    %v3071 = vmul.f32 1.0, %v3070
    %v3072 = vrcp.pop %v3069
    %v3073 = vmul.f32 1.0, %v3072
    %v3074 = vmul.f32 %v3057, %v2731
    %v3075 = vmul.f32 %v3059, %v2732
    %v3076 = vmul.f32 %v3045, %v3060
    %v3077 = vmul.f32 %v3047, %v3061
    %v3078 = vadd.f32 %v3074, %v3076
    %v3079 = vadd.f32 %v3075, %v3077
    %v3080 = vtanh.pop %v3078
    %v3081 = vtanh.pop %v3079
    %v3082 = vmul.f32 %v3071, %v3080
    %v3083 = vmul.f32 %v3073, %v3081
    %s3084 = scalar_lea.vmem [#allocation5], 96
    %3085 = vst [vmem:[%s3084] sm:$0xff] %v3082
    %3086 = vst [vmem:[%s3084 + $0x8] sm:$0xff] %v3083
    %s3087 = scalar_lea.vmem [#allocation4], 448
    %v3088 = vld [vmem:[%s3087] sm:$0xff]
    %v3089 = vld [vmem:[%s3087 + $0x8] sm:$0xff]
    %v3090 = vld [vmem:[%s3087 + $0x10] sm:$0xff]
    %v3091 = vld [vmem:[%s3087 + $0x18] sm:$0xff]
    %v3092 = vld [vmem:[%s3087 + $0x20] sm:$0xff]
    %v3093 = vld [vmem:[%s3087 + $0x28] sm:$0xff]
    %v3094 = vld [vmem:[%s3087 + $0x30] sm:$0xff]
    %v3095 = vld [vmem:[%s3087 + $0x38] sm:$0xff]
    %v3096 = vpack.c.bf16 %v3083, %v3082
    %v3097 = vld [vmem:[#allocation11] sm:$0xff]
    %v3098 = vld [vmem:[#allocation11 + $0x8] sm:$0xff]
    %v3099 = vld [vmem:[#allocation11 + $0x10] sm:$0xff]
    %v3100 = vld [vmem:[#allocation11 + $0x18] sm:$0xff]
    %v3101 = vld [vmem:[#allocation11 + $0x20] sm:$0xff]
    %v3102 = vld [vmem:[#allocation11 + $0x28] sm:$0xff]
    %v3103 = vld [vmem:[#allocation11 + $0x30] sm:$0xff]
    %v3104 = vld [vmem:[#allocation11 + $0x38] sm:$0xff]
    %v3105 = vld [vmem:[#allocation11 + $0x40] sm:$0xff]
    %v3106 = vld [vmem:[#allocation11 + $0x48] sm:$0xff]
    %v3107 = vld [vmem:[#allocation11 + $0x50] sm:$0xff]
    %v3108 = vld [vmem:[#allocation11 + $0x58] sm:$0xff]
    %v3109 = vld [vmem:[#allocation11 + $0x60] sm:$0xff]
    %v3110 = vld [vmem:[#allocation11 + $0x68] sm:$0xff]
    %v3111 = vld [vmem:[#allocation11 + $0x70] sm:$0xff]
    %v3112 = vld [vmem:[#allocation11 + $0x78] sm:$0xff]
    %v3113 = vld [vmem:[#allocation11 + $0x80] sm:$0xff]
    %v3114 = vld [vmem:[#allocation11 + $0x88] sm:$0xff]
    %v3115 = vld [vmem:[#allocation11 + $0x90] sm:$0xff]
    %v3116 = vld [vmem:[#allocation11 + $0x98] sm:$0xff]
    %v3117 = vld [vmem:[#allocation11 + $0xa0] sm:$0xff]
    %v3118 = vld [vmem:[#allocation11 + $0xa8] sm:$0xff]
    %v3119 = vld [vmem:[#allocation11 + $0xb0] sm:$0xff]
    %v3120 = vld [vmem:[#allocation11 + $0xb8] sm:$0xff]
    %v3121 = vld [vmem:[#allocation11 + $0xc0] sm:$0xff]
    %v3122 = vld [vmem:[#allocation11 + $0xc8] sm:$0xff]
    %v3123 = vld [vmem:[#allocation11 + $0xd0] sm:$0xff]
    %v3124 = vld [vmem:[#allocation11 + $0xd8] sm:$0xff]
    %v3125 = vld [vmem:[#allocation11 + $0xe0] sm:$0xff]
    %v3126 = vld [vmem:[#allocation11 + $0xe8] sm:$0xff]
    %v3127 = vld [vmem:[#allocation11 + $0xf0] sm:$0xff]
    %v3128 = vld [vmem:[#allocation11 + $0xf8] sm:$0xff]
    %v3161 = vunpack.c.l.b16 %v3097
    %v3162 = vunpack.c.h.b16 %v3097
    %v3163 = vunpack.c.l.b16 %v3098
    %v3164 = vunpack.c.h.b16 %v3098
    %v3165 = vunpack.c.l.b16 %v3099
    %v3166 = vunpack.c.h.b16 %v3099
    %v3167 = vunpack.c.l.b16 %v3100
    %v3168 = vunpack.c.h.b16 %v3100
    %v3169 = vunpack.c.l.b16 %v3101
    %v3170 = vunpack.c.h.b16 %v3101
    %v3171 = vunpack.c.l.b16 %v3102
    %v3172 = vunpack.c.h.b16 %v3102
    %v3173 = vunpack.c.l.b16 %v3103
    %v3174 = vunpack.c.h.b16 %v3103
    %v3175 = vunpack.c.l.b16 %v3104
    %v3176 = vunpack.c.h.b16 %v3104
    %v3177 = vunpack.c.l.b16 %v3105
    %v3178 = vunpack.c.h.b16 %v3105
    %v3179 = vunpack.c.l.b16 %v3106
    %v3180 = vunpack.c.h.b16 %v3106
    %v3181 = vunpack.c.l.b16 %v3107
    %v3182 = vunpack.c.h.b16 %v3107
    %v3183 = vunpack.c.l.b16 %v3108
    %v3184 = vunpack.c.h.b16 %v3108
    %v3185 = vunpack.c.l.b16 %v3109
    %v3186 = vunpack.c.h.b16 %v3109
    %v3187 = vunpack.c.l.b16 %v3110
    %v3188 = vunpack.c.h.b16 %v3110
    %v3189 = vunpack.c.l.b16 %v3111
    %v3190 = vunpack.c.h.b16 %v3111
    %v3191 = vunpack.c.l.b16 %v3112
    %v3192 = vunpack.c.h.b16 %v3112
    %v3193 = vunpack.c.l.b16 %v3113
    %v3194 = vunpack.c.h.b16 %v3113
    %v3195 = vunpack.c.l.b16 %v3114
    %v3196 = vunpack.c.h.b16 %v3114
    %v3197 = vunpack.c.l.b16 %v3115
    %v3198 = vunpack.c.h.b16 %v3115
    %v3199 = vunpack.c.l.b16 %v3116
    %v3200 = vunpack.c.h.b16 %v3116
    %v3201 = vunpack.c.l.b16 %v3117
    %v3202 = vunpack.c.h.b16 %v3117
    %v3203 = vunpack.c.l.b16 %v3118
    %v3204 = vunpack.c.h.b16 %v3118
    %v3205 = vunpack.c.l.b16 %v3119
    %v3206 = vunpack.c.h.b16 %v3119
    %v3207 = vunpack.c.l.b16 %v3120
    %v3208 = vunpack.c.h.b16 %v3120
    %v3209 = vunpack.c.l.b16 %v3121
    %v3210 = vunpack.c.h.b16 %v3121
    %v3211 = vunpack.c.l.b16 %v3122
    %v3212 = vunpack.c.h.b16 %v3122
    %v3213 = vunpack.c.l.b16 %v3123
    %v3214 = vunpack.c.h.b16 %v3123
    %v3215 = vunpack.c.l.b16 %v3124
    %v3216 = vunpack.c.h.b16 %v3124
    %v3217 = vunpack.c.l.b16 %v3125
    %v3218 = vunpack.c.h.b16 %v3125
    %v3219 = vunpack.c.l.b16 %v3126
    %v3220 = vunpack.c.h.b16 %v3126
    %v3221 = vunpack.c.l.b16 %v3127
    %v3222 = vunpack.c.h.b16 %v3127
    %v3223 = vunpack.c.l.b16 %v3128
    %v3224 = vunpack.c.h.b16 %v3128
    %v3225 = vpack.c.b16 %v3165, %v3161
    %v3226 = vpack.c.b16 %v3166, %v3162
    %v3227 = vpack.c.b16 %v3167, %v3163
    %v3228 = vpack.c.b16 %v3168, %v3164
    %v3229 = vpack.c.b16 %v3173, %v3169
    %v3230 = vpack.c.b16 %v3174, %v3170
    %v3231 = vpack.c.b16 %v3175, %v3171
    %v3232 = vpack.c.b16 %v3176, %v3172
    %v3233 = vpack.c.b16 %v3181, %v3177
    %v3234 = vpack.c.b16 %v3182, %v3178
    %v3235 = vpack.c.b16 %v3183, %v3179
    %v3236 = vpack.c.b16 %v3184, %v3180
    %v3237 = vpack.c.b16 %v3189, %v3185
    %v3238 = vpack.c.b16 %v3190, %v3186
    %v3239 = vpack.c.b16 %v3191, %v3187
    %v3240 = vpack.c.b16 %v3192, %v3188
    %v3241 = vpack.c.b16 %v3197, %v3193
    %v3242 = vpack.c.b16 %v3198, %v3194
    %v3243 = vpack.c.b16 %v3199, %v3195
    %v3244 = vpack.c.b16 %v3200, %v3196
    %v3245 = vpack.c.b16 %v3205, %v3201
    %v3246 = vpack.c.b16 %v3206, %v3202
    %v3247 = vpack.c.b16 %v3207, %v3203
    %v3248 = vpack.c.b16 %v3208, %v3204
    %v3249 = vpack.c.b16 %v3213, %v3209
    %v3250 = vpack.c.b16 %v3214, %v3210
    %v3251 = vpack.c.b16 %v3215, %v3211
    %v3252 = vpack.c.b16 %v3216, %v3212
    %v3253 = vpack.c.b16 %v3221, %v3217
    %v3254 = vpack.c.b16 %v3222, %v3218
    %v3255 = vpack.c.b16 %v3223, %v3219
    %v3256 = vpack.c.b16 %v3224, %v3220
    %3289 = vmatprep.subr.bf16.mxu0 %v3226
    %3290 = vmatpush1.bf16.msra.mxu0 %v3225
    %3291 = vmatprep.subr.bf16.mxu0 %v3230
    %3292 = vmatpush1.bf16.msra.mxu0 %v3229
    %3293 = vmatprep.subr.bf16.mxu0 %v3234
    %3294 = vmatpush1.bf16.msra.mxu0 %v3233
    %3295 = vmatprep.subr.bf16.mxu0 %v3238
    %3296 = vmatpush1.bf16.msra.mxu0 %v3237
    %3297 = vmatprep.subr.bf16.mxu0 %v3242
    %3298 = vmatpush1.bf16.msra.mxu0 %v3241
    %3299 = vmatprep.subr.bf16.mxu0 %v3246
    %3300 = vmatpush1.bf16.msra.mxu0 %v3245
    %3301 = vmatprep.subr.bf16.mxu0 %v3250
    %3302 = vmatpush1.bf16.msra.mxu0 %v3249
    %3303 = vmatprep.subr.bf16.mxu0 %v3254
    %3304 = vmatpush1.bf16.msra.mxu0 %v3253
    %3305 = vmatprep.subr.bf16.mxu0 0
    %3306 = vmatpush1.bf16.msra.mxu0 0
    %3307 = vmatprep.subr.bf16.mxu0 0
    %3308 = vmatpush1.bf16.msra.mxu0 0
    %3309 = vmatprep.subr.bf16.mxu0 0
    %3310 = vmatpush1.bf16.msra.mxu0 0
    %3311 = vmatprep.subr.bf16.mxu0 0
    %3312 = vmatpush1.bf16.msra.mxu0 0
    %3313 = vmatprep.subr.bf16.mxu0 0
    %3314 = vmatpush1.bf16.msra.mxu0 0
    %3315 = vmatprep.subr.bf16.mxu0 0
    %3316 = vmatpush1.bf16.msra.mxu0 0
    %3317 = vmatprep.subr.bf16.mxu0 0
    %3318 = vmatpush1.bf16.msra.mxu0 0
    %3319 = vmatprep.subr.bf16.mxu0 0
    %3320 = vmatpush1.bf16.msra.mxu0 0
    %3321 = vmatprep.mubr.bf16.mxu0 0
    %3322 = vmatmul.mubr.bf16.gmra.mrb[0].mxu0 %v3096
    %v3323 = vpop.f32.mrb[0].mxu0
    %v3324 = vadd.f32 0.0, %v3323
    %v3325 = vpop.f32.mrb[0].mxu0
    %v3326 = vadd.f32 0.0, %v3325
    %v3327 = vpop.f32.mrb[0].mxu0
    %v3328 = vadd.f32 0.0, %v3327
    %v3329 = vpop.f32.mrb[0].mxu0
    %v3330 = vadd.f32 0.0, %v3329
    %3331 = vdwg.mxu0
    %3332 = vmatprep.subr.bf16.mxu0 %v3228
    %3333 = vmatpush1.bf16.msra.mxu0 %v3227
    %3334 = vmatprep.subr.bf16.mxu0 %v3232
    %3335 = vmatpush1.bf16.msra.mxu0 %v3231
    %3336 = vmatprep.subr.bf16.mxu0 %v3236
    %3337 = vmatpush1.bf16.msra.mxu0 %v3235
    %3338 = vmatprep.subr.bf16.mxu0 %v3240
    %3339 = vmatpush1.bf16.msra.mxu0 %v3239
    %3340 = vmatprep.subr.bf16.mxu0 %v3244
    %3341 = vmatpush1.bf16.msra.mxu0 %v3243
    %3342 = vmatprep.subr.bf16.mxu0 %v3248
    %3343 = vmatpush1.bf16.msra.mxu0 %v3247
    %3344 = vmatprep.subr.bf16.mxu0 %v3252
    %3345 = vmatpush1.bf16.msra.mxu0 %v3251
    %3346 = vmatprep.subr.bf16.mxu0 %v3256
    %3347 = vmatpush1.bf16.msra.mxu0 %v3255
    %3348 = vmatprep.subr.bf16.mxu0 0
    %3349 = vmatpush1.bf16.msra.mxu0 0
    %3350 = vmatprep.subr.bf16.mxu0 0
    %3351 = vmatpush1.bf16.msra.mxu0 0
    %3352 = vmatprep.subr.bf16.mxu0 0
    %3353 = vmatpush1.bf16.msra.mxu0 0
    %3354 = vmatprep.subr.bf16.mxu0 0
    %3355 = vmatpush1.bf16.msra.mxu0 0
    %3356 = vmatprep.subr.bf16.mxu0 0
    %3357 = vmatpush1.bf16.msra.mxu0 0
    %3358 = vmatprep.subr.bf16.mxu0 0
    %3359 = vmatpush1.bf16.msra.mxu0 0
    %3360 = vmatprep.subr.bf16.mxu0 0
    %3361 = vmatpush1.bf16.msra.mxu0 0
    %3362 = vmatprep.subr.bf16.mxu0 0
    %3363 = vmatpush1.bf16.msra.mxu0 0
    %3364 = vmatprep.mubr.bf16.mxu0 0
    %3365 = vmatmul.mubr.bf16.gmra.mrb[0].mxu0 %v3096
    %v3366 = vpop.f32.mrb[0].mxu0
    %v3367 = vadd.f32 0.0, %v3366
    %v3368 = vpop.f32.mrb[0].mxu0
    %v3369 = vadd.f32 0.0, %v3368
    %v3370 = vpop.f32.mrb[0].mxu0
    %v3371 = vadd.f32 0.0, %v3370
    %v3372 = vpop.f32.mrb[0].mxu0
    %v3373 = vadd.f32 0.0, %v3372
    %3374 = vdwg.mxu0
    %v3375 = vadd.f32 %v3088, %v3324
    %v3376 = vadd.f32 %v3089, %v3326
    %v3377 = vadd.f32 %v3090, %v3367
    %v3378 = vadd.f32 %v3091, %v3369
    %v3379 = vadd.f32 %v3092, %v3328
    %v3380 = vadd.f32 %v3093, %v3330
    %v3381 = vadd.f32 %v3094, %v3371
    %v3382 = vadd.f32 %v3095, %v3373
    %v3383 = vxor.u32 %v3375, 2147483648
    %v3384 = vxor.u32 %v3379, 2147483648
    %v3385 = vmul.f32 %v3383, 1.442695
    %v3386 = vpow.pop %v3385
    %v3387 = vmul.f32 %v3384, 1.442695
    %v3388 = vpow.pop %v3387
    %v3389 = vadd.f32 %v3386, 1.0
    %v3390 = vadd.f32 %v3388, 1.0
    %v3391 = vrcp.pop %v3389
    %v3392 = vmul.f32 1.0, %v3391
    %v3393 = vrcp.pop %v3390
    %v3394 = vmul.f32 1.0, %v3393
    %v3395 = vxor.u32 %v3376, 2147483648
    %v3396 = vxor.u32 %v3380, 2147483648
    %v3397 = vmul.f32 %v3395, 1.442695
    %v3398 = vpow.pop %v3397
    %v3399 = vmul.f32 %v3396, 1.442695
    %v3400 = vpow.pop %v3399
    %v3401 = vadd.f32 %v3398, 1.0
    %v3402 = vadd.f32 %v3400, 1.0
    %v3403 = vrcp.pop %v3401
    %v3404 = vmul.f32 1.0, %v3403
    %v3405 = vrcp.pop %v3402
    %v3406 = vmul.f32 1.0, %v3405
    %v3407 = vtanh.pop %v3377
    %v3408 = vtanh.pop %v3381
    %v3409 = vxor.u32 %v3378, 2147483648
    %v3410 = vxor.u32 %v3382, 2147483648
    %v3411 = vmul.f32 %v3409, 1.442695
    %v3412 = vpow.pop %v3411
    %v3413 = vmul.f32 %v3410, 1.442695
    %v3414 = vpow.pop %v3413
    %v3415 = vadd.f32 %v3412, 1.0
    %v3416 = vadd.f32 %v3414, 1.0
    %v3417 = vrcp.pop %v3415
    %v3418 = vmul.f32 1.0, %v3417
    %v3419 = vrcp.pop %v3416
    %v3420 = vmul.f32 1.0, %v3419
    %v3421 = vmul.f32 %v3404, %v3078
    %v3422 = vmul.f32 %v3406, %v3079
    %v3423 = vmul.f32 %v3392, %v3407
    %v3424 = vmul.f32 %v3394, %v3408
    %v3425 = vadd.f32 %v3421, %v3423
    %v3426 = vadd.f32 %v3422, %v3424
    %v3427 = vtanh.pop %v3425
    %v3428 = vtanh.pop %v3426
    %v3429 = vmul.f32 %v3418, %v3427
    %v3430 = vmul.f32 %v3420, %v3428
    %s3431 = scalar_lea.vmem [#allocation5], 112
    %3432 = vst [vmem:[%s3431] sm:$0xff] %v3429
    %3433 = vst [vmem:[%s3431 + $0x8] sm:$0xff] %v3430
    %3434 = vst [vmem:[#allocation2] sm:$0xff] %v3429
    %3435 = vst [vmem:[#allocation2 + $0x8] sm:$0xff] %v3430
    %3436 = vst [vmem:[#allocation3] sm:$0xff] %v3425
    %3437 = vst [vmem:[#allocation3 + $0x8] sm:$0xff] %v3426
    %v3438 = vld [vmem:[#allocation5] sm:$0xff]
    %v3439 = vld [vmem:[#allocation5 + $0x8] sm:$0xff]
    %v3440 = vld [vmem:[#allocation5 + $0x10] sm:$0xff]
    %v3441 = vld [vmem:[#allocation5 + $0x18] sm:$0xff]
    %v3442 = vld [vmem:[#allocation5 + $0x20] sm:$0xff]
    %v3443 = vld [vmem:[#allocation5 + $0x28] sm:$0xff]
    %v3444 = vld [vmem:[#allocation5 + $0x30] sm:$0xff]
    %v3445 = vld [vmem:[#allocation5 + $0x38] sm:$0xff]
    %v3446 = vld [vmem:[#allocation5 + $0x40] sm:$0xff]
    %v3447 = vld [vmem:[#allocation5 + $0x48] sm:$0xff]
    %v3448 = vld [vmem:[#allocation5 + $0x50] sm:$0xff]
    %v3449 = vld [vmem:[#allocation5 + $0x58] sm:$0xff]
    %v3450 = vld [vmem:[#allocation5 + $0x60] sm:$0xff]
    %v3451 = vld [vmem:[#allocation5 + $0x68] sm:$0xff]
    %v3452 = vld [vmem:[#allocation5 + $0x70] sm:$0xff]
    %v3453 = vld [vmem:[#allocation5 + $0x78] sm:$0xff]
    %v3454 = vpack.c.bf16 %v3439, %v3438
    %v3455 = vpack.c.bf16 %v3441, %v3440
    %v3456 = vpack.c.bf16 %v3443, %v3442
    %v3457 = vpack.c.bf16 %v3445, %v3444
    %v3458 = vpack.c.bf16 %v3447, %v3446
    %v3459 = vpack.c.bf16 %v3449, %v3448
    %v3460 = vpack.c.bf16 %v3451, %v3450
    %v3461 = vpack.c.bf16 %v3453, %v3452
    %v3462 = vld [vmem:[#allocation12] sm:$0xf]
    %v3463 = vld [vmem:[#allocation12 + $0x4] sm:$0xf]
    %v3464 = vld [vmem:[#allocation12 + $0x8] sm:$0xf]
    %v3465 = vld [vmem:[#allocation12 + $0xc] sm:$0xf]
    %v3466 = vld [vmem:[#allocation12 + $0x10] sm:$0xf]
    %v3467 = vld [vmem:[#allocation12 + $0x14] sm:$0xf]
    %v3468 = vld [vmem:[#allocation12 + $0x18] sm:$0xf]
    %v3469 = vld [vmem:[#allocation12 + $0x1c] sm:$0xf]
    %v3470 = vld [vmem:[#allocation12 + $0x20] sm:$0xf]
    %v3471 = vld [vmem:[#allocation12 + $0x24] sm:$0xf]
    %v3472 = vld [vmem:[#allocation12 + $0x28] sm:$0xf]
    %v3473 = vld [vmem:[#allocation12 + $0x2c] sm:$0xf]
    %v3474 = vld [vmem:[#allocation12 + $0x30] sm:$0xf]
    %v3475 = vld [vmem:[#allocation12 + $0x34] sm:$0xf]
    %v3476 = vld [vmem:[#allocation12 + $0x38] sm:$0xf]
    %v3477 = vld [vmem:[#allocation12 + $0x3c] sm:$0xf]
    %v3478 = vld [vmem:[%s5] sm:$0x1]
    %v3480 = vlaneseq
    %v3481 = vshrl.u32 %v3480, 7
    %v3482 = vsub.s32 0, %v3481
    %v3483 = vrot.slane %v3478, %v3482
    %v3501 = vunpack.c.l.b16 %v3462
    %v3502 = vunpack.c.l.b16 %v3463
    %v3503 = vunpack.c.l.b16 %v3464
    %v3504 = vunpack.c.l.b16 %v3465
    %v3505 = vunpack.c.l.b16 %v3466
    %v3506 = vunpack.c.l.b16 %v3467
    %v3507 = vunpack.c.l.b16 %v3468
    %v3508 = vunpack.c.l.b16 %v3469
    %v3509 = vunpack.c.l.b16 %v3470
    %v3510 = vunpack.c.l.b16 %v3471
    %v3511 = vunpack.c.l.b16 %v3472
    %v3512 = vunpack.c.l.b16 %v3473
    %v3513 = vunpack.c.l.b16 %v3474
    %v3514 = vunpack.c.l.b16 %v3475
    %v3515 = vunpack.c.l.b16 %v3476
    %v3516 = vunpack.c.l.b16 %v3477
    %v3517 = vpack.c.b16 %v3502, %v3501
    %v3518 = vpack.c.b16 %v3504, %v3503
    %v3519 = vpack.c.b16 %v3506, %v3505
    %v3520 = vpack.c.b16 %v3508, %v3507
    %v3521 = vpack.c.b16 %v3510, %v3509
    %v3522 = vpack.c.b16 %v3512, %v3511
    %v3523 = vpack.c.b16 %v3514, %v3513
    %v3524 = vpack.c.b16 %v3516, %v3515
    %3533 = vmatprep.subr.bf16.mxu0 0
    %3534 = vmatpush1.bf16.msra.mxu0 %v3517
    %3535 = vmatprep.subr.bf16.mxu0 0
    %3536 = vmatpush1.bf16.msra.mxu0 %v3518
    %3537 = vmatprep.subr.bf16.mxu0 0
    %3538 = vmatpush1.bf16.msra.mxu0 %v3519
    %3539 = vmatprep.subr.bf16.mxu0 0
    %3540 = vmatpush1.bf16.msra.mxu0 %v3520
    %3541 = vmatprep.subr.bf16.mxu0 0
    %3542 = vmatpush1.bf16.msra.mxu0 %v3521
    %3543 = vmatprep.subr.bf16.mxu0 0
    %3544 = vmatpush1.bf16.msra.mxu0 %v3522
    %3545 = vmatprep.subr.bf16.mxu0 0
    %3546 = vmatpush1.bf16.msra.mxu0 %v3523
    %3547 = vmatprep.subr.bf16.mxu0 0
    %3548 = vmatpush1.bf16.msra.mxu0 %v3524
    %3549 = vmatprep.subr.bf16.mxu0 0
    %3550 = vmatpush1.bf16.msra.mxu0 0
    %3551 = vmatprep.subr.bf16.mxu0 0
    %3552 = vmatpush1.bf16.msra.mxu0 0
    %3553 = vmatprep.subr.bf16.mxu0 0
    %3554 = vmatpush1.bf16.msra.mxu0 0
    %3555 = vmatprep.subr.bf16.mxu0 0
    %3556 = vmatpush1.bf16.msra.mxu0 0
    %3557 = vmatprep.subr.bf16.mxu0 0
    %3558 = vmatpush1.bf16.msra.mxu0 0
    %3559 = vmatprep.subr.bf16.mxu0 0
    %3560 = vmatpush1.bf16.msra.mxu0 0
    %3561 = vmatprep.subr.bf16.mxu0 0
    %3562 = vmatpush1.bf16.msra.mxu0 0
    %3563 = vmatprep.subr.bf16.mxu0 0
    %3564 = vmatpush1.bf16.msra.mxu0 0
    %3565 = vmatprep.mubr.bf16.mxu0 0
    %3566 = vmatmul.mubr.bf16.gmra.mrb[0].mxu0 %v3454
    %v3567 = vpop.f32.mrb[0].mxu0
    %v3568 = vadd.f32 %v3483, %v3567
    %v3569 = vpop.f32.mrb[0].mxu0
    %v3570 = vpop.f32.mrb[0].mxu0
    %v3571 = vadd.f32 %v3483, %v3570
    %v3572 = vpop.f32.mrb[0].mxu0
    %3573 = vmatprep.mubr.bf16.mxu0 0
    %3574 = vmatmul.mubr.bf16.gmra.mrb[0].mxu0 %v3455
    %v3575 = vpop.f32.mrb[0].mxu0
    %v3576 = vadd.f32 %v3483, %v3575
    %v3577 = vpop.f32.mrb[0].mxu0
    %v3578 = vpop.f32.mrb[0].mxu0
    %v3579 = vadd.f32 %v3483, %v3578
    %v3580 = vpop.f32.mrb[0].mxu0
    %3581 = vmatprep.mubr.bf16.mxu0 0
    %3582 = vmatmul.mubr.bf16.gmra.mrb[0].mxu0 %v3456
    %v3583 = vpop.f32.mrb[0].mxu0
    %v3584 = vadd.f32 %v3483, %v3583
    %v3585 = vpop.f32.mrb[0].mxu0
    %v3586 = vpop.f32.mrb[0].mxu0
    %v3587 = vadd.f32 %v3483, %v3586
    %v3588 = vpop.f32.mrb[0].mxu0
    %3589 = vmatprep.mubr.bf16.mxu0 0
    %3590 = vmatmul.mubr.bf16.gmra.mrb[0].mxu0 %v3457
    %v3591 = vpop.f32.mrb[0].mxu0
    %v3592 = vadd.f32 %v3483, %v3591
    %v3593 = vpop.f32.mrb[0].mxu0
    %v3594 = vpop.f32.mrb[0].mxu0
    %v3595 = vadd.f32 %v3483, %v3594
    %v3596 = vpop.f32.mrb[0].mxu0
    %3597 = vmatprep.mubr.bf16.mxu0 0
    %3598 = vmatmul.mubr.bf16.gmra.mrb[0].mxu0 %v3458
    %v3599 = vpop.f32.mrb[0].mxu0
    %v3600 = vadd.f32 %v3483, %v3599
    %v3601 = vpop.f32.mrb[0].mxu0
    %v3602 = vpop.f32.mrb[0].mxu0
    %v3603 = vadd.f32 %v3483, %v3602
    %v3604 = vpop.f32.mrb[0].mxu0
    %3605 = vmatprep.mubr.bf16.mxu0 0
    %3606 = vmatmul.mubr.bf16.gmra.mrb[0].mxu0 %v3459
    %v3607 = vpop.f32.mrb[0].mxu0
    %v3608 = vadd.f32 %v3483, %v3607
    %v3609 = vpop.f32.mrb[0].mxu0
    %v3610 = vpop.f32.mrb[0].mxu0
    %v3611 = vadd.f32 %v3483, %v3610
    %v3612 = vpop.f32.mrb[0].mxu0
    %3613 = vmatprep.mubr.bf16.mxu0 0
    %3614 = vmatmul.mubr.bf16.gmra.mrb[0].mxu0 %v3460
    %v3615 = vpop.f32.mrb[0].mxu0
    %v3616 = vadd.f32 %v3483, %v3615
    %v3617 = vpop.f32.mrb[0].mxu0
    %v3618 = vpop.f32.mrb[0].mxu0
    %v3619 = vadd.f32 %v3483, %v3618
    %v3620 = vpop.f32.mrb[0].mxu0
    %3621 = vmatprep.mubr.bf16.mxu0 0
    %3622 = vmatmul.mubr.bf16.gmra.mrb[0].mxu0 %v3461
    %v3623 = vpop.f32.mrb[0].mxu0
    %v3624 = vadd.f32 %v3483, %v3623
    %v3625 = vpop.f32.mrb[0].mxu0
    %v3626 = vpop.f32.mrb[0].mxu0
    %v3627 = vadd.f32 %v3483, %v3626
    %v3628 = vpop.f32.mrb[0].mxu0
    %3629 = vdwg.mxu0
    %3630 = vst [vmem:[#allocation14] sm:$0xff] %v3568
    %3631 = vst [vmem:[#allocation14 + $0x8] sm:$0xff] %v3571
    %3632 = vst [vmem:[#allocation14 + $0x10] sm:$0xff] %v3576
    %3633 = vst [vmem:[#allocation14 + $0x18] sm:$0xff] %v3579
    %3634 = vst [vmem:[#allocation14 + $0x20] sm:$0xff] %v3584
    %3635 = vst [vmem:[#allocation14 + $0x28] sm:$0xff] %v3587
    %3636 = vst [vmem:[#allocation14 + $0x30] sm:$0xff] %v3592
    %3637 = vst [vmem:[#allocation14 + $0x38] sm:$0xff] %v3595
    %3638 = vst [vmem:[#allocation14 + $0x40] sm:$0xff] %v3600
    %3639 = vst [vmem:[#allocation14 + $0x48] sm:$0xff] %v3603
    %3640 = vst [vmem:[#allocation14 + $0x50] sm:$0xff] %v3608
    %3641 = vst [vmem:[#allocation14 + $0x58] sm:$0xff] %v3611
    %3642 = vst [vmem:[#allocation14 + $0x60] sm:$0xff] %v3616
    %3643 = vst [vmem:[#allocation14 + $0x68] sm:$0xff] %v3619
    %3644 = vst [vmem:[#allocation14 + $0x70] sm:$0xff] %v3624
    %3645 = vst [vmem:[#allocation14 + $0x78] sm:$0xff] %v3627
    // Predicated region
    $region46: #{tpu_custom_call.1} parent=1 // pred_check
      _
    $region47: #{tpu_custom_call.1} parent=1 // pred_check_branch
      %3647 = sbr.rel (0) target = $region49
    $region48: #{tpu_custom_call.1} parent=1 // pred_region
      %s3649 = ssub.s32 2048, 2048
      %3650 = vsyncadd [#allocation8], %s3649
      %s3651 = sshll.u32 [#allocation14], 4
      %s3652 = int_to_ptr.vmem [resolvable:$true] %s3651
      %3657 = dma.vmem_to_hbm [thread:$0]  %s3652, 2048, %s6, [#allocation8], 128, 128, 8
    $region49: #{tpu_custom_call.1} parent=1 // pred_fallthru
      _
    // Predicated region
    $region50: #{tpu_custom_call.1} parent=1 // pred_check
      _
    $region51: #{tpu_custom_call.1} parent=1 // pred_check_branch
      %3659 = sbr.rel (0) target = $region53
    $region52: #{tpu_custom_call.1} parent=1 // pred_region
      %3660 = dma.done [#allocation8], 2048
    $region53: #{tpu_custom_call.1} parent=1 // pred_fallthru
      _
    %3661 = vsyncpa [#allocation7], 1
    %3662 = vsyncpa [#allocation10], 1
    %3663 = vsyncpa [#allocation13], 1
    %3664 = vsyncpa [#allocation8], 1

// kernel: tpu_custom_call.1
$region0: #{tpu_custom_call.1}
  #allocation0 [shape = 'u32[]', space=smem, size = 0x4, offset = 0x4, fixed_abs, tag = 'smem constant byte address 0x4 - core index']
  #allocation1 [shape = 'u32[144,128]{1,0:T(1,128)}', space=vmem, size = 0x12000, scoped, tag = 'internal scratch']
  #allocation2 [shape = 'f32[16,128]{1,0:T(8,128)}', space=vmem, size = 0x2000, scoped, tag = 'scratch operand']
  #allocation3 [shape = 'f32[16,128]{1,0:T(8,128)}', space=vmem, size = 0x2000, scoped, tag = 'scratch operand']
  #allocation4 [shape = 'f32[8,16,512]{2,1,0:T(8,128)}', space=vmem, size = 0x40000, scoped, tag = 'scratch operand']
  #allocation5 [shape = 'f32[8,16,128]{2,1,0:T(8,128)}', space=vmem, size = 0x10000, scoped, tag = 'scratch operand']
  %s0 = inlined_call_operand.hbm [shape: bf16[8,16,128], index: 0, kind: input, shape index: {}]
  %s1 = inlined_call_operand.hbm [shape: bf16[128,512], index: 1, kind: input, shape index: {}]
  %s2 = inlined_call_operand.hbm [shape: bf16[128,512], index: 2, kind: input, shape index: {}]
  %s3 = inlined_call_operand.vmem [shape: f32[1,512], index: 3, kind: input, shape index: {}]
  %s4 = inlined_call_operand.hbm [shape: bf16[128,128], index: 4, kind: input, shape index: {}]
  %s5 = inlined_call_operand.vmem [shape: f32[1,128], index: 5, kind: input, shape index: {}]
  %s6 = inlined_call_operand.hbm [shape: f32[8,16,128], index: 6, kind: output, shape index: {}]
  %s7 = sld [smem:[#allocation0]]
  $region54: #{tpu_custom_call.1} parent=0
    _
  %s9 = ssub.s32 1, %s7
  %s10 = scalar_select 0, %s9, %s7
  $region1: #{tpu_custom_call.1} parent=0
    #allocation6 [shape = 'u8[32768]{0}', space=vmem, size = 0x8000, scoped, tag = 'input window, operand 0, single buffered']
    #allocation7 [shape = 's32[1]{0}', space=sflag, size = 0x4, scoped, tag = 'scoped memory for tpu_custom_call.1']
    #allocation8 [shape = 's32[1]{0}', space=sflag, size = 0x4, scoped, tag = 'scoped memory for tpu_custom_call.1']
    #allocation9 [shape = 'u8[131072]{0}', space=vmem, size = 0x20000, scoped, tag = 'input window, operand 1, single buffered']
    #allocation10 [shape = 's32[1]{0}', space=sflag, size = 0x4, scoped, tag = 'scoped memory for tpu_custom_call.1']
    #allocation11 [shape = 'u8[131072]{0}', space=vmem, size = 0x20000, scoped, tag = 'input window, operand 2, single buffered']
    #allocation12 [shape = 'u8[32768]{0}', space=vmem, size = 0x8000, scoped, tag = 'input window, operand 4, single buffered']
    #allocation13 [shape = 's32[1]{0}', space=sflag, size = 0x4, scoped, tag = 'scoped memory for tpu_custom_call.1']
    #allocation14 [shape = 'u8[65536]{0}', space=vmem, size = 0x10000, scoped, tag = 'output window, operand 0, single buffered']
    %11 = vsyncpa [#allocation7], 0
    %12 = vsyncpa [#allocation10], 0
    %13 = vsyncpa [#allocation13], 0
    %14 = vsyncpa [#allocation8], 0
    // Predicated region
    $region2: #{tpu_custom_call.1} parent=1 // pred_check
      _
    $region3: #{tpu_custom_call.1} parent=1 // pred_check_branch
      %16 = sbr.rel (0) target = $region5
    $region4: #{tpu_custom_call.1} parent=1 // pred_region
      %s18 = ssub.s32 1024, 1024
      %19 = vsyncadd [#allocation7], %s18
      %s20 = sshll.u32 [#allocation6], 4
      %s21 = int_to_ptr.vmem [resolvable:$true] %s20
      %26 = dma.hbm_to_vmem [thread:$0]  %s0, 1024, %s21, [#allocation7], 64, 64, 4
    $region5: #{tpu_custom_call.1} parent=1 // pred_fallthru
      _
    // Predicated region
    $region6: #{tpu_custom_call.1} parent=1 // pred_check
      _
    $region7: #{tpu_custom_call.1} parent=1 // pred_check_branch
      %28 = sbr.rel (0) target = $region9
    $region8: #{tpu_custom_call.1} parent=1 // pred_region
      %s30 = ssub.s32 4096, 4096
      %31 = vsyncadd [#allocation10], %s30
      %s32 = sshll.u32 [#allocation9], 4
      %s33 = int_to_ptr.vmem [resolvable:$true] %s32
      %38 = dma.hbm_to_vmem [thread:$0]  %s1, 4096, %s33, [#allocation10], 256, 256, 16
    $region9: #{tpu_custom_call.1} parent=1 // pred_fallthru
      _
    // Predicated region
    $region10: #{tpu_custom_call.1} parent=1 // pred_check
      _
    $region11: #{tpu_custom_call.1} parent=1 // pred_check_branch
      %40 = sbr.rel (0) target = $region13
    $region12: #{tpu_custom_call.1} parent=1 // pred_region
      %s42 = ssub.s32 4096, 4096
      %43 = vsyncadd [#allocation10], %s42
      %s44 = sshll.u32 [#allocation11], 4
      %s45 = int_to_ptr.vmem [resolvable:$true] %s44
      %50 = dma.hbm_to_vmem [thread:$0]  %s2, 4096, %s45, [#allocation10], 256, 256, 16
    $region13: #{tpu_custom_call.1} parent=1 // pred_fallthru
      _
    // Predicated region
    $region14: #{tpu_custom_call.1} parent=1 // pred_check
      _
    $region15: #{tpu_custom_call.1} parent=1 // pred_check_branch
      %52 = sbr.rel (0) target = $region17
    $region16: #{tpu_custom_call.1} parent=1 // pred_region
      _
    $region17: #{tpu_custom_call.1} parent=1 // pred_fallthru
      _
    // Predicated region
    $region18: #{tpu_custom_call.1} parent=1 // pred_check
      _
    $region19: #{tpu_custom_call.1} parent=1 // pred_check_branch
      %54 = sbr.rel (0) target = $region21
    $region20: #{tpu_custom_call.1} parent=1 // pred_region
      %s56 = ssub.s32 1024, 1024
      %57 = vsyncadd [#allocation13], %s56
      %s58 = sshll.u32 [#allocation12], 4
      %s59 = int_to_ptr.vmem [resolvable:$true] %s58
      %64 = dma.hbm_to_vmem [thread:$0]  %s4, 1024, %s59, [#allocation13], 64, 64, 4
    $region21: #{tpu_custom_call.1} parent=1 // pred_fallthru
      _
    // Predicated region
    $region22: #{tpu_custom_call.1} parent=1 // pred_check
      _
    $region23: #{tpu_custom_call.1} parent=1 // pred_check_branch
      %66 = sbr.rel (0) target = $region25
    $region24: #{tpu_custom_call.1} parent=1 // pred_region
      _
    $region25: #{tpu_custom_call.1} parent=1 // pred_fallthru
      _
    // Predicated region
    $region26: #{tpu_custom_call.1} parent=1 // pred_check
      _
    $region27: #{tpu_custom_call.1} parent=1 // pred_check_branch
      %68 = sbr.rel (0) target = $region29
    $region28: #{tpu_custom_call.1} parent=1 // pred_region
      %69 = dma.done [#allocation7], 1024
    $region29: #{tpu_custom_call.1} parent=1 // pred_fallthru
      _
    // Predicated region
    $region30: #{tpu_custom_call.1} parent=1 // pred_check
      _
    $region31: #{tpu_custom_call.1} parent=1 // pred_check_branch
      %71 = sbr.rel (0) target = $region33
    $region32: #{tpu_custom_call.1} parent=1 // pred_region
      %72 = dma.done [#allocation10], 4096
    $region33: #{tpu_custom_call.1} parent=1 // pred_fallthru
      _
    // Predicated region
    $region34: #{tpu_custom_call.1} parent=1 // pred_check
      _
    $region35: #{tpu_custom_call.1} parent=1 // pred_check_branch
      %74 = sbr.rel (0) target = $region37
    $region36: #{tpu_custom_call.1} parent=1 // pred_region
      %75 = dma.done [#allocation10], 4096
    $region37: #{tpu_custom_call.1} parent=1 // pred_fallthru
      _
    // Predicated region
    $region38: #{tpu_custom_call.1} parent=1 // pred_check
      _
    $region39: #{tpu_custom_call.1} parent=1 // pred_check_branch
      %77 = sbr.rel (0) target = $region41
    $region40: #{tpu_custom_call.1} parent=1 // pred_region
      %78 = dma.done [#allocation13], 1024
    $region41: #{tpu_custom_call.1} parent=1 // pred_fallthru
      _
    %p80 = scmp.eq.s32.totalorder 0, 0
    // Predicated region
    $region42: #{tpu_custom_call.1} parent=1 // pred_check
      %p81 = pneg %p80
    $region43: #{tpu_custom_call.1} parent=1 // pred_check_branch
      %83 = sbr.rel (%p81) target = $region45
    $region44: #{tpu_custom_call.1} parent=1 // pred_region
      %84 = vst [vmem:[#allocation2] sm:$0xff] 0.0
      %85 = vst [vmem:[#allocation2 + $0x8] sm:$0xff] 0.0
      %86 = vst [vmem:[#allocation3] sm:$0xff] 0.0
      %87 = vst [vmem:[#allocation3 + $0x8] sm:$0xff] 0.0
    $region45: #{tpu_custom_call.1} parent=1 // pred_fallthru
      _
    %v88 = vld [vmem:[#allocation6] sm:$0xf]
    %v89 = vld [vmem:[#allocation6 + $0x4] sm:$0xf]
    %v90 = vld [vmem:[#allocation6 + $0x8] sm:$0xf]
    %v91 = vld [vmem:[#allocation6 + $0xc] sm:$0xf]
    %v92 = vld [vmem:[#allocation6 + $0x10] sm:$0xf]
    %v93 = vld [vmem:[#allocation6 + $0x14] sm:$0xf]
    %v94 = vld [vmem:[#allocation6 + $0x18] sm:$0xf]
    %v95 = vld [vmem:[#allocation6 + $0x1c] sm:$0xf]
    %v96 = vld [vmem:[#allocation6 + $0x20] sm:$0xf]
    %v97 = vld [vmem:[#allocation6 + $0x24] sm:$0xf]
    %v98 = vld [vmem:[#allocation6 + $0x28] sm:$0xf]
    %v99 = vld [vmem:[#allocation6 + $0x2c] sm:$0xf]
    %v100 = vld [vmem:[#allocation6 + $0x30] sm:$0xf]
    %v101 = vld [vmem:[#allocation6 + $0x34] sm:$0xf]
    %v102 = vld [vmem:[#allocation6 + $0x38] sm:$0xf]
    %v103 = vld [vmem:[#allocation6 + $0x3c] sm:$0xf]
    %v104 = vld [vmem:[#allocation9] sm:$0xff]
    %v105 = vld [vmem:[#allocation9 + $0x8] sm:$0xff]
    %v106 = vld [vmem:[#allocation9 + $0x10] sm:$0xff]
    %v107 = vld [vmem:[#allocation9 + $0x18] sm:$0xff]
    %v108 = vld [vmem:[#allocation9 + $0x20] sm:$0xff]
    %v109 = vld [vmem:[#allocation9 + $0x28] sm:$0xff]
    %v110 = vld [vmem:[#allocation9 + $0x30] sm:$0xff]
    %v111 = vld [vmem:[#allocation9 + $0x38] sm:$0xff]
    %v112 = vld [vmem:[#allocation9 + $0x40] sm:$0xff]
    %v113 = vld [vmem:[#allocation9 + $0x48] sm:$0xff]
    %v114 = vld [vmem:[#allocation9 + $0x50] sm:$0xff]
    %v115 = vld [vmem:[#allocation9 + $0x58] sm:$0xff]
    %v116 = vld [vmem:[#allocation9 + $0x60] sm:$0xff]
    %v117 = vld [vmem:[#allocation9 + $0x68] sm:$0xff]
    %v118 = vld [vmem:[#allocation9 + $0x70] sm:$0xff]
    %v119 = vld [vmem:[#allocation9 + $0x78] sm:$0xff]
    %v120 = vld [vmem:[#allocation9 + $0x80] sm:$0xff]
    %v121 = vld [vmem:[#allocation9 + $0x88] sm:$0xff]
    %v122 = vld [vmem:[#allocation9 + $0x90] sm:$0xff]
    %v123 = vld [vmem:[#allocation9 + $0x98] sm:$0xff]
    %v124 = vld [vmem:[#allocation9 + $0xa0] sm:$0xff]
    %v125 = vld [vmem:[#allocation9 + $0xa8] sm:$0xff]
    %v126 = vld [vmem:[#allocation9 + $0xb0] sm:$0xff]
    %v127 = vld [vmem:[#allocation9 + $0xb8] sm:$0xff]
    %v128 = vld [vmem:[#allocation9 + $0xc0] sm:$0xff]
    %v129 = vld [vmem:[#allocation9 + $0xc8] sm:$0xff]
    %v130 = vld [vmem:[#allocation9 + $0xd0] sm:$0xff]
    %v131 = vld [vmem:[#allocation9 + $0xd8] sm:$0xff]
    %v132 = vld [vmem:[#allocation9 + $0xe0] sm:$0xff]
    %v133 = vld [vmem:[#allocation9 + $0xe8] sm:$0xff]
    %v134 = vld [vmem:[#allocation9 + $0xf0] sm:$0xff]
    %v135 = vld [vmem:[#allocation9 + $0xf8] sm:$0xff]
    %v136 = vld [vmem:[%s3] sm:$0xf]
    %v138 = vlaneseq
    %v139 = vshrl.u32 %v138, 7
    %v140 = vsub.s32 0, %v139
    %v141 = vrot.slane %v136, %v140
    %v142 = vlaneseq
    %v143 = vshrl.u32 %v142, 7
    %v144 = vsub.s32 1, %v143
    %v145 = vrot.slane %v136, %v144
    %v146 = vlaneseq
    %v147 = vshrl.u32 %v146, 7
    %v148 = vsub.s32 2, %v147
    %v149 = vrot.slane %v136, %v148
    %v150 = vlaneseq
    %v151 = vshrl.u32 %v150, 7
    %v152 = vsub.s32 3, %v151
    %v153 = vrot.slane %v136, %v152
    %v174 = vunpack.c.l.b16 %v88
    %v175 = vunpack.c.l.b16 %v89
    %v176 = vunpack.c.l.b16 %v90
    %v177 = vunpack.c.l.b16 %v91
    %v178 = vunpack.c.l.b16 %v92
    %v179 = vunpack.c.l.b16 %v93
    %v180 = vunpack.c.l.b16 %v94
    %v181 = vunpack.c.l.b16 %v95
    %v182 = vunpack.c.l.b16 %v96
    %v183 = vunpack.c.l.b16 %v97
    %v184 = vunpack.c.l.b16 %v98
    %v185 = vunpack.c.l.b16 %v99
    %v186 = vunpack.c.l.b16 %v100
    %v187 = vunpack.c.l.b16 %v101
    %v188 = vunpack.c.l.b16 %v102
    %v189 = vunpack.c.l.b16 %v103
    %v190 = vpack.c.b16 %v175, %v174
    %v191 = vpack.c.b16 %v177, %v176
    %v192 = vpack.c.b16 %v179, %v178
    %v193 = vpack.c.b16 %v181, %v180
    %v194 = vpack.c.b16 %v183, %v182
    %v195 = vpack.c.b16 %v185, %v184
    %v196 = vpack.c.b16 %v187, %v186
    %v197 = vpack.c.b16 %v189, %v188
    %v238 = vunpack.c.l.b16 %v104
    %v239 = vunpack.c.h.b16 %v104
    %v240 = vunpack.c.l.b16 %v105
    %v241 = vunpack.c.h.b16 %v105
    %v242 = vunpack.c.l.b16 %v106
    %v243 = vunpack.c.h.b16 %v106
    %v244 = vunpack.c.l.b16 %v107
    %v245 = vunpack.c.h.b16 %v107
    %v246 = vunpack.c.l.b16 %v108
    %v247 = vunpack.c.h.b16 %v108
    %v248 = vunpack.c.l.b16 %v109
    %v249 = vunpack.c.h.b16 %v109
    %v250 = vunpack.c.l.b16 %v110
    %v251 = vunpack.c.h.b16 %v110
    %v252 = vunpack.c.l.b16 %v111
    %v253 = vunpack.c.h.b16 %v111
    %v254 = vunpack.c.l.b16 %v112
    %v255 = vunpack.c.h.b16 %v112
    %v256 = vunpack.c.l.b16 %v113
    %v257 = vunpack.c.h.b16 %v113
    %v258 = vunpack.c.l.b16 %v114
    %v259 = vunpack.c.h.b16 %v114
    %v260 = vunpack.c.l.b16 %v115
    %v261 = vunpack.c.h.b16 %v115
    %v262 = vunpack.c.l.b16 %v116
    %v263 = vunpack.c.h.b16 %v116
    %v264 = vunpack.c.l.b16 %v117
    %v265 = vunpack.c.h.b16 %v117
    %v266 = vunpack.c.l.b16 %v118
    %v267 = vunpack.c.h.b16 %v118
    %v268 = vunpack.c.l.b16 %v119
    %v269 = vunpack.c.h.b16 %v119
    %v270 = vunpack.c.l.b16 %v120
    %v271 = vunpack.c.h.b16 %v120
    %v272 = vunpack.c.l.b16 %v121
    %v273 = vunpack.c.h.b16 %v121
    %v274 = vunpack.c.l.b16 %v122
    %v275 = vunpack.c.h.b16 %v122
    %v276 = vunpack.c.l.b16 %v123
    %v277 = vunpack.c.h.b16 %v123
    %v278 = vunpack.c.l.b16 %v124
    %v279 = vunpack.c.h.b16 %v124
    %v280 = vunpack.c.l.b16 %v125
    %v281 = vunpack.c.h.b16 %v125
    %v282 = vunpack.c.l.b16 %v126
    %v283 = vunpack.c.h.b16 %v126
    %v284 = vunpack.c.l.b16 %v127
    %v285 = vunpack.c.h.b16 %v127
    %v286 = vunpack.c.l.b16 %v128
    %v287 = vunpack.c.h.b16 %v128
    %v288 = vunpack.c.l.b16 %v129
    %v289 = vunpack.c.h.b16 %v129
    %v290 = vunpack.c.l.b16 %v130
    %v291 = vunpack.c.h.b16 %v130
    %v292 = vunpack.c.l.b16 %v131
    %v293 = vunpack.c.h.b16 %v131
    %v294 = vunpack.c.l.b16 %v132
    %v295 = vunpack.c.h.b16 %v132
    %v296 = vunpack.c.l.b16 %v133
    %v297 = vunpack.c.h.b16 %v133
    %v298 = vunpack.c.l.b16 %v134
    %v299 = vunpack.c.h.b16 %v134
    %v300 = vunpack.c.l.b16 %v135
    %v301 = vunpack.c.h.b16 %v135
    %v302 = vpack.c.b16 %v242, %v238
    %v303 = vpack.c.b16 %v243, %v239
    %v304 = vpack.c.b16 %v244, %v240
    %v305 = vpack.c.b16 %v245, %v241
    %v306 = vpack.c.b16 %v250, %v246
    %v307 = vpack.c.b16 %v251, %v247
    %v308 = vpack.c.b16 %v252, %v248
    %v309 = vpack.c.b16 %v253, %v249
    %v310 = vpack.c.b16 %v258, %v254
    %v311 = vpack.c.b16 %v259, %v255
    %v312 = vpack.c.b16 %v260, %v256
    %v313 = vpack.c.b16 %v261, %v257
    %v314 = vpack.c.b16 %v266, %v262
    %v315 = vpack.c.b16 %v267, %v263
    %v316 = vpack.c.b16 %v268, %v264
    %v317 = vpack.c.b16 %v269, %v265
    %v318 = vpack.c.b16 %v274, %v270
    %v319 = vpack.c.b16 %v275, %v271
    %v320 = vpack.c.b16 %v276, %v272
    %v321 = vpack.c.b16 %v277, %v273
    %v322 = vpack.c.b16 %v282, %v278
    %v323 = vpack.c.b16 %v283, %v279
    %v324 = vpack.c.b16 %v284, %v280
    %v325 = vpack.c.b16 %v285, %v281
    %v326 = vpack.c.b16 %v290, %v286
    %v327 = vpack.c.b16 %v291, %v287
    %v328 = vpack.c.b16 %v292, %v288
    %v329 = vpack.c.b16 %v293, %v289
    %v330 = vpack.c.b16 %v298, %v294
    %v331 = vpack.c.b16 %v299, %v295
    %v332 = vpack.c.b16 %v300, %v296
    %v333 = vpack.c.b16 %v301, %v297
    %366 = vmatprep.subr.bf16.mxu0 %v303
    %367 = vmatpush1.bf16.msra.mxu0 %v302
    %368 = vmatprep.subr.bf16.mxu0 %v307
    %369 = vmatpush1.bf16.msra.mxu0 %v306
    %370 = vmatprep.subr.bf16.mxu0 %v311
    %371 = vmatpush1.bf16.msra.mxu0 %v310
    %372 = vmatprep.subr.bf16.mxu0 %v315
    %373 = vmatpush1.bf16.msra.mxu0 %v314
    %374 = vmatprep.subr.bf16.mxu0 %v319
    %375 = vmatpush1.bf16.msra.mxu0 %v318
    %376 = vmatprep.subr.bf16.mxu0 %v323
    %377 = vmatpush1.bf16.msra.mxu0 %v322
    %378 = vmatprep.subr.bf16.mxu0 %v327
    %379 = vmatpush1.bf16.msra.mxu0 %v326
    %380 = vmatprep.subr.bf16.mxu0 %v331
    %381 = vmatpush1.bf16.msra.mxu0 %v330
    %382 = vmatprep.subr.bf16.mxu0 0
    %383 = vmatpush1.bf16.msra.mxu0 0
    %384 = vmatprep.subr.bf16.mxu0 0
    %385 = vmatpush1.bf16.msra.mxu0 0
    %386 = vmatprep.subr.bf16.mxu0 0
    %387 = vmatpush1.bf16.msra.mxu0 0
    %388 = vmatprep.subr.bf16.mxu0 0
    %389 = vmatpush1.bf16.msra.mxu0 0
    %390 = vmatprep.subr.bf16.mxu0 0
    %391 = vmatpush1.bf16.msra.mxu0 0
    %392 = vmatprep.subr.bf16.mxu0 0
    %393 = vmatpush1.bf16.msra.mxu0 0
    %394 = vmatprep.subr.bf16.mxu0 0
    %395 = vmatpush1.bf16.msra.mxu0 0
    %396 = vmatprep.subr.bf16.mxu0 0
    %397 = vmatpush1.bf16.msra.mxu0 0
    %398 = vmatprep.mubr.bf16.mxu0 0
    %399 = vmatmul.mubr.bf16.gmra.mrb[0].mxu0 %v190
    %v400 = vpop.f32.mrb[0].mxu0
    %v401 = vadd.f32 %v141, %v400
    %v402 = vpop.f32.mrb[0].mxu0
    %v403 = vadd.f32 %v145, %v402
    %v404 = vpop.f32.mrb[0].mxu0
    %v405 = vadd.f32 %v141, %v404
    %v406 = vpop.f32.mrb[0].mxu0
    %v407 = vadd.f32 %v145, %v406
    %408 = vmatprep.mubr.bf16.mxu0 0
    %409 = vmatmul.mubr.bf16.gmra.mrb[0].mxu0 %v191
    %v410 = vpop.f32.mrb[0].mxu0
    %v411 = vadd.f32 %v141, %v410
    %v412 = vpop.f32.mrb[0].mxu0
    %v413 = vadd.f32 %v145, %v412
    %v414 = vpop.f32.mrb[0].mxu0
    %v415 = vadd.f32 %v141, %v414
    %v416 = vpop.f32.mrb[0].mxu0
    %v417 = vadd.f32 %v145, %v416
    %418 = vmatprep.mubr.bf16.mxu0 0
    %419 = vmatmul.mubr.bf16.gmra.mrb[0].mxu0 %v192
    %v420 = vpop.f32.mrb[0].mxu0
    %v421 = vadd.f32 %v141, %v420
    %v422 = vpop.f32.mrb[0].mxu0
    %v423 = vadd.f32 %v145, %v422
    %v424 = vpop.f32.mrb[0].mxu0
    %v425 = vadd.f32 %v141, %v424
    %v426 = vpop.f32.mrb[0].mxu0
    %v427 = vadd.f32 %v145, %v426
    %428 = vmatprep.mubr.bf16.mxu0 0
    %429 = vmatmul.mubr.bf16.gmra.mrb[0].mxu0 %v193
    %v430 = vpop.f32.mrb[0].mxu0
    %v431 = vadd.f32 %v141, %v430
    %v432 = vpop.f32.mrb[0].mxu0
    %v433 = vadd.f32 %v145, %v432
    %v434 = vpop.f32.mrb[0].mxu0
    %v435 = vadd.f32 %v141, %v434
    %v436 = vpop.f32.mrb[0].mxu0
    %v437 = vadd.f32 %v145, %v436
    %438 = vmatprep.mubr.bf16.mxu0 0
    %439 = vmatmul.mubr.bf16.gmra.mrb[0].mxu0 %v194
    %v440 = vpop.f32.mrb[0].mxu0
    %v441 = vadd.f32 %v141, %v440
    %v442 = vpop.f32.mrb[0].mxu0
    %v443 = vadd.f32 %v145, %v442
    %v444 = vpop.f32.mrb[0].mxu0
    %v445 = vadd.f32 %v141, %v444
    %v446 = vpop.f32.mrb[0].mxu0
    %v447 = vadd.f32 %v145, %v446
    %448 = vmatprep.mubr.bf16.mxu0 0
    %449 = vmatmul.mubr.bf16.gmra.mrb[0].mxu0 %v195
    %v450 = vpop.f32.mrb[0].mxu0
    %v451 = vadd.f32 %v141, %v450
    %v452 = vpop.f32.mrb[0].mxu0
    %v453 = vadd.f32 %v145, %v452
    %v454 = vpop.f32.mrb[0].mxu0
    %v455 = vadd.f32 %v141, %v454
    %v456 = vpop.f32.mrb[0].mxu0
    %v457 = vadd.f32 %v145, %v456
    %458 = vmatprep.mubr.bf16.mxu0 0
    %459 = vmatmul.mubr.bf16.gmra.mrb[0].mxu0 %v196
    %v460 = vpop.f32.mrb[0].mxu0
    %v461 = vadd.f32 %v141, %v460
    %v462 = vpop.f32.mrb[0].mxu0
    %v463 = vadd.f32 %v145, %v462
    %v464 = vpop.f32.mrb[0].mxu0
    %v465 = vadd.f32 %v141, %v464
    %v466 = vpop.f32.mrb[0].mxu0
    %v467 = vadd.f32 %v145, %v466
    %468 = vmatprep.mubr.bf16.mxu0 0
    %469 = vmatmul.mubr.bf16.gmra.mrb[0].mxu0 %v197
    %v470 = vpop.f32.mrb[0].mxu0
    %v471 = vadd.f32 %v141, %v470
    %v472 = vpop.f32.mrb[0].mxu0
    %v473 = vadd.f32 %v145, %v472
    %v474 = vpop.f32.mrb[0].mxu0
    %v475 = vadd.f32 %v141, %v474
    %v476 = vpop.f32.mrb[0].mxu0
    %v477 = vadd.f32 %v145, %v476
    %478 = vdwg.mxu0
    %479 = vmatprep.subr.bf16.mxu0 %v305
    %480 = vmatpush1.bf16.msra.mxu0 %v304
    %481 = vmatprep.subr.bf16.mxu0 %v309
    %482 = vmatpush1.bf16.msra.mxu0 %v308
    %483 = vmatprep.subr.bf16.mxu0 %v313
    %484 = vmatpush1.bf16.msra.mxu0 %v312
    %485 = vmatprep.subr.bf16.mxu0 %v317
    %486 = vmatpush1.bf16.msra.mxu0 %v316
    %487 = vmatprep.subr.bf16.mxu0 %v321
    %488 = vmatpush1.bf16.msra.mxu0 %v320
    %489 = vmatprep.subr.bf16.mxu0 %v325
    %490 = vmatpush1.bf16.msra.mxu0 %v324
    %491 = vmatprep.subr.bf16.mxu0 %v329
    %492 = vmatpush1.bf16.msra.mxu0 %v328
    %493 = vmatprep.subr.bf16.mxu0 %v333
    %494 = vmatpush1.bf16.msra.mxu0 %v332
    %495 = vmatprep.subr.bf16.mxu0 0
    %496 = vmatpush1.bf16.msra.mxu0 0
    %497 = vmatprep.subr.bf16.mxu0 0
    %498 = vmatpush1.bf16.msra.mxu0 0
    %499 = vmatprep.subr.bf16.mxu0 0
    %500 = vmatpush1.bf16.msra.mxu0 0
    %501 = vmatprep.subr.bf16.mxu0 0
    %502 = vmatpush1.bf16.msra.mxu0 0
    %503 = vmatprep.subr.bf16.mxu0 0
    %504 = vmatpush1.bf16.msra.mxu0 0
    %505 = vmatprep.subr.bf16.mxu0 0
    %506 = vmatpush1.bf16.msra.mxu0 0
    %507 = vmatprep.subr.bf16.mxu0 0
    %508 = vmatpush1.bf16.msra.mxu0 0
    %509 = vmatprep.subr.bf16.mxu0 0
    %510 = vmatpush1.bf16.msra.mxu0 0
    %511 = vmatprep.mubr.bf16.mxu0 0
    %512 = vmatmul.mubr.bf16.gmra.mrb[0].mxu0 %v190
    %v513 = vpop.f32.mrb[0].mxu0
    %v514 = vadd.f32 %v149, %v513
    %v515 = vpop.f32.mrb[0].mxu0
    %v516 = vadd.f32 %v153, %v515
    %v517 = vpop.f32.mrb[0].mxu0
    %v518 = vadd.f32 %v149, %v517
    %v519 = vpop.f32.mrb[0].mxu0
    %v520 = vadd.f32 %v153, %v519
    %521 = vmatprep.mubr.bf16.mxu0 0
    %522 = vmatmul.mubr.bf16.gmra.mrb[0].mxu0 %v191
    %v523 = vpop.f32.mrb[0].mxu0
    %v524 = vadd.f32 %v149, %v523
    %v525 = vpop.f32.mrb[0].mxu0
    %v526 = vadd.f32 %v153, %v525
    %v527 = vpop.f32.mrb[0].mxu0
    %v528 = vadd.f32 %v149, %v527
    %v529 = vpop.f32.mrb[0].mxu0
    %v530 = vadd.f32 %v153, %v529
    %531 = vmatprep.mubr.bf16.mxu0 0
    %532 = vmatmul.mubr.bf16.gmra.mrb[0].mxu0 %v192
    %v533 = vpop.f32.mrb[0].mxu0
    %v534 = vadd.f32 %v149, %v533
    %v535 = vpop.f32.mrb[0].mxu0
    %v536 = vadd.f32 %v153, %v535
    %v537 = vpop.f32.mrb[0].mxu0
    %v538 = vadd.f32 %v149, %v537
    %v539 = vpop.f32.mrb[0].mxu0
    %v540 = vadd.f32 %v153, %v539
    %541 = vmatprep.mubr.bf16.mxu0 0
    %542 = vmatmul.mubr.bf16.gmra.mrb[0].mxu0 %v193
    %v543 = vpop.f32.mrb[0].mxu0
    %v544 = vadd.f32 %v149, %v543
    %v545 = vpop.f32.mrb[0].mxu0
    %v546 = vadd.f32 %v153, %v545
    %v547 = vpop.f32.mrb[0].mxu0
    %v548 = vadd.f32 %v149, %v547
    %v549 = vpop.f32.mrb[0].mxu0
    %v550 = vadd.f32 %v153, %v549
    %551 = vmatprep.mubr.bf16.mxu0 0
    %552 = vmatmul.mubr.bf16.gmra.mrb[0].mxu0 %v194
    %v553 = vpop.f32.mrb[0].mxu0
    %v554 = vadd.f32 %v149, %v553
    %v555 = vpop.f32.mrb[0].mxu0
    %v556 = vadd.f32 %v153, %v555
    %v557 = vpop.f32.mrb[0].mxu0
    %v558 = vadd.f32 %v149, %v557
    %v559 = vpop.f32.mrb[0].mxu0
    %v560 = vadd.f32 %v153, %v559
    %561 = vmatprep.mubr.bf16.mxu0 0
    %562 = vmatmul.mubr.bf16.gmra.mrb[0].mxu0 %v195
    %v563 = vpop.f32.mrb[0].mxu0
    %v564 = vadd.f32 %v149, %v563
    %v565 = vpop.f32.mrb[0].mxu0
    %v566 = vadd.f32 %v153, %v565
    %v567 = vpop.f32.mrb[0].mxu0
    %v568 = vadd.f32 %v149, %v567
    %v569 = vpop.f32.mrb[0].mxu0
    %v570 = vadd.f32 %v153, %v569
    %571 = vmatprep.mubr.bf16.mxu0 0
    %572 = vmatmul.mubr.bf16.gmra.mrb[0].mxu0 %v196
    %v573 = vpop.f32.mrb[0].mxu0
    %v574 = vadd.f32 %v149, %v573
    %v575 = vpop.f32.mrb[0].mxu0
    %v576 = vadd.f32 %v153, %v575
    %v577 = vpop.f32.mrb[0].mxu0
    %v578 = vadd.f32 %v149, %v577
    %v579 = vpop.f32.mrb[0].mxu0
    %v580 = vadd.f32 %v153, %v579
    %581 = vmatprep.mubr.bf16.mxu0 0
    %582 = vmatmul.mubr.bf16.gmra.mrb[0].mxu0 %v197
    %v583 = vpop.f32.mrb[0].mxu0
    %v584 = vadd.f32 %v149, %v583
    %v585 = vpop.f32.mrb[0].mxu0
    %v586 = vadd.f32 %v153, %v585
    %v587 = vpop.f32.mrb[0].mxu0
    %v588 = vadd.f32 %v149, %v587
    %v589 = vpop.f32.mrb[0].mxu0
    %v590 = vadd.f32 %v153, %v589
    %591 = vdwg.mxu0
    %592 = vst [vmem:[#allocation4] sm:$0xff] %v401
    %593 = vst [vmem:[#allocation4 + $0x8] sm:$0xff] %v403
    %594 = vst [vmem:[#allocation4 + $0x10] sm:$0xff] %v514
    %595 = vst [vmem:[#allocation4 + $0x18] sm:$0xff] %v516
    %596 = vst [vmem:[#allocation4 + $0x20] sm:$0xff] %v405
    %597 = vst [vmem:[#allocation4 + $0x28] sm:$0xff] %v407
    %598 = vst [vmem:[#allocation4 + $0x30] sm:$0xff] %v518
    %599 = vst [vmem:[#allocation4 + $0x38] sm:$0xff] %v520
    %600 = vst [vmem:[#allocation4 + $0x40] sm:$0xff] %v411
    %601 = vst [vmem:[#allocation4 + $0x48] sm:$0xff] %v413
    %602 = vst [vmem:[#allocation4 + $0x50] sm:$0xff] %v524
    %603 = vst [vmem:[#allocation4 + $0x58] sm:$0xff] %v526
    %604 = vst [vmem:[#allocation4 + $0x60] sm:$0xff] %v415
    %605 = vst [vmem:[#allocation4 + $0x68] sm:$0xff] %v417
    %606 = vst [vmem:[#allocation4 + $0x70] sm:$0xff] %v528
    %607 = vst [vmem:[#allocation4 + $0x78] sm:$0xff] %v530
    %608 = vst [vmem:[#allocation4 + $0x80] sm:$0xff] %v421
    %609 = vst [vmem:[#allocation4 + $0x88] sm:$0xff] %v423
    %610 = vst [vmem:[#allocation4 + $0x90] sm:$0xff] %v534
    %611 = vst [vmem:[#allocation4 + $0x98] sm:$0xff] %v536
    %612 = vst [vmem:[#allocation4 + $0xa0] sm:$0xff] %v425
    %613 = vst [vmem:[#allocation4 + $0xa8] sm:$0xff] %v427
    %614 = vst [vmem:[#allocation4 + $0xb0] sm:$0xff] %v538
    %615 = vst [vmem:[#allocation4 + $0xb8] sm:$0xff] %v540
    %616 = vst [vmem:[#allocation4 + $0xc0] sm:$0xff] %v431
    %617 = vst [vmem:[#allocation4 + $0xc8] sm:$0xff] %v433
    %618 = vst [vmem:[#allocation4 + $0xd0] sm:$0xff] %v544
    %619 = vst [vmem:[#allocation4 + $0xd8] sm:$0xff] %v546
    %620 = vst [vmem:[#allocation4 + $0xe0] sm:$0xff] %v435
    %621 = vst [vmem:[#allocation4 + $0xe8] sm:$0xff] %v437
    %622 = vst [vmem:[#allocation4 + $0xf0] sm:$0xff] %v548
    %623 = vst [vmem:[#allocation4 + $0xf8] sm:$0xff] %v550
    %624 = vst [vmem:[#allocation4 + $0x100] sm:$0xff] %v441
    %625 = vst [vmem:[#allocation4 + $0x108] sm:$0xff] %v443
    %626 = vst [vmem:[#allocation4 + $0x110] sm:$0xff] %v554
    %627 = vst [vmem:[#allocation4 + $0x118] sm:$0xff] %v556
    %628 = vst [vmem:[#allocation4 + $0x120] sm:$0xff] %v445
    %629 = vst [vmem:[#allocation4 + $0x128] sm:$0xff] %v447
    %630 = vst [vmem:[#allocation4 + $0x130] sm:$0xff] %v558
    %631 = vst [vmem:[#allocation4 + $0x138] sm:$0xff] %v560
    %632 = vst [vmem:[#allocation4 + $0x140] sm:$0xff] %v451
    %633 = vst [vmem:[#allocation4 + $0x148] sm:$0xff] %v453
    %634 = vst [vmem:[#allocation4 + $0x150] sm:$0xff] %v564
    %635 = vst [vmem:[#allocation4 + $0x158] sm:$0xff] %v566
    %636 = vst [vmem:[#allocation4 + $0x160] sm:$0xff] %v455
    %637 = vst [vmem:[#allocation4 + $0x168] sm:$0xff] %v457
    %638 = vst [vmem:[#allocation4 + $0x170] sm:$0xff] %v568
    %639 = vst [vmem:[#allocation4 + $0x178] sm:$0xff] %v570
    %640 = vst [vmem:[#allocation4 + $0x180] sm:$0xff] %v461
    %641 = vst [vmem:[#allocation4 + $0x188] sm:$0xff] %v463
    %642 = vst [vmem:[#allocation4 + $0x190] sm:$0xff] %v574
    %643 = vst [vmem:[#allocation4 + $0x198] sm:$0xff] %v576
    %644 = vst [vmem:[#allocation4 + $0x1a0] sm:$0xff] %v465
    %645 = vst [vmem:[#allocation4 + $0x1a8] sm:$0xff] %v467
    %646 = vst [vmem:[#allocation4 + $0x1b0] sm:$0xff] %v578
    %647 = vst [vmem:[#allocation4 + $0x1b8] sm:$0xff] %v580
    %648 = vst [vmem:[#allocation4 + $0x1c0] sm:$0xff] %v471
    %649 = vst [vmem:[#allocation4 + $0x1c8] sm:$0xff] %v473
    %650 = vst [vmem:[#allocation4 + $0x1d0] sm:$0xff] %v584
    %651 = vst [vmem:[#allocation4 + $0x1d8] sm:$0xff] %v586
    %652 = vst [vmem:[#allocation4 + $0x1e0] sm:$0xff] %v475
    %653 = vst [vmem:[#allocation4 + $0x1e8] sm:$0xff] %v477
    %654 = vst [vmem:[#allocation4 + $0x1f0] sm:$0xff] %v588
    %655 = vst [vmem:[#allocation4 + $0x1f8] sm:$0xff] %v590
    %v656 = vld [vmem:[#allocation2] sm:$0xff]
    %v657 = vld [vmem:[#allocation2 + $0x8] sm:$0xff]
    %v658 = vld [vmem:[#allocation3] sm:$0xff]
    %v659 = vld [vmem:[#allocation3 + $0x8] sm:$0xff]
    %v660 = vld [vmem:[#allocation4] sm:$0xff]
    %v661 = vld [vmem:[#allocation4 + $0x8] sm:$0xff]
    %v662 = vld [vmem:[#allocation4 + $0x10] sm:$0xff]
    %v663 = vld [vmem:[#allocation4 + $0x18] sm:$0xff]
    %v664 = vld [vmem:[#allocation4 + $0x20] sm:$0xff]
    %v665 = vld [vmem:[#allocation4 + $0x28] sm:$0xff]
    %v666 = vld [vmem:[#allocation4 + $0x30] sm:$0xff]
    %v667 = vld [vmem:[#allocation4 + $0x38] sm:$0xff]
    %v668 = vpack.c.bf16 %v657, %v656
    %v669 = vld [vmem:[#allocation11] sm:$0xff]
    %v670 = vld [vmem:[#allocation11 + $0x8] sm:$0xff]
    %v671 = vld [vmem:[#allocation11 + $0x10] sm:$0xff]
    %v672 = vld [vmem:[#allocation11 + $0x18] sm:$0xff]
    %v673 = vld [vmem:[#allocation11 + $0x20] sm:$0xff]
    %v674 = vld [vmem:[#allocation11 + $0x28] sm:$0xff]
    %v675 = vld [vmem:[#allocation11 + $0x30] sm:$0xff]
    %v676 = vld [vmem:[#allocation11 + $0x38] sm:$0xff]
    %v677 = vld [vmem:[#allocation11 + $0x40] sm:$0xff]
    %v678 = vld [vmem:[#allocation11 + $0x48] sm:$0xff]
    %v679 = vld [vmem:[#allocation11 + $0x50] sm:$0xff]
    %v680 = vld [vmem:[#allocation11 + $0x58] sm:$0xff]
    %v681 = vld [vmem:[#allocation11 + $0x60] sm:$0xff]
    %v682 = vld [vmem:[#allocation11 + $0x68] sm:$0xff]
    %v683 = vld [vmem:[#allocation11 + $0x70] sm:$0xff]
    %v684 = vld [vmem:[#allocation11 + $0x78] sm:$0xff]
    %v685 = vld [vmem:[#allocation11 + $0x80] sm:$0xff]
    %v686 = vld [vmem:[#allocation11 + $0x88] sm:$0xff]
    %v687 = vld [vmem:[#allocation11 + $0x90] sm:$0xff]
    %v688 = vld [vmem:[#allocation11 + $0x98] sm:$0xff]
    %v689 = vld [vmem:[#allocation11 + $0xa0] sm:$0xff]
    %v690 = vld [vmem:[#allocation11 + $0xa8] sm:$0xff]
    %v691 = vld [vmem:[#allocation11 + $0xb0] sm:$0xff]
    %v692 = vld [vmem:[#allocation11 + $0xb8] sm:$0xff]
    %v693 = vld [vmem:[#allocation11 + $0xc0] sm:$0xff]
    %v694 = vld [vmem:[#allocation11 + $0xc8] sm:$0xff]
    %v695 = vld [vmem:[#allocation11 + $0xd0] sm:$0xff]
    %v696 = vld [vmem:[#allocation11 + $0xd8] sm:$0xff]
    %v697 = vld [vmem:[#allocation11 + $0xe0] sm:$0xff]
    %v698 = vld [vmem:[#allocation11 + $0xe8] sm:$0xff]
    %v699 = vld [vmem:[#allocation11 + $0xf0] sm:$0xff]
    %v700 = vld [vmem:[#allocation11 + $0xf8] sm:$0xff]
    %v733 = vunpack.c.l.b16 %v669
    %v734 = vunpack.c.h.b16 %v669
    %v735 = vunpack.c.l.b16 %v670
    %v736 = vunpack.c.h.b16 %v670
    %v737 = vunpack.c.l.b16 %v671
    %v738 = vunpack.c.h.b16 %v671
    %v739 = vunpack.c.l.b16 %v672
    %v740 = vunpack.c.h.b16 %v672
    %v741 = vunpack.c.l.b16 %v673
    %v742 = vunpack.c.h.b16 %v673
    %v743 = vunpack.c.l.b16 %v674
    %v744 = vunpack.c.h.b16 %v674
    %v745 = vunpack.c.l.b16 %v675
    %v746 = vunpack.c.h.b16 %v675
    %v747 = vunpack.c.l.b16 %v676
    %v748 = vunpack.c.h.b16 %v676
    %v749 = vunpack.c.l.b16 %v677
    %v750 = vunpack.c.h.b16 %v677
    %v751 = vunpack.c.l.b16 %v678
    %v752 = vunpack.c.h.b16 %v678
    %v753 = vunpack.c.l.b16 %v679
    %v754 = vunpack.c.h.b16 %v679
    %v755 = vunpack.c.l.b16 %v680
    %v756 = vunpack.c.h.b16 %v680
    %v757 = vunpack.c.l.b16 %v681
    %v758 = vunpack.c.h.b16 %v681
    %v759 = vunpack.c.l.b16 %v682
    %v760 = vunpack.c.h.b16 %v682
    %v761 = vunpack.c.l.b16 %v683
    %v762 = vunpack.c.h.b16 %v683
    %v763 = vunpack.c.l.b16 %v684
    %v764 = vunpack.c.h.b16 %v684
    %v765 = vunpack.c.l.b16 %v685
    %v766 = vunpack.c.h.b16 %v685
    %v767 = vunpack.c.l.b16 %v686
    %v768 = vunpack.c.h.b16 %v686
    %v769 = vunpack.c.l.b16 %v687
    %v770 = vunpack.c.h.b16 %v687
    %v771 = vunpack.c.l.b16 %v688
    %v772 = vunpack.c.h.b16 %v688
    %v773 = vunpack.c.l.b16 %v689
    %v774 = vunpack.c.h.b16 %v689
    %v775 = vunpack.c.l.b16 %v690
    %v776 = vunpack.c.h.b16 %v690
    %v777 = vunpack.c.l.b16 %v691
    %v778 = vunpack.c.h.b16 %v691
    %v779 = vunpack.c.l.b16 %v692
    %v780 = vunpack.c.h.b16 %v692
    %v781 = vunpack.c.l.b16 %v693
    %v782 = vunpack.c.h.b16 %v693
    %v783 = vunpack.c.l.b16 %v694
    %v784 = vunpack.c.h.b16 %v694
    %v785 = vunpack.c.l.b16 %v695
    %v786 = vunpack.c.h.b16 %v695
    %v787 = vunpack.c.l.b16 %v696
    %v788 = vunpack.c.h.b16 %v696
    %v789 = vunpack.c.l.b16 %v697
    %v790 = vunpack.c.h.b16 %v697
    %v791 = vunpack.c.l.b16 %v698
    %v792 = vunpack.c.h.b16 %v698
    %v793 = vunpack.c.l.b16 %v699
    %v794 = vunpack.c.h.b16 %v699
    %v795 = vunpack.c.l.b16 %v700
    %v796 = vunpack.c.h.b16 %v700
    %v797 = vpack.c.b16 %v737, %v733
    %v798 = vpack.c.b16 %v738, %v734
    %v799 = vpack.c.b16 %v739, %v735
    %v800 = vpack.c.b16 %v740, %v736
    %v801 = vpack.c.b16 %v745, %v741
    %v802 = vpack.c.b16 %v746, %v742
    %v803 = vpack.c.b16 %v747, %v743
    %v804 = vpack.c.b16 %v748, %v744
    %v805 = vpack.c.b16 %v753, %v749
    %v806 = vpack.c.b16 %v754, %v750
    %v807 = vpack.c.b16 %v755, %v751
    %v808 = vpack.c.b16 %v756, %v752
    %v809 = vpack.c.b16 %v761, %v757
    %v810 = vpack.c.b16 %v762, %v758
    %v811 = vpack.c.b16 %v763, %v759
    %v812 = vpack.c.b16 %v764, %v760
    %v813 = vpack.c.b16 %v769, %v765
    %v814 = vpack.c.b16 %v770, %v766
    %v815 = vpack.c.b16 %v771, %v767
    %v816 = vpack.c.b16 %v772, %v768
    %v817 = vpack.c.b16 %v777, %v773
    %v818 = vpack.c.b16 %v778, %v774
    %v819 = vpack.c.b16 %v779, %v775
    %v820 = vpack.c.b16 %v780, %v776
    %v821 = vpack.c.b16 %v785, %v781
    %v822 = vpack.c.b16 %v786, %v782
    %v823 = vpack.c.b16 %v787, %v783
    %v824 = vpack.c.b16 %v788, %v784
    %v825 = vpack.c.b16 %v793, %v789
    %v826 = vpack.c.b16 %v794, %v790
    %v827 = vpack.c.b16 %v795, %v791
    %v828 = vpack.c.b16 %v796, %v792
    %861 = vmatprep.subr.bf16.mxu0 %v798
    %862 = vmatpush1.bf16.msra.mxu0 %v797
    %863 = vmatprep.subr.bf16.mxu0 %v802
    %864 = vmatpush1.bf16.msra.mxu0 %v801
    %865 = vmatprep.subr.bf16.mxu0 %v806
    %866 = vmatpush1.bf16.msra.mxu0 %v805
    %867 = vmatprep.subr.bf16.mxu0 %v810
    %868 = vmatpush1.bf16.msra.mxu0 %v809
    %869 = vmatprep.subr.bf16.mxu0 %v814
    %870 = vmatpush1.bf16.msra.mxu0 %v813
    %871 = vmatprep.subr.bf16.mxu0 %v818
    %872 = vmatpush1.bf16.msra.mxu0 %v817
    %873 = vmatprep.subr.bf16.mxu0 %v822
    %874 = vmatpush1.bf16.msra.mxu0 %v821
    %875 = vmatprep.subr.bf16.mxu0 %v826
    %876 = vmatpush1.bf16.msra.mxu0 %v825
    %877 = vmatprep.subr.bf16.mxu0 0
    %878 = vmatpush1.bf16.msra.mxu0 0
    %879 = vmatprep.subr.bf16.mxu0 0
    %880 = vmatpush1.bf16.msra.mxu0 0
    %881 = vmatprep.subr.bf16.mxu0 0
    %882 = vmatpush1.bf16.msra.mxu0 0
    %883 = vmatprep.subr.bf16.mxu0 0
    %884 = vmatpush1.bf16.msra.mxu0 0
    %885 = vmatprep.subr.bf16.mxu0 0
    %886 = vmatpush1.bf16.msra.mxu0 0
    %887 = vmatprep.subr.bf16.mxu0 0
    %888 = vmatpush1.bf16.msra.mxu0 0
    %889 = vmatprep.subr.bf16.mxu0 0
    %890 = vmatpush1.bf16.msra.mxu0 0
    %891 = vmatprep.subr.bf16.mxu0 0
    %892 = vmatpush1.bf16.msra.mxu0 0
    %893 = vmatprep.mubr.bf16.mxu0 0
    %894 = vmatmul.mubr.bf16.gmra.mrb[0].mxu0 %v668
    %v895 = vpop.f32.mrb[0].mxu0
    %v896 = vadd.f32 0.0, %v895
    %v897 = vpop.f32.mrb[0].mxu0
    %v898 = vadd.f32 0.0, %v897
    %v899 = vpop.f32.mrb[0].mxu0
    %v900 = vadd.f32 0.0, %v899
    %v901 = vpop.f32.mrb[0].mxu0
    %v902 = vadd.f32 0.0, %v901
    %903 = vdwg.mxu0
    %904 = vmatprep.subr.bf16.mxu0 %v800
    %905 = vmatpush1.bf16.msra.mxu0 %v799
    %906 = vmatprep.subr.bf16.mxu0 %v804
    %907 = vmatpush1.bf16.msra.mxu0 %v803
    %908 = vmatprep.subr.bf16.mxu0 %v808
    %909 = vmatpush1.bf16.msra.mxu0 %v807
    %910 = vmatprep.subr.bf16.mxu0 %v812
    %911 = vmatpush1.bf16.msra.mxu0 %v811
    %912 = vmatprep.subr.bf16.mxu0 %v816
    %913 = vmatpush1.bf16.msra.mxu0 %v815
    %914 = vmatprep.subr.bf16.mxu0 %v820
    %915 = vmatpush1.bf16.msra.mxu0 %v819
    %916 = vmatprep.subr.bf16.mxu0 %v824
    %917 = vmatpush1.bf16.msra.mxu0 %v823
    %918 = vmatprep.subr.bf16.mxu0 %v828
    %919 = vmatpush1.bf16.msra.mxu0 %v827
    %920 = vmatprep.subr.bf16.mxu0 0
    %921 = vmatpush1.bf16.msra.mxu0 0
    %922 = vmatprep.subr.bf16.mxu0 0
    %923 = vmatpush1.bf16.msra.mxu0 0
    %924 = vmatprep.subr.bf16.mxu0 0
    %925 = vmatpush1.bf16.msra.mxu0 0
    %926 = vmatprep.subr.bf16.mxu0 0
    %927 = vmatpush1.bf16.msra.mxu0 0
    %928 = vmatprep.subr.bf16.mxu0 0
    %929 = vmatpush1.bf16.msra.mxu0 0
    %930 = vmatprep.subr.bf16.mxu0 0
    %931 = vmatpush1.bf16.msra.mxu0 0
    %932 = vmatprep.subr.bf16.mxu0 0
    %933 = vmatpush1.bf16.msra.mxu0 0
    %934 = vmatprep.subr.bf16.mxu0 0
    %935 = vmatpush1.bf16.msra.mxu0 0
    %936 = vmatprep.mubr.bf16.mxu0 0
    %937 = vmatmul.mubr.bf16.gmra.mrb[0].mxu0 %v668
    %v938 = vpop.f32.mrb[0].mxu0
    %v939 = vadd.f32 0.0, %v938
    %v940 = vpop.f32.mrb[0].mxu0
    %v941 = vadd.f32 0.0, %v940
    %v942 = vpop.f32.mrb[0].mxu0
    %v943 = vadd.f32 0.0, %v942
    %v944 = vpop.f32.mrb[0].mxu0
    %v945 = vadd.f32 0.0, %v944
    %946 = vdwg.mxu0
    %v947 = vadd.f32 %v660, %v896
    %v948 = vadd.f32 %v661, %v898
    %v949 = vadd.f32 %v662, %v939
    %v950 = vadd.f32 %v663, %v941
    %v951 = vadd.f32 %v664, %v900
    %v952 = vadd.f32 %v665, %v902
    %v953 = vadd.f32 %v666, %v943
    %v954 = vadd.f32 %v667, %v945
    %v955 = vxor.u32 %v947, 2147483648
    %v956 = vxor.u32 %v951, 2147483648
    %v957 = vmul.f32 %v955, 1.442695
    %v958 = vpow.pop %v957
    %v959 = vmul.f32 %v956, 1.442695
    %v960 = vpow.pop %v959
    %v961 = vadd.f32 %v958, 1.0
    %v962 = vadd.f32 %v960, 1.0
    %v963 = vrcp.pop %v961
    %v964 = vmul.f32 1.0, %v963
    %v965 = vrcp.pop %v962
    %v966 = vmul.f32 1.0, %v965
    %v967 = vxor.u32 %v948, 2147483648
    %v968 = vxor.u32 %v952, 2147483648
    %v969 = vmul.f32 %v967, 1.442695
    %v970 = vpow.pop %v969
    %v971 = vmul.f32 %v968, 1.442695
    %v972 = vpow.pop %v971
    %v973 = vadd.f32 %v970, 1.0
    %v974 = vadd.f32 %v972, 1.0
    %v975 = vrcp.pop %v973
    %v976 = vmul.f32 1.0, %v975
    %v977 = vrcp.pop %v974
    %v978 = vmul.f32 1.0, %v977
    %v979 = vtanh.pop %v949
    %v980 = vtanh.pop %v953
    %v981 = vxor.u32 %v950, 2147483648
    %v982 = vxor.u32 %v954, 2147483648
    %v983 = vmul.f32 %v981, 1.442695
    %v984 = vpow.pop %v983
    %v985 = vmul.f32 %v982, 1.442695
    %v986 = vpow.pop %v985
    %v987 = vadd.f32 %v984, 1.0
    %v988 = vadd.f32 %v986, 1.0
    %v989 = vrcp.pop %v987
    %v990 = vmul.f32 1.0, %v989
    %v991 = vrcp.pop %v988
    %v992 = vmul.f32 1.0, %v991
    %v993 = vmul.f32 %v976, %v658
    %v994 = vmul.f32 %v978, %v659
    %v995 = vmul.f32 %v964, %v979
    %v996 = vmul.f32 %v966, %v980
    %v997 = vadd.f32 %v993, %v995
    %v998 = vadd.f32 %v994, %v996
    %v999 = vtanh.pop %v997
    %v1000 = vtanh.pop %v998
    %v1001 = vmul.f32 %v990, %v999
    %v1002 = vmul.f32 %v992, %v1000
    %1003 = vst [vmem:[#allocation5] sm:$0xff] %v1001
    %1004 = vst [vmem:[#allocation5 + $0x8] sm:$0xff] %v1002
    %s1005 = scalar_lea.vmem [#allocation4], 64
    %v1006 = vld [vmem:[%s1005] sm:$0xff]
    %v1007 = vld [vmem:[%s1005 + $0x8] sm:$0xff]
    %v1008 = vld [vmem:[%s1005 + $0x10] sm:$0xff]
    %v1009 = vld [vmem:[%s1005 + $0x18] sm:$0xff]
    %v1010 = vld [vmem:[%s1005 + $0x20] sm:$0xff]
    %v1011 = vld [vmem:[%s1005 + $0x28] sm:$0xff]
    %v1012 = vld [vmem:[%s1005 + $0x30] sm:$0xff]
    %v1013 = vld [vmem:[%s1005 + $0x38] sm:$0xff]
    %v1014 = vpack.c.bf16 %v1002, %v1001
    %v1015 = vld [vmem:[#allocation11] sm:$0xff]
    %v1016 = vld [vmem:[#allocation11 + $0x8] sm:$0xff]
    %v1017 = vld [vmem:[#allocation11 + $0x10] sm:$0xff]
    %v1018 = vld [vmem:[#allocation11 + $0x18] sm:$0xff]
    %v1019 = vld [vmem:[#allocation11 + $0x20] sm:$0xff]
    %v1020 = vld [vmem:[#allocation11 + $0x28] sm:$0xff]
    %v1021 = vld [vmem:[#allocation11 + $0x30] sm:$0xff]
    %v1022 = vld [vmem:[#allocation11 + $0x38] sm:$0xff]
    %v1023 = vld [vmem:[#allocation11 + $0x40] sm:$0xff]
    %v1024 = vld [vmem:[#allocation11 + $0x48] sm:$0xff]
    %v1025 = vld [vmem:[#allocation11 + $0x50] sm:$0xff]
    %v1026 = vld [vmem:[#allocation11 + $0x58] sm:$0xff]
    %v1027 = vld [vmem:[#allocation11 + $0x60] sm:$0xff]
    %v1028 = vld [vmem:[#allocation11 + $0x68] sm:$0xff]
    %v1029 = vld [vmem:[#allocation11 + $0x70] sm:$0xff]
    %v1030 = vld [vmem:[#allocation11 + $0x78] sm:$0xff]
    %v1031 = vld [vmem:[#allocation11 + $0x80] sm:$0xff]
    %v1032 = vld [vmem:[#allocation11 + $0x88] sm:$0xff]
    %v1033 = vld [vmem:[#allocation11 + $0x90] sm:$0xff]
    %v1034 = vld [vmem:[#allocation11 + $0x98] sm:$0xff]
    %v1035 = vld [vmem:[#allocation11 + $0xa0] sm:$0xff]
    %v1036 = vld [vmem:[#allocation11 + $0xa8] sm:$0xff]
    %v1037 = vld [vmem:[#allocation11 + $0xb0] sm:$0xff]
    %v1038 = vld [vmem:[#allocation11 + $0xb8] sm:$0xff]
    %v1039 = vld [vmem:[#allocation11 + $0xc0] sm:$0xff]
    %v1040 = vld [vmem:[#allocation11 + $0xc8] sm:$0xff]
    %v1041 = vld [vmem:[#allocation11 + $0xd0] sm:$0xff]
    %v1042 = vld [vmem:[#allocation11 + $0xd8] sm:$0xff]
    %v1043 = vld [vmem:[#allocation11 + $0xe0] sm:$0xff]
    %v1044 = vld [vmem:[#allocation11 + $0xe8] sm:$0xff]
    %v1045 = vld [vmem:[#allocation11 + $0xf0] sm:$0xff]
    %v1046 = vld [vmem:[#allocation11 + $0xf8] sm:$0xff]
    %v1079 = vunpack.c.l.b16 %v1015
    %v1080 = vunpack.c.h.b16 %v1015
    %v1081 = vunpack.c.l.b16 %v1016
    %v1082 = vunpack.c.h.b16 %v1016
    %v1083 = vunpack.c.l.b16 %v1017
    %v1084 = vunpack.c.h.b16 %v1017
    %v1085 = vunpack.c.l.b16 %v1018
    %v1086 = vunpack.c.h.b16 %v1018
    %v1087 = vunpack.c.l.b16 %v1019
    %v1088 = vunpack.c.h.b16 %v1019
    %v1089 = vunpack.c.l.b16 %v1020
    %v1090 = vunpack.c.h.b16 %v1020
    %v1091 = vunpack.c.l.b16 %v1021
    %v1092 = vunpack.c.h.b16 %v1021
    %v1093 = vunpack.c.l.b16 %v1022
    %v1094 = vunpack.c.h.b16 %v1022
    %v1095 = vunpack.c.l.b16 %v1023
    %v1096 = vunpack.c.h.b16 %v1023
    %v1097 = vunpack.c.l.b16 %v1024
    %v1098 = vunpack.c.h.b16 %v1024
    %v1099 = vunpack.c.l.b16 %v1025
    %v1100 = vunpack.c.h.b16 %v1025
    %v1101 = vunpack.c.l.b16 %v1026
    %v1102 = vunpack.c.h.b16 %v1026
    %v1103 = vunpack.c.l.b16 %v1027
    %v1104 = vunpack.c.h.b16 %v1027
    %v1105 = vunpack.c.l.b16 %v1028
    %v1106 = vunpack.c.h.b16 %v1028
    %v1107 = vunpack.c.l.b16 %v1029
    %v1108 = vunpack.c.h.b16 %v1029
    %v1109 = vunpack.c.l.b16 %v1030
    %v1110 = vunpack.c.h.b16 %v1030
    %v1111 = vunpack.c.l.b16 %v1031
    %v1112 = vunpack.c.h.b16 %v1031
    %v1113 = vunpack.c.l.b16 %v1032
    %v1114 = vunpack.c.h.b16 %v1032
    %v1115 = vunpack.c.l.b16 %v1033
    %v1116 = vunpack.c.h.b16 %v1033
    %v1117 = vunpack.c.l.b16 %v1034
    %v1118 = vunpack.c.h.b16 %v1034
    %v1119 = vunpack.c.l.b16 %v1035
    %v1120 = vunpack.c.h.b16 %v1035
    %v1121 = vunpack.c.l.b16 %v1036
    %v1122 = vunpack.c.h.b16 %v1036
    %v1123 = vunpack.c.l.b16 %v1037
    %v1124 = vunpack.c.h.b16 %v1037
    %v1125 = vunpack.c.l.b16 %v1038
    %v1126 = vunpack.c.h.b16 %v1038
    %v1127 = vunpack.c.l.b16 %v1039
    %v1128 = vunpack.c.h.b16 %v1039
    %v1129 = vunpack.c.l.b16 %v1040
    %v1130 = vunpack.c.h.b16 %v1040
    %v1131 = vunpack.c.l.b16 %v1041
    %v1132 = vunpack.c.h.b16 %v1041
    %v1133 = vunpack.c.l.b16 %v1042
    %v1134 = vunpack.c.h.b16 %v1042
    %v1135 = vunpack.c.l.b16 %v1043
    %v1136 = vunpack.c.h.b16 %v1043
    %v1137 = vunpack.c.l.b16 %v1044
    %v1138 = vunpack.c.h.b16 %v1044
    %v1139 = vunpack.c.l.b16 %v1045
    %v1140 = vunpack.c.h.b16 %v1045
    %v1141 = vunpack.c.l.b16 %v1046
    %v1142 = vunpack.c.h.b16 %v1046
    %v1143 = vpack.c.b16 %v1083, %v1079
    %v1144 = vpack.c.b16 %v1084, %v1080
    %v1145 = vpack.c.b16 %v1085, %v1081
    %v1146 = vpack.c.b16 %v1086, %v1082
    %v1147 = vpack.c.b16 %v1091, %v1087
    %v1148 = vpack.c.b16 %v1092, %v1088
    %v1149 = vpack.c.b16 %v1093, %v1089
    %v1150 = vpack.c.b16 %v1094, %v1090
    %v1151 = vpack.c.b16 %v1099, %v1095
    %v1152 = vpack.c.b16 %v1100, %v1096
    %v1153 = vpack.c.b16 %v1101, %v1097
    %v1154 = vpack.c.b16 %v1102, %v1098
    %v1155 = vpack.c.b16 %v1107, %v1103
    %v1156 = vpack.c.b16 %v1108, %v1104
    %v1157 = vpack.c.b16 %v1109, %v1105
    %v1158 = vpack.c.b16 %v1110, %v1106
    %v1159 = vpack.c.b16 %v1115, %v1111
    %v1160 = vpack.c.b16 %v1116, %v1112
    %v1161 = vpack.c.b16 %v1117, %v1113
    %v1162 = vpack.c.b16 %v1118, %v1114
    %v1163 = vpack.c.b16 %v1123, %v1119
    %v1164 = vpack.c.b16 %v1124, %v1120
    %v1165 = vpack.c.b16 %v1125, %v1121
    %v1166 = vpack.c.b16 %v1126, %v1122
    %v1167 = vpack.c.b16 %v1131, %v1127
    %v1168 = vpack.c.b16 %v1132, %v1128
    %v1169 = vpack.c.b16 %v1133, %v1129
    %v1170 = vpack.c.b16 %v1134, %v1130
    %v1171 = vpack.c.b16 %v1139, %v1135
    %v1172 = vpack.c.b16 %v1140, %v1136
    %v1173 = vpack.c.b16 %v1141, %v1137
    %v1174 = vpack.c.b16 %v1142, %v1138
    %1207 = vmatprep.subr.bf16.mxu0 %v1144
    %1208 = vmatpush1.bf16.msra.mxu0 %v1143
    %1209 = vmatprep.subr.bf16.mxu0 %v1148
    %1210 = vmatpush1.bf16.msra.mxu0 %v1147
    %1211 = vmatprep.subr.bf16.mxu0 %v1152
    %1212 = vmatpush1.bf16.msra.mxu0 %v1151
    %1213 = vmatprep.subr.bf16.mxu0 %v1156
    %1214 = vmatpush1.bf16.msra.mxu0 %v1155
    %1215 = vmatprep.subr.bf16.mxu0 %v1160
    %1216 = vmatpush1.bf16.msra.mxu0 %v1159
    %1217 = vmatprep.subr.bf16.mxu0 %v1164
    %1218 = vmatpush1.bf16.msra.mxu0 %v1163
    %1219 = vmatprep.subr.bf16.mxu0 %v1168
    %1220 = vmatpush1.bf16.msra.mxu0 %v1167
    %1221 = vmatprep.subr.bf16.mxu0 %v1172
    %1222 = vmatpush1.bf16.msra.mxu0 %v1171
    %1223 = vmatprep.subr.bf16.mxu0 0
    %1224 = vmatpush1.bf16.msra.mxu0 0
    %1225 = vmatprep.subr.bf16.mxu0 0
    %1226 = vmatpush1.bf16.msra.mxu0 0
    %1227 = vmatprep.subr.bf16.mxu0 0
    %1228 = vmatpush1.bf16.msra.mxu0 0
    %1229 = vmatprep.subr.bf16.mxu0 0
    %1230 = vmatpush1.bf16.msra.mxu0 0
    %1231 = vmatprep.subr.bf16.mxu0 0
    %1232 = vmatpush1.bf16.msra.mxu0 0
    %1233 = vmatprep.subr.bf16.mxu0 0
    %1234 = vmatpush1.bf16.msra.mxu0 0
    %1235 = vmatprep.subr.bf16.mxu0 0
    %1236 = vmatpush1.bf16.msra.mxu0 0
    %1237 = vmatprep.subr.bf16.mxu0 0
    %1238 = vmatpush1.bf16.msra.mxu0 0
    %1239 = vmatprep.mubr.bf16.mxu0 0
    %1240 = vmatmul.mubr.bf16.gmra.mrb[0].mxu0 %v1014
    %v1241 = vpop.f32.mrb[0].mxu0
    %v1242 = vadd.f32 0.0, %v1241
    %v1243 = vpop.f32.mrb[0].mxu0
    %v1244 = vadd.f32 0.0, %v1243
    %v1245 = vpop.f32.mrb[0].mxu0
    %v1246 = vadd.f32 0.0, %v1245
    %v1247 = vpop.f32.mrb[0].mxu0
    %v1248 = vadd.f32 0.0, %v1247
    %1249 = vdwg.mxu0
    %1250 = vmatprep.subr.bf16.mxu0 %v1146
    %1251 = vmatpush1.bf16.msra.mxu0 %v1145
    %1252 = vmatprep.subr.bf16.mxu0 %v1150
    %1253 = vmatpush1.bf16.msra.mxu0 %v1149
    %1254 = vmatprep.subr.bf16.mxu0 %v1154
    %1255 = vmatpush1.bf16.msra.mxu0 %v1153
    %1256 = vmatprep.subr.bf16.mxu0 %v1158
    %1257 = vmatpush1.bf16.msra.mxu0 %v1157
    %1258 = vmatprep.subr.bf16.mxu0 %v1162
    %1259 = vmatpush1.bf16.msra.mxu0 %v1161
    %1260 = vmatprep.subr.bf16.mxu0 %v1166
    %1261 = vmatpush1.bf16.msra.mxu0 %v1165
    %1262 = vmatprep.subr.bf16.mxu0 %v1170
    %1263 = vmatpush1.bf16.msra.mxu0 %v1169
    %1264 = vmatprep.subr.bf16.mxu0 %v1174
    %1265 = vmatpush1.bf16.msra.mxu0 %v1173
    %1266 = vmatprep.subr.bf16.mxu0 0
    %1267 = vmatpush1.bf16.msra.mxu0 0
    %1268 = vmatprep.subr.bf16.mxu0 0
    %1269 = vmatpush1.bf16.msra.mxu0 0
    %1270 = vmatprep.subr.bf16.mxu0 0
    %1271 = vmatpush1.bf16.msra.mxu0 0
    %1272 = vmatprep.subr.bf16.mxu0 0
    %1273 = vmatpush1.bf16.msra.mxu0 0
    %1274 = vmatprep.subr.bf16.mxu0 0
    %1275 = vmatpush1.bf16.msra.mxu0 0
    %1276 = vmatprep.subr.bf16.mxu0 0
    %1277 = vmatpush1.bf16.msra.mxu0 0
    %1278 = vmatprep.subr.bf16.mxu0 0
    %1279 = vmatpush1.bf16.msra.mxu0 0
    %1280 = vmatprep.subr.bf16.mxu0 0
    %1281 = vmatpush1.bf16.msra.mxu0 0
    %1282 = vmatprep.mubr.bf16.mxu0 0
    %1283 = vmatmul.mubr.bf16.gmra.mrb[0].mxu0 %v1014
    %v1284 = vpop.f32.mrb[0].mxu0
    %v1285 = vadd.f32 0.0, %v1284
    %v1286 = vpop.f32.mrb[0].mxu0
    %v1287 = vadd.f32 0.0, %v1286
    %v1288 = vpop.f32.mrb[0].mxu0
    %v1289 = vadd.f32 0.0, %v1288
    %v1290 = vpop.f32.mrb[0].mxu0
    %v1291 = vadd.f32 0.0, %v1290
    %1292 = vdwg.mxu0
    %v1293 = vadd.f32 %v1006, %v1242
    %v1294 = vadd.f32 %v1007, %v1244
    %v1295 = vadd.f32 %v1008, %v1285
    %v1296 = vadd.f32 %v1009, %v1287
    %v1297 = vadd.f32 %v1010, %v1246
    %v1298 = vadd.f32 %v1011, %v1248
    %v1299 = vadd.f32 %v1012, %v1289
    %v1300 = vadd.f32 %v1013, %v1291
    %v1301 = vxor.u32 %v1293, 2147483648
    %v1302 = vxor.u32 %v1297, 2147483648
    %v1303 = vmul.f32 %v1301, 1.442695
    %v1304 = vpow.pop %v1303
    %v1305 = vmul.f32 %v1302, 1.442695
    %v1306 = vpow.pop %v1305
    %v1307 = vadd.f32 %v1304, 1.0
    %v1308 = vadd.f32 %v1306, 1.0
    %v1309 = vrcp.pop %v1307
    %v1310 = vmul.f32 1.0, %v1309
    %v1311 = vrcp.pop %v1308
    %v1312 = vmul.f32 1.0, %v1311
    %v1313 = vxor.u32 %v1294, 2147483648
    %v1314 = vxor.u32 %v1298, 2147483648
    %v1315 = vmul.f32 %v1313, 1.442695
    %v1316 = vpow.pop %v1315
    %v1317 = vmul.f32 %v1314, 1.442695
    %v1318 = vpow.pop %v1317
    %v1319 = vadd.f32 %v1316, 1.0
    %v1320 = vadd.f32 %v1318, 1.0
    %v1321 = vrcp.pop %v1319
    %v1322 = vmul.f32 1.0, %v1321
    %v1323 = vrcp.pop %v1320
    %v1324 = vmul.f32 1.0, %v1323
    %v1325 = vtanh.pop %v1295
    %v1326 = vtanh.pop %v1299
    %v1327 = vxor.u32 %v1296, 2147483648
    %v1328 = vxor.u32 %v1300, 2147483648
    %v1329 = vmul.f32 %v1327, 1.442695
    %v1330 = vpow.pop %v1329
    %v1331 = vmul.f32 %v1328, 1.442695
    %v1332 = vpow.pop %v1331
    %v1333 = vadd.f32 %v1330, 1.0
    %v1334 = vadd.f32 %v1332, 1.0
    %v1335 = vrcp.pop %v1333
    %v1336 = vmul.f32 1.0, %v1335
    %v1337 = vrcp.pop %v1334
    %v1338 = vmul.f32 1.0, %v1337
    %v1339 = vmul.f32 %v1322, %v997
    %v1340 = vmul.f32 %v1324, %v998
    %v1341 = vmul.f32 %v1310, %v1325
    %v1342 = vmul.f32 %v1312, %v1326
    %v1343 = vadd.f32 %v1339, %v1341
    %v1344 = vadd.f32 %v1340, %v1342
    %v1345 = vtanh.pop %v1343
    %v1346 = vtanh.pop %v1344
    %v1347 = vmul.f32 %v1336, %v1345
    %v1348 = vmul.f32 %v1338, %v1346
    %s1349 = scalar_lea.vmem [#allocation5], 16
    %1350 = vst [vmem:[%s1349] sm:$0xff] %v1347
    %1351 = vst [vmem:[%s1349 + $0x8] sm:$0xff] %v1348
    %s1352 = scalar_lea.vmem [#allocation4], 128
    %v1353 = vld [vmem:[%s1352] sm:$0xff]
    %v1354 = vld [vmem:[%s1352 + $0x8] sm:$0xff]
    %v1355 = vld [vmem:[%s1352 + $0x10] sm:$0xff]
    %v1356 = vld [vmem:[%s1352 + $0x18] sm:$0xff]
    %v1357 = vld [vmem:[%s1352 + $0x20] sm:$0xff]
    %v1358 = vld [vmem:[%s1352 + $0x28] sm:$0xff]
    %v1359 = vld [vmem:[%s1352 + $0x30] sm:$0xff]
    %v1360 = vld [vmem:[%s1352 + $0x38] sm:$0xff]
    %v1361 = vpack.c.bf16 %v1348, %v1347
    %v1362 = vld [vmem:[#allocation11] sm:$0xff]
    %v1363 = vld [vmem:[#allocation11 + $0x8] sm:$0xff]
    %v1364 = vld [vmem:[#allocation11 + $0x10] sm:$0xff]
    %v1365 = vld [vmem:[#allocation11 + $0x18] sm:$0xff]
    %v1366 = vld [vmem:[#allocation11 + $0x20] sm:$0xff]
    %v1367 = vld [vmem:[#allocation11 + $0x28] sm:$0xff]
    %v1368 = vld [vmem:[#allocation11 + $0x30] sm:$0xff]
    %v1369 = vld [vmem:[#allocation11 + $0x38] sm:$0xff]
    %v1370 = vld [vmem:[#allocation11 + $0x40] sm:$0xff]
    %v1371 = vld [vmem:[#allocation11 + $0x48] sm:$0xff]
    %v1372 = vld [vmem:[#allocation11 + $0x50] sm:$0xff]
    %v1373 = vld [vmem:[#allocation11 + $0x58] sm:$0xff]
    %v1374 = vld [vmem:[#allocation11 + $0x60] sm:$0xff]
    %v1375 = vld [vmem:[#allocation11 + $0x68] sm:$0xff]
    %v1376 = vld [vmem:[#allocation11 + $0x70] sm:$0xff]
    %v1377 = vld [vmem:[#allocation11 + $0x78] sm:$0xff]
    %v1378 = vld [vmem:[#allocation11 + $0x80] sm:$0xff]
    %v1379 = vld [vmem:[#allocation11 + $0x88] sm:$0xff]
    %v1380 = vld [vmem:[#allocation11 + $0x90] sm:$0xff]
    %v1381 = vld [vmem:[#allocation11 + $0x98] sm:$0xff]
    %v1382 = vld [vmem:[#allocation11 + $0xa0] sm:$0xff]
    %v1383 = vld [vmem:[#allocation11 + $0xa8] sm:$0xff]
    %v1384 = vld [vmem:[#allocation11 + $0xb0] sm:$0xff]
    %v1385 = vld [vmem:[#allocation11 + $0xb8] sm:$0xff]
    %v1386 = vld [vmem:[#allocation11 + $0xc0] sm:$0xff]
    %v1387 = vld [vmem:[#allocation11 + $0xc8] sm:$0xff]
    %v1388 = vld [vmem:[#allocation11 + $0xd0] sm:$0xff]
    %v1389 = vld [vmem:[#allocation11 + $0xd8] sm:$0xff]
    %v1390 = vld [vmem:[#allocation11 + $0xe0] sm:$0xff]
    %v1391 = vld [vmem:[#allocation11 + $0xe8] sm:$0xff]
    %v1392 = vld [vmem:[#allocation11 + $0xf0] sm:$0xff]
    %v1393 = vld [vmem:[#allocation11 + $0xf8] sm:$0xff]
    %v1426 = vunpack.c.l.b16 %v1362
    %v1427 = vunpack.c.h.b16 %v1362
    %v1428 = vunpack.c.l.b16 %v1363
    %v1429 = vunpack.c.h.b16 %v1363
    %v1430 = vunpack.c.l.b16 %v1364
    %v1431 = vunpack.c.h.b16 %v1364
    %v1432 = vunpack.c.l.b16 %v1365
    %v1433 = vunpack.c.h.b16 %v1365
    %v1434 = vunpack.c.l.b16 %v1366
    %v1435 = vunpack.c.h.b16 %v1366
    %v1436 = vunpack.c.l.b16 %v1367
    %v1437 = vunpack.c.h.b16 %v1367
    %v1438 = vunpack.c.l.b16 %v1368
    %v1439 = vunpack.c.h.b16 %v1368
    %v1440 = vunpack.c.l.b16 %v1369
    %v1441 = vunpack.c.h.b16 %v1369
    %v1442 = vunpack.c.l.b16 %v1370
    %v1443 = vunpack.c.h.b16 %v1370
    %v1444 = vunpack.c.l.b16 %v1371
    %v1445 = vunpack.c.h.b16 %v1371
    %v1446 = vunpack.c.l.b16 %v1372
    %v1447 = vunpack.c.h.b16 %v1372
    %v1448 = vunpack.c.l.b16 %v1373
    %v1449 = vunpack.c.h.b16 %v1373
    %v1450 = vunpack.c.l.b16 %v1374
    %v1451 = vunpack.c.h.b16 %v1374
    %v1452 = vunpack.c.l.b16 %v1375
    %v1453 = vunpack.c.h.b16 %v1375
    %v1454 = vunpack.c.l.b16 %v1376
    %v1455 = vunpack.c.h.b16 %v1376
    %v1456 = vunpack.c.l.b16 %v1377
    %v1457 = vunpack.c.h.b16 %v1377
    %v1458 = vunpack.c.l.b16 %v1378
    %v1459 = vunpack.c.h.b16 %v1378
    %v1460 = vunpack.c.l.b16 %v1379
    %v1461 = vunpack.c.h.b16 %v1379
    %v1462 = vunpack.c.l.b16 %v1380
    %v1463 = vunpack.c.h.b16 %v1380
    %v1464 = vunpack.c.l.b16 %v1381
    %v1465 = vunpack.c.h.b16 %v1381
    %v1466 = vunpack.c.l.b16 %v1382
    %v1467 = vunpack.c.h.b16 %v1382
    %v1468 = vunpack.c.l.b16 %v1383
    %v1469 = vunpack.c.h.b16 %v1383
    %v1470 = vunpack.c.l.b16 %v1384
    %v1471 = vunpack.c.h.b16 %v1384
    %v1472 = vunpack.c.l.b16 %v1385
    %v1473 = vunpack.c.h.b16 %v1385
    %v1474 = vunpack.c.l.b16 %v1386
    %v1475 = vunpack.c.h.b16 %v1386
    %v1476 = vunpack.c.l.b16 %v1387
    %v1477 = vunpack.c.h.b16 %v1387
    %v1478 = vunpack.c.l.b16 %v1388
    %v1479 = vunpack.c.h.b16 %v1388
    %v1480 = vunpack.c.l.b16 %v1389
    %v1481 = vunpack.c.h.b16 %v1389
    %v1482 = vunpack.c.l.b16 %v1390
    %v1483 = vunpack.c.h.b16 %v1390
    %v1484 = vunpack.c.l.b16 %v1391
    %v1485 = vunpack.c.h.b16 %v1391
    %v1486 = vunpack.c.l.b16 %v1392
    %v1487 = vunpack.c.h.b16 %v1392
    %v1488 = vunpack.c.l.b16 %v1393
    %v1489 = vunpack.c.h.b16 %v1393
    %v1490 = vpack.c.b16 %v1430, %v1426
    %v1491 = vpack.c.b16 %v1431, %v1427
    %v1492 = vpack.c.b16 %v1432, %v1428
    %v1493 = vpack.c.b16 %v1433, %v1429
    %v1494 = vpack.c.b16 %v1438, %v1434
    %v1495 = vpack.c.b16 %v1439, %v1435
    %v1496 = vpack.c.b16 %v1440, %v1436
    %v1497 = vpack.c.b16 %v1441, %v1437
    %v1498 = vpack.c.b16 %v1446, %v1442
    %v1499 = vpack.c.b16 %v1447, %v1443
    %v1500 = vpack.c.b16 %v1448, %v1444
    %v1501 = vpack.c.b16 %v1449, %v1445
    %v1502 = vpack.c.b16 %v1454, %v1450
    %v1503 = vpack.c.b16 %v1455, %v1451
    %v1504 = vpack.c.b16 %v1456, %v1452
    %v1505 = vpack.c.b16 %v1457, %v1453
    %v1506 = vpack.c.b16 %v1462, %v1458
    %v1507 = vpack.c.b16 %v1463, %v1459
    %v1508 = vpack.c.b16 %v1464, %v1460
    %v1509 = vpack.c.b16 %v1465, %v1461
    %v1510 = vpack.c.b16 %v1470, %v1466
    %v1511 = vpack.c.b16 %v1471, %v1467
    %v1512 = vpack.c.b16 %v1472, %v1468
    %v1513 = vpack.c.b16 %v1473, %v1469
    %v1514 = vpack.c.b16 %v1478, %v1474
    %v1515 = vpack.c.b16 %v1479, %v1475
    %v1516 = vpack.c.b16 %v1480, %v1476
    %v1517 = vpack.c.b16 %v1481, %v1477
    %v1518 = vpack.c.b16 %v1486, %v1482
    %v1519 = vpack.c.b16 %v1487, %v1483
    %v1520 = vpack.c.b16 %v1488, %v1484
    %v1521 = vpack.c.b16 %v1489, %v1485
    %1554 = vmatprep.subr.bf16.mxu0 %v1491
    %1555 = vmatpush1.bf16.msra.mxu0 %v1490
    %1556 = vmatprep.subr.bf16.mxu0 %v1495
    %1557 = vmatpush1.bf16.msra.mxu0 %v1494
    %1558 = vmatprep.subr.bf16.mxu0 %v1499
    %1559 = vmatpush1.bf16.msra.mxu0 %v1498
    %1560 = vmatprep.subr.bf16.mxu0 %v1503
    %1561 = vmatpush1.bf16.msra.mxu0 %v1502
    %1562 = vmatprep.subr.bf16.mxu0 %v1507
    %1563 = vmatpush1.bf16.msra.mxu0 %v1506
    %1564 = vmatprep.subr.bf16.mxu0 %v1511
    %1565 = vmatpush1.bf16.msra.mxu0 %v1510
    %1566 = vmatprep.subr.bf16.mxu0 %v1515
    %1567 = vmatpush1.bf16.msra.mxu0 %v1514
    %1568 = vmatprep.subr.bf16.mxu0 %v1519
    %1569 = vmatpush1.bf16.msra.mxu0 %v1518
    %1570 = vmatprep.subr.bf16.mxu0 0
    %1571 = vmatpush1.bf16.msra.mxu0 0
    %1572 = vmatprep.subr.bf16.mxu0 0
    %1573 = vmatpush1.bf16.msra.mxu0 0
    %1574 = vmatprep.subr.bf16.mxu0 0
    %1575 = vmatpush1.bf16.msra.mxu0 0
    %1576 = vmatprep.subr.bf16.mxu0 0
    %1577 = vmatpush1.bf16.msra.mxu0 0
    %1578 = vmatprep.subr.bf16.mxu0 0
    %1579 = vmatpush1.bf16.msra.mxu0 0
    %1580 = vmatprep.subr.bf16.mxu0 0
    %1581 = vmatpush1.bf16.msra.mxu0 0
    %1582 = vmatprep.subr.bf16.mxu0 0
    %1583 = vmatpush1.bf16.msra.mxu0 0
    %1584 = vmatprep.subr.bf16.mxu0 0
    %1585 = vmatpush1.bf16.msra.mxu0 0
    %1586 = vmatprep.mubr.bf16.mxu0 0
    %1587 = vmatmul.mubr.bf16.gmra.mrb[0].mxu0 %v1361
    %v1588 = vpop.f32.mrb[0].mxu0
    %v1589 = vadd.f32 0.0, %v1588
    %v1590 = vpop.f32.mrb[0].mxu0
    %v1591 = vadd.f32 0.0, %v1590
    %v1592 = vpop.f32.mrb[0].mxu0
    %v1593 = vadd.f32 0.0, %v1592
    %v1594 = vpop.f32.mrb[0].mxu0
    %v1595 = vadd.f32 0.0, %v1594
    %1596 = vdwg.mxu0
    %1597 = vmatprep.subr.bf16.mxu0 %v1493
    %1598 = vmatpush1.bf16.msra.mxu0 %v1492
    %1599 = vmatprep.subr.bf16.mxu0 %v1497
    %1600 = vmatpush1.bf16.msra.mxu0 %v1496
    %1601 = vmatprep.subr.bf16.mxu0 %v1501
    %1602 = vmatpush1.bf16.msra.mxu0 %v1500
    %1603 = vmatprep.subr.bf16.mxu0 %v1505
    %1604 = vmatpush1.bf16.msra.mxu0 %v1504
    %1605 = vmatprep.subr.bf16.mxu0 %v1509
    %1606 = vmatpush1.bf16.msra.mxu0 %v1508
    %1607 = vmatprep.subr.bf16.mxu0 %v1513
    %1608 = vmatpush1.bf16.msra.mxu0 %v1512
    %1609 = vmatprep.subr.bf16.mxu0 %v1517
    %1610 = vmatpush1.bf16.msra.mxu0 %v1516
    %1611 = vmatprep.subr.bf16.mxu0 %v1521
    %1612 = vmatpush1.bf16.msra.mxu0 %v1520
    %1613 = vmatprep.subr.bf16.mxu0 0
    %1614 = vmatpush1.bf16.msra.mxu0 0
    %1615 = vmatprep.subr.bf16.mxu0 0
    %1616 = vmatpush1.bf16.msra.mxu0 0
    %1617 = vmatprep.subr.bf16.mxu0 0
    %1618 = vmatpush1.bf16.msra.mxu0 0
    %1619 = vmatprep.subr.bf16.mxu0 0
    %1620 = vmatpush1.bf16.msra.mxu0 0
    %1621 = vmatprep.subr.bf16.mxu0 0
    %1622 = vmatpush1.bf16.msra.mxu0 0
    %1623 = vmatprep.subr.bf16.mxu0 0
    %1624 = vmatpush1.bf16.msra.mxu0 0
    %1625 = vmatprep.subr.bf16.mxu0 0
    %1626 = vmatpush1.bf16.msra.mxu0 0
    %1627 = vmatprep.subr.bf16.mxu0 0
    %1628 = vmatpush1.bf16.msra.mxu0 0
    %1629 = vmatprep.mubr.bf16.mxu0 0
    %1630 = vmatmul.mubr.bf16.gmra.mrb[0].mxu0 %v1361
    %v1631 = vpop.f32.mrb[0].mxu0
    %v1632 = vadd.f32 0.0, %v1631
    %v1633 = vpop.f32.mrb[0].mxu0
    %v1634 = vadd.f32 0.0, %v1633
    %v1635 = vpop.f32.mrb[0].mxu0
    %v1636 = vadd.f32 0.0, %v1635
    %v1637 = vpop.f32.mrb[0].mxu0
    %v1638 = vadd.f32 0.0, %v1637
    %1639 = vdwg.mxu0
    %v1640 = vadd.f32 %v1353, %v1589
    %v1641 = vadd.f32 %v1354, %v1591
    %v1642 = vadd.f32 %v1355, %v1632
    %v1643 = vadd.f32 %v1356, %v1634
    %v1644 = vadd.f32 %v1357, %v1593
    %v1645 = vadd.f32 %v1358, %v1595
    %v1646 = vadd.f32 %v1359, %v1636
    %v1647 = vadd.f32 %v1360, %v1638
    %v1648 = vxor.u32 %v1640, 2147483648
    %v1649 = vxor.u32 %v1644, 2147483648
    %v1650 = vmul.f32 %v1648, 1.442695
    %v1651 = vpow.pop %v1650
    %v1652 = vmul.f32 %v1649, 1.442695
    %v1653 = vpow.pop %v1652
    %v1654 = vadd.f32 %v1651, 1.0
    %v1655 = vadd.f32 %v1653, 1.0
    %v1656 = vrcp.pop %v1654
    %v1657 = vmul.f32 1.0, %v1656
    %v1658 = vrcp.pop %v1655
    %v1659 = vmul.f32 1.0, %v1658
    %v1660 = vxor.u32 %v1641, 2147483648
    %v1661 = vxor.u32 %v1645, 2147483648
    %v1662 = vmul.f32 %v1660, 1.442695
    %v1663 = vpow.pop %v1662
    %v1664 = vmul.f32 %v1661, 1.442695
    %v1665 = vpow.pop %v1664
    %v1666 = vadd.f32 %v1663, 1.0
    %v1667 = vadd.f32 %v1665, 1.0
    %v1668 = vrcp.pop %v1666
    %v1669 = vmul.f32 1.0, %v1668
    %v1670 = vrcp.pop %v1667
    %v1671 = vmul.f32 1.0, %v1670
    %v1672 = vtanh.pop %v1642
    %v1673 = vtanh.pop %v1646
    %v1674 = vxor.u32 %v1643, 2147483648
    %v1675 = vxor.u32 %v1647, 2147483648
    %v1676 = vmul.f32 %v1674, 1.442695
    %v1677 = vpow.pop %v1676
    %v1678 = vmul.f32 %v1675, 1.442695
    %v1679 = vpow.pop %v1678
    %v1680 = vadd.f32 %v1677, 1.0
    %v1681 = vadd.f32 %v1679, 1.0
    %v1682 = vrcp.pop %v1680
    %v1683 = vmul.f32 1.0, %v1682
    %v1684 = vrcp.pop %v1681
    %v1685 = vmul.f32 1.0, %v1684
    %v1686 = vmul.f32 %v1669, %v1343
    %v1687 = vmul.f32 %v1671, %v1344
    %v1688 = vmul.f32 %v1657, %v1672
    %v1689 = vmul.f32 %v1659, %v1673
    %v1690 = vadd.f32 %v1686, %v1688
    %v1691 = vadd.f32 %v1687, %v1689
    %v1692 = vtanh.pop %v1690
    %v1693 = vtanh.pop %v1691
    %v1694 = vmul.f32 %v1683, %v1692
    %v1695 = vmul.f32 %v1685, %v1693
    %s1696 = scalar_lea.vmem [#allocation5], 32
    %1697 = vst [vmem:[%s1696] sm:$0xff] %v1694
    %1698 = vst [vmem:[%s1696 + $0x8] sm:$0xff] %v1695
    %s1699 = scalar_lea.vmem [#allocation4], 192
    %v1700 = vld [vmem:[%s1699] sm:$0xff]
    %v1701 = vld [vmem:[%s1699 + $0x8] sm:$0xff]
    %v1702 = vld [vmem:[%s1699 + $0x10] sm:$0xff]
    %v1703 = vld [vmem:[%s1699 + $0x18] sm:$0xff]
    %v1704 = vld [vmem:[%s1699 + $0x20] sm:$0xff]
    %v1705 = vld [vmem:[%s1699 + $0x28] sm:$0xff]
    %v1706 = vld [vmem:[%s1699 + $0x30] sm:$0xff]
    %v1707 = vld [vmem:[%s1699 + $0x38] sm:$0xff]
    %v1708 = vpack.c.bf16 %v1695, %v1694
    %v1709 = vld [vmem:[#allocation11] sm:$0xff]
    %v1710 = vld [vmem:[#allocation11 + $0x8] sm:$0xff]
    %v1711 = vld [vmem:[#allocation11 + $0x10] sm:$0xff]
    %v1712 = vld [vmem:[#allocation11 + $0x18] sm:$0xff]
    %v1713 = vld [vmem:[#allocation11 + $0x20] sm:$0xff]
    %v1714 = vld [vmem:[#allocation11 + $0x28] sm:$0xff]
    %v1715 = vld [vmem:[#allocation11 + $0x30] sm:$0xff]
    %v1716 = vld [vmem:[#allocation11 + $0x38] sm:$0xff]
    %v1717 = vld [vmem:[#allocation11 + $0x40] sm:$0xff]
    %v1718 = vld [vmem:[#allocation11 + $0x48] sm:$0xff]
    %v1719 = vld [vmem:[#allocation11 + $0x50] sm:$0xff]
    %v1720 = vld [vmem:[#allocation11 + $0x58] sm:$0xff]
    %v1721 = vld [vmem:[#allocation11 + $0x60] sm:$0xff]
    %v1722 = vld [vmem:[#allocation11 + $0x68] sm:$0xff]
    %v1723 = vld [vmem:[#allocation11 + $0x70] sm:$0xff]
    %v1724 = vld [vmem:[#allocation11 + $0x78] sm:$0xff]
    %v1725 = vld [vmem:[#allocation11 + $0x80] sm:$0xff]
    %v1726 = vld [vmem:[#allocation11 + $0x88] sm:$0xff]
    %v1727 = vld [vmem:[#allocation11 + $0x90] sm:$0xff]
    %v1728 = vld [vmem:[#allocation11 + $0x98] sm:$0xff]
    %v1729 = vld [vmem:[#allocation11 + $0xa0] sm:$0xff]
    %v1730 = vld [vmem:[#allocation11 + $0xa8] sm:$0xff]
    %v1731 = vld [vmem:[#allocation11 + $0xb0] sm:$0xff]
    %v1732 = vld [vmem:[#allocation11 + $0xb8] sm:$0xff]
    %v1733 = vld [vmem:[#allocation11 + $0xc0] sm:$0xff]
    %v1734 = vld [vmem:[#allocation11 + $0xc8] sm:$0xff]
    %v1735 = vld [vmem:[#allocation11 + $0xd0] sm:$0xff]
    %v1736 = vld [vmem:[#allocation11 + $0xd8] sm:$0xff]
    %v1737 = vld [vmem:[#allocation11 + $0xe0] sm:$0xff]
    %v1738 = vld [vmem:[#allocation11 + $0xe8] sm:$0xff]
    %v1739 = vld [vmem:[#allocation11 + $0xf0] sm:$0xff]
    %v1740 = vld [vmem:[#allocation11 + $0xf8] sm:$0xff]
    %v1773 = vunpack.c.l.b16 %v1709
    %v1774 = vunpack.c.h.b16 %v1709
    %v1775 = vunpack.c.l.b16 %v1710
    %v1776 = vunpack.c.h.b16 %v1710
    %v1777 = vunpack.c.l.b16 %v1711
    %v1778 = vunpack.c.h.b16 %v1711
    %v1779 = vunpack.c.l.b16 %v1712
    %v1780 = vunpack.c.h.b16 %v1712
    %v1781 = vunpack.c.l.b16 %v1713
    %v1782 = vunpack.c.h.b16 %v1713
    %v1783 = vunpack.c.l.b16 %v1714
    %v1784 = vunpack.c.h.b16 %v1714
    %v1785 = vunpack.c.l.b16 %v1715
    %v1786 = vunpack.c.h.b16 %v1715
    %v1787 = vunpack.c.l.b16 %v1716
    %v1788 = vunpack.c.h.b16 %v1716
    %v1789 = vunpack.c.l.b16 %v1717
    %v1790 = vunpack.c.h.b16 %v1717
    %v1791 = vunpack.c.l.b16 %v1718
    %v1792 = vunpack.c.h.b16 %v1718
    %v1793 = vunpack.c.l.b16 %v1719
    %v1794 = vunpack.c.h.b16 %v1719
    %v1795 = vunpack.c.l.b16 %v1720
    %v1796 = vunpack.c.h.b16 %v1720
    %v1797 = vunpack.c.l.b16 %v1721
    %v1798 = vunpack.c.h.b16 %v1721
    %v1799 = vunpack.c.l.b16 %v1722
    %v1800 = vunpack.c.h.b16 %v1722
    %v1801 = vunpack.c.l.b16 %v1723
    %v1802 = vunpack.c.h.b16 %v1723
    %v1803 = vunpack.c.l.b16 %v1724
    %v1804 = vunpack.c.h.b16 %v1724
    %v1805 = vunpack.c.l.b16 %v1725
    %v1806 = vunpack.c.h.b16 %v1725
    %v1807 = vunpack.c.l.b16 %v1726
    %v1808 = vunpack.c.h.b16 %v1726
    %v1809 = vunpack.c.l.b16 %v1727
    %v1810 = vunpack.c.h.b16 %v1727
    %v1811 = vunpack.c.l.b16 %v1728
    %v1812 = vunpack.c.h.b16 %v1728
    %v1813 = vunpack.c.l.b16 %v1729
    %v1814 = vunpack.c.h.b16 %v1729
    %v1815 = vunpack.c.l.b16 %v1730
    %v1816 = vunpack.c.h.b16 %v1730
    %v1817 = vunpack.c.l.b16 %v1731
    %v1818 = vunpack.c.h.b16 %v1731
    %v1819 = vunpack.c.l.b16 %v1732
    %v1820 = vunpack.c.h.b16 %v1732
    %v1821 = vunpack.c.l.b16 %v1733
    %v1822 = vunpack.c.h.b16 %v1733
    %v1823 = vunpack.c.l.b16 %v1734
    %v1824 = vunpack.c.h.b16 %v1734
    %v1825 = vunpack.c.l.b16 %v1735
    %v1826 = vunpack.c.h.b16 %v1735
    %v1827 = vunpack.c.l.b16 %v1736
    %v1828 = vunpack.c.h.b16 %v1736
    %v1829 = vunpack.c.l.b16 %v1737
    %v1830 = vunpack.c.h.b16 %v1737
    %v1831 = vunpack.c.l.b16 %v1738
    %v1832 = vunpack.c.h.b16 %v1738
    %v1833 = vunpack.c.l.b16 %v1739
    %v1834 = vunpack.c.h.b16 %v1739
    %v1835 = vunpack.c.l.b16 %v1740
    %v1836 = vunpack.c.h.b16 %v1740
    %v1837 = vpack.c.b16 %v1777, %v1773
    %v1838 = vpack.c.b16 %v1778, %v1774
    %v1839 = vpack.c.b16 %v1779, %v1775
    %v1840 = vpack.c.b16 %v1780, %v1776
    %v1841 = vpack.c.b16 %v1785, %v1781
    %v1842 = vpack.c.b16 %v1786, %v1782
    %v1843 = vpack.c.b16 %v1787, %v1783
    %v1844 = vpack.c.b16 %v1788, %v1784
    %v1845 = vpack.c.b16 %v1793, %v1789
    %v1846 = vpack.c.b16 %v1794, %v1790
    %v1847 = vpack.c.b16 %v1795, %v1791
    %v1848 = vpack.c.b16 %v1796, %v1792
    %v1849 = vpack.c.b16 %v1801, %v1797
    %v1850 = vpack.c.b16 %v1802, %v1798
    %v1851 = vpack.c.b16 %v1803, %v1799
    %v1852 = vpack.c.b16 %v1804, %v1800
    %v1853 = vpack.c.b16 %v1809, %v1805
    %v1854 = vpack.c.b16 %v1810, %v1806
    %v1855 = vpack.c.b16 %v1811, %v1807
    %v1856 = vpack.c.b16 %v1812, %v1808
    %v1857 = vpack.c.b16 %v1817, %v1813
    %v1858 = vpack.c.b16 %v1818, %v1814
    %v1859 = vpack.c.b16 %v1819, %v1815
    %v1860 = vpack.c.b16 %v1820, %v1816
    %v1861 = vpack.c.b16 %v1825, %v1821
    %v1862 = vpack.c.b16 %v1826, %v1822
    %v1863 = vpack.c.b16 %v1827, %v1823
    %v1864 = vpack.c.b16 %v1828, %v1824
    %v1865 = vpack.c.b16 %v1833, %v1829
    %v1866 = vpack.c.b16 %v1834, %v1830
    %v1867 = vpack.c.b16 %v1835, %v1831
    %v1868 = vpack.c.b16 %v1836, %v1832
    %1901 = vmatprep.subr.bf16.mxu0 %v1838
    %1902 = vmatpush1.bf16.msra.mxu0 %v1837
    %1903 = vmatprep.subr.bf16.mxu0 %v1842
    %1904 = vmatpush1.bf16.msra.mxu0 %v1841
    %1905 = vmatprep.subr.bf16.mxu0 %v1846
    %1906 = vmatpush1.bf16.msra.mxu0 %v1845
    %1907 = vmatprep.subr.bf16.mxu0 %v1850
    %1908 = vmatpush1.bf16.msra.mxu0 %v1849
    %1909 = vmatprep.subr.bf16.mxu0 %v1854
    %1910 = vmatpush1.bf16.msra.mxu0 %v1853
    %1911 = vmatprep.subr.bf16.mxu0 %v1858
    %1912 = vmatpush1.bf16.msra.mxu0 %v1857
    %1913 = vmatprep.subr.bf16.mxu0 %v1862
    %1914 = vmatpush1.bf16.msra.mxu0 %v1861
    %1915 = vmatprep.subr.bf16.mxu0 %v1866
    %1916 = vmatpush1.bf16.msra.mxu0 %v1865
    %1917 = vmatprep.subr.bf16.mxu0 0
    %1918 = vmatpush1.bf16.msra.mxu0 0
    %1919 = vmatprep.subr.bf16.mxu0 0
    %1920 = vmatpush1.bf16.msra.mxu0 0
    %1921 = vmatprep.subr.bf16.mxu0 0
    %1922 = vmatpush1.bf16.msra.mxu0 0
    %1923 = vmatprep.subr.bf16.mxu0 0
    %1924 = vmatpush1.bf16.msra.mxu0 0
    %1925 = vmatprep.subr.bf16.mxu0 0
    %1926 = vmatpush1.bf16.msra.mxu0 0
    %1927 = vmatprep.subr.bf16.mxu0 0
    %1928 = vmatpush1.bf16.msra.mxu0 0
    %1929 = vmatprep.subr.bf16.mxu0 0
    %1930 = vmatpush1.bf16.msra.mxu0 0
    %1931 = vmatprep.subr.bf16.mxu0 0
    %1932 = vmatpush1.bf16.msra.mxu0 0
    %1933 = vmatprep.mubr.bf16.mxu0 0
    %1934 = vmatmul.mubr.bf16.gmra.mrb[0].mxu0 %v1708
    %v1935 = vpop.f32.mrb[0].mxu0
    %v1936 = vadd.f32 0.0, %v1935
    %v1937 = vpop.f32.mrb[0].mxu0
    %v1938 = vadd.f32 0.0, %v1937
    %v1939 = vpop.f32.mrb[0].mxu0
    %v1940 = vadd.f32 0.0, %v1939
    %v1941 = vpop.f32.mrb[0].mxu0
    %v1942 = vadd.f32 0.0, %v1941
    %1943 = vdwg.mxu0
    %1944 = vmatprep.subr.bf16.mxu0 %v1840
    %1945 = vmatpush1.bf16.msra.mxu0 %v1839
    %1946 = vmatprep.subr.bf16.mxu0 %v1844
    %1947 = vmatpush1.bf16.msra.mxu0 %v1843
    %1948 = vmatprep.subr.bf16.mxu0 %v1848
    %1949 = vmatpush1.bf16.msra.mxu0 %v1847
    %1950 = vmatprep.subr.bf16.mxu0 %v1852
    %1951 = vmatpush1.bf16.msra.mxu0 %v1851
    %1952 = vmatprep.subr.bf16.mxu0 %v1856
    %1953 = vmatpush1.bf16.msra.mxu0 %v1855
    %1954 = vmatprep.subr.bf16.mxu0 %v1860
    %1955 = vmatpush1.bf16.msra.mxu0 %v1859
    %1956 = vmatprep.subr.bf16.mxu0 %v1864
    %1957 = vmatpush1.bf16.msra.mxu0 %v1863
    %1958 = vmatprep.subr.bf16.mxu0 %v1868
    %1959 = vmatpush1.bf16.msra.mxu0 %v1867
    %1960 = vmatprep.subr.bf16.mxu0 0
    %1961 = vmatpush1.bf16.msra.mxu0 0
    %1962 = vmatprep.subr.bf16.mxu0 0
    %1963 = vmatpush1.bf16.msra.mxu0 0
    %1964 = vmatprep.subr.bf16.mxu0 0
    %1965 = vmatpush1.bf16.msra.mxu0 0
    %1966 = vmatprep.subr.bf16.mxu0 0
    %1967 = vmatpush1.bf16.msra.mxu0 0
    %1968 = vmatprep.subr.bf16.mxu0 0
    %1969 = vmatpush1.bf16.msra.mxu0 0
    %1970 = vmatprep.subr.bf16.mxu0 0
    %1971 = vmatpush1.bf16.msra.mxu0 0
    %1972 = vmatprep.subr.bf16.mxu0 0
    %1973 = vmatpush1.bf16.msra.mxu0 0
    %1974 = vmatprep.subr.bf16.mxu0 0
    %1975 = vmatpush1.bf16.msra.mxu0 0
    %1976 = vmatprep.mubr.bf16.mxu0 0
    %1977 = vmatmul.mubr.bf16.gmra.mrb[0].mxu0 %v1708
    %v1978 = vpop.f32.mrb[0].mxu0
    %v1979 = vadd.f32 0.0, %v1978
    %v1980 = vpop.f32.mrb[0].mxu0
    %v1981 = vadd.f32 0.0, %v1980
    %v1982 = vpop.f32.mrb[0].mxu0
    %v1983 = vadd.f32 0.0, %v1982
    %v1984 = vpop.f32.mrb[0].mxu0
    %v1985 = vadd.f32 0.0, %v1984
    %1986 = vdwg.mxu0
    %v1987 = vadd.f32 %v1700, %v1936
    %v1988 = vadd.f32 %v1701, %v1938
    %v1989 = vadd.f32 %v1702, %v1979
    %v1990 = vadd.f32 %v1703, %v1981
    %v1991 = vadd.f32 %v1704, %v1940
    %v1992 = vadd.f32 %v1705, %v1942
    %v1993 = vadd.f32 %v1706, %v1983
    %v1994 = vadd.f32 %v1707, %v1985
    %v1995 = vxor.u32 %v1987, 2147483648
    %v1996 = vxor.u32 %v1991, 2147483648
    %v1997 = vmul.f32 %v1995, 1.442695
    %v1998 = vpow.pop %v1997
    %v1999 = vmul.f32 %v1996, 1.442695
    %v2000 = vpow.pop %v1999
    %v2001 = vadd.f32 %v1998, 1.0
    %v2002 = vadd.f32 %v2000, 1.0
    %v2003 = vrcp.pop %v2001
    %v2004 = vmul.f32 1.0, %v2003
    %v2005 = vrcp.pop %v2002
    %v2006 = vmul.f32 1.0, %v2005
    %v2007 = vxor.u32 %v1988, 2147483648
    %v2008 = vxor.u32 %v1992, 2147483648
    %v2009 = vmul.f32 %v2007, 1.442695
    %v2010 = vpow.pop %v2009
    %v2011 = vmul.f32 %v2008, 1.442695
    %v2012 = vpow.pop %v2011
    %v2013 = vadd.f32 %v2010, 1.0
    %v2014 = vadd.f32 %v2012, 1.0
    %v2015 = vrcp.pop %v2013
    %v2016 = vmul.f32 1.0, %v2015
    %v2017 = vrcp.pop %v2014
    %v2018 = vmul.f32 1.0, %v2017
    %v2019 = vtanh.pop %v1989
    %v2020 = vtanh.pop %v1993
    %v2021 = vxor.u32 %v1990, 2147483648
    %v2022 = vxor.u32 %v1994, 2147483648
    %v2023 = vmul.f32 %v2021, 1.442695
    %v2024 = vpow.pop %v2023
    %v2025 = vmul.f32 %v2022, 1.442695
    %v2026 = vpow.pop %v2025
    %v2027 = vadd.f32 %v2024, 1.0
    %v2028 = vadd.f32 %v2026, 1.0
    %v2029 = vrcp.pop %v2027
    %v2030 = vmul.f32 1.0, %v2029
    %v2031 = vrcp.pop %v2028
    %v2032 = vmul.f32 1.0, %v2031
    %v2033 = vmul.f32 %v2016, %v1690
    %v2034 = vmul.f32 %v2018, %v1691
    %v2035 = vmul.f32 %v2004, %v2019
    %v2036 = vmul.f32 %v2006, %v2020
    %v2037 = vadd.f32 %v2033, %v2035
    %v2038 = vadd.f32 %v2034, %v2036
    %v2039 = vtanh.pop %v2037
    %v2040 = vtanh.pop %v2038
    %v2041 = vmul.f32 %v2030, %v2039
    %v2042 = vmul.f32 %v2032, %v2040
    %s2043 = scalar_lea.vmem [#allocation5], 48
    %2044 = vst [vmem:[%s2043] sm:$0xff] %v2041
    %2045 = vst [vmem:[%s2043 + $0x8] sm:$0xff] %v2042
    %s2046 = scalar_lea.vmem [#allocation4], 256
    %v2047 = vld [vmem:[%s2046] sm:$0xff]
    %v2048 = vld [vmem:[%s2046 + $0x8] sm:$0xff]
    %v2049 = vld [vmem:[%s2046 + $0x10] sm:$0xff]
    %v2050 = vld [vmem:[%s2046 + $0x18] sm:$0xff]
    %v2051 = vld [vmem:[%s2046 + $0x20] sm:$0xff]
    %v2052 = vld [vmem:[%s2046 + $0x28] sm:$0xff]
    %v2053 = vld [vmem:[%s2046 + $0x30] sm:$0xff]
    %v2054 = vld [vmem:[%s2046 + $0x38] sm:$0xff]
    %v2055 = vpack.c.bf16 %v2042, %v2041
    %v2056 = vld [vmem:[#allocation11] sm:$0xff]
    %v2057 = vld [vmem:[#allocation11 + $0x8] sm:$0xff]
    %v2058 = vld [vmem:[#allocation11 + $0x10] sm:$0xff]
    %v2059 = vld [vmem:[#allocation11 + $0x18] sm:$0xff]
    %v2060 = vld [vmem:[#allocation11 + $0x20] sm:$0xff]
    %v2061 = vld [vmem:[#allocation11 + $0x28] sm:$0xff]
    %v2062 = vld [vmem:[#allocation11 + $0x30] sm:$0xff]
    %v2063 = vld [vmem:[#allocation11 + $0x38] sm:$0xff]
    %v2064 = vld [vmem:[#allocation11 + $0x40] sm:$0xff]
    %v2065 = vld [vmem:[#allocation11 + $0x48] sm:$0xff]
    %v2066 = vld [vmem:[#allocation11 + $0x50] sm:$0xff]
    %v2067 = vld [vmem:[#allocation11 + $0x58] sm:$0xff]
    %v2068 = vld [vmem:[#allocation11 + $0x60] sm:$0xff]
    %v2069 = vld [vmem:[#allocation11 + $0x68] sm:$0xff]
    %v2070 = vld [vmem:[#allocation11 + $0x70] sm:$0xff]
    %v2071 = vld [vmem:[#allocation11 + $0x78] sm:$0xff]
    %v2072 = vld [vmem:[#allocation11 + $0x80] sm:$0xff]
    %v2073 = vld [vmem:[#allocation11 + $0x88] sm:$0xff]
    %v2074 = vld [vmem:[#allocation11 + $0x90] sm:$0xff]
    %v2075 = vld [vmem:[#allocation11 + $0x98] sm:$0xff]
    %v2076 = vld [vmem:[#allocation11 + $0xa0] sm:$0xff]
    %v2077 = vld [vmem:[#allocation11 + $0xa8] sm:$0xff]
    %v2078 = vld [vmem:[#allocation11 + $0xb0] sm:$0xff]
    %v2079 = vld [vmem:[#allocation11 + $0xb8] sm:$0xff]
    %v2080 = vld [vmem:[#allocation11 + $0xc0] sm:$0xff]
    %v2081 = vld [vmem:[#allocation11 + $0xc8] sm:$0xff]
    %v2082 = vld [vmem:[#allocation11 + $0xd0] sm:$0xff]
    %v2083 = vld [vmem:[#allocation11 + $0xd8] sm:$0xff]
    %v2084 = vld [vmem:[#allocation11 + $0xe0] sm:$0xff]
    %v2085 = vld [vmem:[#allocation11 + $0xe8] sm:$0xff]
    %v2086 = vld [vmem:[#allocation11 + $0xf0] sm:$0xff]
    %v2087 = vld [vmem:[#allocation11 + $0xf8] sm:$0xff]
    %v2120 = vunpack.c.l.b16 %v2056
    %v2121 = vunpack.c.h.b16 %v2056
    %v2122 = vunpack.c.l.b16 %v2057
    %v2123 = vunpack.c.h.b16 %v2057
    %v2124 = vunpack.c.l.b16 %v2058
    %v2125 = vunpack.c.h.b16 %v2058
    %v2126 = vunpack.c.l.b16 %v2059
    %v2127 = vunpack.c.h.b16 %v2059
    %v2128 = vunpack.c.l.b16 %v2060
    %v2129 = vunpack.c.h.b16 %v2060
    %v2130 = vunpack.c.l.b16 %v2061
    %v2131 = vunpack.c.h.b16 %v2061
    %v2132 = vunpack.c.l.b16 %v2062
    %v2133 = vunpack.c.h.b16 %v2062
    %v2134 = vunpack.c.l.b16 %v2063
    %v2135 = vunpack.c.h.b16 %v2063
    %v2136 = vunpack.c.l.b16 %v2064
    %v2137 = vunpack.c.h.b16 %v2064
    %v2138 = vunpack.c.l.b16 %v2065
    %v2139 = vunpack.c.h.b16 %v2065
    %v2140 = vunpack.c.l.b16 %v2066
    %v2141 = vunpack.c.h.b16 %v2066
    %v2142 = vunpack.c.l.b16 %v2067
    %v2143 = vunpack.c.h.b16 %v2067
    %v2144 = vunpack.c.l.b16 %v2068
    %v2145 = vunpack.c.h.b16 %v2068
    %v2146 = vunpack.c.l.b16 %v2069
    %v2147 = vunpack.c.h.b16 %v2069
    %v2148 = vunpack.c.l.b16 %v2070
    %v2149 = vunpack.c.h.b16 %v2070
    %v2150 = vunpack.c.l.b16 %v2071
    %v2151 = vunpack.c.h.b16 %v2071
    %v2152 = vunpack.c.l.b16 %v2072
    %v2153 = vunpack.c.h.b16 %v2072
    %v2154 = vunpack.c.l.b16 %v2073
    %v2155 = vunpack.c.h.b16 %v2073
    %v2156 = vunpack.c.l.b16 %v2074
    %v2157 = vunpack.c.h.b16 %v2074
    %v2158 = vunpack.c.l.b16 %v2075
    %v2159 = vunpack.c.h.b16 %v2075
    %v2160 = vunpack.c.l.b16 %v2076
    %v2161 = vunpack.c.h.b16 %v2076
    %v2162 = vunpack.c.l.b16 %v2077
    %v2163 = vunpack.c.h.b16 %v2077
    %v2164 = vunpack.c.l.b16 %v2078
    %v2165 = vunpack.c.h.b16 %v2078
    %v2166 = vunpack.c.l.b16 %v2079
    %v2167 = vunpack.c.h.b16 %v2079
    %v2168 = vunpack.c.l.b16 %v2080
    %v2169 = vunpack.c.h.b16 %v2080
    %v2170 = vunpack.c.l.b16 %v2081
    %v2171 = vunpack.c.h.b16 %v2081
    %v2172 = vunpack.c.l.b16 %v2082
    %v2173 = vunpack.c.h.b16 %v2082
    %v2174 = vunpack.c.l.b16 %v2083
    %v2175 = vunpack.c.h.b16 %v2083
    %v2176 = vunpack.c.l.b16 %v2084
    %v2177 = vunpack.c.h.b16 %v2084
    %v2178 = vunpack.c.l.b16 %v2085
    %v2179 = vunpack.c.h.b16 %v2085
    %v2180 = vunpack.c.l.b16 %v2086
    %v2181 = vunpack.c.h.b16 %v2086
    %v2182 = vunpack.c.l.b16 %v2087
    %v2183 = vunpack.c.h.b16 %v2087
    %v2184 = vpack.c.b16 %v2124, %v2120
    %v2185 = vpack.c.b16 %v2125, %v2121
    %v2186 = vpack.c.b16 %v2126, %v2122
    %v2187 = vpack.c.b16 %v2127, %v2123
    %v2188 = vpack.c.b16 %v2132, %v2128
    %v2189 = vpack.c.b16 %v2133, %v2129
    %v2190 = vpack.c.b16 %v2134, %v2130
    %v2191 = vpack.c.b16 %v2135, %v2131
    %v2192 = vpack.c.b16 %v2140, %v2136
    %v2193 = vpack.c.b16 %v2141, %v2137
    %v2194 = vpack.c.b16 %v2142, %v2138
    %v2195 = vpack.c.b16 %v2143, %v2139
    %v2196 = vpack.c.b16 %v2148, %v2144
    %v2197 = vpack.c.b16 %v2149, %v2145
    %v2198 = vpack.c.b16 %v2150, %v2146
    %v2199 = vpack.c.b16 %v2151, %v2147
    %v2200 = vpack.c.b16 %v2156, %v2152
    %v2201 = vpack.c.b16 %v2157, %v2153
    %v2202 = vpack.c.b16 %v2158, %v2154
    %v2203 = vpack.c.b16 %v2159, %v2155
    %v2204 = vpack.c.b16 %v2164, %v2160
    %v2205 = vpack.c.b16 %v2165, %v2161
    %v2206 = vpack.c.b16 %v2166, %v2162
    %v2207 = vpack.c.b16 %v2167, %v2163
    %v2208 = vpack.c.b16 %v2172, %v2168
    %v2209 = vpack.c.b16 %v2173, %v2169
    %v2210 = vpack.c.b16 %v2174, %v2170
    %v2211 = vpack.c.b16 %v2175, %v2171
    %v2212 = vpack.c.b16 %v2180, %v2176
    %v2213 = vpack.c.b16 %v2181, %v2177
    %v2214 = vpack.c.b16 %v2182, %v2178
    %v2215 = vpack.c.b16 %v2183, %v2179
    %2248 = vmatprep.subr.bf16.mxu0 %v2185
    %2249 = vmatpush1.bf16.msra.mxu0 %v2184
    %2250 = vmatprep.subr.bf16.mxu0 %v2189
    %2251 = vmatpush1.bf16.msra.mxu0 %v2188
    %2252 = vmatprep.subr.bf16.mxu0 %v2193
    %2253 = vmatpush1.bf16.msra.mxu0 %v2192
    %2254 = vmatprep.subr.bf16.mxu0 %v2197
    %2255 = vmatpush1.bf16.msra.mxu0 %v2196
    %2256 = vmatprep.subr.bf16.mxu0 %v2201
    %2257 = vmatpush1.bf16.msra.mxu0 %v2200
    %2258 = vmatprep.subr.bf16.mxu0 %v2205
    %2259 = vmatpush1.bf16.msra.mxu0 %v2204
    %2260 = vmatprep.subr.bf16.mxu0 %v2209
    %2261 = vmatpush1.bf16.msra.mxu0 %v2208
    %2262 = vmatprep.subr.bf16.mxu0 %v2213
    %2263 = vmatpush1.bf16.msra.mxu0 %v2212
    %2264 = vmatprep.subr.bf16.mxu0 0
    %2265 = vmatpush1.bf16.msra.mxu0 0
    %2266 = vmatprep.subr.bf16.mxu0 0
    %2267 = vmatpush1.bf16.msra.mxu0 0
    %2268 = vmatprep.subr.bf16.mxu0 0
    %2269 = vmatpush1.bf16.msra.mxu0 0
    %2270 = vmatprep.subr.bf16.mxu0 0
    %2271 = vmatpush1.bf16.msra.mxu0 0
    %2272 = vmatprep.subr.bf16.mxu0 0
    %2273 = vmatpush1.bf16.msra.mxu0 0
    %2274 = vmatprep.subr.bf16.mxu0 0
    %2275 = vmatpush1.bf16.msra.mxu0 0
    %2276 = vmatprep.subr.bf16.mxu0 0
    %2277 = vmatpush1.bf16.msra.mxu0 0
    %2278 = vmatprep.subr.bf16.mxu0 0
    %2279 = vmatpush1.bf16.msra.mxu0 0
    %2280 = vmatprep.mubr.bf16.mxu0 0
    %2281 = vmatmul.mubr.bf16.gmra.mrb[0].mxu0 %v2055
    %v2282 = vpop.f32.mrb[0].mxu0
    %v2283 = vadd.f32 0.0, %v2282
    %v2284 = vpop.f32.mrb[0].mxu0
    %v2285 = vadd.f32 0.0, %v2284
    %v2286 = vpop.f32.mrb[0].mxu0
    %v2287 = vadd.f32 0.0, %v2286
    %v2288 = vpop.f32.mrb[0].mxu0
    %v2289 = vadd.f32 0.0, %v2288
    %2290 = vdwg.mxu0
    %2291 = vmatprep.subr.bf16.mxu0 %v2187
    %2292 = vmatpush1.bf16.msra.mxu0 %v2186
    %2293 = vmatprep.subr.bf16.mxu0 %v2191
    %2294 = vmatpush1.bf16.msra.mxu0 %v2190
    %2295 = vmatprep.subr.bf16.mxu0 %v2195
    %2296 = vmatpush1.bf16.msra.mxu0 %v2194
    %2297 = vmatprep.subr.bf16.mxu0 %v2199
    %2298 = vmatpush1.bf16.msra.mxu0 %v2198
    %2299 = vmatprep.subr.bf16.mxu0 %v2203
    %2300 = vmatpush1.bf16.msra.mxu0 %v2202
    %2301 = vmatprep.subr.bf16.mxu0 %v2207
    %2302 = vmatpush1.bf16.msra.mxu0 %v2206
    %2303 = vmatprep.subr.bf16.mxu0 %v2211
    %2304 = vmatpush1.bf16.msra.mxu0 %v2210
    %2305 = vmatprep.subr.bf16.mxu0 %v2215
    %2306 = vmatpush1.bf16.msra.mxu0 %v2214
    %2307 = vmatprep.subr.bf16.mxu0 0
    %2308 = vmatpush1.bf16.msra.mxu0 0
    %2309 = vmatprep.subr.bf16.mxu0 0
    %2310 = vmatpush1.bf16.msra.mxu0 0
    %2311 = vmatprep.subr.bf16.mxu0 0
    %2312 = vmatpush1.bf16.msra.mxu0 0
    %2313 = vmatprep.subr.bf16.mxu0 0
    %2314 = vmatpush1.bf16.msra.mxu0 0
    %2315 = vmatprep.subr.bf16.mxu0 0
    %2316 = vmatpush1.bf16.msra.mxu0 0
    %2317 = vmatprep.subr.bf16.mxu0 0
    %2318 = vmatpush1.bf16.msra.mxu0 0
    %2319 = vmatprep.subr.bf16.mxu0 0
    %2320 = vmatpush1.bf16.msra.mxu0 0
    %2321 = vmatprep.subr.bf16.mxu0 0
    %2322 = vmatpush1.bf16.msra.mxu0 0
    %2323 = vmatprep.mubr.bf16.mxu0 0
    %2324 = vmatmul.mubr.bf16.gmra.mrb[0].mxu0 %v2055
    %v2325 = vpop.f32.mrb[0].mxu0
    %v2326 = vadd.f32 0.0, %v2325
    %v2327 = vpop.f32.mrb[0].mxu0
    %v2328 = vadd.f32 0.0, %v2327
    %v2329 = vpop.f32.mrb[0].mxu0
    %v2330 = vadd.f32 0.0, %v2329
    %v2331 = vpop.f32.mrb[0].mxu0
    %v2332 = vadd.f32 0.0, %v2331
    %2333 = vdwg.mxu0
    %v2334 = vadd.f32 %v2047, %v2283
    %v2335 = vadd.f32 %v2048, %v2285
    %v2336 = vadd.f32 %v2049, %v2326
    %v2337 = vadd.f32 %v2050, %v2328
    %v2338 = vadd.f32 %v2051, %v2287
    %v2339 = vadd.f32 %v2052, %v2289
    %v2340 = vadd.f32 %v2053, %v2330
    %v2341 = vadd.f32 %v2054, %v2332
    %v2342 = vxor.u32 %v2334, 2147483648
    %v2343 = vxor.u32 %v2338, 2147483648
    %v2344 = vmul.f32 %v2342, 1.442695
    %v2345 = vpow.pop %v2344
    %v2346 = vmul.f32 %v2343, 1.442695
    %v2347 = vpow.pop %v2346
    %v2348 = vadd.f32 %v2345, 1.0
    %v2349 = vadd.f32 %v2347, 1.0
    %v2350 = vrcp.pop %v2348
    %v2351 = vmul.f32 1.0, %v2350
    %v2352 = vrcp.pop %v2349
    %v2353 = vmul.f32 1.0, %v2352
    %v2354 = vxor.u32 %v2335, 2147483648
    %v2355 = vxor.u32 %v2339, 2147483648
    %v2356 = vmul.f32 %v2354, 1.442695
    %v2357 = vpow.pop %v2356
    %v2358 = vmul.f32 %v2355, 1.442695
    %v2359 = vpow.pop %v2358
    %v2360 = vadd.f32 %v2357, 1.0
    %v2361 = vadd.f32 %v2359, 1.0
    %v2362 = vrcp.pop %v2360
    %v2363 = vmul.f32 1.0, %v2362
    %v2364 = vrcp.pop %v2361
    %v2365 = vmul.f32 1.0, %v2364
    %v2366 = vtanh.pop %v2336
    %v2367 = vtanh.pop %v2340
    %v2368 = vxor.u32 %v2337, 2147483648
    %v2369 = vxor.u32 %v2341, 2147483648
    %v2370 = vmul.f32 %v2368, 1.442695
    %v2371 = vpow.pop %v2370
    %v2372 = vmul.f32 %v2369, 1.442695
    %v2373 = vpow.pop %v2372
    %v2374 = vadd.f32 %v2371, 1.0
    %v2375 = vadd.f32 %v2373, 1.0
    %v2376 = vrcp.pop %v2374
    %v2377 = vmul.f32 1.0, %v2376
    %v2378 = vrcp.pop %v2375
    %v2379 = vmul.f32 1.0, %v2378
    %v2380 = vmul.f32 %v2363, %v2037
    %v2381 = vmul.f32 %v2365, %v2038
    %v2382 = vmul.f32 %v2351, %v2366
    %v2383 = vmul.f32 %v2353, %v2367
    %v2384 = vadd.f32 %v2380, %v2382
    %v2385 = vadd.f32 %v2381, %v2383
    %v2386 = vtanh.pop %v2384
    %v2387 = vtanh.pop %v2385
    %v2388 = vmul.f32 %v2377, %v2386
    %v2389 = vmul.f32 %v2379, %v2387
    %s2390 = scalar_lea.vmem [#allocation5], 64
    %2391 = vst [vmem:[%s2390] sm:$0xff] %v2388
    %2392 = vst [vmem:[%s2390 + $0x8] sm:$0xff] %v2389
    %s2393 = scalar_lea.vmem [#allocation4], 320
    %v2394 = vld [vmem:[%s2393] sm:$0xff]
    %v2395 = vld [vmem:[%s2393 + $0x8] sm:$0xff]
    %v2396 = vld [vmem:[%s2393 + $0x10] sm:$0xff]
    %v2397 = vld [vmem:[%s2393 + $0x18] sm:$0xff]
    %v2398 = vld [vmem:[%s2393 + $0x20] sm:$0xff]
    %v2399 = vld [vmem:[%s2393 + $0x28] sm:$0xff]
    %v2400 = vld [vmem:[%s2393 + $0x30] sm:$0xff]
    %v2401 = vld [vmem:[%s2393 + $0x38] sm:$0xff]
    %v2402 = vpack.c.bf16 %v2389, %v2388
    %v2403 = vld [vmem:[#allocation11] sm:$0xff]
    %v2404 = vld [vmem:[#allocation11 + $0x8] sm:$0xff]
    %v2405 = vld [vmem:[#allocation11 + $0x10] sm:$0xff]
    %v2406 = vld [vmem:[#allocation11 + $0x18] sm:$0xff]
    %v2407 = vld [vmem:[#allocation11 + $0x20] sm:$0xff]
    %v2408 = vld [vmem:[#allocation11 + $0x28] sm:$0xff]
    %v2409 = vld [vmem:[#allocation11 + $0x30] sm:$0xff]
    %v2410 = vld [vmem:[#allocation11 + $0x38] sm:$0xff]
    %v2411 = vld [vmem:[#allocation11 + $0x40] sm:$0xff]
    %v2412 = vld [vmem:[#allocation11 + $0x48] sm:$0xff]
    %v2413 = vld [vmem:[#allocation11 + $0x50] sm:$0xff]
    %v2414 = vld [vmem:[#allocation11 + $0x58] sm:$0xff]
    %v2415 = vld [vmem:[#allocation11 + $0x60] sm:$0xff]
    %v2416 = vld [vmem:[#allocation11 + $0x68] sm:$0xff]
    %v2417 = vld [vmem:[#allocation11 + $0x70] sm:$0xff]
    %v2418 = vld [vmem:[#allocation11 + $0x78] sm:$0xff]
    %v2419 = vld [vmem:[#allocation11 + $0x80] sm:$0xff]
    %v2420 = vld [vmem:[#allocation11 + $0x88] sm:$0xff]
    %v2421 = vld [vmem:[#allocation11 + $0x90] sm:$0xff]
    %v2422 = vld [vmem:[#allocation11 + $0x98] sm:$0xff]
    %v2423 = vld [vmem:[#allocation11 + $0xa0] sm:$0xff]
    %v2424 = vld [vmem:[#allocation11 + $0xa8] sm:$0xff]
    %v2425 = vld [vmem:[#allocation11 + $0xb0] sm:$0xff]
    %v2426 = vld [vmem:[#allocation11 + $0xb8] sm:$0xff]
    %v2427 = vld [vmem:[#allocation11 + $0xc0] sm:$0xff]
    %v2428 = vld [vmem:[#allocation11 + $0xc8] sm:$0xff]
    %v2429 = vld [vmem:[#allocation11 + $0xd0] sm:$0xff]
    %v2430 = vld [vmem:[#allocation11 + $0xd8] sm:$0xff]
    %v2431 = vld [vmem:[#allocation11 + $0xe0] sm:$0xff]
    %v2432 = vld [vmem:[#allocation11 + $0xe8] sm:$0xff]
    %v2433 = vld [vmem:[#allocation11 + $0xf0] sm:$0xff]
    %v2434 = vld [vmem:[#allocation11 + $0xf8] sm:$0xff]
    %v2467 = vunpack.c.l.b16 %v2403
    %v2468 = vunpack.c.h.b16 %v2403
    %v2469 = vunpack.c.l.b16 %v2404
    %v2470 = vunpack.c.h.b16 %v2404
    %v2471 = vunpack.c.l.b16 %v2405
    %v2472 = vunpack.c.h.b16 %v2405
    %v2473 = vunpack.c.l.b16 %v2406
    %v2474 = vunpack.c.h.b16 %v2406
    %v2475 = vunpack.c.l.b16 %v2407
    %v2476 = vunpack.c.h.b16 %v2407
    %v2477 = vunpack.c.l.b16 %v2408
    %v2478 = vunpack.c.h.b16 %v2408
    %v2479 = vunpack.c.l.b16 %v2409
    %v2480 = vunpack.c.h.b16 %v2409
    %v2481 = vunpack.c.l.b16 %v2410
    %v2482 = vunpack.c.h.b16 %v2410
    %v2483 = vunpack.c.l.b16 %v2411
    %v2484 = vunpack.c.h.b16 %v2411
    %v2485 = vunpack.c.l.b16 %v2412
    %v2486 = vunpack.c.h.b16 %v2412
    %v2487 = vunpack.c.l.b16 %v2413
    %v2488 = vunpack.c.h.b16 %v2413
    %v2489 = vunpack.c.l.b16 %v2414
    %v2490 = vunpack.c.h.b16 %v2414
    %v2491 = vunpack.c.l.b16 %v2415
    %v2492 = vunpack.c.h.b16 %v2415
    %v2493 = vunpack.c.l.b16 %v2416
    %v2494 = vunpack.c.h.b16 %v2416
    %v2495 = vunpack.c.l.b16 %v2417
    %v2496 = vunpack.c.h.b16 %v2417
    %v2497 = vunpack.c.l.b16 %v2418
    %v2498 = vunpack.c.h.b16 %v2418
    %v2499 = vunpack.c.l.b16 %v2419
    %v2500 = vunpack.c.h.b16 %v2419
    %v2501 = vunpack.c.l.b16 %v2420
    %v2502 = vunpack.c.h.b16 %v2420
    %v2503 = vunpack.c.l.b16 %v2421
    %v2504 = vunpack.c.h.b16 %v2421
    %v2505 = vunpack.c.l.b16 %v2422
    %v2506 = vunpack.c.h.b16 %v2422
    %v2507 = vunpack.c.l.b16 %v2423
    %v2508 = vunpack.c.h.b16 %v2423
    %v2509 = vunpack.c.l.b16 %v2424
    %v2510 = vunpack.c.h.b16 %v2424
    %v2511 = vunpack.c.l.b16 %v2425
    %v2512 = vunpack.c.h.b16 %v2425
    %v2513 = vunpack.c.l.b16 %v2426
    %v2514 = vunpack.c.h.b16 %v2426
    %v2515 = vunpack.c.l.b16 %v2427
    %v2516 = vunpack.c.h.b16 %v2427
    %v2517 = vunpack.c.l.b16 %v2428
    %v2518 = vunpack.c.h.b16 %v2428
    %v2519 = vunpack.c.l.b16 %v2429
    %v2520 = vunpack.c.h.b16 %v2429
    %v2521 = vunpack.c.l.b16 %v2430
    %v2522 = vunpack.c.h.b16 %v2430
    %v2523 = vunpack.c.l.b16 %v2431
    %v2524 = vunpack.c.h.b16 %v2431
    %v2525 = vunpack.c.l.b16 %v2432
    %v2526 = vunpack.c.h.b16 %v2432
    %v2527 = vunpack.c.l.b16 %v2433
    %v2528 = vunpack.c.h.b16 %v2433
    %v2529 = vunpack.c.l.b16 %v2434
    %v2530 = vunpack.c.h.b16 %v2434
    %v2531 = vpack.c.b16 %v2471, %v2467
    %v2532 = vpack.c.b16 %v2472, %v2468
    %v2533 = vpack.c.b16 %v2473, %v2469
    %v2534 = vpack.c.b16 %v2474, %v2470
    %v2535 = vpack.c.b16 %v2479, %v2475
    %v2536 = vpack.c.b16 %v2480, %v2476
    %v2537 = vpack.c.b16 %v2481, %v2477
    %v2538 = vpack.c.b16 %v2482, %v2478
    %v2539 = vpack.c.b16 %v2487, %v2483
    %v2540 = vpack.c.b16 %v2488, %v2484
    %v2541 = vpack.c.b16 %v2489, %v2485
    %v2542 = vpack.c.b16 %v2490, %v2486
    %v2543 = vpack.c.b16 %v2495, %v2491
    %v2544 = vpack.c.b16 %v2496, %v2492
    %v2545 = vpack.c.b16 %v2497, %v2493
    %v2546 = vpack.c.b16 %v2498, %v2494
    %v2547 = vpack.c.b16 %v2503, %v2499
    %v2548 = vpack.c.b16 %v2504, %v2500
    %v2549 = vpack.c.b16 %v2505, %v2501
    %v2550 = vpack.c.b16 %v2506, %v2502
    %v2551 = vpack.c.b16 %v2511, %v2507
    %v2552 = vpack.c.b16 %v2512, %v2508
    %v2553 = vpack.c.b16 %v2513, %v2509
    %v2554 = vpack.c.b16 %v2514, %v2510
    %v2555 = vpack.c.b16 %v2519, %v2515
    %v2556 = vpack.c.b16 %v2520, %v2516
    %v2557 = vpack.c.b16 %v2521, %v2517
    %v2558 = vpack.c.b16 %v2522, %v2518
    %v2559 = vpack.c.b16 %v2527, %v2523
    %v2560 = vpack.c.b16 %v2528, %v2524
    %v2561 = vpack.c.b16 %v2529, %v2525
    %v2562 = vpack.c.b16 %v2530, %v2526
    %2595 = vmatprep.subr.bf16.mxu0 %v2532
    %2596 = vmatpush1.bf16.msra.mxu0 %v2531
    %2597 = vmatprep.subr.bf16.mxu0 %v2536
    %2598 = vmatpush1.bf16.msra.mxu0 %v2535
    %2599 = vmatprep.subr.bf16.mxu0 %v2540
    %2600 = vmatpush1.bf16.msra.mxu0 %v2539
    %2601 = vmatprep.subr.bf16.mxu0 %v2544
    %2602 = vmatpush1.bf16.msra.mxu0 %v2543
    %2603 = vmatprep.subr.bf16.mxu0 %v2548
    %2604 = vmatpush1.bf16.msra.mxu0 %v2547
    %2605 = vmatprep.subr.bf16.mxu0 %v2552
    %2606 = vmatpush1.bf16.msra.mxu0 %v2551
    %2607 = vmatprep.subr.bf16.mxu0 %v2556
    %2608 = vmatpush1.bf16.msra.mxu0 %v2555
    %2609 = vmatprep.subr.bf16.mxu0 %v2560
    %2610 = vmatpush1.bf16.msra.mxu0 %v2559
    %2611 = vmatprep.subr.bf16.mxu0 0
    %2612 = vmatpush1.bf16.msra.mxu0 0
    %2613 = vmatprep.subr.bf16.mxu0 0
    %2614 = vmatpush1.bf16.msra.mxu0 0
    %2615 = vmatprep.subr.bf16.mxu0 0
    %2616 = vmatpush1.bf16.msra.mxu0 0
    %2617 = vmatprep.subr.bf16.mxu0 0
    %2618 = vmatpush1.bf16.msra.mxu0 0
    %2619 = vmatprep.subr.bf16.mxu0 0
    %2620 = vmatpush1.bf16.msra.mxu0 0
    %2621 = vmatprep.subr.bf16.mxu0 0
    %2622 = vmatpush1.bf16.msra.mxu0 0
    %2623 = vmatprep.subr.bf16.mxu0 0
    %2624 = vmatpush1.bf16.msra.mxu0 0
    %2625 = vmatprep.subr.bf16.mxu0 0
    %2626 = vmatpush1.bf16.msra.mxu0 0
    %2627 = vmatprep.mubr.bf16.mxu0 0
    %2628 = vmatmul.mubr.bf16.gmra.mrb[0].mxu0 %v2402
    %v2629 = vpop.f32.mrb[0].mxu0
    %v2630 = vadd.f32 0.0, %v2629
    %v2631 = vpop.f32.mrb[0].mxu0
    %v2632 = vadd.f32 0.0, %v2631
    %v2633 = vpop.f32.mrb[0].mxu0
    %v2634 = vadd.f32 0.0, %v2633
    %v2635 = vpop.f32.mrb[0].mxu0
    %v2636 = vadd.f32 0.0, %v2635
    %2637 = vdwg.mxu0
    %2638 = vmatprep.subr.bf16.mxu0 %v2534
    %2639 = vmatpush1.bf16.msra.mxu0 %v2533
    %2640 = vmatprep.subr.bf16.mxu0 %v2538
    %2641 = vmatpush1.bf16.msra.mxu0 %v2537
    %2642 = vmatprep.subr.bf16.mxu0 %v2542
    %2643 = vmatpush1.bf16.msra.mxu0 %v2541
    %2644 = vmatprep.subr.bf16.mxu0 %v2546
    %2645 = vmatpush1.bf16.msra.mxu0 %v2545
    %2646 = vmatprep.subr.bf16.mxu0 %v2550
    %2647 = vmatpush1.bf16.msra.mxu0 %v2549
    %2648 = vmatprep.subr.bf16.mxu0 %v2554
    %2649 = vmatpush1.bf16.msra.mxu0 %v2553
    %2650 = vmatprep.subr.bf16.mxu0 %v2558
    %2651 = vmatpush1.bf16.msra.mxu0 %v2557
    %2652 = vmatprep.subr.bf16.mxu0 %v2562
    %2653 = vmatpush1.bf16.msra.mxu0 %v2561
    %2654 = vmatprep.subr.bf16.mxu0 0
    %2655 = vmatpush1.bf16.msra.mxu0 0
    %2656 = vmatprep.subr.bf16.mxu0 0
    %2657 = vmatpush1.bf16.msra.mxu0 0
    %2658 = vmatprep.subr.bf16.mxu0 0
    %2659 = vmatpush1.bf16.msra.mxu0 0
    %2660 = vmatprep.subr.bf16.mxu0 0
    %2661 = vmatpush1.bf16.msra.mxu0 0
    %2662 = vmatprep.subr.bf16.mxu0 0
    %2663 = vmatpush1.bf16.msra.mxu0 0
    %2664 = vmatprep.subr.bf16.mxu0 0
    %2665 = vmatpush1.bf16.msra.mxu0 0
    %2666 = vmatprep.subr.bf16.mxu0 0
    %2667 = vmatpush1.bf16.msra.mxu0 0
    %2668 = vmatprep.subr.bf16.mxu0 0
    %2669 = vmatpush1.bf16.msra.mxu0 0
    %2670 = vmatprep.mubr.bf16.mxu0 0
    %2671 = vmatmul.mubr.bf16.gmra.mrb[0].mxu0 %v2402
    %v2672 = vpop.f32.mrb[0].mxu0
    %v2673 = vadd.f32 0.0, %v2672
    %v2674 = vpop.f32.mrb[0].mxu0
    %v2675 = vadd.f32 0.0, %v2674
    %v2676 = vpop.f32.mrb[0].mxu0
    %v2677 = vadd.f32 0.0, %v2676
    %v2678 = vpop.f32.mrb[0].mxu0
    %v2679 = vadd.f32 0.0, %v2678
    %2680 = vdwg.mxu0
    %v2681 = vadd.f32 %v2394, %v2630
    %v2682 = vadd.f32 %v2395, %v2632
    %v2683 = vadd.f32 %v2396, %v2673
    %v2684 = vadd.f32 %v2397, %v2675
    %v2685 = vadd.f32 %v2398, %v2634
    %v2686 = vadd.f32 %v2399, %v2636
    %v2687 = vadd.f32 %v2400, %v2677
    %v2688 = vadd.f32 %v2401, %v2679
    %v2689 = vxor.u32 %v2681, 2147483648
    %v2690 = vxor.u32 %v2685, 2147483648
    %v2691 = vmul.f32 %v2689, 1.442695
    %v2692 = vpow.pop %v2691
    %v2693 = vmul.f32 %v2690, 1.442695
    %v2694 = vpow.pop %v2693
    %v2695 = vadd.f32 %v2692, 1.0
    %v2696 = vadd.f32 %v2694, 1.0
    %v2697 = vrcp.pop %v2695
    %v2698 = vmul.f32 1.0, %v2697
    %v2699 = vrcp.pop %v2696
    %v2700 = vmul.f32 1.0, %v2699
    %v2701 = vxor.u32 %v2682, 2147483648
    %v2702 = vxor.u32 %v2686, 2147483648
    %v2703 = vmul.f32 %v2701, 1.442695
    %v2704 = vpow.pop %v2703
    %v2705 = vmul.f32 %v2702, 1.442695
    %v2706 = vpow.pop %v2705
    %v2707 = vadd.f32 %v2704, 1.0
    %v2708 = vadd.f32 %v2706, 1.0
    %v2709 = vrcp.pop %v2707
    %v2710 = vmul.f32 1.0, %v2709
    %v2711 = vrcp.pop %v2708
    %v2712 = vmul.f32 1.0, %v2711
    %v2713 = vtanh.pop %v2683
    %v2714 = vtanh.pop %v2687
    %v2715 = vxor.u32 %v2684, 2147483648
    %v2716 = vxor.u32 %v2688, 2147483648
    %v2717 = vmul.f32 %v2715, 1.442695
    %v2718 = vpow.pop %v2717
    %v2719 = vmul.f32 %v2716, 1.442695
    %v2720 = vpow.pop %v2719
    %v2721 = vadd.f32 %v2718, 1.0
    %v2722 = vadd.f32 %v2720, 1.0
    %v2723 = vrcp.pop %v2721
    %v2724 = vmul.f32 1.0, %v2723
    %v2725 = vrcp.pop %v2722
    %v2726 = vmul.f32 1.0, %v2725
    %v2727 = vmul.f32 %v2710, %v2384
    %v2728 = vmul.f32 %v2712, %v2385
    %v2729 = vmul.f32 %v2698, %v2713
    %v2730 = vmul.f32 %v2700, %v2714
    %v2731 = vadd.f32 %v2727, %v2729
    %v2732 = vadd.f32 %v2728, %v2730
    %v2733 = vtanh.pop %v2731
    %v2734 = vtanh.pop %v2732
    %v2735 = vmul.f32 %v2724, %v2733
    %v2736 = vmul.f32 %v2726, %v2734
    %s2737 = scalar_lea.vmem [#allocation5], 80
    %2738 = vst [vmem:[%s2737] sm:$0xff] %v2735
    %2739 = vst [vmem:[%s2737 + $0x8] sm:$0xff] %v2736
    %s2740 = scalar_lea.vmem [#allocation4], 384
    %v2741 = vld [vmem:[%s2740] sm:$0xff]
    %v2742 = vld [vmem:[%s2740 + $0x8] sm:$0xff]
    %v2743 = vld [vmem:[%s2740 + $0x10] sm:$0xff]
    %v2744 = vld [vmem:[%s2740 + $0x18] sm:$0xff]
    %v2745 = vld [vmem:[%s2740 + $0x20] sm:$0xff]
    %v2746 = vld [vmem:[%s2740 + $0x28] sm:$0xff]
    %v2747 = vld [vmem:[%s2740 + $0x30] sm:$0xff]
    %v2748 = vld [vmem:[%s2740 + $0x38] sm:$0xff]
    %v2749 = vpack.c.bf16 %v2736, %v2735
    %v2750 = vld [vmem:[#allocation11] sm:$0xff]
    %v2751 = vld [vmem:[#allocation11 + $0x8] sm:$0xff]
    %v2752 = vld [vmem:[#allocation11 + $0x10] sm:$0xff]
    %v2753 = vld [vmem:[#allocation11 + $0x18] sm:$0xff]
    %v2754 = vld [vmem:[#allocation11 + $0x20] sm:$0xff]
    %v2755 = vld [vmem:[#allocation11 + $0x28] sm:$0xff]
    %v2756 = vld [vmem:[#allocation11 + $0x30] sm:$0xff]
    %v2757 = vld [vmem:[#allocation11 + $0x38] sm:$0xff]
    %v2758 = vld [vmem:[#allocation11 + $0x40] sm:$0xff]
    %v2759 = vld [vmem:[#allocation11 + $0x48] sm:$0xff]
    %v2760 = vld [vmem:[#allocation11 + $0x50] sm:$0xff]
    %v2761 = vld [vmem:[#allocation11 + $0x58] sm:$0xff]
    %v2762 = vld [vmem:[#allocation11 + $0x60] sm:$0xff]
    %v2763 = vld [vmem:[#allocation11 + $0x68] sm:$0xff]
    %v2764 = vld [vmem:[#allocation11 + $0x70] sm:$0xff]
    %v2765 = vld [vmem:[#allocation11 + $0x78] sm:$0xff]
    %v2766 = vld [vmem:[#allocation11 + $0x80] sm:$0xff]
    %v2767 = vld [vmem:[#allocation11 + $0x88] sm:$0xff]
    %v2768 = vld [vmem:[#allocation11 + $0x90] sm:$0xff]
    %v2769 = vld [vmem:[#allocation11 + $0x98] sm:$0xff]
    %v2770 = vld [vmem:[#allocation11 + $0xa0] sm:$0xff]
    %v2771 = vld [vmem:[#allocation11 + $0xa8] sm:$0xff]
    %v2772 = vld [vmem:[#allocation11 + $0xb0] sm:$0xff]
    %v2773 = vld [vmem:[#allocation11 + $0xb8] sm:$0xff]
    %v2774 = vld [vmem:[#allocation11 + $0xc0] sm:$0xff]
    %v2775 = vld [vmem:[#allocation11 + $0xc8] sm:$0xff]
    %v2776 = vld [vmem:[#allocation11 + $0xd0] sm:$0xff]
    %v2777 = vld [vmem:[#allocation11 + $0xd8] sm:$0xff]
    %v2778 = vld [vmem:[#allocation11 + $0xe0] sm:$0xff]
    %v2779 = vld [vmem:[#allocation11 + $0xe8] sm:$0xff]
    %v2780 = vld [vmem:[#allocation11 + $0xf0] sm:$0xff]
    %v2781 = vld [vmem:[#allocation11 + $0xf8] sm:$0xff]
    %v2814 = vunpack.c.l.b16 %v2750
    %v2815 = vunpack.c.h.b16 %v2750
    %v2816 = vunpack.c.l.b16 %v2751
    %v2817 = vunpack.c.h.b16 %v2751
    %v2818 = vunpack.c.l.b16 %v2752
    %v2819 = vunpack.c.h.b16 %v2752
    %v2820 = vunpack.c.l.b16 %v2753
    %v2821 = vunpack.c.h.b16 %v2753
    %v2822 = vunpack.c.l.b16 %v2754
    %v2823 = vunpack.c.h.b16 %v2754
    %v2824 = vunpack.c.l.b16 %v2755
    %v2825 = vunpack.c.h.b16 %v2755
    %v2826 = vunpack.c.l.b16 %v2756
    %v2827 = vunpack.c.h.b16 %v2756
    %v2828 = vunpack.c.l.b16 %v2757
    %v2829 = vunpack.c.h.b16 %v2757
    %v2830 = vunpack.c.l.b16 %v2758
    %v2831 = vunpack.c.h.b16 %v2758
    %v2832 = vunpack.c.l.b16 %v2759
    %v2833 = vunpack.c.h.b16 %v2759
    %v2834 = vunpack.c.l.b16 %v2760
    %v2835 = vunpack.c.h.b16 %v2760
    %v2836 = vunpack.c.l.b16 %v2761
    %v2837 = vunpack.c.h.b16 %v2761
    %v2838 = vunpack.c.l.b16 %v2762
    %v2839 = vunpack.c.h.b16 %v2762
    %v2840 = vunpack.c.l.b16 %v2763
    %v2841 = vunpack.c.h.b16 %v2763
    %v2842 = vunpack.c.l.b16 %v2764
    %v2843 = vunpack.c.h.b16 %v2764
    %v2844 = vunpack.c.l.b16 %v2765
    %v2845 = vunpack.c.h.b16 %v2765
    %v2846 = vunpack.c.l.b16 %v2766
    %v2847 = vunpack.c.h.b16 %v2766
    %v2848 = vunpack.c.l.b16 %v2767
    %v2849 = vunpack.c.h.b16 %v2767
    %v2850 = vunpack.c.l.b16 %v2768
    %v2851 = vunpack.c.h.b16 %v2768
    %v2852 = vunpack.c.l.b16 %v2769
    %v2853 = vunpack.c.h.b16 %v2769
    %v2854 = vunpack.c.l.b16 %v2770
    %v2855 = vunpack.c.h.b16 %v2770
    %v2856 = vunpack.c.l.b16 %v2771
    %v2857 = vunpack.c.h.b16 %v2771
    %v2858 = vunpack.c.l.b16 %v2772
    %v2859 = vunpack.c.h.b16 %v2772
    %v2860 = vunpack.c.l.b16 %v2773
    %v2861 = vunpack.c.h.b16 %v2773
    %v2862 = vunpack.c.l.b16 %v2774
    %v2863 = vunpack.c.h.b16 %v2774
    %v2864 = vunpack.c.l.b16 %v2775
    %v2865 = vunpack.c.h.b16 %v2775
    %v2866 = vunpack.c.l.b16 %v2776
    %v2867 = vunpack.c.h.b16 %v2776
    %v2868 = vunpack.c.l.b16 %v2777
    %v2869 = vunpack.c.h.b16 %v2777
    %v2870 = vunpack.c.l.b16 %v2778
    %v2871 = vunpack.c.h.b16 %v2778
    %v2872 = vunpack.c.l.b16 %v2779
    %v2873 = vunpack.c.h.b16 %v2779
    %v2874 = vunpack.c.l.b16 %v2780
    %v2875 = vunpack.c.h.b16 %v2780
    %v2876 = vunpack.c.l.b16 %v2781
    %v2877 = vunpack.c.h.b16 %v2781
    %v2878 = vpack.c.b16 %v2818, %v2814
    %v2879 = vpack.c.b16 %v2819, %v2815
    %v2880 = vpack.c.b16 %v2820, %v2816
    %v2881 = vpack.c.b16 %v2821, %v2817
    %v2882 = vpack.c.b16 %v2826, %v2822
    %v2883 = vpack.c.b16 %v2827, %v2823
    %v2884 = vpack.c.b16 %v2828, %v2824
    %v2885 = vpack.c.b16 %v2829, %v2825
    %v2886 = vpack.c.b16 %v2834, %v2830
    %v2887 = vpack.c.b16 %v2835, %v2831
    %v2888 = vpack.c.b16 %v2836, %v2832
    %v2889 = vpack.c.b16 %v2837, %v2833
    %v2890 = vpack.c.b16 %v2842, %v2838
    %v2891 = vpack.c.b16 %v2843, %v2839
    %v2892 = vpack.c.b16 %v2844, %v2840
    %v2893 = vpack.c.b16 %v2845, %v2841
    %v2894 = vpack.c.b16 %v2850, %v2846
    %v2895 = vpack.c.b16 %v2851, %v2847
    %v2896 = vpack.c.b16 %v2852, %v2848
    %v2897 = vpack.c.b16 %v2853, %v2849
    %v2898 = vpack.c.b16 %v2858, %v2854
    %v2899 = vpack.c.b16 %v2859, %v2855
    %v2900 = vpack.c.b16 %v2860, %v2856
    %v2901 = vpack.c.b16 %v2861, %v2857
    %v2902 = vpack.c.b16 %v2866, %v2862
    %v2903 = vpack.c.b16 %v2867, %v2863
    %v2904 = vpack.c.b16 %v2868, %v2864
    %v2905 = vpack.c.b16 %v2869, %v2865
    %v2906 = vpack.c.b16 %v2874, %v2870
    %v2907 = vpack.c.b16 %v2875, %v2871
    %v2908 = vpack.c.b16 %v2876, %v2872
    %v2909 = vpack.c.b16 %v2877, %v2873
    %2942 = vmatprep.subr.bf16.mxu0 %v2879
    %2943 = vmatpush1.bf16.msra.mxu0 %v2878
    %2944 = vmatprep.subr.bf16.mxu0 %v2883
    %2945 = vmatpush1.bf16.msra.mxu0 %v2882
    %2946 = vmatprep.subr.bf16.mxu0 %v2887
    %2947 = vmatpush1.bf16.msra.mxu0 %v2886
    %2948 = vmatprep.subr.bf16.mxu0 %v2891
    %2949 = vmatpush1.bf16.msra.mxu0 %v2890
    %2950 = vmatprep.subr.bf16.mxu0 %v2895
    %2951 = vmatpush1.bf16.msra.mxu0 %v2894
    %2952 = vmatprep.subr.bf16.mxu0 %v2899
    %2953 = vmatpush1.bf16.msra.mxu0 %v2898
    %2954 = vmatprep.subr.bf16.mxu0 %v2903
    %2955 = vmatpush1.bf16.msra.mxu0 %v2902
    %2956 = vmatprep.subr.bf16.mxu0 %v2907
    %2957 = vmatpush1.bf16.msra.mxu0 %v2906
    %2958 = vmatprep.subr.bf16.mxu0 0
    %2959 = vmatpush1.bf16.msra.mxu0 0
    %2960 = vmatprep.subr.bf16.mxu0 0
    %2961 = vmatpush1.bf16.msra.mxu0 0
    %2962 = vmatprep.subr.bf16.mxu0 0
    %2963 = vmatpush1.bf16.msra.mxu0 0
    %2964 = vmatprep.subr.bf16.mxu0 0
    %2965 = vmatpush1.bf16.msra.mxu0 0
    %2966 = vmatprep.subr.bf16.mxu0 0
    %2967 = vmatpush1.bf16.msra.mxu0 0
    %2968 = vmatprep.subr.bf16.mxu0 0
    %2969 = vmatpush1.bf16.msra.mxu0 0
    %2970 = vmatprep.subr.bf16.mxu0 0
    %2971 = vmatpush1.bf16.msra.mxu0 0
    %2972 = vmatprep.subr.bf16.mxu0 0
    %2973 = vmatpush1.bf16.msra.mxu0 0
    %2974 = vmatprep.mubr.bf16.mxu0 0
    %2975 = vmatmul.mubr.bf16.gmra.mrb[0].mxu0 %v2749
    %v2976 = vpop.f32.mrb[0].mxu0
    %v2977 = vadd.f32 0.0, %v2976
    %v2978 = vpop.f32.mrb[0].mxu0
    %v2979 = vadd.f32 0.0, %v2978
    %v2980 = vpop.f32.mrb[0].mxu0
    %v2981 = vadd.f32 0.0, %v2980
    %v2982 = vpop.f32.mrb[0].mxu0
    %v2983 = vadd.f32 0.0, %v2982
    %2984 = vdwg.mxu0
    %2985 = vmatprep.subr.bf16.mxu0 %v2881
    %2986 = vmatpush1.bf16.msra.mxu0 %v2880
    %2987 = vmatprep.subr.bf16.mxu0 %v2885
    %2988 = vmatpush1.bf16.msra.mxu0 %v2884
    %2989 = vmatprep.subr.bf16.mxu0 %v2889
    %2990 = vmatpush1.bf16.msra.mxu0 %v2888
    %2991 = vmatprep.subr.bf16.mxu0 %v2893
    %2992 = vmatpush1.bf16.msra.mxu0 %v2892
    %2993 = vmatprep.subr.bf16.mxu0 %v2897
    %2994 = vmatpush1.bf16.msra.mxu0 %v2896
    %2995 = vmatprep.subr.bf16.mxu0 %v2901
    %2996 = vmatpush1.bf16.msra.mxu0 %v2900
    %2997 = vmatprep.subr.bf16.mxu0 %v2905
    %2998 = vmatpush1.bf16.msra.mxu0 %v2904
    %2999 = vmatprep.subr.bf16.mxu0 %v2909
    %3000 = vmatpush1.bf16.msra.mxu0 %v2908
    %3001 = vmatprep.subr.bf16.mxu0 0
    %3002 = vmatpush1.bf16.msra.mxu0 0
    %3003 = vmatprep.subr.bf16.mxu0 0
    %3004 = vmatpush1.bf16.msra.mxu0 0
    %3005 = vmatprep.subr.bf16.mxu0 0
    %3006 = vmatpush1.bf16.msra.mxu0 0
    %3007 = vmatprep.subr.bf16.mxu0 0
    %3008 = vmatpush1.bf16.msra.mxu0 0
    %3009 = vmatprep.subr.bf16.mxu0 0
    %3010 = vmatpush1.bf16.msra.mxu0 0
    %3011 = vmatprep.subr.bf16.mxu0 0
    %3012 = vmatpush1.bf16.msra.mxu0 0
    %3013 = vmatprep.subr.bf16.mxu0 0
    %3014 = vmatpush1.bf16.msra.mxu0 0
    %3015 = vmatprep.subr.bf16.mxu0 0
    %3016 = vmatpush1.bf16.msra.mxu0 0
    %3017 = vmatprep.mubr.bf16.mxu0 0
    %3018 = vmatmul.mubr.bf16.gmra.mrb[0].mxu0 %v2749
    %v3019 = vpop.f32.mrb[0].mxu0
    %v3020 = vadd.f32 0.0, %v3019
    %v3021 = vpop.f32.mrb[0].mxu0
    %v3022 = vadd.f32 0.0, %v3021
    %v3023 = vpop.f32.mrb[0].mxu0
    %v3024 = vadd.f32 0.0, %v3023
    %v3025 = vpop.f32.mrb[0].mxu0
    %v3026 = vadd.f32 0.0, %v3025
    %3027 = vdwg.mxu0
    %v3028 = vadd.f32 %v2741, %v2977
    %v3029 = vadd.f32 %v2742, %v2979
    %v3030 = vadd.f32 %v2743, %v3020
    %v3031 = vadd.f32 %v2744, %v3022
    %v3032 = vadd.f32 %v2745, %v2981
    %v3033 = vadd.f32 %v2746, %v2983
    %v3034 = vadd.f32 %v2747, %v3024
    %v3035 = vadd.f32 %v2748, %v3026
    %v3036 = vxor.u32 %v3028, 2147483648
    %v3037 = vxor.u32 %v3032, 2147483648
    %v3038 = vmul.f32 %v3036, 1.442695
    %v3039 = vpow.pop %v3038
    %v3040 = vmul.f32 %v3037, 1.442695
    %v3041 = vpow.pop %v3040
    %v3042 = vadd.f32 %v3039, 1.0
    %v3043 = vadd.f32 %v3041, 1.0
    %v3044 = vrcp.pop %v3042
    %v3045 = vmul.f32 1.0, %v3044
    %v3046 = vrcp.pop %v3043
    %v3047 = vmul.f32 1.0, %v3046
    %v3048 = vxor.u32 %v3029, 2147483648
    %v3049 = vxor.u32 %v3033, 2147483648
    %v3050 = vmul.f32 %v3048, 1.442695
    %v3051 = vpow.pop %v3050
    %v3052 = vmul.f32 %v3049, 1.442695
    %v3053 = vpow.pop %v3052
    %v3054 = vadd.f32 %v3051, 1.0
    %v3055 = vadd.f32 %v3053, 1.0
    %v3056 = vrcp.pop %v3054
    %v3057 = vmul.f32 1.0, %v3056
    %v3058 = vrcp.pop %v3055
    %v3059 = vmul.f32 1.0, %v3058
    %v3060 = vtanh.pop %v3030
    %v3061 = vtanh.pop %v3034
    %v3062 = vxor.u32 %v3031, 2147483648
    %v3063 = vxor.u32 %v3035, 2147483648
    %v3064 = vmul.f32 %v3062, 1.442695
    %v3065 = vpow.pop %v3064
    %v3066 = vmul.f32 %v3063, 1.442695
    %v3067 = vpow.pop %v3066
    %v3068 = vadd.f32 %v3065, 1.0
    %v3069 = vadd.f32 %v3067, 1.0
    %v3070 = vrcp.pop %v3068
    %v3071 = vmul.f32 1.0, %v3070
    %v3072 = vrcp.pop %v3069
    %v3073 = vmul.f32 1.0, %v3072
    %v3074 = vmul.f32 %v3057, %v2731
    %v3075 = vmul.f32 %v3059, %v2732
    %v3076 = vmul.f32 %v3045, %v3060
    %v3077 = vmul.f32 %v3047, %v3061
    %v3078 = vadd.f32 %v3074, %v3076
    %v3079 = vadd.f32 %v3075, %v3077
    %v3080 = vtanh.pop %v3078
    %v3081 = vtanh.pop %v3079
    %v3082 = vmul.f32 %v3071, %v3080
    %v3083 = vmul.f32 %v3073, %v3081
    %s3084 = scalar_lea.vmem [#allocation5], 96
    %3085 = vst [vmem:[%s3084] sm:$0xff] %v3082
    %3086 = vst [vmem:[%s3084 + $0x8] sm:$0xff] %v3083
    %s3087 = scalar_lea.vmem [#allocation4], 448
    %v3088 = vld [vmem:[%s3087] sm:$0xff]
    %v3089 = vld [vmem:[%s3087 + $0x8] sm:$0xff]
    %v3090 = vld [vmem:[%s3087 + $0x10] sm:$0xff]
    %v3091 = vld [vmem:[%s3087 + $0x18] sm:$0xff]
    %v3092 = vld [vmem:[%s3087 + $0x20] sm:$0xff]
    %v3093 = vld [vmem:[%s3087 + $0x28] sm:$0xff]
    %v3094 = vld [vmem:[%s3087 + $0x30] sm:$0xff]
    %v3095 = vld [vmem:[%s3087 + $0x38] sm:$0xff]
    %v3096 = vpack.c.bf16 %v3083, %v3082
    %v3097 = vld [vmem:[#allocation11] sm:$0xff]
    %v3098 = vld [vmem:[#allocation11 + $0x8] sm:$0xff]
    %v3099 = vld [vmem:[#allocation11 + $0x10] sm:$0xff]
    %v3100 = vld [vmem:[#allocation11 + $0x18] sm:$0xff]
    %v3101 = vld [vmem:[#allocation11 + $0x20] sm:$0xff]
    %v3102 = vld [vmem:[#allocation11 + $0x28] sm:$0xff]
    %v3103 = vld [vmem:[#allocation11 + $0x30] sm:$0xff]
    %v3104 = vld [vmem:[#allocation11 + $0x38] sm:$0xff]
    %v3105 = vld [vmem:[#allocation11 + $0x40] sm:$0xff]
    %v3106 = vld [vmem:[#allocation11 + $0x48] sm:$0xff]
    %v3107 = vld [vmem:[#allocation11 + $0x50] sm:$0xff]
    %v3108 = vld [vmem:[#allocation11 + $0x58] sm:$0xff]
    %v3109 = vld [vmem:[#allocation11 + $0x60] sm:$0xff]
    %v3110 = vld [vmem:[#allocation11 + $0x68] sm:$0xff]
    %v3111 = vld [vmem:[#allocation11 + $0x70] sm:$0xff]
    %v3112 = vld [vmem:[#allocation11 + $0x78] sm:$0xff]
    %v3113 = vld [vmem:[#allocation11 + $0x80] sm:$0xff]
    %v3114 = vld [vmem:[#allocation11 + $0x88] sm:$0xff]
    %v3115 = vld [vmem:[#allocation11 + $0x90] sm:$0xff]
    %v3116 = vld [vmem:[#allocation11 + $0x98] sm:$0xff]
    %v3117 = vld [vmem:[#allocation11 + $0xa0] sm:$0xff]
    %v3118 = vld [vmem:[#allocation11 + $0xa8] sm:$0xff]
    %v3119 = vld [vmem:[#allocation11 + $0xb0] sm:$0xff]
    %v3120 = vld [vmem:[#allocation11 + $0xb8] sm:$0xff]
    %v3121 = vld [vmem:[#allocation11 + $0xc0] sm:$0xff]
    %v3122 = vld [vmem:[#allocation11 + $0xc8] sm:$0xff]
    %v3123 = vld [vmem:[#allocation11 + $0xd0] sm:$0xff]
    %v3124 = vld [vmem:[#allocation11 + $0xd8] sm:$0xff]
    %v3125 = vld [vmem:[#allocation11 + $0xe0] sm:$0xff]
    %v3126 = vld [vmem:[#allocation11 + $0xe8] sm:$0xff]
    %v3127 = vld [vmem:[#allocation11 + $0xf0] sm:$0xff]
    %v3128 = vld [vmem:[#allocation11 + $0xf8] sm:$0xff]
    %v3161 = vunpack.c.l.b16 %v3097
    %v3162 = vunpack.c.h.b16 %v3097
    %v3163 = vunpack.c.l.b16 %v3098
    %v3164 = vunpack.c.h.b16 %v3098
    %v3165 = vunpack.c.l.b16 %v3099
    %v3166 = vunpack.c.h.b16 %v3099
    %v3167 = vunpack.c.l.b16 %v3100
    %v3168 = vunpack.c.h.b16 %v3100
    %v3169 = vunpack.c.l.b16 %v3101
    %v3170 = vunpack.c.h.b16 %v3101
    %v3171 = vunpack.c.l.b16 %v3102
    %v3172 = vunpack.c.h.b16 %v3102
    %v3173 = vunpack.c.l.b16 %v3103
    %v3174 = vunpack.c.h.b16 %v3103
    %v3175 = vunpack.c.l.b16 %v3104
    %v3176 = vunpack.c.h.b16 %v3104
    %v3177 = vunpack.c.l.b16 %v3105
    %v3178 = vunpack.c.h.b16 %v3105
    %v3179 = vunpack.c.l.b16 %v3106
    %v3180 = vunpack.c.h.b16 %v3106
    %v3181 = vunpack.c.l.b16 %v3107
    %v3182 = vunpack.c.h.b16 %v3107
    %v3183 = vunpack.c.l.b16 %v3108
    %v3184 = vunpack.c.h.b16 %v3108
    %v3185 = vunpack.c.l.b16 %v3109
    %v3186 = vunpack.c.h.b16 %v3109
    %v3187 = vunpack.c.l.b16 %v3110
    %v3188 = vunpack.c.h.b16 %v3110
    %v3189 = vunpack.c.l.b16 %v3111
    %v3190 = vunpack.c.h.b16 %v3111
    %v3191 = vunpack.c.l.b16 %v3112
    %v3192 = vunpack.c.h.b16 %v3112
    %v3193 = vunpack.c.l.b16 %v3113
    %v3194 = vunpack.c.h.b16 %v3113
    %v3195 = vunpack.c.l.b16 %v3114
    %v3196 = vunpack.c.h.b16 %v3114
    %v3197 = vunpack.c.l.b16 %v3115
    %v3198 = vunpack.c.h.b16 %v3115
    %v3199 = vunpack.c.l.b16 %v3116
    %v3200 = vunpack.c.h.b16 %v3116
    %v3201 = vunpack.c.l.b16 %v3117
    %v3202 = vunpack.c.h.b16 %v3117
    %v3203 = vunpack.c.l.b16 %v3118
    %v3204 = vunpack.c.h.b16 %v3118
    %v3205 = vunpack.c.l.b16 %v3119
    %v3206 = vunpack.c.h.b16 %v3119
    %v3207 = vunpack.c.l.b16 %v3120
    %v3208 = vunpack.c.h.b16 %v3120
    %v3209 = vunpack.c.l.b16 %v3121
    %v3210 = vunpack.c.h.b16 %v3121
    %v3211 = vunpack.c.l.b16 %v3122
    %v3212 = vunpack.c.h.b16 %v3122
    %v3213 = vunpack.c.l.b16 %v3123
    %v3214 = vunpack.c.h.b16 %v3123
    %v3215 = vunpack.c.l.b16 %v3124
    %v3216 = vunpack.c.h.b16 %v3124
    %v3217 = vunpack.c.l.b16 %v3125
    %v3218 = vunpack.c.h.b16 %v3125
    %v3219 = vunpack.c.l.b16 %v3126
    %v3220 = vunpack.c.h.b16 %v3126
    %v3221 = vunpack.c.l.b16 %v3127
    %v3222 = vunpack.c.h.b16 %v3127
    %v3223 = vunpack.c.l.b16 %v3128
    %v3224 = vunpack.c.h.b16 %v3128
    %v3225 = vpack.c.b16 %v3165, %v3161
    %v3226 = vpack.c.b16 %v3166, %v3162
    %v3227 = vpack.c.b16 %v3167, %v3163
    %v3228 = vpack.c.b16 %v3168, %v3164
    %v3229 = vpack.c.b16 %v3173, %v3169
    %v3230 = vpack.c.b16 %v3174, %v3170
    %v3231 = vpack.c.b16 %v3175, %v3171
    %v3232 = vpack.c.b16 %v3176, %v3172
    %v3233 = vpack.c.b16 %v3181, %v3177
    %v3234 = vpack.c.b16 %v3182, %v3178
    %v3235 = vpack.c.b16 %v3183, %v3179
    %v3236 = vpack.c.b16 %v3184, %v3180
    %v3237 = vpack.c.b16 %v3189, %v3185
    %v3238 = vpack.c.b16 %v3190, %v3186
    %v3239 = vpack.c.b16 %v3191, %v3187
    %v3240 = vpack.c.b16 %v3192, %v3188
    %v3241 = vpack.c.b16 %v3197, %v3193
    %v3242 = vpack.c.b16 %v3198, %v3194
    %v3243 = vpack.c.b16 %v3199, %v3195
    %v3244 = vpack.c.b16 %v3200, %v3196
    %v3245 = vpack.c.b16 %v3205, %v3201
    %v3246 = vpack.c.b16 %v3206, %v3202
    %v3247 = vpack.c.b16 %v3207, %v3203
    %v3248 = vpack.c.b16 %v3208, %v3204
    %v3249 = vpack.c.b16 %v3213, %v3209
    %v3250 = vpack.c.b16 %v3214, %v3210
    %v3251 = vpack.c.b16 %v3215, %v3211
    %v3252 = vpack.c.b16 %v3216, %v3212
    %v3253 = vpack.c.b16 %v3221, %v3217
    %v3254 = vpack.c.b16 %v3222, %v3218
    %v3255 = vpack.c.b16 %v3223, %v3219
    %v3256 = vpack.c.b16 %v3224, %v3220
    %3289 = vmatprep.subr.bf16.mxu0 %v3226
    %3290 = vmatpush1.bf16.msra.mxu0 %v3225
    %3291 = vmatprep.subr.bf16.mxu0 %v3230
    %3292 = vmatpush1.bf16.msra.mxu0 %v3229
    %3293 = vmatprep.subr.bf16.mxu0 %v3234
    %3294 = vmatpush1.bf16.msra.mxu0 %v3233
    %3295 = vmatprep.subr.bf16.mxu0 %v3238
    %3296 = vmatpush1.bf16.msra.mxu0 %v3237
    %3297 = vmatprep.subr.bf16.mxu0 %v3242
    %3298 = vmatpush1.bf16.msra.mxu0 %v3241
    %3299 = vmatprep.subr.bf16.mxu0 %v3246
    %3300 = vmatpush1.bf16.msra.mxu0 %v3245
    %3301 = vmatprep.subr.bf16.mxu0 %v3250
    %3302 = vmatpush1.bf16.msra.mxu0 %v3249
    %3303 = vmatprep.subr.bf16.mxu0 %v3254
    %3304 = vmatpush1.bf16.msra.mxu0 %v3253
    %3305 = vmatprep.subr.bf16.mxu0 0
    %3306 = vmatpush1.bf16.msra.mxu0 0
    %3307 = vmatprep.subr.bf16.mxu0 0
    %3308 = vmatpush1.bf16.msra.mxu0 0
    %3309 = vmatprep.subr.bf16.mxu0 0
    %3310 = vmatpush1.bf16.msra.mxu0 0
    %3311 = vmatprep.subr.bf16.mxu0 0
    %3312 = vmatpush1.bf16.msra.mxu0 0
    %3313 = vmatprep.subr.bf16.mxu0 0
    %3314 = vmatpush1.bf16.msra.mxu0 0
    %3315 = vmatprep.subr.bf16.mxu0 0
    %3316 = vmatpush1.bf16.msra.mxu0 0
    %3317 = vmatprep.subr.bf16.mxu0 0
    %3318 = vmatpush1.bf16.msra.mxu0 0
    %3319 = vmatprep.subr.bf16.mxu0 0
    %3320 = vmatpush1.bf16.msra.mxu0 0
    %3321 = vmatprep.mubr.bf16.mxu0 0
    %3322 = vmatmul.mubr.bf16.gmra.mrb[0].mxu0 %v3096
    %v3323 = vpop.f32.mrb[0].mxu0
    %v3324 = vadd.f32 0.0, %v3323
    %v3325 = vpop.f32.mrb[0].mxu0
    %v3326 = vadd.f32 0.0, %v3325
    %v3327 = vpop.f32.mrb[0].mxu0
    %v3328 = vadd.f32 0.0, %v3327
    %v3329 = vpop.f32.mrb[0].mxu0
    %v3330 = vadd.f32 0.0, %v3329
    %3331 = vdwg.mxu0
    %3332 = vmatprep.subr.bf16.mxu0 %v3228
    %3333 = vmatpush1.bf16.msra.mxu0 %v3227
    %3334 = vmatprep.subr.bf16.mxu0 %v3232
    %3335 = vmatpush1.bf16.msra.mxu0 %v3231
    %3336 = vmatprep.subr.bf16.mxu0 %v3236
    %3337 = vmatpush1.bf16.msra.mxu0 %v3235
    %3338 = vmatprep.subr.bf16.mxu0 %v3240
    %3339 = vmatpush1.bf16.msra.mxu0 %v3239
    %3340 = vmatprep.subr.bf16.mxu0 %v3244
    %3341 = vmatpush1.bf16.msra.mxu0 %v3243
    %3342 = vmatprep.subr.bf16.mxu0 %v3248
    %3343 = vmatpush1.bf16.msra.mxu0 %v3247
    %3344 = vmatprep.subr.bf16.mxu0 %v3252
    %3345 = vmatpush1.bf16.msra.mxu0 %v3251
    %3346 = vmatprep.subr.bf16.mxu0 %v3256
    %3347 = vmatpush1.bf16.msra.mxu0 %v3255
    %3348 = vmatprep.subr.bf16.mxu0 0
    %3349 = vmatpush1.bf16.msra.mxu0 0
    %3350 = vmatprep.subr.bf16.mxu0 0
    %3351 = vmatpush1.bf16.msra.mxu0 0
    %3352 = vmatprep.subr.bf16.mxu0 0
    %3353 = vmatpush1.bf16.msra.mxu0 0
    %3354 = vmatprep.subr.bf16.mxu0 0
    %3355 = vmatpush1.bf16.msra.mxu0 0
    %3356 = vmatprep.subr.bf16.mxu0 0
    %3357 = vmatpush1.bf16.msra.mxu0 0
    %3358 = vmatprep.subr.bf16.mxu0 0
    %3359 = vmatpush1.bf16.msra.mxu0 0
    %3360 = vmatprep.subr.bf16.mxu0 0
    %3361 = vmatpush1.bf16.msra.mxu0 0
    %3362 = vmatprep.subr.bf16.mxu0 0
    %3363 = vmatpush1.bf16.msra.mxu0 0
    %3364 = vmatprep.mubr.bf16.mxu0 0
    %3365 = vmatmul.mubr.bf16.gmra.mrb[0].mxu0 %v3096
    %v3366 = vpop.f32.mrb[0].mxu0
    %v3367 = vadd.f32 0.0, %v3366
    %v3368 = vpop.f32.mrb[0].mxu0
    %v3369 = vadd.f32 0.0, %v3368
    %v3370 = vpop.f32.mrb[0].mxu0
    %v3371 = vadd.f32 0.0, %v3370
    %v3372 = vpop.f32.mrb[0].mxu0
    %v3373 = vadd.f32 0.0, %v3372
    %3374 = vdwg.mxu0
    %v3375 = vadd.f32 %v3088, %v3324
    %v3376 = vadd.f32 %v3089, %v3326
    %v3377 = vadd.f32 %v3090, %v3367
    %v3378 = vadd.f32 %v3091, %v3369
    %v3379 = vadd.f32 %v3092, %v3328
    %v3380 = vadd.f32 %v3093, %v3330
    %v3381 = vadd.f32 %v3094, %v3371
    %v3382 = vadd.f32 %v3095, %v3373
    %v3383 = vxor.u32 %v3375, 2147483648
    %v3384 = vxor.u32 %v3379, 2147483648
    %v3385 = vmul.f32 %v3383, 1.442695
    %v3386 = vpow.pop %v3385
    %v3387 = vmul.f32 %v3384, 1.442695
    %v3388 = vpow.pop %v3387
    %v3389 = vadd.f32 %v3386, 1.0
    %v3390 = vadd.f32 %v3388, 1.0
    %v3391 = vrcp.pop %v3389
    %v3392 = vmul.f32 1.0, %v3391
    %v3393 = vrcp.pop %v3390
    %v3394 = vmul.f32 1.0, %v3393
    %v3395 = vxor.u32 %v3376, 2147483648
    %v3396 = vxor.u32 %v3380, 2147483648
    %v3397 = vmul.f32 %v3395, 1.442695
    %v3398 = vpow.pop %v3397
    %v3399 = vmul.f32 %v3396, 1.442695
    %v3400 = vpow.pop %v3399
    %v3401 = vadd.f32 %v3398, 1.0
    %v3402 = vadd.f32 %v3400, 1.0
    %v3403 = vrcp.pop %v3401
    %v3404 = vmul.f32 1.0, %v3403
    %v3405 = vrcp.pop %v3402
    %v3406 = vmul.f32 1.0, %v3405
    %v3407 = vtanh.pop %v3377
    %v3408 = vtanh.pop %v3381
    %v3409 = vxor.u32 %v3378, 2147483648
    %v3410 = vxor.u32 %v3382, 2147483648
    %v3411 = vmul.f32 %v3409, 1.442695
    %v3412 = vpow.pop %v3411
    %v3413 = vmul.f32 %v3410, 1.442695
    %v3414 = vpow.pop %v3413
    %v3415 = vadd.f32 %v3412, 1.0
    %v3416 = vadd.f32 %v3414, 1.0
    %v3417 = vrcp.pop %v3415
    %v3418 = vmul.f32 1.0, %v3417
    %v3419 = vrcp.pop %v3416
    %v3420 = vmul.f32 1.0, %v3419
    %v3421 = vmul.f32 %v3404, %v3078
    %v3422 = vmul.f32 %v3406, %v3079
    %v3423 = vmul.f32 %v3392, %v3407
    %v3424 = vmul.f32 %v3394, %v3408
    %v3425 = vadd.f32 %v3421, %v3423
    %v3426 = vadd.f32 %v3422, %v3424
    %v3427 = vtanh.pop %v3425
    %v3428 = vtanh.pop %v3426
    %v3429 = vmul.f32 %v3418, %v3427
    %v3430 = vmul.f32 %v3420, %v3428
    %s3431 = scalar_lea.vmem [#allocation5], 112
    %3432 = vst [vmem:[%s3431] sm:$0xff] %v3429
    %3433 = vst [vmem:[%s3431 + $0x8] sm:$0xff] %v3430
    %3434 = vst [vmem:[#allocation2] sm:$0xff] %v3429
    %3435 = vst [vmem:[#allocation2 + $0x8] sm:$0xff] %v3430
    %3436 = vst [vmem:[#allocation3] sm:$0xff] %v3425
    %3437 = vst [vmem:[#allocation3 + $0x8] sm:$0xff] %v3426
    %v3438 = vld [vmem:[#allocation5] sm:$0xff]
    %v3439 = vld [vmem:[#allocation5 + $0x8] sm:$0xff]
    %v3440 = vld [vmem:[#allocation5 + $0x10] sm:$0xff]
    %v3441 = vld [vmem:[#allocation5 + $0x18] sm:$0xff]
    %v3442 = vld [vmem:[#allocation5 + $0x20] sm:$0xff]
    %v3443 = vld [vmem:[#allocation5 + $0x28] sm:$0xff]
    %v3444 = vld [vmem:[#allocation5 + $0x30] sm:$0xff]
    %v3445 = vld [vmem:[#allocation5 + $0x38] sm:$0xff]
    %v3446 = vld [vmem:[#allocation5 + $0x40] sm:$0xff]
    %v3447 = vld [vmem:[#allocation5 + $0x48] sm:$0xff]
    %v3448 = vld [vmem:[#allocation5 + $0x50] sm:$0xff]
    %v3449 = vld [vmem:[#allocation5 + $0x58] sm:$0xff]
    %v3450 = vld [vmem:[#allocation5 + $0x60] sm:$0xff]
    %v3451 = vld [vmem:[#allocation5 + $0x68] sm:$0xff]
    %v3452 = vld [vmem:[#allocation5 + $0x70] sm:$0xff]
    %v3453 = vld [vmem:[#allocation5 + $0x78] sm:$0xff]
    %v3454 = vpack.c.bf16 %v3439, %v3438
    %v3455 = vpack.c.bf16 %v3441, %v3440
    %v3456 = vpack.c.bf16 %v3443, %v3442
    %v3457 = vpack.c.bf16 %v3445, %v3444
    %v3458 = vpack.c.bf16 %v3447, %v3446
    %v3459 = vpack.c.bf16 %v3449, %v3448
    %v3460 = vpack.c.bf16 %v3451, %v3450
    %v3461 = vpack.c.bf16 %v3453, %v3452
    %v3462 = vld [vmem:[#allocation12] sm:$0xf]
    %v3463 = vld [vmem:[#allocation12 + $0x4] sm:$0xf]
    %v3464 = vld [vmem:[#allocation12 + $0x8] sm:$0xf]
    %v3465 = vld [vmem:[#allocation12 + $0xc] sm:$0xf]
    %v3466 = vld [vmem:[#allocation12 + $0x10] sm:$0xf]
    %v3467 = vld [vmem:[#allocation12 + $0x14] sm:$0xf]
    %v3468 = vld [vmem:[#allocation12 + $0x18] sm:$0xf]
    %v3469 = vld [vmem:[#allocation12 + $0x1c] sm:$0xf]
    %v3470 = vld [vmem:[#allocation12 + $0x20] sm:$0xf]
    %v3471 = vld [vmem:[#allocation12 + $0x24] sm:$0xf]
    %v3472 = vld [vmem:[#allocation12 + $0x28] sm:$0xf]
    %v3473 = vld [vmem:[#allocation12 + $0x2c] sm:$0xf]
    %v3474 = vld [vmem:[#allocation12 + $0x30] sm:$0xf]
    %v3475 = vld [vmem:[#allocation12 + $0x34] sm:$0xf]
    %v3476 = vld [vmem:[#allocation12 + $0x38] sm:$0xf]
    %v3477 = vld [vmem:[#allocation12 + $0x3c] sm:$0xf]
    %v3478 = vld [vmem:[%s5] sm:$0x1]
    %v3480 = vlaneseq
    %v3481 = vshrl.u32 %v3480, 7
    %v3482 = vsub.s32 0, %v3481
    %v3483 = vrot.slane %v3478, %v3482
    %v3501 = vunpack.c.l.b16 %v3462
    %v3502 = vunpack.c.l.b16 %v3463
    %v3503 = vunpack.c.l.b16 %v3464
    %v3504 = vunpack.c.l.b16 %v3465
    %v3505 = vunpack.c.l.b16 %v3466
    %v3506 = vunpack.c.l.b16 %v3467
    %v3507 = vunpack.c.l.b16 %v3468
    %v3508 = vunpack.c.l.b16 %v3469
    %v3509 = vunpack.c.l.b16 %v3470
    %v3510 = vunpack.c.l.b16 %v3471
    %v3511 = vunpack.c.l.b16 %v3472
    %v3512 = vunpack.c.l.b16 %v3473
    %v3513 = vunpack.c.l.b16 %v3474
    %v3514 = vunpack.c.l.b16 %v3475
    %v3515 = vunpack.c.l.b16 %v3476
    %v3516 = vunpack.c.l.b16 %v3477
    %v3517 = vpack.c.b16 %v3502, %v3501
    %v3518 = vpack.c.b16 %v3504, %v3503
    %v3519 = vpack.c.b16 %v3506, %v3505
    %v3520 = vpack.c.b16 %v3508, %v3507
    %v3521 = vpack.c.b16 %v3510, %v3509
    %v3522 = vpack.c.b16 %v3512, %v3511
    %v3523 = vpack.c.b16 %v3514, %v3513
    %v3524 = vpack.c.b16 %v3516, %v3515
    %3533 = vmatprep.subr.bf16.mxu0 0
    %3534 = vmatpush1.bf16.msra.mxu0 %v3517
    %3535 = vmatprep.subr.bf16.mxu0 0
    %3536 = vmatpush1.bf16.msra.mxu0 %v3518
    %3537 = vmatprep.subr.bf16.mxu0 0
    %3538 = vmatpush1.bf16.msra.mxu0 %v3519
    %3539 = vmatprep.subr.bf16.mxu0 0
    %3540 = vmatpush1.bf16.msra.mxu0 %v3520
    %3541 = vmatprep.subr.bf16.mxu0 0
    %3542 = vmatpush1.bf16.msra.mxu0 %v3521
    %3543 = vmatprep.subr.bf16.mxu0 0
    %3544 = vmatpush1.bf16.msra.mxu0 %v3522
    %3545 = vmatprep.subr.bf16.mxu0 0
    %3546 = vmatpush1.bf16.msra.mxu0 %v3523
    %3547 = vmatprep.subr.bf16.mxu0 0
    %3548 = vmatpush1.bf16.msra.mxu0 %v3524
    %3549 = vmatprep.subr.bf16.mxu0 0
    %3550 = vmatpush1.bf16.msra.mxu0 0
    %3551 = vmatprep.subr.bf16.mxu0 0
    %3552 = vmatpush1.bf16.msra.mxu0 0
    %3553 = vmatprep.subr.bf16.mxu0 0
    %3554 = vmatpush1.bf16.msra.mxu0 0
    %3555 = vmatprep.subr.bf16.mxu0 0
    %3556 = vmatpush1.bf16.msra.mxu0 0
    %3557 = vmatprep.subr.bf16.mxu0 0
    %3558 = vmatpush1.bf16.msra.mxu0 0
    %3559 = vmatprep.subr.bf16.mxu0 0
    %3560 = vmatpush1.bf16.msra.mxu0 0
    %3561 = vmatprep.subr.bf16.mxu0 0
    %3562 = vmatpush1.bf16.msra.mxu0 0
    %3563 = vmatprep.subr.bf16.mxu0 0
    %3564 = vmatpush1.bf16.msra.mxu0 0
    %3565 = vmatprep.mubr.bf16.mxu0 0
    %3566 = vmatmul.mubr.bf16.gmra.mrb[0].mxu0 %v3454
    %v3567 = vpop.f32.mrb[0].mxu0
    %v3568 = vadd.f32 %v3483, %v3567
    %v3569 = vpop.f32.mrb[0].mxu0
    %v3570 = vpop.f32.mrb[0].mxu0
    %v3571 = vadd.f32 %v3483, %v3570
    %v3572 = vpop.f32.mrb[0].mxu0
    %3573 = vmatprep.mubr.bf16.mxu0 0
    %3574 = vmatmul.mubr.bf16.gmra.mrb[0].mxu0 %v3455
    %v3575 = vpop.f32.mrb[0].mxu0
    %v3576 = vadd.f32 %v3483, %v3575
    %v3577 = vpop.f32.mrb[0].mxu0
    %v3578 = vpop.f32.mrb[0].mxu0
    %v3579 = vadd.f32 %v3483, %v3578
    %v3580 = vpop.f32.mrb[0].mxu0
    %3581 = vmatprep.mubr.bf16.mxu0 0
    %3582 = vmatmul.mubr.bf16.gmra.mrb[0].mxu0 %v3456
    %v3583 = vpop.f32.mrb[0].mxu0
    %v3584 = vadd.f32 %v3483, %v3583
    %v3585 = vpop.f32.mrb[0].mxu0
    %v3586 = vpop.f32.mrb[0].mxu0
    %v3587 = vadd.f32 %v3483, %v3586
    %v3588 = vpop.f32.mrb[0].mxu0
    %3589 = vmatprep.mubr.bf16.mxu0 0
    %3590 = vmatmul.mubr.bf16.gmra.mrb[0].mxu0 %v3457
    %v3591 = vpop.f32.mrb[0].mxu0
    %v3592 = vadd.f32 %v3483, %v3591
    %v3593 = vpop.f32.mrb[0].mxu0
    %v3594 = vpop.f32.mrb[0].mxu0
    %v3595 = vadd.f32 %v3483, %v3594
    %v3596 = vpop.f32.mrb[0].mxu0
    %3597 = vmatprep.mubr.bf16.mxu0 0
    %3598 = vmatmul.mubr.bf16.gmra.mrb[0].mxu0 %v3458
    %v3599 = vpop.f32.mrb[0].mxu0
    %v3600 = vadd.f32 %v3483, %v3599
    %v3601 = vpop.f32.mrb[0].mxu0
    %v3602 = vpop.f32.mrb[0].mxu0
    %v3603 = vadd.f32 %v3483, %v3602
    %v3604 = vpop.f32.mrb[0].mxu0
    %3605 = vmatprep.mubr.bf16.mxu0 0
    %3606 = vmatmul.mubr.bf16.gmra.mrb[0].mxu0 %v3459
    %v3607 = vpop.f32.mrb[0].mxu0
    %v3608 = vadd.f32 %v3483, %v3607
    %v3609 = vpop.f32.mrb[0].mxu0
    %v3610 = vpop.f32.mrb[0].mxu0
    %v3611 = vadd.f32 %v3483, %v3610
    %v3612 = vpop.f32.mrb[0].mxu0
    %3613 = vmatprep.mubr.bf16.mxu0 0
    %3614 = vmatmul.mubr.bf16.gmra.mrb[0].mxu0 %v3460
    %v3615 = vpop.f32.mrb[0].mxu0
    %v3616 = vadd.f32 %v3483, %v3615
    %v3617 = vpop.f32.mrb[0].mxu0
    %v3618 = vpop.f32.mrb[0].mxu0
    %v3619 = vadd.f32 %v3483, %v3618
    %v3620 = vpop.f32.mrb[0].mxu0
    %3621 = vmatprep.mubr.bf16.mxu0 0
    %3622 = vmatmul.mubr.bf16.gmra.mrb[0].mxu0 %v3461
    %v3623 = vpop.f32.mrb[0].mxu0
    %v3624 = vadd.f32 %v3483, %v3623
    %v3625 = vpop.f32.mrb[0].mxu0
    %v3626 = vpop.f32.mrb[0].mxu0
    %v3627 = vadd.f32 %v3483, %v3626
    %v3628 = vpop.f32.mrb[0].mxu0
    %3629 = vdwg.mxu0
    %3630 = vst [vmem:[#allocation14] sm:$0xff] %v3568
    %3631 = vst [vmem:[#allocation14 + $0x8] sm:$0xff] %v3571
    %3632 = vst [vmem:[#allocation14 + $0x10] sm:$0xff] %v3576
    %3633 = vst [vmem:[#allocation14 + $0x18] sm:$0xff] %v3579
    %3634 = vst [vmem:[#allocation14 + $0x20] sm:$0xff] %v3584
    %3635 = vst [vmem:[#allocation14 + $0x28] sm:$0xff] %v3587
    %3636 = vst [vmem:[#allocation14 + $0x30] sm:$0xff] %v3592
    %3637 = vst [vmem:[#allocation14 + $0x38] sm:$0xff] %v3595
    %3638 = vst [vmem:[#allocation14 + $0x40] sm:$0xff] %v3600
    %3639 = vst [vmem:[#allocation14 + $0x48] sm:$0xff] %v3603
    %3640 = vst [vmem:[#allocation14 + $0x50] sm:$0xff] %v3608
    %3641 = vst [vmem:[#allocation14 + $0x58] sm:$0xff] %v3611
    %3642 = vst [vmem:[#allocation14 + $0x60] sm:$0xff] %v3616
    %3643 = vst [vmem:[#allocation14 + $0x68] sm:$0xff] %v3619
    %3644 = vst [vmem:[#allocation14 + $0x70] sm:$0xff] %v3624
    %3645 = vst [vmem:[#allocation14 + $0x78] sm:$0xff] %v3627
    // Predicated region
    $region46: #{tpu_custom_call.1} parent=1 // pred_check
      _
    $region47: #{tpu_custom_call.1} parent=1 // pred_check_branch
      %3647 = sbr.rel (0) target = $region49
    $region48: #{tpu_custom_call.1} parent=1 // pred_region
      %s3649 = ssub.s32 2048, 2048
      %3650 = vsyncadd [#allocation8], %s3649
      %s3651 = sshll.u32 [#allocation14], 4
      %s3652 = int_to_ptr.vmem [resolvable:$true] %s3651
      %3657 = dma.vmem_to_hbm [thread:$0]  %s3652, 2048, %s6, [#allocation8], 128, 128, 8
    $region49: #{tpu_custom_call.1} parent=1 // pred_fallthru
      _
    // Predicated region
    $region50: #{tpu_custom_call.1} parent=1 // pred_check
      _
    $region51: #{tpu_custom_call.1} parent=1 // pred_check_branch
      %3659 = sbr.rel (0) target = $region53
    $region52: #{tpu_custom_call.1} parent=1 // pred_region
      %3660 = dma.done [#allocation8], 2048
    $region53: #{tpu_custom_call.1} parent=1 // pred_fallthru
      _
    %3661 = vsyncpa [#allocation7], 1
    %3662 = vsyncpa [#allocation10], 1
    %3663 = vsyncpa [#allocation13], 1
    %3664 = vsyncpa [#allocation8], 1

</llo_original>
